<compile_context>
chip_gen: v6e
topology: v6e:2x2x1
jax: 0.10.0
libtpu: 0.0.40
codegen_flags: <defaults>
</compile_context>

<pallas_src>
import functools
import math

import jax
import jax.numpy as jnp
from jax.experimental import pallas as pl
from jax.experimental.pallas import tpu as pltpu

# ----------------------------- small synthetic config -----------------------
SST_DIM = 32                  # image is (B, 3, 32, 32)
MAX_OBJECT = 8                # number of boxes per frame
SELECTOR_CHANNEL = (8, 8, 8, 8, 8, 8)   # 3 vgg sources + 3 extras sources
FINAL_NET_CFG = [96, 48, 24, 12, 6, 1]  # final_net[0] == 2 * sum(selector)
FALSE_CONSTANT = 10.0
BN_EPS = 1e-5
BN_SCALE = 1.0 / math.sqrt(1.0 + BN_EPS)   # eval-mode BN with default stats


# ----------------------------- Pallas kernels --------------------------------
def _matmul_fused_kernel(a_ref, w_ref, t_ref, o_ref, *, relu):
    """out = act(A @ W + t)  (bias / BN already folded into W, t)."""
    acc = jnp.dot(a_ref[...], w_ref[...], preferred_element_type=jnp.float32)
    y = acc + t_ref[...]
    if relu:
        y = jnp.maximum(y, 0.0)
    o_ref[...] = y.astype(o_ref.dtype)


def _matmul_dual_kernel(a_ref, w_ref, t_ref, o_pre_ref, o_post_ref, *, bn_scale):
    """Conv for the extras blocks: emit pre-BN source AND BN+ReLU output."""
    acc = jnp.dot(a_ref[...], w_ref[...], preferred_element_type=jnp.float32)
    y = acc + t_ref[...]
    o_pre_ref[...] = y.astype(o_pre_ref.dtype)
    o_post_ref[...] = jnp.maximum(y * bn_scale, 0.0).astype(o_post_ref.dtype)


def _final_chain_kernel(x_ref, w1_ref, w2_ref, w3_ref, w4_ref, w5_ref,
                        b1_ref, b2_ref, b3_ref, b4_ref, b5_ref, o_ref):
    """Five chained 1x1 convs (ReLU each), all intermediates in VMEM/vregs."""
    h = x_ref[...]
    for w_r, b_r in ((w1_ref, b1_ref), (w2_ref, b2_ref), (w3_ref, b3_ref),
                     (w4_ref, b4_ref), (w5_ref, b5_ref)):
        h = jnp.maximum(
            jnp.dot(h, w_r[...], preferred_element_type=jnp.float32) + b_r[...],
            0.0)
    o_ref[...] = h.astype(o_ref.dtype)


# ----------------------------- kernel wrappers --------------------------------
def _pick_tm(M):
    """Largest M-tile: full M up to 1024, else the biggest nice divisor."""
    if M <= 1024:
        return M
    for t in (1024, 512, 256, 128, 8):
        if M % t == 0:
            return t
    return M


def matmul_fused(a, w, t, *, relu):
    """(M,K)@(K,N) + shift (+ReLU). bf16 MXU operands, f32 accumulate/epilogue."""
    M, K = a.shape
    _, N = w.shape
    tm = _pick_tm(M)
    return pl.pallas_call(
        functools.partial(_matmul_fused_kernel, relu=relu),
        out_shape=jax.ShapeDtypeStruct((M, N), jnp.float32),
        grid=(M // tm,),
        in_specs=[
            pl.BlockSpec((tm, K), lambda i: (i, 0)),
            pl.BlockSpec((K, N), lambda i: (0, 0)),
            pl.BlockSpec((1, N), lambda i: (0, 0)),
        ],
        out_specs=pl.BlockSpec((tm, N), lambda i: (i, 0)),
        compiler_params=pltpu.CompilerParams(dimension_semantics=("parallel",)),
    )(a.astype(jnp.bfloat16), w.astype(jnp.bfloat16),
      t.reshape(1, N).astype(jnp.float32))


def matmul_dual_bn(a, w, b):
    """(M,K)@(K,N)+b  -> (pre-BN, relu(BN(pre-BN)))  in one pallas_call."""
    M, K = a.shape
    _, N = w.shape
    tm = _pick_tm(M)
    return pl.pallas_call(
        functools.partial(_matmul_dual_kernel, bn_scale=BN_SCALE),
        out_shape=(jax.ShapeDtypeStruct((M, N), jnp.float32),
                   jax.ShapeDtypeStruct((M, N), jnp.float32)),
        grid=(M // tm,),
        in_specs=[
            pl.BlockSpec((tm, K), lambda i: (i, 0)),
            pl.BlockSpec((K, N), lambda i: (0, 0)),
            pl.BlockSpec((1, N), lambda i: (0, 0)),
        ],
        out_specs=(pl.BlockSpec((tm, N), lambda i: (i, 0)),
                   pl.BlockSpec((tm, N), lambda i: (i, 0))),
        compiler_params=pltpu.CompilerParams(dimension_semantics=("parallel",)),
    )(a.astype(jnp.bfloat16), w.astype(jnp.bfloat16),
      b.reshape(1, N).astype(jnp.float32))


# ----------------------------- JAX glue ---------------------------------------
def im2col(x, kh, kw, stride, padding, dilation):
    N, H, W, C = x.shape
    xp = jnp.pad(x, ((0, 0), (padding, padding), (padding, padding), (0, 0)))
    Ho = (H + 2 * padding - dilation * (kh - 1) - 1) // stride + 1
    Wo = (W + 2 * padding - dilation * (kw - 1) - 1) // stride + 1
    patches = []
    for i in range(kh):
        for j in range(kw):
            hs, ws = i * dilation, j * dilation
            sl = xp[:, hs:hs + (Ho - 1) * stride + 1:stride,
                    ws:ws + (Wo - 1) * stride + 1:stride, :]
            patches.append(sl)
    cols = jnp.stack(patches, axis=3)                   # (N, Ho, Wo, kh*kw, C)
    return cols.reshape(N * Ho * Wo, kh * kw * C), (N, Ho, Wo)


def conv2d(x, w, b, *, stride=1, padding=1, dilation=1, relu=False, bn=False):
    kh, kw, Cin, Cout = w.shape
    cols, (N, Ho, Wo) = im2col(x, kh, kw, stride, padding, dilation)
    wf = w.reshape(kh * kw * Cin, Cout)
    t = b
    if bn:   # fold eval-mode BN (scale only, shift==0) into W and bias
        wf = wf * BN_SCALE
        t = b * BN_SCALE
    y = matmul_fused(cols, wf, t, relu=relu)
    return y.reshape(N, Ho, Wo, Cout)


def conv2d_dual_bn(x, w, b, *, stride, padding):
    """3x3 conv for the extras blocks: returns (pre-BN source, BN+ReLU output)."""
    kh, kw, Cin, Cout = w.shape
    cols, (N, Ho, Wo) = im2col(x, kh, kw, stride, padding, 1)
    pre, post = matmul_dual_bn(cols, w.reshape(kh * kw * Cin, Cout), b)
    return pre.reshape(N, Ho, Wo, Cout), post.reshape(N, Ho, Wo, Cout)


def maxpool2x2(x):
    # elementwise max chain — XLA fuses this; no kernel launch needed.
    a = x[:, 0::2, 0::2, :]
    b = x[:, 0::2, 1::2, :]
    c = x[:, 1::2, 0::2, :]
    d = x[:, 1::2, 1::2, :]
    return jnp.maximum(jnp.maximum(a, b), jnp.maximum(c, d))


def maxpool3x3_s1_p1(x):
    N, H, W, C = x.shape
    neg = jnp.finfo(jnp.float32).min
    xp = jnp.pad(x, ((0, 0), (1, 1), (1, 1), (0, 0)), constant_values=neg)
    out = None
    for i in range(3):
        for j in range(3):
            sl = xp[:, i:i + H, j:j + W, :]
            out = sl if out is None else jnp.maximum(out, sl)
    return out


def sample_bilinear(f, pts):
    """grid_sample (align_corners=True, zero padding) as a 4-corner gather.

    f:   (B2, H, W, C) feature map
    pts: (B2, No, 2)   (x, y) in [-1, 1]
    returns (B2, No, C)
    """
    B2, H, W, C = f.shape
    gx = (pts[..., 0] + 1.0) * 0.5 * (W - 1)
    gy = (pts[..., 1] + 1.0) * 0.5 * (H - 1)
    x0 = jnp.floor(gx)
    y0 = jnp.floor(gy)
    wx1, wy1 = gx - x0, gy - y0
    wx0, wy0 = 1.0 - wx1, 1.0 - wy1
    ff = f.reshape(B2, H * W, C)

    def corner(xi, yi, wgt):
        valid = (xi >= 0) & (xi <= W - 1) & (yi >= 0) & (yi <= H - 1)
        xc = jnp.clip(xi, 0, W - 1).astype(jnp.int32)
        yc = jnp.clip(yi, 0, H - 1).astype(jnp.int32)
        idx = yc * W + xc                                       # (B2, No)
        vals = jnp.take_along_axis(ff, idx[..., None], axis=1)  # (B2, No, C)
        return vals * (wgt * valid)[..., None]

    return (corner(x0, y0, wx0 * wy0) + corner(x0 + 1, y0, wx1 * wy0)
            + corner(x0, y0 + 1, wx0 * wy1) + corner(x0 + 1, y0 + 1, wx1 * wy1))


# ----------------------------- parameters -------------------------------------
def conv_params(key, kh, kw, cin, cout):
    k1, k2 = jax.random.split(key)
    w = jax.random.normal(k1, (kh, kw, cin, cout), jnp.float32) * (0.3 / jnp.sqrt(kh * kw * cin))
    b = jax.random.normal(k2, (cout,), jnp.float32) * 0.01
    return w, b


def build_params(key):
    ks = iter(jax.random.split(key, 64))
    P = {}
    # VGG base (no batch norm -> 35-layer structure, split at torch indices 16/23/35)
    P['vgg_s1'] = [conv_params(next(ks), 3, 3, 3, 8), conv_params(next(ks), 3, 3, 8, 8),
                   conv_params(next(ks), 3, 3, 8, 16), conv_params(next(ks), 3, 3, 16, 16),
                   conv_params(next(ks), 3, 3, 16, 16), conv_params(next(ks), 3, 3, 16, 16),
                   conv_params(next(ks), 3, 3, 16, 16)]
    P['vgg_s2'] = [conv_params(next(ks), 3, 3, 16, 32), conv_params(next(ks), 3, 3, 32, 32),
                   conv_params(next(ks), 3, 3, 32, 32)]
    P['vgg_s3'] = [conv_params(next(ks), 3, 3, 32, 32), conv_params(next(ks), 3, 3, 32, 32),
                   conv_params(next(ks), 3, 3, 32, 32)]
    P['conv6'] = conv_params(next(ks), 3, 3, 32, 64)    # dilation=6, padding=6
    P['conv7'] = conv_params(next(ks), 1, 1, 64, 64)
    # extras (batch_norm=True): [conv1x1, BN, ReLU, conv3x3 s2, BN, ReLU] per block
    P['extras'] = [
        (conv_params(next(ks), 1, 1, 64, 16), conv_params(next(ks), 3, 3, 16, 32)),
        (conv_params(next(ks), 1, 1, 32, 16), conv_params(next(ks), 3, 3, 16, 32)),
        (conv_params(next(ks), 1, 1, 32, 16), conv_params(next(ks), 3, 3, 16, 32)),
    ]
    src_ch = (16, 32, 64, 32, 32, 32)
    P['selector'] = [conv_params(next(ks), 3, 3, ci, co)
                     for ci, co in zip(src_ch, SELECTOR_CHANNEL)]
    P['final'] = [conv_params(next(ks), 1, 1, FINAL_NET_CFG[i], FINAL_NET_CFG[i + 1])
                  for i in range(len(FINAL_NET_CFG) - 1)]
    return P


# ----------------------------- SST forward ------------------------------------
def forward_vgg(x, P):
    sources = []
    s1 = P['vgg_s1']
    x = conv2d(x, *s1[0], relu=True); x = conv2d(x, *s1[1], relu=True); x = maxpool2x2(x)
    x = conv2d(x, *s1[2], relu=True); x = conv2d(x, *s1[3], relu=True); x = maxpool2x2(x)
    x = conv2d(x, *s1[4], relu=True); x = conv2d(x, *s1[5], relu=True); x = conv2d(x, *s1[6], relu=True)
    sources.append(x)                               # torch vgg index 15
    x = maxpool2x2(x)                               # 'C' pool (even -> ceil == floor)
    for w, b in P['vgg_s2']:
        x = conv2d(x, w, b, relu=True)
    sources.append(x)                               # torch vgg index 22
    x = maxpool2x2(x)
    for w, b in P['vgg_s3']:
        x = conv2d(x, w, b, relu=True)
    x = maxpool3x3_s1_p1(x)                         # pool5
    x = conv2d(x, *P['conv6'], padding=6, dilation=6, relu=True)
    x = conv2d(x, *P['conv7'], padding=0, relu=True)
    sources.append(x)                               # torch vgg index 34
    return x, sources


def forward_extras(x, P):
    sources = []
    for (p1, p3) in P['extras']:
        x = conv2d(x, *p1, padding=0, relu=True, bn=True)      # conv1x1 + BN + ReLU
        pre, x = conv2d_dual_bn(x, *p3, stride=2, padding=1)   # conv3x3 s2, dual output
        sources.append(pre)                                    # appended at k % 6 == 3 (pre-BN)
    return x, sources


def forward_selector_stacker1(sources, labels, P):
    """sources: list of (2B, H, W, C); labels: (2B, No, 1, 1, 2) -> (2B, No, 48)."""
    pts = labels[:, :, 0, 0, :]
    feats = [conv2d(src, w, b, relu=True) for (w, b), src in zip(P['selector'], sources)]
    sampled = [sample_bilinear(f, pts) for f in feats]
    return jnp.concatenate(sampled, axis=-1)


def forward_stacker2(xp, xn):
    # stacker2_bn (eval mode, default stats) is a pure per-channel scale; it is
    # folded into the first final-net weight inside forward_final_fused.
    B, N, C = xp.shape
    pre_grid = jnp.broadcast_to(xp[:, :, None, :], (B, N, MAX_OBJECT, C))
    nxt_grid = jnp.broadcast_to(xn[:, None, :, :], (B, MAX_OBJECT, N, C))
    return jnp.concatenate([pre_grid, nxt_grid], axis=-1)      # (B, No, No, 2C) NHWC


def forward_final_fused(x, P):
    """Five 1x1 convs (BN on the first three, ReLU on all) in one pallas_call."""
    B, No1, No2, C = x.shape
    M = B * No1 * No2
    xf = x.reshape(M, C)
    ws, bs = [], []
    for i, (w, b) in enumerate(P['final']):
        wf = w.reshape(w.shape[2], w.shape[3])
        bf = b
        if i == 0:
            # fold stacker2_bn (input scale) and this layer's own BN (output scale)
            wf = wf * (BN_SCALE * BN_SCALE)
            bf = bf * BN_SCALE
        elif i < len(P['final']) - 2:
            wf = wf * BN_SCALE
            bf = bf * BN_SCALE
        ws.append(wf.astype(jnp.float32))
        bs.append(bf.reshape(1, -1).astype(jnp.float32))

    out = pl.pallas_call(
        _final_chain_kernel,
        out_shape=jax.ShapeDtypeStruct((M, 1), jnp.float32),
        grid=(1,),
        in_specs=([pl.BlockSpec((M, C), lambda i: (0, 0))]
                  + [pl.BlockSpec(w.shape, lambda i: (0, 0)) for w in ws]
                  + [pl.BlockSpec(b.shape, lambda i: (0, 0)) for b in bs]),
        out_specs=pl.BlockSpec((M, 1), lambda i: (0, 0)),
    )(xf, *ws, *bs)
    return out.reshape(B, No1, No2, 1)


def add_unmatched_dim(x_nchw):
    B, C, H, W = x_nchw.shape
    col = jnp.full((B, C, H, 1), FALSE_CONSTANT, jnp.float32)
    x = jnp.concatenate([x_nchw, col], axis=3)
    row = jnp.full((B, C, 1, x.shape[3]), FALSE_CONSTANT, jnp.float32)
    return jnp.concatenate([x, row], axis=2)


def sst_forward(params, x_pre, x_next, l_pre, l_next):
    # inputs are NCHW (like PyTorch); both frames are batched through one pass.
    B = x_pre.shape[0]
    x = jnp.concatenate([x_pre, x_next], axis=0)        # (2B, 3, H, W)
    x = jnp.transpose(x, (0, 2, 3, 1))                  # NHWC
    x, sources = forward_vgg(x, params)
    x, extra_sources = forward_extras(x, params)
    sources = sources + extra_sources
    labels = jnp.concatenate([l_pre, l_next], axis=0)   # (2B, No, 1, 1, 2)
    feats = forward_selector_stacker1(sources, labels, params)   # (2B, No, 48)
    fp, fn = feats[:B], feats[B:]
    x = forward_stacker2(fp, fn)                        # (B, No, No, 96) NHWC
    # final_dp: Dropout(0.5) -> identity in inference mode
    x = forward_final_fused(x, params)                  # (B, No, No, 1)
    x = jnp.transpose(x, (0, 3, 1, 2))                  # NCHW (B, 1, No, No)
    return add_unmatched_dim(x)                         # (B, 1, No+1, No+1)


if __name__ == "__main__":
    key = jax.random.PRNGKey(0)
    kp, k1, k2, k3, k4 = jax.random.split(key, 5)
    params = build_params(kp)
    B = 1
    x_pre = jax.random.normal(k1, (B, 3, SST_DIM, SST_DIM), jnp.float32)
    x_next = jax.random.normal(k2, (B, 3, SST_DIM, SST_DIM), jnp.float32)
    l_pre = jax.random.uniform(k3, (B, MAX_OBJECT, 1, 1, 2), jnp.float32, -0.9, 0.9)
    l_next = jax.random.uniform(k4, (B, MAX_OBJECT, 1, 1, 2), jnp.float32, -0.9, 0.9)

    out = jax.jit(sst_forward)(params, x_pre, x_next, l_pre, l_next)
    out = jax.block_until_ready(out)
    assert out.shape == (B, 1, MAX_OBJECT + 1, MAX_OBJECT + 1), out.shape
    assert jnp.all(jnp.isfinite(out))
    print("KERNEL_OK")
</pallas_src>

<mosaic_0001>
module attributes {stable_mosaic.version = 11 : i64} {
  func.func @_matmul_fused_kernel(%arg0: i32, %arg1: memref<1024x27xbf16, #tpu.memory_space<vmem>>, %arg2: memref<27x8xbf16, #tpu.memory_space<vmem>>, %arg3: memref<1x8xf32, #tpu.memory_space<vmem>>, %arg4: memref<1024x8xf32, #tpu.memory_space<vmem>>) attributes {dimension_semantics = [#tpu.dimension_semantics<parallel>], iteration_bounds = array<i64: 2>, scalar_prefetch = 0 : i64, scratch_operands = 0 : i64, tpu.core_type = #tpu.core_type<tc>, window_params = [{transform_indices = @transform_0, window_bounds = array<i64: 1024, 27>}, {pipeline_mode = #tpu.pipeline_mode<synchronous>, transform_indices = @transform_1, window_bounds = array<i64: 27, 8>}, {pipeline_mode = #tpu.pipeline_mode<synchronous>, transform_indices = @transform_2, window_bounds = array<i64: 1, 8>}, {transform_indices = @transform_3, window_bounds = array<i64: 1024, 8>}]} {
    %c0 = arith.constant 0 : index
    %c0_0 = arith.constant 0 : index
    %0 = vector.load %arg1[%c0, %c0_0] : memref<1024x27xbf16, #tpu.memory_space<vmem>>, vector<1024x27xbf16>
    %c0_1 = arith.constant 0 : index
    %c0_2 = arith.constant 0 : index
    %1 = vector.load %arg2[%c0_1, %c0_2] : memref<27x8xbf16, #tpu.memory_space<vmem>>, vector<27x8xbf16>
    %cst = arith.constant dense<0.000000e+00> : vector<1024x8xf32>
    %2 = tpu.matmul %0, %1, %cst {dimension_numbers = #tpu.dot_dimension_numbers<[1], [0], [0], [1], [0, 0, 1, 1], [], []>} : vector<1024x27xbf16>, vector<27x8xbf16>, vector<1024x8xf32> -> vector<1024x8xf32>
    %c0_3 = arith.constant 0 : index
    %c0_4 = arith.constant 0 : index
    %3 = vector.load %arg3[%c0_3, %c0_4] : memref<1x8xf32, #tpu.memory_space<vmem>>, vector<1x8xf32>
    %4 = vector.broadcast %3 : vector<1x8xf32> to vector<1024x8xf32>
    %5 = arith.addf %2, %4 : vector<1024x8xf32>
    %cst_5 = arith.constant 0.000000e+00 : f32
    %6 = vector.broadcast %cst_5 : f32 to vector<1024x8xf32>
    %7 = arith.maximumf %5, %6 : vector<1024x8xf32>
    %c0_6 = arith.constant 0 : index
    %c0_7 = arith.constant 0 : index
    %8 = vector.load %arg4[%c0_6, %c0_7] : memref<1024x8xf32, #tpu.memory_space<vmem>>, vector<1024x8xf32>
    tpu.vector_store %arg4[%c0_6, %c0_7], %7 {strides = array<i32>} : memref<1024x8xf32, #tpu.memory_space<vmem>>, vector<1024x8xf32>,
    return
  }
  func.func @transform_0(%arg0: i32) -> (i32, i32) {
    %c0_i32 = arith.constant 0 : i32
    %c0_i32_0 = arith.constant 0 : i32
    return %arg0, %c0_i32 : i32, i32
  }
  func.func @transform_1(%arg0: i32) -> (i32, i32) {
    %c0_i32 = arith.constant 0 : i32
    %c0_i32_0 = arith.constant 0 : i32
    %c0_i32_1 = arith.constant 0 : i32
    return %c0_i32, %c0_i32_0 : i32, i32
  }
  func.func @transform_2(%arg0: i32) -> (i32, i32) {
    %c0_i32 = arith.constant 0 : i32
    %c0_i32_0 = arith.constant 0 : i32
    %c0_i32_1 = arith.constant 0 : i32
    return %c0_i32, %c0_i32_0 : i32, i32
  }
  func.func @transform_3(%arg0: i32) -> (i32, i32) {
    %c0_i32 = arith.constant 0 : i32
    %c0_i32_0 = arith.constant 0 : i32
    return %arg0, %c0_i32 : i32, i32
  }
}

module attributes {stable_mosaic.version = 11 : i64} {
  func.func @_matmul_fused_kernel(%arg0: i32, %arg1: memref<1024x72xbf16, #tpu.memory_space<vmem>>, %arg2: memref<72x8xbf16, #tpu.memory_space<vmem>>, %arg3: memref<1x8xf32, #tpu.memory_space<vmem>>, %arg4: memref<1024x8xf32, #tpu.memory_space<vmem>>) attributes {dimension_semantics = [#tpu.dimension_semantics<parallel>], iteration_bounds = array<i64: 2>, scalar_prefetch = 0 : i64, scratch_operands = 0 : i64, tpu.core_type = #tpu.core_type<tc>, window_params = [{transform_indices = @transform_0, window_bounds = array<i64: 1024, 72>}, {pipeline_mode = #tpu.pipeline_mode<synchronous>, transform_indices = @transform_1, window_bounds = array<i64: 72, 8>}, {pipeline_mode = #tpu.pipeline_mode<synchronous>, transform_indices = @transform_2, window_bounds = array<i64: 1, 8>}, {transform_indices = @transform_3, window_bounds = array<i64: 1024, 8>}]} {
    %c0 = arith.constant 0 : index
    %c0_0 = arith.constant 0 : index
    %0 = vector.load %arg1[%c0, %c0_0] : memref<1024x72xbf16, #tpu.memory_space<vmem>>, vector<1024x72xbf16>
    %c0_1 = arith.constant 0 : index
    %c0_2 = arith.constant 0 : index
    %1 = vector.load %arg2[%c0_1, %c0_2] : memref<72x8xbf16, #tpu.memory_space<vmem>>, vector<72x8xbf16>
    %cst = arith.constant dense<0.000000e+00> : vector<1024x8xf32>
    %2 = tpu.matmul %0, %1, %cst {dimension_numbers = #tpu.dot_dimension_numbers<[1], [0], [0], [1], [0, 0, 1, 1], [], []>} : vector<1024x72xbf16>, vector<72x8xbf16>, vector<1024x8xf32> -> vector<1024x8xf32>
    %c0_3 = arith.constant 0 : index
    %c0_4 = arith.constant 0 : index
    %3 = vector.load %arg3[%c0_3, %c0_4] : memref<1x8xf32, #tpu.memory_space<vmem>>, vector<1x8xf32>
    %4 = vector.broadcast %3 : vector<1x8xf32> to vector<1024x8xf32>
    %5 = arith.addf %2, %4 : vector<1024x8xf32>
    %cst_5 = arith.constant 0.000000e+00 : f32
    %6 = vector.broadcast %cst_5 : f32 to vector<1024x8xf32>
    %7 = arith.maximumf %5, %6 : vector<1024x8xf32>
    %c0_6 = arith.constant 0 : index
    %c0_7 = arith.constant 0 : index
    %8 = vector.load %arg4[%c0_6, %c0_7] : memref<1024x8xf32, #tpu.memory_space<vmem>>, vector<1024x8xf32>
    tpu.vector_store %arg4[%c0_6, %c0_7], %7 {strides = array<i32>} : memref<1024x8xf32, #tpu.memory_space<vmem>>, vector<1024x8xf32>,
    return
  }
  func.func @transform_0(%arg0: i32) -> (i32, i32) {
    %c0_i32 = arith.constant 0 : i32
    %c0_i32_0 = arith.constant 0 : i32
    return %arg0, %c0_i32 : i32, i32
  }
  func.func @transform_1(%arg0: i32) -> (i32, i32) {
    %c0_i32 = arith.constant 0 : i32
    %c0_i32_0 = arith.constant 0 : i32
    %c0_i32_1 = arith.constant 0 : i32
    return %c0_i32, %c0_i32_0 : i32, i32
  }
  func.func @transform_2(%arg0: i32) -> (i32, i32) {
    %c0_i32 = arith.constant 0 : i32
    %c0_i32_0 = arith.constant 0 : i32
    %c0_i32_1 = arith.constant 0 : i32
    return %c0_i32, %c0_i32_0 : i32, i32
  }
  func.func @transform_3(%arg0: i32) -> (i32, i32) {
    %c0_i32 = arith.constant 0 : i32
    %c0_i32_0 = arith.constant 0 : i32
    return %arg0, %c0_i32 : i32, i32
  }
}

module attributes {stable_mosaic.version = 11 : i64} {
  func.func @_matmul_fused_kernel(%arg0: i32, %arg1: memref<512x72xbf16, #tpu.memory_space<vmem>>, %arg2: memref<72x16xbf16, #tpu.memory_space<vmem>>, %arg3: memref<1x16xf32, #tpu.memory_space<vmem>>, %arg4: memref<512x16xf32, #tpu.memory_space<vmem>>) attributes {dimension_semantics = [#tpu.dimension_semantics<parallel>], iteration_bounds = array<i64: 1>, scalar_prefetch = 0 : i64, scratch_operands = 0 : i64, tpu.core_type = #tpu.core_type<tc>, window_params = [{transform_indices = @transform_0, window_bounds = array<i64: 512, 72>}, {pipeline_mode = #tpu.pipeline_mode<synchronous>, transform_indices = @transform_1, window_bounds = array<i64: 72, 16>}, {pipeline_mode = #tpu.pipeline_mode<synchronous>, transform_indices = @transform_2, window_bounds = array<i64: 1, 16>}, {transform_indices = @transform_3, window_bounds = array<i64: 512, 16>}]} {
    %c0 = arith.constant 0 : index
    %c0_0 = arith.constant 0 : index
    %0 = vector.load %arg1[%c0, %c0_0] : memref<512x72xbf16, #tpu.memory_space<vmem>>, vector<512x72xbf16>
    %c0_1 = arith.constant 0 : index
    %c0_2 = arith.constant 0 : index
    %1 = vector.load %arg2[%c0_1, %c0_2] : memref<72x16xbf16, #tpu.memory_space<vmem>>, vector<72x16xbf16>
    %cst = arith.constant dense<0.000000e+00> : vector<512x16xf32>
    %2 = tpu.matmul %0, %1, %cst {dimension_numbers = #tpu.dot_dimension_numbers<[1], [0], [0], [1], [0, 0, 1, 1], [], []>} : vector<512x72xbf16>, vector<72x16xbf16>, vector<512x16xf32> -> vector<512x16xf32>
    %c0_3 = arith.constant 0 : index
    %c0_4 = arith.constant 0 : index
    %3 = vector.load %arg3[%c0_3, %c0_4] : memref<1x16xf32, #tpu.memory_space<vmem>>, vector<1x16xf32>
    %4 = vector.broadcast %3 : vector<1x16xf32> to vector<512x16xf32>
    %5 = arith.addf %2, %4 : vector<512x16xf32>
    %cst_5 = arith.constant 0.000000e+00 : f32
    %6 = vector.broadcast %cst_5 : f32 to vector<512x16xf32>
    %7 = arith.maximumf %5, %6 : vector<512x16xf32>
    %c0_6 = arith.constant 0 : index
    %c0_7 = arith.constant 0 : index
    %8 = vector.load %arg4[%c0_6, %c0_7] : memref<512x16xf32, #tpu.memory_space<vmem>>, vector<512x16xf32>
    tpu.vector_store %arg4[%c0_6, %c0_7], %7 {strides = array<i32>} : memref<512x16xf32, #tpu.memory_space<vmem>>, vector<512x16xf32>,
    return
  }
  func.func @transform_0(%arg0: i32) -> (i32, i32) {
    %c0_i32 = arith.constant 0 : i32
    %c0_i32_0 = arith.constant 0 : i32
    return %arg0, %c0_i32 : i32, i32
  }
  func.func @transform_1(%arg0: i32) -> (i32, i32) {
    %c0_i32 = arith.constant 0 : i32
    %c0_i32_0 = arith.constant 0 : i32
    %c0_i32_1 = arith.constant 0 : i32
    return %c0_i32, %c0_i32_0 : i32, i32
  }
  func.func @transform_2(%arg0: i32) -> (i32, i32) {
    %c0_i32 = arith.constant 0 : i32
    %c0_i32_0 = arith.constant 0 : i32
    %c0_i32_1 = arith.constant 0 : i32
    return %c0_i32, %c0_i32_0 : i32, i32
  }
  func.func @transform_3(%arg0: i32) -> (i32, i32) {
    %c0_i32 = arith.constant 0 : i32
    %c0_i32_0 = arith.constant 0 : i32
    return %arg0, %c0_i32 : i32, i32
  }
}

module attributes {stable_mosaic.version = 11 : i64} {
  func.func @_matmul_fused_kernel(%arg0: i32, %arg1: memref<512x144xbf16, #tpu.memory_space<vmem>>, %arg2: memref<144x16xbf16, #tpu.memory_space<vmem>>, %arg3: memref<1x16xf32, #tpu.memory_space<vmem>>, %arg4: memref<512x16xf32, #tpu.memory_space<vmem>>) attributes {dimension_semantics = [#tpu.dimension_semantics<parallel>], iteration_bounds = array<i64: 1>, scalar_prefetch = 0 : i64, scratch_operands = 0 : i64, tpu.core_type = #tpu.core_type<tc>, window_params = [{transform_indices = @transform_0, window_bounds = array<i64: 512, 144>}, {pipeline_mode = #tpu.pipeline_mode<synchronous>, transform_indices = @transform_1, window_bounds = array<i64: 144, 16>}, {pipeline_mode = #tpu.pipeline_mode<synchronous>, transform_indices = @transform_2, window_bounds = array<i64: 1, 16>}, {transform_indices = @transform_3, window_bounds = array<i64: 512, 16>}]} {
    %c0 = arith.constant 0 : index
    %c0_0 = arith.constant 0 : index
    %0 = vector.load %arg1[%c0, %c0_0] : memref<512x144xbf16, #tpu.memory_space<vmem>>, vector<512x144xbf16>
    %c0_1 = arith.constant 0 : index
    %c0_2 = arith.constant 0 : index
    %1 = vector.load %arg2[%c0_1, %c0_2] : memref<144x16xbf16, #tpu.memory_space<vmem>>, vector<144x16xbf16>
    %cst = arith.constant dense<0.000000e+00> : vector<512x16xf32>
    %2 = tpu.matmul %0, %1, %cst {dimension_numbers = #tpu.dot_dimension_numbers<[1], [0], [0], [1], [0, 0, 1, 1], [], []>} : vector<512x144xbf16>, vector<144x16xbf16>, vector<512x16xf32> -> vector<512x16xf32>
    %c0_3 = arith.constant 0 : index
    %c0_4 = arith.constant 0 : index
    %3 = vector.load %arg3[%c0_3, %c0_4] : memref<1x16xf32, #tpu.memory_space<vmem>>, vector<1x16xf32>
    %4 = vector.broadcast %3 : vector<1x16xf32> to vector<512x16xf32>
    %5 = arith.addf %2, %4 : vector<512x16xf32>
    %cst_5 = arith.constant 0.000000e+00 : f32
    %6 = vector.broadcast %cst_5 : f32 to vector<512x16xf32>
    %7 = arith.maximumf %5, %6 : vector<512x16xf32>
    %c0_6 = arith.constant 0 : index
    %c0_7 = arith.constant 0 : index
    %8 = vector.load %arg4[%c0_6, %c0_7] : memref<512x16xf32, #tpu.memory_space<vmem>>, vector<512x16xf32>
    tpu.vector_store %arg4[%c0_6, %c0_7], %7 {strides = array<i32>} : memref<512x16xf32, #tpu.memory_space<vmem>>, vector<512x16xf32>,
    return
  }
  func.func @transform_0(%arg0: i32) -> (i32, i32) {
    %c0_i32 = arith.constant 0 : i32
    %c0_i32_0 = arith.constant 0 : i32
    return %arg0, %c0_i32 : i32, i32
  }
  func.func @transform_1(%arg0: i32) -> (i32, i32) {
    %c0_i32 = arith.constant 0 : i32
    %c0_i32_0 = arith.constant 0 : i32
    %c0_i32_1 = arith.constant 0 : i32
    return %c0_i32, %c0_i32_0 : i32, i32
  }
  func.func @transform_2(%arg0: i32) -> (i32, i32) {
    %c0_i32 = arith.constant 0 : i32
    %c0_i32_0 = arith.constant 0 : i32
    %c0_i32_1 = arith.constant 0 : i32
    return %c0_i32, %c0_i32_0 : i32, i32
  }
  func.func @transform_3(%arg0: i32) -> (i32, i32) {
    %c0_i32 = arith.constant 0 : i32
    %c0_i32_0 = arith.constant 0 : i32
    return %arg0, %c0_i32 : i32, i32
  }
}

module attributes {stable_mosaic.version = 11 : i64} {
  func.func @_matmul_fused_kernel(%arg0: i32, %arg1: memref<128x144xbf16, #tpu.memory_space<vmem>>, %arg2: memref<144x16xbf16, #tpu.memory_space<vmem>>, %arg3: memref<1x16xf32, #tpu.memory_space<vmem>>, %arg4: memref<128x16xf32, #tpu.memory_space<vmem>>) attributes {dimension_semantics = [#tpu.dimension_semantics<parallel>], iteration_bounds = array<i64: 1>, scalar_prefetch = 0 : i64, scratch_operands = 0 : i64, tpu.core_type = #tpu.core_type<tc>, window_params = [{transform_indices = @transform_0, window_bounds = array<i64: 128, 144>}, {pipeline_mode = #tpu.pipeline_mode<synchronous>, transform_indices = @transform_1, window_bounds = array<i64: 144, 16>}, {pipeline_mode = #tpu.pipeline_mode<synchronous>, transform_indices = @transform_2, window_bounds = array<i64: 1, 16>}, {transform_indices = @transform_3, window_bounds = array<i64: 128, 16>}]} {
    %c0 = arith.constant 0 : index
    %c0_0 = arith.constant 0 : index
    %0 = vector.load %arg1[%c0, %c0_0] : memref<128x144xbf16, #tpu.memory_space<vmem>>, vector<128x144xbf16>
    %c0_1 = arith.constant 0 : index
    %c0_2 = arith.constant 0 : index
    %1 = vector.load %arg2[%c0_1, %c0_2] : memref<144x16xbf16, #tpu.memory_space<vmem>>, vector<144x16xbf16>
    %cst = arith.constant dense<0.000000e+00> : vector<128x16xf32>
    %2 = tpu.matmul %0, %1, %cst {dimension_numbers = #tpu.dot_dimension_numbers<[1], [0], [0], [1], [0, 0, 1, 1], [], []>} : vector<128x144xbf16>, vector<144x16xbf16>, vector<128x16xf32> -> vector<128x16xf32>
    %c0_3 = arith.constant 0 : index
    %c0_4 = arith.constant 0 : index
    %3 = vector.load %arg3[%c0_3, %c0_4] : memref<1x16xf32, #tpu.memory_space<vmem>>, vector<1x16xf32>
    %4 = vector.broadcast %3 : vector<1x16xf32> to vector<128x16xf32>
    %5 = arith.addf %2, %4 : vector<128x16xf32>
    %cst_5 = arith.constant 0.000000e+00 : f32
    %6 = vector.broadcast %cst_5 : f32 to vector<128x16xf32>
    %7 = arith.maximumf %5, %6 : vector<128x16xf32>
    %c0_6 = arith.constant 0 : index
    %c0_7 = arith.constant 0 : index
    %8 = vector.load %arg4[%c0_6, %c0_7] : memref<128x16xf32, #tpu.memory_space<vmem>>, vector<128x16xf32>
    tpu.vector_store %arg4[%c0_6, %c0_7], %7 {strides = array<i32>} : memref<128x16xf32, #tpu.memory_space<vmem>>, vector<128x16xf32>,
    return
  }
  func.func @transform_0(%arg0: i32) -> (i32, i32) {
    %c0_i32 = arith.constant 0 : i32
    %c0_i32_0 = arith.constant 0 : i32
    return %arg0, %c0_i32 : i32, i32
  }
  func.func @transform_1(%arg0: i32) -> (i32, i32) {
    %c0_i32 = arith.constant 0 : i32
    %c0_i32_0 = arith.constant 0 : i32
    %c0_i32_1 = arith.constant 0 : i32
    return %c0_i32, %c0_i32_0 : i32, i32
  }
  func.func @transform_2(%arg0: i32) -> (i32, i32) {
    %c0_i32 = arith.constant 0 : i32
    %c0_i32_0 = arith.constant 0 : i32
    %c0_i32_1 = arith.constant 0 : i32
    return %c0_i32, %c0_i32_0 : i32, i32
  }
  func.func @transform_3(%arg0: i32) -> (i32, i32) {
    %c0_i32 = arith.constant 0 : i32
    %c0_i32_0 = arith.constant 0 : i32
    return %arg0, %c0_i32 : i32, i32
  }
}

module attributes {stable_mosaic.version = 11 : i64} {
  func.func @_matmul_fused_kernel(%arg0: i32, %arg1: memref<32x144xbf16, #tpu.memory_space<vmem>>, %arg2: memref<144x32xbf16, #tpu.memory_space<vmem>>, %arg3: memref<1x32xf32, #tpu.memory_space<vmem>>, %arg4: memref<32x32xf32, #tpu.memory_space<vmem>>) attributes {dimension_semantics = [#tpu.dimension_semantics<parallel>], iteration_bounds = array<i64: 1>, scalar_prefetch = 0 : i64, scratch_operands = 0 : i64, tpu.core_type = #tpu.core_type<tc>, window_params = [{transform_indices = @transform_0, window_bounds = array<i64: 32, 144>}, {pipeline_mode = #tpu.pipeline_mode<synchronous>, transform_indices = @transform_1, window_bounds = array<i64: 144, 32>}, {pipeline_mode = #tpu.pipeline_mode<synchronous>, transform_indices = @transform_2, window_bounds = array<i64: 1, 32>}, {transform_indices = @transform_3, window_bounds = array<i64: 32, 32>}]} {
    %c0 = arith.constant 0 : index
    %c0_0 = arith.constant 0 : index
    %0 = vector.load %arg1[%c0, %c0_0] : memref<32x144xbf16, #tpu.memory_space<vmem>>, vector<32x144xbf16>
    %c0_1 = arith.constant 0 : index
    %c0_2 = arith.constant 0 : index
    %1 = vector.load %arg2[%c0_1, %c0_2] : memref<144x32xbf16, #tpu.memory_space<vmem>>, vector<144x32xbf16>
    %cst = arith.constant dense<0.000000e+00> : vector<32x32xf32>
    %2 = tpu.matmul %0, %1, %cst {dimension_numbers = #tpu.dot_dimension_numbers<[1], [0], [0], [1], [0, 0, 1, 1], [], []>} : vector<32x144xbf16>, vector<144x32xbf16>, vector<32x32xf32> -> vector<32x32xf32>
    %c0_3 = arith.constant 0 : index
    %c0_4 = arith.constant 0 : index
    %3 = vector.load %arg3[%c0_3, %c0_4] : memref<1x32xf32, #tpu.memory_space<vmem>>, vector<1x32xf32>
    %4 = vector.broadcast %3 : vector<1x32xf32> to vector<32x32xf32>
    %5 = arith.addf %2, %4 : vector<32x32xf32>
    %cst_5 = arith.constant 0.000000e+00 : f32
    %6 = vector.broadcast %cst_5 : f32 to vector<32x32xf32>
    %7 = arith.maximumf %5, %6 : vector<32x32xf32>
    %c0_6 = arith.constant 0 : index
    %c0_7 = arith.constant 0 : index
    %8 = vector.load %arg4[%c0_6, %c0_7] : memref<32x32xf32, #tpu.memory_space<vmem>>, vector<32x32xf32>
    tpu.vector_store %arg4[%c0_6, %c0_7], %7 {strides = array<i32>} : memref<32x32xf32, #tpu.memory_space<vmem>>, vector<32x32xf32>,
    return
  }
  func.func @transform_0(%arg0: i32) -> (i32, i32) {
    %c0_i32 = arith.constant 0 : i32
    %c0_i32_0 = arith.constant 0 : i32
    return %arg0, %c0_i32 : i32, i32
  }
  func.func @transform_1(%arg0: i32) -> (i32, i32) {
    %c0_i32 = arith.constant 0 : i32
    %c0_i32_0 = arith.constant 0 : i32
    %c0_i32_1 = arith.constant 0 : i32
    return %c0_i32, %c0_i32_0 : i32, i32
  }
  func.func @transform_2(%arg0: i32) -> (i32, i32) {
    %c0_i32 = arith.constant 0 : i32
    %c0_i32_0 = arith.constant 0 : i32
    %c0_i32_1 = arith.constant 0 : i32
    return %c0_i32, %c0_i32_0 : i32, i32
  }
  func.func @transform_3(%arg0: i32) -> (i32, i32) {
    %c0_i32 = arith.constant 0 : i32
    %c0_i32_0 = arith.constant 0 : i32
    return %arg0, %c0_i32 : i32, i32
  }
}

module attributes {stable_mosaic.version = 11 : i64} {
  func.func @_matmul_fused_kernel(%arg0: i32, %arg1: memref<32x288xbf16, #tpu.memory_space<vmem>>, %arg2: memref<288x32xbf16, #tpu.memory_space<vmem>>, %arg3: memref<1x32xf32, #tpu.memory_space<vmem>>, %arg4: memref<32x32xf32, #tpu.memory_space<vmem>>) attributes {dimension_semantics = [#tpu.dimension_semantics<parallel>], iteration_bounds = array<i64: 1>, scalar_prefetch = 0 : i64, scratch_operands = 0 : i64, tpu.core_type = #tpu.core_type<tc>, window_params = [{transform_indices = @transform_0, window_bounds = array<i64: 32, 288>}, {pipeline_mode = #tpu.pipeline_mode<synchronous>, transform_indices = @transform_1, window_bounds = array<i64: 288, 32>}, {pipeline_mode = #tpu.pipeline_mode<synchronous>, transform_indices = @transform_2, window_bounds = array<i64: 1, 32>}, {transform_indices = @transform_3, window_bounds = array<i64: 32, 32>}]} {
    %c0 = arith.constant 0 : index
    %c0_0 = arith.constant 0 : index
    %0 = vector.load %arg1[%c0, %c0_0] : memref<32x288xbf16, #tpu.memory_space<vmem>>, vector<32x288xbf16>
    %c0_1 = arith.constant 0 : index
    %c0_2 = arith.constant 0 : index
    %1 = vector.load %arg2[%c0_1, %c0_2] : memref<288x32xbf16, #tpu.memory_space<vmem>>, vector<288x32xbf16>
    %cst = arith.constant dense<0.000000e+00> : vector<32x32xf32>
    %2 = tpu.matmul %0, %1, %cst {dimension_numbers = #tpu.dot_dimension_numbers<[1], [0], [0], [1], [0, 0, 1, 1], [], []>} : vector<32x288xbf16>, vector<288x32xbf16>, vector<32x32xf32> -> vector<32x32xf32>
    %c0_3 = arith.constant 0 : index
    %c0_4 = arith.constant 0 : index
    %3 = vector.load %arg3[%c0_3, %c0_4] : memref<1x32xf32, #tpu.memory_space<vmem>>, vector<1x32xf32>
    %4 = vector.broadcast %3 : vector<1x32xf32> to vector<32x32xf32>
    %5 = arith.addf %2, %4 : vector<32x32xf32>
    %cst_5 = arith.constant 0.000000e+00 : f32
    %6 = vector.broadcast %cst_5 : f32 to vector<32x32xf32>
    %7 = arith.maximumf %5, %6 : vector<32x32xf32>
    %c0_6 = arith.constant 0 : index
    %c0_7 = arith.constant 0 : index
    %8 = vector.load %arg4[%c0_6, %c0_7] : memref<32x32xf32, #tpu.memory_space<vmem>>, vector<32x32xf32>
    tpu.vector_store %arg4[%c0_6, %c0_7], %7 {strides = array<i32>} : memref<32x32xf32, #tpu.memory_space<vmem>>, vector<32x32xf32>,
    return
  }
  func.func @transform_0(%arg0: i32) -> (i32, i32) {
    %c0_i32 = arith.constant 0 : i32
    %c0_i32_0 = arith.constant 0 : i32
    return %arg0, %c0_i32 : i32, i32
  }
  func.func @transform_1(%arg0: i32) -> (i32, i32) {
    %c0_i32 = arith.constant 0 : i32
    %c0_i32_0 = arith.constant 0 : i32
    %c0_i32_1 = arith.constant 0 : i32
    return %c0_i32, %c0_i32_0 : i32, i32
  }
  func.func @transform_2(%arg0: i32) -> (i32, i32) {
    %c0_i32 = arith.constant 0 : i32
    %c0_i32_0 = arith.constant 0 : i32
    %c0_i32_1 = arith.constant 0 : i32
    return %c0_i32, %c0_i32_0 : i32, i32
  }
  func.func @transform_3(%arg0: i32) -> (i32, i32) {
    %c0_i32 = arith.constant 0 : i32
    %c0_i32_0 = arith.constant 0 : i32
    return %arg0, %c0_i32 : i32, i32
  }
}

module attributes {stable_mosaic.version = 11 : i64} {
  func.func @_matmul_fused_kernel(%arg0: i32, %arg1: memref<8x288xbf16, #tpu.memory_space<vmem>>, %arg2: memref<288x32xbf16, #tpu.memory_space<vmem>>, %arg3: memref<1x32xf32, #tpu.memory_space<vmem>>, %arg4: memref<8x32xf32, #tpu.memory_space<vmem>>) attributes {dimension_semantics = [#tpu.dimension_semantics<parallel>], iteration_bounds = array<i64: 1>, scalar_prefetch = 0 : i64, scratch_operands = 0 : i64, tpu.core_type = #tpu.core_type<tc>, window_params = [{transform_indices = @transform_0, window_bounds = array<i64: 8, 288>}, {pipeline_mode = #tpu.pipeline_mode<synchronous>, transform_indices = @transform_1, window_bounds = array<i64: 288, 32>}, {pipeline_mode = #tpu.pipeline_mode<synchronous>, transform_indices = @transform_2, window_bounds = array<i64: 1, 32>}, {transform_indices = @transform_3, window_bounds = array<i64: 8, 32>}]} {
    %c0 = arith.constant 0 : index
    %c0_0 = arith.constant 0 : index
    %0 = vector.load %arg1[%c0, %c0_0] : memref<8x288xbf16, #tpu.memory_space<vmem>>, vector<8x288xbf16>
    %c0_1 = arith.constant 0 : index
    %c0_2 = arith.constant 0 : index
    %1 = vector.load %arg2[%c0_1, %c0_2] : memref<288x32xbf16, #tpu.memory_space<vmem>>, vector<288x32xbf16>
    %cst = arith.constant dense<0.000000e+00> : vector<8x32xf32>
    %2 = tpu.matmul %0, %1, %cst {dimension_numbers = #tpu.dot_dimension_numbers<[1], [0], [0], [1], [0, 0, 1, 1], [], []>} : vector<8x288xbf16>, vector<288x32xbf16>, vector<8x32xf32> -> vector<8x32xf32>
    %c0_3 = arith.constant 0 : index
    %c0_4 = arith.constant 0 : index
    %3 = vector.load %arg3[%c0_3, %c0_4] : memref<1x32xf32, #tpu.memory_space<vmem>>, vector<1x32xf32>
    %4 = vector.broadcast %3 : vector<1x32xf32> to vector<8x32xf32>
    %5 = arith.addf %2, %4 : vector<8x32xf32>
    %cst_5 = arith.constant 0.000000e+00 : f32
    %6 = vector.broadcast %cst_5 : f32 to vector<8x32xf32>
    %7 = arith.maximumf %5, %6 : vector<8x32xf32>
    %c0_6 = arith.constant 0 : index
    %c0_7 = arith.constant 0 : index
    %8 = vector.load %arg4[%c0_6, %c0_7] : memref<8x32xf32, #tpu.memory_space<vmem>>, vector<8x32xf32>
    tpu.vector_store %arg4[%c0_6, %c0_7], %7 {strides = array<i32>} : memref<8x32xf32, #tpu.memory_space<vmem>>, vector<8x32xf32>,
    return
  }
  func.func @transform_0(%arg0: i32) -> (i32, i32) {
    %c0_i32 = arith.constant 0 : i32
    %c0_i32_0 = arith.constant 0 : i32
    return %arg0, %c0_i32 : i32, i32
  }
  func.func @transform_1(%arg0: i32) -> (i32, i32) {
    %c0_i32 = arith.constant 0 : i32
    %c0_i32_0 = arith.constant 0 : i32
    %c0_i32_1 = arith.constant 0 : i32
    return %c0_i32, %c0_i32_0 : i32, i32
  }
  func.func @transform_2(%arg0: i32) -> (i32, i32) {
    %c0_i32 = arith.constant 0 : i32
    %c0_i32_0 = arith.constant 0 : i32
    %c0_i32_1 = arith.constant 0 : i32
    return %c0_i32, %c0_i32_0 : i32, i32
  }
  func.func @transform_3(%arg0: i32) -> (i32, i32) {
    %c0_i32 = arith.constant 0 : i32
    %c0_i32_0 = arith.constant 0 : i32
    return %arg0, %c0_i32 : i32, i32
  }
}

module attributes {stable_mosaic.version = 11 : i64} {
  func.func @_matmul_fused_kernel(%arg0: i32, %arg1: memref<8x288xbf16, #tpu.memory_space<vmem>>, %arg2: memref<288x64xbf16, #tpu.memory_space<vmem>>, %arg3: memref<1x64xf32, #tpu.memory_space<vmem>>, %arg4: memref<8x64xf32, #tpu.memory_space<vmem>>) attributes {dimension_semantics = [#tpu.dimension_semantics<parallel>], iteration_bounds = array<i64: 1>, scalar_prefetch = 0 : i64, scratch_operands = 0 : i64, tpu.core_type = #tpu.core_type<tc>, window_params = [{transform_indices = @transform_0, window_bounds = array<i64: 8, 288>}, {pipeline_mode = #tpu.pipeline_mode<synchronous>, transform_indices = @transform_1, window_bounds = array<i64: 288, 64>}, {pipeline_mode = #tpu.pipeline_mode<synchronous>, transform_indices = @transform_2, window_bounds = array<i64: 1, 64>}, {transform_indices = @transform_3, window_bounds = array<i64: 8, 64>}]} {
    %c0 = arith.constant 0 : index
    %c0_0 = arith.constant 0 : index
    %0 = vector.load %arg1[%c0, %c0_0] : memref<8x288xbf16, #tpu.memory_space<vmem>>, vector<8x288xbf16>
    %c0_1 = arith.constant 0 : index
    %c0_2 = arith.constant 0 : index
    %1 = vector.load %arg2[%c0_1, %c0_2] : memref<288x64xbf16, #tpu.memory_space<vmem>>, vector<288x64xbf16>
    %cst = arith.constant dense<0.000000e+00> : vector<8x64xf32>
    %2 = tpu.matmul %0, %1, %cst {dimension_numbers = #tpu.dot_dimension_numbers<[1], [0], [0], [1], [0, 0, 1, 1], [], []>} : vector<8x288xbf16>, vector<288x64xbf16>, vector<8x64xf32> -> vector<8x64xf32>
    %c0_3 = arith.constant 0 : index
    %c0_4 = arith.constant 0 : index
    %3 = vector.load %arg3[%c0_3, %c0_4] : memref<1x64xf32, #tpu.memory_space<vmem>>, vector<1x64xf32>
    %4 = vector.broadcast %3 : vector<1x64xf32> to vector<8x64xf32>
    %5 = arith.addf %2, %4 : vector<8x64xf32>
    %cst_5 = arith.constant 0.000000e+00 : f32
    %6 = vector.broadcast %cst_5 : f32 to vector<8x64xf32>
    %7 = arith.maximumf %5, %6 : vector<8x64xf32>
    %c0_6 = arith.constant 0 : index
    %c0_7 = arith.constant 0 : index
    %8 = vector.load %arg4[%c0_6, %c0_7] : memref<8x64xf32, #tpu.memory_space<vmem>>, vector<8x64xf32>
    tpu.vector_store %arg4[%c0_6, %c0_7], %7 {strides = array<i32>} : memref<8x64xf32, #tpu.memory_space<vmem>>, vector<8x64xf32>,
    return
  }
  func.func @transform_0(%arg0: i32) -> (i32, i32) {
    %c0_i32 = arith.constant 0 : i32
    %c0_i32_0 = arith.constant 0 : i32
    return %arg0, %c0_i32 : i32, i32
  }
  func.func @transform_1(%arg0: i32) -> (i32, i32) {
    %c0_i32 = arith.constant 0 : i32
    %c0_i32_0 = arith.constant 0 : i32
    %c0_i32_1 = arith.constant 0 : i32
    return %c0_i32, %c0_i32_0 : i32, i32
  }
  func.func @transform_2(%arg0: i32) -> (i32, i32) {
    %c0_i32 = arith.constant 0 : i32
    %c0_i32_0 = arith.constant 0 : i32
    %c0_i32_1 = arith.constant 0 : i32
    return %c0_i32, %c0_i32_0 : i32, i32
  }
  func.func @transform_3(%arg0: i32) -> (i32, i32) {
    %c0_i32 = arith.constant 0 : i32
    %c0_i32_0 = arith.constant 0 : i32
    return %arg0, %c0_i32 : i32, i32
  }
}

module attributes {stable_mosaic.version = 11 : i64} {
  func.func @_matmul_fused_kernel(%arg0: i32, %arg1: memref<8x64xbf16, #tpu.memory_space<vmem>>, %arg2: memref<64x64xbf16, #tpu.memory_space<vmem>>, %arg3: memref<1x64xf32, #tpu.memory_space<vmem>>, %arg4: memref<8x64xf32, #tpu.memory_space<vmem>>) attributes {dimension_semantics = [#tpu.dimension_semantics<parallel>], iteration_bounds = array<i64: 1>, scalar_prefetch = 0 : i64, scratch_operands = 0 : i64, tpu.core_type = #tpu.core_type<tc>, window_params = [{transform_indices = @transform_0, window_bounds = array<i64: 8, 64>}, {pipeline_mode = #tpu.pipeline_mode<synchronous>, transform_indices = @transform_1, window_bounds = array<i64: 64, 64>}, {pipeline_mode = #tpu.pipeline_mode<synchronous>, transform_indices = @transform_2, window_bounds = array<i64: 1, 64>}, {transform_indices = @transform_3, window_bounds = array<i64: 8, 64>}]} {
    %c0 = arith.constant 0 : index
    %c0_0 = arith.constant 0 : index
    %0 = vector.load %arg1[%c0, %c0_0] : memref<8x64xbf16, #tpu.memory_space<vmem>>, vector<8x64xbf16>
    %c0_1 = arith.constant 0 : index
    %c0_2 = arith.constant 0 : index
    %1 = vector.load %arg2[%c0_1, %c0_2] : memref<64x64xbf16, #tpu.memory_space<vmem>>, vector<64x64xbf16>
    %cst = arith.constant dense<0.000000e+00> : vector<8x64xf32>
    %2 = tpu.matmul %0, %1, %cst {dimension_numbers = #tpu.dot_dimension_numbers<[1], [0], [0], [1], [0, 0, 1, 1], [], []>} : vector<8x64xbf16>, vector<64x64xbf16>, vector<8x64xf32> -> vector<8x64xf32>
    %c0_3 = arith.constant 0 : index
    %c0_4 = arith.constant 0 : index
    %3 = vector.load %arg3[%c0_3, %c0_4] : memref<1x64xf32, #tpu.memory_space<vmem>>, vector<1x64xf32>
    %4 = vector.broadcast %3 : vector<1x64xf32> to vector<8x64xf32>
    %5 = arith.addf %2, %4 : vector<8x64xf32>
    %cst_5 = arith.constant 0.000000e+00 : f32
    %6 = vector.broadcast %cst_5 : f32 to vector<8x64xf32>
    %7 = arith.maximumf %5, %6 : vector<8x64xf32>
    %c0_6 = arith.constant 0 : index
    %c0_7 = arith.constant 0 : index
    %8 = vector.load %arg4[%c0_6, %c0_7] : memref<8x64xf32, #tpu.memory_space<vmem>>, vector<8x64xf32>
    tpu.vector_store %arg4[%c0_6, %c0_7], %7 {strides = array<i32>} : memref<8x64xf32, #tpu.memory_space<vmem>>, vector<8x64xf32>,
    return
  }
  func.func @transform_0(%arg0: i32) -> (i32, i32) {
    %c0_i32 = arith.constant 0 : i32
    %c0_i32_0 = arith.constant 0 : i32
    return %arg0, %c0_i32 : i32, i32
  }
  func.func @transform_1(%arg0: i32) -> (i32, i32) {
    %c0_i32 = arith.constant 0 : i32
    %c0_i32_0 = arith.constant 0 : i32
    %c0_i32_1 = arith.constant 0 : i32
    return %c0_i32, %c0_i32_0 : i32, i32
  }
  func.func @transform_2(%arg0: i32) -> (i32, i32) {
    %c0_i32 = arith.constant 0 : i32
    %c0_i32_0 = arith.constant 0 : i32
    %c0_i32_1 = arith.constant 0 : i32
    return %c0_i32, %c0_i32_0 : i32, i32
  }
  func.func @transform_3(%arg0: i32) -> (i32, i32) {
    %c0_i32 = arith.constant 0 : i32
    %c0_i32_0 = arith.constant 0 : i32
    return %arg0, %c0_i32 : i32, i32
  }
}

module attributes {stable_mosaic.version = 11 : i64} {
  func.func @_matmul_fused_kernel(%arg0: i32, %arg1: memref<8x64xbf16, #tpu.memory_space<vmem>>, %arg2: memref<64x16xbf16, #tpu.memory_space<vmem>>, %arg3: memref<1x16xf32, #tpu.memory_space<vmem>>, %arg4: memref<8x16xf32, #tpu.memory_space<vmem>>) attributes {dimension_semantics = [#tpu.dimension_semantics<parallel>], iteration_bounds = array<i64: 1>, scalar_prefetch = 0 : i64, scratch_operands = 0 : i64, tpu.core_type = #tpu.core_type<tc>, window_params = [{transform_indices = @transform_0, window_bounds = array<i64: 8, 64>}, {pipeline_mode = #tpu.pipeline_mode<synchronous>, transform_indices = @transform_1, window_bounds = array<i64: 64, 16>}, {pipeline_mode = #tpu.pipeline_mode<synchronous>, transform_indices = @transform_2, window_bounds = array<i64: 1, 16>}, {transform_indices = @transform_3, window_bounds = array<i64: 8, 16>}]} {
    %c0 = arith.constant 0 : index
    %c0_0 = arith.constant 0 : index
    %0 = vector.load %arg1[%c0, %c0_0] : memref<8x64xbf16, #tpu.memory_space<vmem>>, vector<8x64xbf16>
    %c0_1 = arith.constant 0 : index
    %c0_2 = arith.constant 0 : index
    %1 = vector.load %arg2[%c0_1, %c0_2] : memref<64x16xbf16, #tpu.memory_space<vmem>>, vector<64x16xbf16>
    %cst = arith.constant dense<0.000000e+00> : vector<8x16xf32>
    %2 = tpu.matmul %0, %1, %cst {dimension_numbers = #tpu.dot_dimension_numbers<[1], [0], [0], [1], [0, 0, 1, 1], [], []>} : vector<8x64xbf16>, vector<64x16xbf16>, vector<8x16xf32> -> vector<8x16xf32>
    %c0_3 = arith.constant 0 : index
    %c0_4 = arith.constant 0 : index
    %3 = vector.load %arg3[%c0_3, %c0_4] : memref<1x16xf32, #tpu.memory_space<vmem>>, vector<1x16xf32>
    %4 = vector.broadcast %3 : vector<1x16xf32> to vector<8x16xf32>
    %5 = arith.addf %2, %4 : vector<8x16xf32>
    %cst_5 = arith.constant 0.000000e+00 : f32
    %6 = vector.broadcast %cst_5 : f32 to vector<8x16xf32>
    %7 = arith.maximumf %5, %6 : vector<8x16xf32>
    %c0_6 = arith.constant 0 : index
    %c0_7 = arith.constant 0 : index
    %8 = vector.load %arg4[%c0_6, %c0_7] : memref<8x16xf32, #tpu.memory_space<vmem>>, vector<8x16xf32>
    tpu.vector_store %arg4[%c0_6, %c0_7], %7 {strides = array<i32>} : memref<8x16xf32, #tpu.memory_space<vmem>>, vector<8x16xf32>,
    return
  }
  func.func @transform_0(%arg0: i32) -> (i32, i32) {
    %c0_i32 = arith.constant 0 : i32
    %c0_i32_0 = arith.constant 0 : i32
    return %arg0, %c0_i32 : i32, i32
  }
  func.func @transform_1(%arg0: i32) -> (i32, i32) {
    %c0_i32 = arith.constant 0 : i32
    %c0_i32_0 = arith.constant 0 : i32
    %c0_i32_1 = arith.constant 0 : i32
    return %c0_i32, %c0_i32_0 : i32, i32
  }
  func.func @transform_2(%arg0: i32) -> (i32, i32) {
    %c0_i32 = arith.constant 0 : i32
    %c0_i32_0 = arith.constant 0 : i32
    %c0_i32_1 = arith.constant 0 : i32
    return %c0_i32, %c0_i32_0 : i32, i32
  }
  func.func @transform_3(%arg0: i32) -> (i32, i32) {
    %c0_i32 = arith.constant 0 : i32
    %c0_i32_0 = arith.constant 0 : i32
    return %arg0, %c0_i32 : i32, i32
  }
}

module attributes {stable_mosaic.version = 11 : i64} {
  func.func @_matmul_dual_kernel(%arg0: i32, %arg1: memref<2x144xbf16, #tpu.memory_space<vmem>>, %arg2: memref<144x32xbf16, #tpu.memory_space<vmem>>, %arg3: memref<1x32xf32, #tpu.memory_space<vmem>>, %arg4: memref<2x32xf32, #tpu.memory_space<vmem>>, %arg5: memref<2x32xf32, #tpu.memory_space<vmem>>) attributes {dimension_semantics = [#tpu.dimension_semantics<parallel>], iteration_bounds = array<i64: 1>, scalar_prefetch = 0 : i64, scratch_operands = 0 : i64, tpu.core_type = #tpu.core_type<tc>, window_params = [{transform_indices = @transform_0, window_bounds = array<i64: 2, 144>}, {pipeline_mode = #tpu.pipeline_mode<synchronous>, transform_indices = @transform_1, window_bounds = array<i64: 144, 32>}, {pipeline_mode = #tpu.pipeline_mode<synchronous>, transform_indices = @transform_2, window_bounds = array<i64: 1, 32>}, {transform_indices = @transform_3, window_bounds = array<i64: 2, 32>}, {transform_indices = @transform_4, window_bounds = array<i64: 2, 32>}]} {
    %c0 = arith.constant 0 : index
    %c0_0 = arith.constant 0 : index
    %0 = vector.load %arg1[%c0, %c0_0] : memref<2x144xbf16, #tpu.memory_space<vmem>>, vector<2x144xbf16>
    %c0_1 = arith.constant 0 : index
    %c0_2 = arith.constant 0 : index
    %1 = vector.load %arg2[%c0_1, %c0_2] : memref<144x32xbf16, #tpu.memory_space<vmem>>, vector<144x32xbf16>
    %cst = arith.constant dense<0.000000e+00> : vector<2x32xf32>
    %2 = tpu.matmul %0, %1, %cst {dimension_numbers = #tpu.dot_dimension_numbers<[1], [0], [0], [1], [0, 0, 1, 1], [], []>} : vector<2x144xbf16>, vector<144x32xbf16>, vector<2x32xf32> -> vector<2x32xf32>
    %c0_3 = arith.constant 0 : index
    %c0_4 = arith.constant 0 : index
    %3 = vector.load %arg3[%c0_3, %c0_4] : memref<1x32xf32, #tpu.memory_space<vmem>>, vector<1x32xf32>
    %4 = vector.broadcast %3 : vector<1x32xf32> to vector<2x32xf32>
    %5 = arith.addf %2, %4 : vector<2x32xf32>
    %c0_5 = arith.constant 0 : index
    %c0_6 = arith.constant 0 : index
    %6 = vector.load %arg4[%c0_5, %c0_6] : memref<2x32xf32, #tpu.memory_space<vmem>>, vector<2x32xf32>
    tpu.vector_store %arg4[%c0_5, %c0_6], %5 {strides = array<i32>} : memref<2x32xf32, #tpu.memory_space<vmem>>, vector<2x32xf32>,
    %cst_7 = arith.constant 0.999994993 : f32
    %7 = vector.broadcast %cst_7 : f32 to vector<2x32xf32>
    %8 = arith.mulf %5, %7 : vector<2x32xf32>
    %cst_8 = arith.constant 0.000000e+00 : f32
    %9 = vector.broadcast %cst_8 : f32 to vector<2x32xf32>
    %10 = arith.maximumf %8, %9 : vector<2x32xf32>
    %c0_9 = arith.constant 0 : index
    %c0_10 = arith.constant 0 : index
    %11 = vector.load %arg5[%c0_9, %c0_10] : memref<2x32xf32, #tpu.memory_space<vmem>>, vector<2x32xf32>
    tpu.vector_store %arg5[%c0_9, %c0_10], %10 {strides = array<i32>} : memref<2x32xf32, #tpu.memory_space<vmem>>, vector<2x32xf32>,
    return
  }
  func.func @transform_0(%arg0: i32) -> (i32, i32) {
    %c0_i32 = arith.constant 0 : i32
    %c0_i32_0 = arith.constant 0 : i32
    return %arg0, %c0_i32 : i32, i32
  }
  func.func @transform_1(%arg0: i32) -> (i32, i32) {
    %c0_i32 = arith.constant 0 : i32
    %c0_i32_0 = arith.constant 0 : i32
    %c0_i32_1 = arith.constant 0 : i32
    return %c0_i32, %c0_i32_0 : i32, i32
  }
  func.func @transform_2(%arg0: i32) -> (i32, i32) {
    %c0_i32 = arith.constant 0 : i32
    %c0_i32_0 = arith.constant 0 : i32
    %c0_i32_1 = arith.constant 0 : i32
    return %c0_i32, %c0_i32_0 : i32, i32
  }
  func.func @transform_3(%arg0: i32) -> (i32, i32) {
    %c0_i32 = arith.constant 0 : i32
    %c0_i32_0 = arith.constant 0 : i32
    return %arg0, %c0_i32 : i32, i32
  }
  func.func @transform_4(%arg0: i32) -> (i32, i32) {
    %c0_i32 = arith.constant 0 : i32
    %c0_i32_0 = arith.constant 0 : i32
    return %arg0, %c0_i32 : i32, i32
  }
}

module attributes {stable_mosaic.version = 11 : i64} {
  func.func @_matmul_fused_kernel(%arg0: i32, %arg1: memref<2x32xbf16, #tpu.memory_space<vmem>>, %arg2: memref<32x16xbf16, #tpu.memory_space<vmem>>, %arg3: memref<1x16xf32, #tpu.memory_space<vmem>>, %arg4: memref<2x16xf32, #tpu.memory_space<vmem>>) attributes {dimension_semantics = [#tpu.dimension_semantics<parallel>], iteration_bounds = array<i64: 1>, scalar_prefetch = 0 : i64, scratch_operands = 0 : i64, tpu.core_type = #tpu.core_type<tc>, window_params = [{transform_indices = @transform_0, window_bounds = array<i64: 2, 32>}, {pipeline_mode = #tpu.pipeline_mode<synchronous>, transform_indices = @transform_1, window_bounds = array<i64: 32, 16>}, {pipeline_mode = #tpu.pipeline_mode<synchronous>, transform_indices = @transform_2, window_bounds = array<i64: 1, 16>}, {transform_indices = @transform_3, window_bounds = array<i64: 2, 16>}]} {
    %c0 = arith.constant 0 : index
    %c0_0 = arith.constant 0 : index
    %0 = vector.load %arg1[%c0, %c0_0] : memref<2x32xbf16, #tpu.memory_space<vmem>>, vector<2x32xbf16>
    %c0_1 = arith.constant 0 : index
    %c0_2 = arith.constant 0 : index
    %1 = vector.load %arg2[%c0_1, %c0_2] : memref<32x16xbf16, #tpu.memory_space<vmem>>, vector<32x16xbf16>
    %cst = arith.constant dense<0.000000e+00> : vector<2x16xf32>
    %2 = tpu.matmul %0, %1, %cst {dimension_numbers = #tpu.dot_dimension_numbers<[1], [0], [0], [1], [0, 0, 1, 1], [], []>} : vector<2x32xbf16>, vector<32x16xbf16>, vector<2x16xf32> -> vector<2x16xf32>
    %c0_3 = arith.constant 0 : index
    %c0_4 = arith.constant 0 : index
    %3 = vector.load %arg3[%c0_3, %c0_4] : memref<1x16xf32, #tpu.memory_space<vmem>>, vector<1x16xf32>
    %4 = vector.broadcast %3 : vector<1x16xf32> to vector<2x16xf32>
    %5 = arith.addf %2, %4 : vector<2x16xf32>
    %cst_5 = arith.constant 0.000000e+00 : f32
    %6 = vector.broadcast %cst_5 : f32 to vector<2x16xf32>
    %7 = arith.maximumf %5, %6 : vector<2x16xf32>
    %c0_6 = arith.constant 0 : index
    %c0_7 = arith.constant 0 : index
    %8 = vector.load %arg4[%c0_6, %c0_7] : memref<2x16xf32, #tpu.memory_space<vmem>>, vector<2x16xf32>
    tpu.vector_store %arg4[%c0_6, %c0_7], %7 {strides = array<i32>} : memref<2x16xf32, #tpu.memory_space<vmem>>, vector<2x16xf32>,
    return
  }
  func.func @transform_0(%arg0: i32) -> (i32, i32) {
    %c0_i32 = arith.constant 0 : i32
    %c0_i32_0 = arith.constant 0 : i32
    return %arg0, %c0_i32 : i32, i32
  }
  func.func @transform_1(%arg0: i32) -> (i32, i32) {
    %c0_i32 = arith.constant 0 : i32
    %c0_i32_0 = arith.constant 0 : i32
    %c0_i32_1 = arith.constant 0 : i32
    return %c0_i32, %c0_i32_0 : i32, i32
  }
  func.func @transform_2(%arg0: i32) -> (i32, i32) {
    %c0_i32 = arith.constant 0 : i32
    %c0_i32_0 = arith.constant 0 : i32
    %c0_i32_1 = arith.constant 0 : i32
    return %c0_i32, %c0_i32_0 : i32, i32
  }
  func.func @transform_3(%arg0: i32) -> (i32, i32) {
    %c0_i32 = arith.constant 0 : i32
    %c0_i32_0 = arith.constant 0 : i32
    return %arg0, %c0_i32 : i32, i32
  }
}

module attributes {stable_mosaic.version = 11 : i64} {
  func.func @_matmul_dual_kernel(%arg0: i32, %arg1: memref<2x144xbf16, #tpu.memory_space<vmem>>, %arg2: memref<144x32xbf16, #tpu.memory_space<vmem>>, %arg3: memref<1x32xf32, #tpu.memory_space<vmem>>, %arg4: memref<2x32xf32, #tpu.memory_space<vmem>>, %arg5: memref<2x32xf32, #tpu.memory_space<vmem>>) attributes {dimension_semantics = [#tpu.dimension_semantics<parallel>], iteration_bounds = array<i64: 1>, scalar_prefetch = 0 : i64, scratch_operands = 0 : i64, tpu.core_type = #tpu.core_type<tc>, window_params = [{transform_indices = @transform_0, window_bounds = array<i64: 2, 144>}, {pipeline_mode = #tpu.pipeline_mode<synchronous>, transform_indices = @transform_1, window_bounds = array<i64: 144, 32>}, {pipeline_mode = #tpu.pipeline_mode<synchronous>, transform_indices = @transform_2, window_bounds = array<i64: 1, 32>}, {transform_indices = @transform_3, window_bounds = array<i64: 2, 32>}, {transform_indices = @transform_4, window_bounds = array<i64: 2, 32>}]} {
    %c0 = arith.constant 0 : index
    %c0_0 = arith.constant 0 : index
    %0 = vector.load %arg1[%c0, %c0_0] : memref<2x144xbf16, #tpu.memory_space<vmem>>, vector<2x144xbf16>
    %c0_1 = arith.constant 0 : index
    %c0_2 = arith.constant 0 : index
    %1 = vector.load %arg2[%c0_1, %c0_2] : memref<144x32xbf16, #tpu.memory_space<vmem>>, vector<144x32xbf16>
    %cst = arith.constant dense<0.000000e+00> : vector<2x32xf32>
    %2 = tpu.matmul %0, %1, %cst {dimension_numbers = #tpu.dot_dimension_numbers<[1], [0], [0], [1], [0, 0, 1, 1], [], []>} : vector<2x144xbf16>, vector<144x32xbf16>, vector<2x32xf32> -> vector<2x32xf32>
    %c0_3 = arith.constant 0 : index
    %c0_4 = arith.constant 0 : index
    %3 = vector.load %arg3[%c0_3, %c0_4] : memref<1x32xf32, #tpu.memory_space<vmem>>, vector<1x32xf32>
    %4 = vector.broadcast %3 : vector<1x32xf32> to vector<2x32xf32>
    %5 = arith.addf %2, %4 : vector<2x32xf32>
    %c0_5 = arith.constant 0 : index
    %c0_6 = arith.constant 0 : index
    %6 = vector.load %arg4[%c0_5, %c0_6] : memref<2x32xf32, #tpu.memory_space<vmem>>, vector<2x32xf32>
    tpu.vector_store %arg4[%c0_5, %c0_6], %5 {strides = array<i32>} : memref<2x32xf32, #tpu.memory_space<vmem>>, vector<2x32xf32>,
    %cst_7 = arith.constant 0.999994993 : f32
    %7 = vector.broadcast %cst_7 : f32 to vector<2x32xf32>
    %8 = arith.mulf %5, %7 : vector<2x32xf32>
    %cst_8 = arith.constant 0.000000e+00 : f32
    %9 = vector.broadcast %cst_8 : f32 to vector<2x32xf32>
    %10 = arith.maximumf %8, %9 : vector<2x32xf32>
    %c0_9 = arith.constant 0 : index
    %c0_10 = arith.constant 0 : index
    %11 = vector.load %arg5[%c0_9, %c0_10] : memref<2x32xf32, #tpu.memory_space<vmem>>, vector<2x32xf32>
    tpu.vector_store %arg5[%c0_9, %c0_10], %10 {strides = array<i32>} : memref<2x32xf32, #tpu.memory_space<vmem>>, vector<2x32xf32>,
    return
  }
  func.func @transform_0(%arg0: i32) -> (i32, i32) {
    %c0_i32 = arith.constant 0 : i32
    %c0_i32_0 = arith.constant 0 : i32
    return %arg0, %c0_i32 : i32, i32
  }
  func.func @transform_1(%arg0: i32) -> (i32, i32) {
    %c0_i32 = arith.constant 0 : i32
    %c0_i32_0 = arith.constant 0 : i32
    %c0_i32_1 = arith.constant 0 : i32
    return %c0_i32, %c0_i32_0 : i32, i32
  }
  func.func @transform_2(%arg0: i32) -> (i32, i32) {
    %c0_i32 = arith.constant 0 : i32
    %c0_i32_0 = arith.constant 0 : i32
    %c0_i32_1 = arith.constant 0 : i32
    return %c0_i32, %c0_i32_0 : i32, i32
  }
  func.func @transform_3(%arg0: i32) -> (i32, i32) {
    %c0_i32 = arith.constant 0 : i32
    %c0_i32_0 = arith.constant 0 : i32
    return %arg0, %c0_i32 : i32, i32
  }
  func.func @transform_4(%arg0: i32) -> (i32, i32) {
    %c0_i32 = arith.constant 0 : i32
    %c0_i32_0 = arith.constant 0 : i32
    return %arg0, %c0_i32 : i32, i32
  }
}

module attributes {stable_mosaic.version = 11 : i64} {
  func.func @_matmul_fused_kernel(%arg0: i32, %arg1: memref<2x288xbf16, #tpu.memory_space<vmem>>, %arg2: memref<288x8xbf16, #tpu.memory_space<vmem>>, %arg3: memref<1x8xf32, #tpu.memory_space<vmem>>, %arg4: memref<2x8xf32, #tpu.memory_space<vmem>>) attributes {dimension_semantics = [#tpu.dimension_semantics<parallel>], iteration_bounds = array<i64: 1>, scalar_prefetch = 0 : i64, scratch_operands = 0 : i64, tpu.core_type = #tpu.core_type<tc>, window_params = [{transform_indices = @transform_0, window_bounds = array<i64: 2, 288>}, {pipeline_mode = #tpu.pipeline_mode<synchronous>, transform_indices = @transform_1, window_bounds = array<i64: 288, 8>}, {pipeline_mode = #tpu.pipeline_mode<synchronous>, transform_indices = @transform_2, window_bounds = array<i64: 1, 8>}, {transform_indices = @transform_3, window_bounds = array<i64: 2, 8>}]} {
    %c0 = arith.constant 0 : index
    %c0_0 = arith.constant 0 : index
    %0 = vector.load %arg1[%c0, %c0_0] : memref<2x288xbf16, #tpu.memory_space<vmem>>, vector<2x288xbf16>
    %c0_1 = arith.constant 0 : index
    %c0_2 = arith.constant 0 : index
    %1 = vector.load %arg2[%c0_1, %c0_2] : memref<288x8xbf16, #tpu.memory_space<vmem>>, vector<288x8xbf16>
    %cst = arith.constant dense<0.000000e+00> : vector<2x8xf32>
    %2 = tpu.matmul %0, %1, %cst {dimension_numbers = #tpu.dot_dimension_numbers<[1], [0], [0], [1], [0, 0, 1, 1], [], []>} : vector<2x288xbf16>, vector<288x8xbf16>, vector<2x8xf32> -> vector<2x8xf32>
    %c0_3 = arith.constant 0 : index
    %c0_4 = arith.constant 0 : index
    %3 = vector.load %arg3[%c0_3, %c0_4] : memref<1x8xf32, #tpu.memory_space<vmem>>, vector<1x8xf32>
    %4 = vector.broadcast %3 : vector<1x8xf32> to vector<2x8xf32>
    %5 = arith.addf %2, %4 : vector<2x8xf32>
    %cst_5 = arith.constant 0.000000e+00 : f32
    %6 = vector.broadcast %cst_5 : f32 to vector<2x8xf32>
    %7 = arith.maximumf %5, %6 : vector<2x8xf32>
    %c0_6 = arith.constant 0 : index
    %c0_7 = arith.constant 0 : index
    %8 = vector.load %arg4[%c0_6, %c0_7] : memref<2x8xf32, #tpu.memory_space<vmem>>, vector<2x8xf32>
    tpu.vector_store %arg4[%c0_6, %c0_7], %7 {strides = array<i32>} : memref<2x8xf32, #tpu.memory_space<vmem>>, vector<2x8xf32>,
    return
  }
  func.func @transform_0(%arg0: i32) -> (i32, i32) {
    %c0_i32 = arith.constant 0 : i32
    %c0_i32_0 = arith.constant 0 : i32
    return %arg0, %c0_i32 : i32, i32
  }
  func.func @transform_1(%arg0: i32) -> (i32, i32) {
    %c0_i32 = arith.constant 0 : i32
    %c0_i32_0 = arith.constant 0 : i32
    %c0_i32_1 = arith.constant 0 : i32
    return %c0_i32, %c0_i32_0 : i32, i32
  }
  func.func @transform_2(%arg0: i32) -> (i32, i32) {
    %c0_i32 = arith.constant 0 : i32
    %c0_i32_0 = arith.constant 0 : i32
    %c0_i32_1 = arith.constant 0 : i32
    return %c0_i32, %c0_i32_0 : i32, i32
  }
  func.func @transform_3(%arg0: i32) -> (i32, i32) {
    %c0_i32 = arith.constant 0 : i32
    %c0_i32_0 = arith.constant 0 : i32
    return %arg0, %c0_i32 : i32, i32
  }
}

module attributes {stable_mosaic.version = 11 : i64} {
  func.func @_matmul_fused_kernel(%arg0: i32, %arg1: memref<8x576xbf16, #tpu.memory_space<vmem>>, %arg2: memref<576x8xbf16, #tpu.memory_space<vmem>>, %arg3: memref<1x8xf32, #tpu.memory_space<vmem>>, %arg4: memref<8x8xf32, #tpu.memory_space<vmem>>) attributes {dimension_semantics = [#tpu.dimension_semantics<parallel>], iteration_bounds = array<i64: 1>, scalar_prefetch = 0 : i64, scratch_operands = 0 : i64, tpu.core_type = #tpu.core_type<tc>, window_params = [{transform_indices = @transform_0, window_bounds = array<i64: 8, 576>}, {pipeline_mode = #tpu.pipeline_mode<synchronous>, transform_indices = @transform_1, window_bounds = array<i64: 576, 8>}, {pipeline_mode = #tpu.pipeline_mode<synchronous>, transform_indices = @transform_2, window_bounds = array<i64: 1, 8>}, {transform_indices = @transform_3, window_bounds = array<i64: 8, 8>}]} {
    %c0 = arith.constant 0 : index
    %c0_0 = arith.constant 0 : index
    %0 = vector.load %arg1[%c0, %c0_0] : memref<8x576xbf16, #tpu.memory_space<vmem>>, vector<8x576xbf16>
    %c0_1 = arith.constant 0 : index
    %c0_2 = arith.constant 0 : index
    %1 = vector.load %arg2[%c0_1, %c0_2] : memref<576x8xbf16, #tpu.memory_space<vmem>>, vector<576x8xbf16>
    %cst = arith.constant dense<0.000000e+00> : vector<8x8xf32>
    %2 = tpu.matmul %0, %1, %cst {dimension_numbers = #tpu.dot_dimension_numbers<[1], [0], [0], [1], [0, 0, 1, 1], [], []>} : vector<8x576xbf16>, vector<576x8xbf16>, vector<8x8xf32> -> vector<8x8xf32>
    %c0_3 = arith.constant 0 : index
    %c0_4 = arith.constant 0 : index
    %3 = vector.load %arg3[%c0_3, %c0_4] : memref<1x8xf32, #tpu.memory_space<vmem>>, vector<1x8xf32>
    %4 = vector.broadcast %3 : vector<1x8xf32> to vector<8x8xf32>
    %5 = arith.addf %2, %4 : vector<8x8xf32>
    %cst_5 = arith.constant 0.000000e+00 : f32
    %6 = vector.broadcast %cst_5 : f32 to vector<8x8xf32>
    %7 = arith.maximumf %5, %6 : vector<8x8xf32>
    %c0_6 = arith.constant 0 : index
    %c0_7 = arith.constant 0 : index
    %8 = vector.load %arg4[%c0_6, %c0_7] : memref<8x8xf32, #tpu.memory_space<vmem>>, vector<8x8xf32>
    tpu.vector_store %arg4[%c0_6, %c0_7], %7 {strides = array<i32>} : memref<8x8xf32, #tpu.memory_space<vmem>>, vector<8x8xf32>,
    return
  }
  func.func @transform_0(%arg0: i32) -> (i32, i32) {
    %c0_i32 = arith.constant 0 : i32
    %c0_i32_0 = arith.constant 0 : i32
    return %arg0, %c0_i32 : i32, i32
  }
  func.func @transform_1(%arg0: i32) -> (i32, i32) {
    %c0_i32 = arith.constant 0 : i32
    %c0_i32_0 = arith.constant 0 : i32
    %c0_i32_1 = arith.constant 0 : i32
    return %c0_i32, %c0_i32_0 : i32, i32
  }
  func.func @transform_2(%arg0: i32) -> (i32, i32) {
    %c0_i32 = arith.constant 0 : i32
    %c0_i32_0 = arith.constant 0 : i32
    %c0_i32_1 = arith.constant 0 : i32
    return %c0_i32, %c0_i32_0 : i32, i32
  }
  func.func @transform_3(%arg0: i32) -> (i32, i32) {
    %c0_i32 = arith.constant 0 : i32
    %c0_i32_0 = arith.constant 0 : i32
    return %arg0, %c0_i32 : i32, i32
  }
}

module attributes {stable_mosaic.version = 11 : i64} {
  func.func @_matmul_fused_kernel(%arg0: i32, %arg1: memref<32x288xbf16, #tpu.memory_space<vmem>>, %arg2: memref<288x8xbf16, #tpu.memory_space<vmem>>, %arg3: memref<1x8xf32, #tpu.memory_space<vmem>>, %arg4: memref<32x8xf32, #tpu.memory_space<vmem>>) attributes {dimension_semantics = [#tpu.dimension_semantics<parallel>], iteration_bounds = array<i64: 1>, scalar_prefetch = 0 : i64, scratch_operands = 0 : i64, tpu.core_type = #tpu.core_type<tc>, window_params = [{transform_indices = @transform_0, window_bounds = array<i64: 32, 288>}, {pipeline_mode = #tpu.pipeline_mode<synchronous>, transform_indices = @transform_1, window_bounds = array<i64: 288, 8>}, {pipeline_mode = #tpu.pipeline_mode<synchronous>, transform_indices = @transform_2, window_bounds = array<i64: 1, 8>}, {transform_indices = @transform_3, window_bounds = array<i64: 32, 8>}]} {
    %c0 = arith.constant 0 : index
    %c0_0 = arith.constant 0 : index
    %0 = vector.load %arg1[%c0, %c0_0] : memref<32x288xbf16, #tpu.memory_space<vmem>>, vector<32x288xbf16>
    %c0_1 = arith.constant 0 : index
    %c0_2 = arith.constant 0 : index
    %1 = vector.load %arg2[%c0_1, %c0_2] : memref<288x8xbf16, #tpu.memory_space<vmem>>, vector<288x8xbf16>
    %cst = arith.constant dense<0.000000e+00> : vector<32x8xf32>
    %2 = tpu.matmul %0, %1, %cst {dimension_numbers = #tpu.dot_dimension_numbers<[1], [0], [0], [1], [0, 0, 1, 1], [], []>} : vector<32x288xbf16>, vector<288x8xbf16>, vector<32x8xf32> -> vector<32x8xf32>
    %c0_3 = arith.constant 0 : index
    %c0_4 = arith.constant 0 : index
    %3 = vector.load %arg3[%c0_3, %c0_4] : memref<1x8xf32, #tpu.memory_space<vmem>>, vector<1x8xf32>
    %4 = vector.broadcast %3 : vector<1x8xf32> to vector<32x8xf32>
    %5 = arith.addf %2, %4 : vector<32x8xf32>
    %cst_5 = arith.constant 0.000000e+00 : f32
    %6 = vector.broadcast %cst_5 : f32 to vector<32x8xf32>
    %7 = arith.maximumf %5, %6 : vector<32x8xf32>
    %c0_6 = arith.constant 0 : index
    %c0_7 = arith.constant 0 : index
    %8 = vector.load %arg4[%c0_6, %c0_7] : memref<32x8xf32, #tpu.memory_space<vmem>>, vector<32x8xf32>
    tpu.vector_store %arg4[%c0_6, %c0_7], %7 {strides = array<i32>} : memref<32x8xf32, #tpu.memory_space<vmem>>, vector<32x8xf32>,
    return
  }
  func.func @transform_0(%arg0: i32) -> (i32, i32) {
    %c0_i32 = arith.constant 0 : i32
    %c0_i32_0 = arith.constant 0 : i32
    return %arg0, %c0_i32 : i32, i32
  }
  func.func @transform_1(%arg0: i32) -> (i32, i32) {
    %c0_i32 = arith.constant 0 : i32
    %c0_i32_0 = arith.constant 0 : i32
    %c0_i32_1 = arith.constant 0 : i32
    return %c0_i32, %c0_i32_0 : i32, i32
  }
  func.func @transform_2(%arg0: i32) -> (i32, i32) {
    %c0_i32 = arith.constant 0 : i32
    %c0_i32_0 = arith.constant 0 : i32
    %c0_i32_1 = arith.constant 0 : i32
    return %c0_i32, %c0_i32_0 : i32, i32
  }
  func.func @transform_3(%arg0: i32) -> (i32, i32) {
    %c0_i32 = arith.constant 0 : i32
    %c0_i32_0 = arith.constant 0 : i32
    return %arg0, %c0_i32 : i32, i32
  }
}

module attributes {stable_mosaic.version = 11 : i64} {
  func.func @_matmul_fused_kernel(%arg0: i32, %arg1: memref<128x144xbf16, #tpu.memory_space<vmem>>, %arg2: memref<144x8xbf16, #tpu.memory_space<vmem>>, %arg3: memref<1x8xf32, #tpu.memory_space<vmem>>, %arg4: memref<128x8xf32, #tpu.memory_space<vmem>>) attributes {dimension_semantics = [#tpu.dimension_semantics<parallel>], iteration_bounds = array<i64: 1>, scalar_prefetch = 0 : i64, scratch_operands = 0 : i64, tpu.core_type = #tpu.core_type<tc>, window_params = [{transform_indices = @transform_0, window_bounds = array<i64: 128, 144>}, {pipeline_mode = #tpu.pipeline_mode<synchronous>, transform_indices = @transform_1, window_bounds = array<i64: 144, 8>}, {pipeline_mode = #tpu.pipeline_mode<synchronous>, transform_indices = @transform_2, window_bounds = array<i64: 1, 8>}, {transform_indices = @transform_3, window_bounds = array<i64: 128, 8>}]} {
    %c0 = arith.constant 0 : index
    %c0_0 = arith.constant 0 : index
    %0 = vector.load %arg1[%c0, %c0_0] : memref<128x144xbf16, #tpu.memory_space<vmem>>, vector<128x144xbf16>
    %c0_1 = arith.constant 0 : index
    %c0_2 = arith.constant 0 : index
    %1 = vector.load %arg2[%c0_1, %c0_2] : memref<144x8xbf16, #tpu.memory_space<vmem>>, vector<144x8xbf16>
    %cst = arith.constant dense<0.000000e+00> : vector<128x8xf32>
    %2 = tpu.matmul %0, %1, %cst {dimension_numbers = #tpu.dot_dimension_numbers<[1], [0], [0], [1], [0, 0, 1, 1], [], []>} : vector<128x144xbf16>, vector<144x8xbf16>, vector<128x8xf32> -> vector<128x8xf32>
    %c0_3 = arith.constant 0 : index
    %c0_4 = arith.constant 0 : index
    %3 = vector.load %arg3[%c0_3, %c0_4] : memref<1x8xf32, #tpu.memory_space<vmem>>, vector<1x8xf32>
    %4 = vector.broadcast %3 : vector<1x8xf32> to vector<128x8xf32>
    %5 = arith.addf %2, %4 : vector<128x8xf32>
    %cst_5 = arith.constant 0.000000e+00 : f32
    %6 = vector.broadcast %cst_5 : f32 to vector<128x8xf32>
    %7 = arith.maximumf %5, %6 : vector<128x8xf32>
    %c0_6 = arith.constant 0 : index
    %c0_7 = arith.constant 0 : index
    %8 = vector.load %arg4[%c0_6, %c0_7] : memref<128x8xf32, #tpu.memory_space<vmem>>, vector<128x8xf32>
    tpu.vector_store %arg4[%c0_6, %c0_7], %7 {strides = array<i32>} : memref<128x8xf32, #tpu.memory_space<vmem>>, vector<128x8xf32>,
    return
  }
  func.func @transform_0(%arg0: i32) -> (i32, i32) {
    %c0_i32 = arith.constant 0 : i32
    %c0_i32_0 = arith.constant 0 : i32
    return %arg0, %c0_i32 : i32, i32
  }
  func.func @transform_1(%arg0: i32) -> (i32, i32) {
    %c0_i32 = arith.constant 0 : i32
    %c0_i32_0 = arith.constant 0 : i32
    %c0_i32_1 = arith.constant 0 : i32
    return %c0_i32, %c0_i32_0 : i32, i32
  }
  func.func @transform_2(%arg0: i32) -> (i32, i32) {
    %c0_i32 = arith.constant 0 : i32
    %c0_i32_0 = arith.constant 0 : i32
    %c0_i32_1 = arith.constant 0 : i32
    return %c0_i32, %c0_i32_0 : i32, i32
  }
  func.func @transform_3(%arg0: i32) -> (i32, i32) {
    %c0_i32 = arith.constant 0 : i32
    %c0_i32_0 = arith.constant 0 : i32
    return %arg0, %c0_i32 : i32, i32
  }
}

module attributes {stable_mosaic.version = 11 : i64} {
  func.func @_final_chain_kernel(%arg0: i32, %arg1: memref<64x96xf32, #tpu.memory_space<vmem>>, %arg2: memref<96x48xf32, #tpu.memory_space<vmem>>, %arg3: memref<48x24xf32, #tpu.memory_space<vmem>>, %arg4: memref<24x12xf32, #tpu.memory_space<vmem>>, %arg5: memref<12x6xf32, #tpu.memory_space<vmem>>, %arg6: memref<6x1xf32, #tpu.memory_space<vmem>>, %arg7: memref<1x48xf32, #tpu.memory_space<vmem>>, %arg8: memref<1x24xf32, #tpu.memory_space<vmem>>, %arg9: memref<1x12xf32, #tpu.memory_space<vmem>>, %arg10: memref<1x6xf32, #tpu.memory_space<vmem>>, %arg11: memref<1x1xf32, #tpu.memory_space<vmem>>, %arg12: memref<64x1xf32, #tpu.memory_space<vmem>>) attributes {dimension_semantics = [#tpu.dimension_semantics<arbitrary>], iteration_bounds = array<i64: 1>, scalar_prefetch = 0 : i64, scratch_operands = 0 : i64, tpu.core_type = #tpu.core_type<tc>, window_params = [{pipeline_mode = #tpu.pipeline_mode<synchronous>, transform_indices = @transform_0, window_bounds = array<i64: 64, 96>}, {pipeline_mode = #tpu.pipeline_mode<synchronous>, transform_indices = @transform_1, window_bounds = array<i64: 96, 48>}, {pipeline_mode = #tpu.pipeline_mode<synchronous>, transform_indices = @transform_2, window_bounds = array<i64: 48, 24>}, {pipeline_mode = #tpu.pipeline_mode<synchronous>, transform_indices = @transform_3, window_bounds = array<i64: 24, 12>}, {pipeline_mode = #tpu.pipeline_mode<synchronous>, transform_indices = @transform_4, window_bounds = array<i64: 12, 6>}, {pipeline_mode = #tpu.pipeline_mode<synchronous>, transform_indices = @transform_5, window_bounds = array<i64: 6, 1>}, {pipeline_mode = #tpu.pipeline_mode<synchronous>, transform_indices = @transform_6, window_bounds = array<i64: 1, 48>}, {pipeline_mode = #tpu.pipeline_mode<synchronous>, transform_indices = @transform_7, window_bounds = array<i64: 1, 24>}, {pipeline_mode = #tpu.pipeline_mode<synchronous>, transform_indices = @transform_8, window_bounds = array<i64: 1, 12>}, {pipeline_mode = #tpu.pipeline_mode<synchronous>, transform_indices = @transform_9, window_bounds = array<i64: 1, 6>}, {pipeline_mode = #tpu.pipeline_mode<synchronous>, transform_indices = @transform_10, window_bounds = array<i64: 1, 1>}, {pipeline_mode = #tpu.pipeline_mode<synchronous>, transform_indices = @transform_11, window_bounds = array<i64: 64, 1>}]} {
    %c0 = arith.constant 0 : index
    %c0_0 = arith.constant 0 : index
    %0 = vector.load %arg1[%c0, %c0_0] : memref<64x96xf32, #tpu.memory_space<vmem>>, vector<64x96xf32>
    %c0_1 = arith.constant 0 : index
    %c0_2 = arith.constant 0 : index
    %1 = vector.load %arg2[%c0_1, %c0_2] : memref<96x48xf32, #tpu.memory_space<vmem>>, vector<96x48xf32>
    %cst = arith.constant dense<0.000000e+00> : vector<64x48xf32>
    %2 = tpu.matmul %0, %1, %cst {dimension_numbers = #tpu.dot_dimension_numbers<[1], [0], [0], [1], [0, 0, 1, 1], [], []>} : vector<64x96xf32>, vector<96x48xf32>, vector<64x48xf32> -> vector<64x48xf32>
    %c0_3 = arith.constant 0 : index
    %c0_4 = arith.constant 0 : index
    %3 = vector.load %arg7[%c0_3, %c0_4] : memref<1x48xf32, #tpu.memory_space<vmem>>, vector<1x48xf32>
    %4 = vector.broadcast %3 : vector<1x48xf32> to vector<64x48xf32>
    %5 = arith.addf %2, %4 : vector<64x48xf32>
    %cst_5 = arith.constant 0.000000e+00 : f32
    %6 = vector.broadcast %cst_5 : f32 to vector<64x48xf32>
    %7 = arith.maximumf %5, %6 : vector<64x48xf32>
    %c0_6 = arith.constant 0 : index
    %c0_7 = arith.constant 0 : index
    %8 = vector.load %arg3[%c0_6, %c0_7] : memref<48x24xf32, #tpu.memory_space<vmem>>, vector<48x24xf32>
    %cst_8 = arith.constant dense<0.000000e+00> : vector<64x24xf32>
    %9 = tpu.matmul %7, %8, %cst_8 {dimension_numbers = #tpu.dot_dimension_numbers<[1], [0], [0], [1], [0, 0, 1, 1], [], []>} : vector<64x48xf32>, vector<48x24xf32>, vector<64x24xf32> -> vector<64x24xf32>
    %c0_9 = arith.constant 0 : index
    %c0_10 = arith.constant 0 : index
    %10 = vector.load %arg8[%c0_9, %c0_10] : memref<1x24xf32, #tpu.memory_space<vmem>>, vector<1x24xf32>
    %11 = vector.broadcast %10 : vector<1x24xf32> to vector<64x24xf32>
    %12 = arith.addf %9, %11 : vector<64x24xf32>
    %cst_11 = arith.constant 0.000000e+00 : f32
    %13 = vector.broadcast %cst_11 : f32 to vector<64x24xf32>
    %14 = arith.maximumf %12, %13 : vector<64x24xf32>
    %c0_12 = arith.constant 0 : index
    %c0_13 = arith.constant 0 : index
    %15 = vector.load %arg4[%c0_12, %c0_13] : memref<24x12xf32, #tpu.memory_space<vmem>>, vector<24x12xf32>
    %cst_14 = arith.constant dense<0.000000e+00> : vector<64x12xf32>
    %16 = tpu.matmul %14, %15, %cst_14 {dimension_numbers = #tpu.dot_dimension_numbers<[1], [0], [0], [1], [0, 0, 1, 1], [], []>} : vector<64x24xf32>, vector<24x12xf32>, vector<64x12xf32> -> vector<64x12xf32>
    %c0_15 = arith.constant 0 : index
    %c0_16 = arith.constant 0 : index
    %17 = vector.load %arg9[%c0_15, %c0_16] : memref<1x12xf32, #tpu.memory_space<vmem>>, vector<1x12xf32>
    %18 = vector.broadcast %17 : vector<1x12xf32> to vector<64x12xf32>
    %19 = arith.addf %16, %18 : vector<64x12xf32>
    %cst_17 = arith.constant 0.000000e+00 : f32
    %20 = vector.broadcast %cst_17 : f32 to vector<64x12xf32>
    %21 = arith.maximumf %19, %20 : vector<64x12xf32>
    %c0_18 = arith.constant 0 : index
    %c0_19 = arith.constant 0 : index
    %22 = vector.load %arg5[%c0_18, %c0_19] : memref<12x6xf32, #tpu.memory_space<vmem>>, vector<12x6xf32>
    %cst_20 = arith.constant dense<0.000000e+00> : vector<64x6xf32>
    %23 = tpu.matmul %21, %22, %cst_20 {dimension_numbers = #tpu.dot_dimension_numbers<[1], [0], [0], [1], [0, 0, 1, 1], [], []>} : vector<64x12xf32>, vector<12x6xf32>, vector<64x6xf32> -> vector<64x6xf32>
    %c0_21 = arith.constant 0 : index
    %c0_22 = arith.constant 0 : index
    %24 = vector.load %arg10[%c0_21, %c0_22] : memref<1x6xf32, #tpu.memory_space<vmem>>, vector<1x6xf32>
    %25 = vector.broadcast %24 : vector<1x6xf32> to vector<64x6xf32>
    %26 = arith.addf %23, %25 : vector<64x6xf32>
    %cst_23 = arith.constant 0.000000e+00 : f32
    %27 = vector.broadcast %cst_23 : f32 to vector<64x6xf32>
    %28 = arith.maximumf %26, %27 : vector<64x6xf32>
    %c0_24 = arith.constant 0 : index
    %c0_25 = arith.constant 0 : index
    %29 = vector.load %arg6[%c0_24, %c0_25] : memref<6x1xf32, #tpu.memory_space<vmem>>, vector<6x1xf32>
    %cst_26 = arith.constant dense<0.000000e+00> : vector<64x1xf32>
    %30 = tpu.matmul %28, %29, %cst_26 {dimension_numbers = #tpu.dot_dimension_numbers<[1], [0], [0], [1], [0, 0, 1, 1], [], []>} : vector<64x6xf32>, vector<6x1xf32>, vector<64x1xf32> -> vector<64x1xf32>
    %c0_27 = arith.constant 0 : index
    %c0_28 = arith.constant 0 : index
    %31 = vector.load %arg11[%c0_27, %c0_28] : memref<1x1xf32, #tpu.memory_space<vmem>>, vector<1x1xf32>
    %32 = vector.broadcast %31 : vector<1x1xf32> to vector<64x1xf32>
    %33 = arith.addf %30, %32 : vector<64x1xf32>
    %cst_29 = arith.constant 0.000000e+00 : f32
    %34 = vector.broadcast %cst_29 : f32 to vector<64x1xf32>
    %35 = arith.maximumf %33, %34 : vector<64x1xf32>
    %c0_30 = arith.constant 0 : index
    %c0_31 = arith.constant 0 : index
    %36 = vector.load %arg12[%c0_30, %c0_31] : memref<64x1xf32, #tpu.memory_space<vmem>>, vector<64x1xf32>
    tpu.vector_store %arg12[%c0_30, %c0_31], %35 {strides = array<i32>} : memref<64x1xf32, #tpu.memory_space<vmem>>, vector<64x1xf32>,
    return
  }
  func.func @transform_0(%arg0: i32) -> (i32, i32) {
    %c0_i32 = arith.constant 0 : i32
    %c0_i32_0 = arith.constant 0 : i32
    %c0_i32_1 = arith.constant 0 : i32
    return %c0_i32, %c0_i32_0 : i32, i32
  }
  func.func @transform_1(%arg0: i32) -> (i32, i32) {
    %c0_i32 = arith.constant 0 : i32
    %c0_i32_0 = arith.constant 0 : i32
    %c0_i32_1 = arith.constant 0 : i32
    return %c0_i32, %c0_i32_0 : i32, i32
  }
  func.func @transform_2(%arg0: i32) -> (i32, i32) {
    %c0_i32 = arith.constant 0 : i32
    %c0_i32_0 = arith.constant 0 : i32
    %c0_i32_1 = arith.constant 0 : i32
    return %c0_i32, %c0_i32_0 : i32, i32
  }
  func.func @transform_3(%arg0: i32) -> (i32, i32) {
    %c0_i32 = arith.constant 0 : i32
    %c0_i32_0 = arith.constant 0 : i32
    %c0_i32_1 = arith.constant 0 : i32
    return %c0_i32, %c0_i32_0 : i32, i32
  }
  func.func @transform_4(%arg0: i32) -> (i32, i32) {
    %c0_i32 = arith.constant 0 : i32
    %c0_i32_0 = arith.constant 0 : i32
    %c0_i32_1 = arith.constant 0 : i32
    return %c0_i32, %c0_i32_0 : i32, i32
  }
  func.func @transform_5(%arg0: i32) -> (i32, i32) {
    %c0_i32 = arith.constant 0 : i32
    %c0_i32_0 = arith.constant 0 : i32
    %c0_i32_1 = arith.constant 0 : i32
    return %c0_i32, %c0_i32_0 : i32, i32
  }
  func.func @transform_6(%arg0: i32) -> (i32, i32) {
    %c0_i32 = arith.constant 0 : i32
    %c0_i32_0 = arith.constant 0 : i32
    %c0_i32_1 = arith.constant 0 : i32
    return %c0_i32, %c0_i32_0 : i32, i32
  }
  func.func @transform_7(%arg0: i32) -> (i32, i32) {
    %c0_i32 = arith.constant 0 : i32
    %c0_i32_0 = arith.constant 0 : i32
    %c0_i32_1 = arith.constant 0 : i32
    return %c0_i32, %c0_i32_0 : i32, i32
  }
  func.func @transform_8(%arg0: i32) -> (i32, i32) {
    %c0_i32 = arith.constant 0 : i32
    %c0_i32_0 = arith.constant 0 : i32
    %c0_i32_1 = arith.constant 0 : i32
    return %c0_i32, %c0_i32_0 : i32, i32
  }
  func.func @transform_9(%arg0: i32) -> (i32, i32) {
    %c0_i32 = arith.constant 0 : i32
    %c0_i32_0 = arith.constant 0 : i32
    %c0_i32_1 = arith.constant 0 : i32
    return %c0_i32, %c0_i32_0 : i32, i32
  }
  func.func @transform_10(%arg0: i32) -> (i32, i32) {
    %c0_i32 = arith.constant 0 : i32
    %c0_i32_0 = arith.constant 0 : i32
    %c0_i32_1 = arith.constant 0 : i32
    return %c0_i32, %c0_i32_0 : i32, i32
  }
  func.func @transform_11(%arg0: i32) -> (i32, i32) {
    %c0_i32 = arith.constant 0 : i32
    %c0_i32_0 = arith.constant 0 : i32
    %c0_i32_1 = arith.constant 0 : i32
    return %c0_i32, %c0_i32_0 : i32, i32
  }
}

</mosaic_0001>

<llo_original>
// kernel: sst_forward.28
$region0: #{sst_forward.28}
  #allocation0 [shape = 'u32[]', space=smem, size = 0x4, offset = 0x4, fixed_abs, tag = 'smem constant byte address 0x4 - core index']
  #allocation1 [shape = 'u32[144,128]{1,0:T(1,128)}', space=vmem, size = 0x12000, scoped, tag = 'internal scratch']
  %s0 = inlined_call_operand.vmem [shape: bf16[2048,27], index: 0, kind: input, shape index: {}]
  %s1 = inlined_call_operand.vmem [shape: bf16[27,8], index: 1, kind: input, shape index: {}]
  %s2 = inlined_call_operand.vmem [shape: f32[1,8], index: 2, kind: input, shape index: {}]
  %s3 = inlined_call_operand.vmem [shape: f32[2048,8], index: 3, kind: output, shape index: {}]
  %s4 = sld [smem:[#allocation0]]
  $region45: #{sst_forward.28} parent=0
    _
  %s6 = ssub.s32 1, %s4
  %s7 = scalar_select 0, %s6, %s4
  loop: start=0, step=1, limit=4
  $region2: #{sst_forward.28} parent=0 // loop_pre_header
    _
  $region3: #{sst_forward.28} parent=0 // loop_header
    %s9 = sphi 0, %s13
    %p10 = scmp.ge.s32.totalorder %s9, 4
    %s19 = sphi 0, %s21
    %s22 = sphi 0, %s19
    %s23 = sphi 0, %s22
    %s39 = sphi 0, %s23
    %s43 = sphi 0, %s43
    %s45 = sphi 0, %s43
    %s46 = sphi 0, %s45
    %s60 = sphi 0, %s46
    %s64 = sphi 0, %s64
    %s66 = sphi 0, %s64
    %s67 = sphi 0, %s66
    %s81 = sphi 0, %s67
    %s87 = sphi 0, %s89
    %s90 = sphi 0, %s87
    %s91 = sphi 0, %s90
    %s107 = sphi 0, %s91
  $region4: #{sst_forward.28} parent=0 // loop_header_branch
    %12 = sbr.rel (%p10) target = $region8
  $region5: #{sst_forward.28} parent=0 // loop_body
    %s14 = ssub.s32 %s9, 1
    %s15 = ssub.s32 %s9, 2
    %s16 = sadd.s32 %s9, 1
    %s17 = ssub.s32 %s9, %s16
    %p18 = scmp.eq.s32.totalorder %s17, 0
    %s20 = sadd.s32 %s19, 1
    %s21 = scalar_select %p18, %s19, %s20
    %p24 = pneg %p18
    %p25 = scmp.eq.s32.totalorder %s9, 1
    %p26 = por %p24, %p25
    %p27 = scmp.ne.s32.totalorder %s19, %s22
    %p28 = scmp.eq.s32.totalorder %s9, 0
    %p29 = por %p27, %p28
    %p30 = scmp.ne.s32.totalorder %s19, %s22
    %p31 = scmp.eq.s32.totalorder %s14, 1
    %p32 = por %p30, %p31
    %p33 = scmp.ne.s32.totalorder %s22, %s23
    %p34 = scmp.eq.s32.totalorder %s14, 0
    %p35 = por %p33, %p34
    %p36 = scmp.ne.s32.totalorder %s22, %s23
    %p37 = scmp.eq.s32.totalorder %s15, 1
    %p38 = por %p36, %p37
    %p40 = scmp.ne.s32.totalorder %s23, %s39
    %p41 = scmp.eq.s32.totalorder %s15, 0
    %p42 = por %p40, %p41
    %s44 = sadd.s32 %s43, 1
    %p47 = scmp.eq.s32.totalorder %s9, 1
    %p48 = scmp.ne.s32.totalorder %s43, %s45
    %p49 = scmp.eq.s32.totalorder %s9, 0
    %p50 = por %p48, %p49
    %p51 = scmp.ne.s32.totalorder %s43, %s45
    %p52 = scmp.eq.s32.totalorder %s14, 1
    %p53 = por %p51, %p52
    %p54 = scmp.ne.s32.totalorder %s45, %s46
    %p55 = scmp.eq.s32.totalorder %s14, 0
    %p56 = por %p54, %p55
    %p57 = scmp.ne.s32.totalorder %s45, %s46
    %p58 = scmp.eq.s32.totalorder %s15, 1
    %p59 = por %p57, %p58
    %p61 = scmp.ne.s32.totalorder %s46, %s60
    %p62 = scmp.eq.s32.totalorder %s15, 0
    %p63 = por %p61, %p62
    %s65 = sadd.s32 %s64, 1
    %p68 = scmp.eq.s32.totalorder %s9, 1
    %p69 = scmp.ne.s32.totalorder %s64, %s66
    %p70 = scmp.eq.s32.totalorder %s9, 0
    %p71 = por %p69, %p70
    %p72 = scmp.ne.s32.totalorder %s64, %s66
    %p73 = scmp.eq.s32.totalorder %s14, 1
    %p74 = por %p72, %p73
    %p75 = scmp.ne.s32.totalorder %s66, %s67
    %p76 = scmp.eq.s32.totalorder %s14, 0
    %p77 = por %p75, %p76
    %p78 = scmp.ne.s32.totalorder %s66, %s67
    %p79 = scmp.eq.s32.totalorder %s15, 1
    %p80 = por %p78, %p79
    %p82 = scmp.ne.s32.totalorder %s67, %s81
    %p83 = scmp.eq.s32.totalorder %s15, 0
    %p84 = por %p82, %p83
    %s85 = ssub.s32 %s9, %s16
    %p86 = scmp.eq.s32.totalorder %s85, 0
    %s88 = sadd.s32 %s87, 1
    %s89 = scalar_select %p86, %s87, %s88
    %p92 = pneg %p86
    %p93 = scmp.eq.s32.totalorder %s9, 1
    %p94 = por %p92, %p93
    %p95 = scmp.ne.s32.totalorder %s87, %s90
    %p96 = scmp.eq.s32.totalorder %s9, 0
    %p97 = por %p95, %p96
    %p98 = scmp.ne.s32.totalorder %s87, %s90
    %p99 = scmp.eq.s32.totalorder %s14, 1
    %p100 = por %p98, %p99
    %p101 = scmp.ne.s32.totalorder %s90, %s91
    %p102 = scmp.eq.s32.totalorder %s14, 0
    %p103 = por %p101, %p102
    %p104 = scmp.ne.s32.totalorder %s90, %s91
    %p105 = scmp.eq.s32.totalorder %s15, 1
    %p106 = por %p104, %p105
    %p108 = scmp.ne.s32.totalorder %s91, %s107
    %p109 = scmp.eq.s32.totalorder %s15, 0
    %p110 = por %p108, %p109
    %p111 = scmp.le.s32.totalorder 1, %s9
    %p112 = scmp.lt.s32.totalorder %s9, 3
    %p113 = pnand %p111, %p112
    %p114 = pneg %p113
    // Predicated region
    $region9: #{sst_forward.28} parent=5 // pred_check
      _
    $region10: #{sst_forward.28} parent=5 // pred_check_branch
      %116 = sbr.rel (%p113) target = $region12
    $region11: #{sst_forward.28} parent=5 // pred_region
      %s117 = ssub.s32 %s9, 1
      // Predicated region
      $region13: #{sst_forward.28} parent=11 // pred_check
        %p118 = pneg %p56
      $region14: #{sst_forward.28} parent=11 // pred_check_branch
        %120 = sbr.rel (%p118) target = $region16
      $region15: #{sst_forward.28} parent=11 // pred_region
        _
      $region16: #{sst_forward.28} parent=11 // pred_fallthru
        _
      // Predicated region
      $region17: #{sst_forward.28} parent=11 // pred_check
        %p121 = pneg %p77
      $region18: #{sst_forward.28} parent=11 // pred_check_branch
        %123 = sbr.rel (%p121) target = $region20
      $region19: #{sst_forward.28} parent=11 // pred_region
        _
      $region20: #{sst_forward.28} parent=11 // pred_fallthru
        _
    $region12: #{sst_forward.28} parent=5 // pred_fallthru
      _
    %p124 = scmp.lt.s32.totalorder %s9, 2
    // Predicated region
    $region21: #{sst_forward.28} parent=5 // pred_check
      %p125 = pneg %p124
    $region22: #{sst_forward.28} parent=5 // pred_check_branch
      %127 = sbr.rel (%p125) target = $region24
    $region23: #{sst_forward.28} parent=5 // pred_region
      // Predicated region
      $region25: #{sst_forward.28} parent=23 // pred_check
        %p128 = pneg %p29
      $region26: #{sst_forward.28} parent=23 // pred_check_branch
        %130 = sbr.rel (%p128) target = $region28
      $region27: #{sst_forward.28} parent=23 // pred_region
        %s131 = smul.u32 128, %s9
        %p132 = scmp.lt.s32.totalorder %s131, 255
        %s133 = scalar_select %p132, %s131, 255
        %s134 = smul.addr %s133, 4
        %s135 = scalar_lea.vmem %s0, %s134
        %s136 = smul.u32 128, %s9
      $region28: #{sst_forward.28} parent=23 // pred_fallthru
        _
    $region24: #{sst_forward.28} parent=5 // pred_fallthru
      _
    %p137 = scmp.le.s32.totalorder 1, %s9
    %p138 = scmp.lt.s32.totalorder %s9, 3
    %p139 = pnand %p137, %p138
    %p140 = pneg %p139
    // Predicated region
    $region29: #{sst_forward.28} parent=5 // pred_check
      _
    $region30: #{sst_forward.28} parent=5 // pred_check_branch
      %142 = sbr.rel (%p139) target = $region32
    $region31: #{sst_forward.28} parent=5 // pred_region
      %s143 = ssub.s32 %s9, 1
      %s144 = smul.u32 128, %s14
      %p145 = scmp.lt.s32.totalorder %s144, 255
      %s146 = scalar_select %p145, %s144, 255
      %s147 = smul.addr %s146, 4
      %s148 = scalar_lea.vmem %s0, %s147
      %p149 = pneg %p35
      %p150 = pneg %p32
      %p151 = pneg %p56
      %p152 = pneg %p53
      %p153 = pneg %p77
      %p154 = pneg %p74
      %p155 = pneg %p103
      %p156 = pneg %p100
      %s157 = smul.u32 128, %s14
      %p158 = scmp.lt.s32.totalorder %s157, 255
      %s159 = scalar_select %p158, %s157, 255
      %s160 = smul.addr %s159, 8
      %s161 = scalar_lea.vmem %s3, %s160
      %s162 = smul.u32 128, %s14
      %p163 = scmp.lt.s32.totalorder %s162, 255
      %s164 = scalar_select %p163, %s162, 255
      %s165 = smul.addr %s164, 4
      %s166 = scalar_lea.vmem %s0, %s165
      %s167 = smul.u32 128, %s14
      %s168 = smul.u32 128, %s14
      %p169 = scmp.lt.s32.totalorder %s168, 255
      %s170 = scalar_select %p169, %s168, 255
      %s171 = smul.addr %s170, 8
      %s172 = scalar_lea.vmem %s3, %s171
      %s173 = smul.u32 128, %s14
      %v175 = vld [vmem:[%s166] sm:$0xf]
      %v176 = vld [vmem:[%s166 + $0x4] sm:$0xf]
      %v177 = vld [vmem:[%s166 + $0x8] sm:$0xf]
      %v178 = vld [vmem:[%s166 + $0xc] sm:$0xf]
      %v179 = vld [vmem:[%s166 + $0x10] sm:$0xf]
      %v180 = vld [vmem:[%s166 + $0x14] sm:$0xf]
      %v181 = vld [vmem:[%s166 + $0x18] sm:$0xf]
      %v182 = vld [vmem:[%s166 + $0x1c] sm:$0xf]
      %v183 = vld [vmem:[%s166 + $0x20] sm:$0xf]
      %v184 = vld [vmem:[%s166 + $0x24] sm:$0xf]
      %v185 = vld [vmem:[%s166 + $0x28] sm:$0xf]
      %v186 = vld [vmem:[%s166 + $0x2c] sm:$0xf]
      %v187 = vld [vmem:[%s166 + $0x30] sm:$0xf]
      %v188 = vld [vmem:[%s166 + $0x34] sm:$0xf]
      %v189 = vld [vmem:[%s166 + $0x38] sm:$0xf]
      %v190 = vld [vmem:[%s166 + $0x3c] sm:$0xf]
      %v191 = vld [vmem:[%s166 + $0x40] sm:$0xf]
      %v192 = vld [vmem:[%s166 + $0x44] sm:$0xf]
      %v193 = vld [vmem:[%s166 + $0x48] sm:$0xf]
      %v194 = vld [vmem:[%s166 + $0x4c] sm:$0xf]
      %v195 = vld [vmem:[%s166 + $0x50] sm:$0xf]
      %v196 = vld [vmem:[%s166 + $0x54] sm:$0xf]
      %v197 = vld [vmem:[%s166 + $0x58] sm:$0xf]
      %v198 = vld [vmem:[%s166 + $0x5c] sm:$0xf]
      %v199 = vld [vmem:[%s166 + $0x60] sm:$0xf]
      %v200 = vld [vmem:[%s166 + $0x64] sm:$0xf]
      %v201 = vld [vmem:[%s166 + $0x68] sm:$0xf]
      %v202 = vld [vmem:[%s166 + $0x6c] sm:$0xf]
      %v203 = vld [vmem:[%s166 + $0x70] sm:$0xf]
      %v204 = vld [vmem:[%s166 + $0x74] sm:$0xf]
      %v205 = vld [vmem:[%s166 + $0x78] sm:$0xf]
      %v206 = vld [vmem:[%s166 + $0x7c] sm:$0xf]
      %v207 = vld [vmem:[%s166 + $0x80] sm:$0xf]
      %v208 = vld [vmem:[%s166 + $0x84] sm:$0xf]
      %v209 = vld [vmem:[%s166 + $0x88] sm:$0xf]
      %v210 = vld [vmem:[%s166 + $0x8c] sm:$0xf]
      %v211 = vld [vmem:[%s166 + $0x90] sm:$0xf]
      %v212 = vld [vmem:[%s166 + $0x94] sm:$0xf]
      %v213 = vld [vmem:[%s166 + $0x98] sm:$0xf]
      %v214 = vld [vmem:[%s166 + $0x9c] sm:$0xf]
      %v215 = vld [vmem:[%s166 + $0xa0] sm:$0xf]
      %v216 = vld [vmem:[%s166 + $0xa4] sm:$0xf]
      %v217 = vld [vmem:[%s166 + $0xa8] sm:$0xf]
      %v218 = vld [vmem:[%s166 + $0xac] sm:$0xf]
      %v219 = vld [vmem:[%s166 + $0xb0] sm:$0xf]
      %v220 = vld [vmem:[%s166 + $0xb4] sm:$0xf]
      %v221 = vld [vmem:[%s166 + $0xb8] sm:$0xf]
      %v222 = vld [vmem:[%s166 + $0xbc] sm:$0xf]
      %v223 = vld [vmem:[%s166 + $0xc0] sm:$0xf]
      %v224 = vld [vmem:[%s166 + $0xc4] sm:$0xf]
      %v225 = vld [vmem:[%s166 + $0xc8] sm:$0xf]
      %v226 = vld [vmem:[%s166 + $0xcc] sm:$0xf]
      %v227 = vld [vmem:[%s166 + $0xd0] sm:$0xf]
      %v228 = vld [vmem:[%s166 + $0xd4] sm:$0xf]
      %v229 = vld [vmem:[%s166 + $0xd8] sm:$0xf]
      %v230 = vld [vmem:[%s166 + $0xdc] sm:$0xf]
      %v231 = vld [vmem:[%s166 + $0xe0] sm:$0xf]
      %v232 = vld [vmem:[%s166 + $0xe4] sm:$0xf]
      %v233 = vld [vmem:[%s166 + $0xe8] sm:$0xf]
      %v234 = vld [vmem:[%s166 + $0xec] sm:$0xf]
      %v235 = vld [vmem:[%s166 + $0xf0] sm:$0xf]
      %v236 = vld [vmem:[%s166 + $0xf4] sm:$0xf]
      %v237 = vld [vmem:[%s166 + $0xf8] sm:$0xf]
      %v238 = vld [vmem:[%s166 + $0xfc] sm:$0xf]
      %v239 = vld [vmem:[%s166 + $0x100] sm:$0xf]
      %v240 = vld [vmem:[%s166 + $0x104] sm:$0xf]
      %v241 = vld [vmem:[%s166 + $0x108] sm:$0xf]
      %v242 = vld [vmem:[%s166 + $0x10c] sm:$0xf]
      %v243 = vld [vmem:[%s166 + $0x110] sm:$0xf]
      %v244 = vld [vmem:[%s166 + $0x114] sm:$0xf]
      %v245 = vld [vmem:[%s166 + $0x118] sm:$0xf]
      %v246 = vld [vmem:[%s166 + $0x11c] sm:$0xf]
      %v247 = vld [vmem:[%s166 + $0x120] sm:$0xf]
      %v248 = vld [vmem:[%s166 + $0x124] sm:$0xf]
      %v249 = vld [vmem:[%s166 + $0x128] sm:$0xf]
      %v250 = vld [vmem:[%s166 + $0x12c] sm:$0xf]
      %v251 = vld [vmem:[%s166 + $0x130] sm:$0xf]
      %v252 = vld [vmem:[%s166 + $0x134] sm:$0xf]
      %v253 = vld [vmem:[%s166 + $0x138] sm:$0xf]
      %v254 = vld [vmem:[%s166 + $0x13c] sm:$0xf]
      %v255 = vld [vmem:[%s166 + $0x140] sm:$0xf]
      %v256 = vld [vmem:[%s166 + $0x144] sm:$0xf]
      %v257 = vld [vmem:[%s166 + $0x148] sm:$0xf]
      %v258 = vld [vmem:[%s166 + $0x14c] sm:$0xf]
      %v259 = vld [vmem:[%s166 + $0x150] sm:$0xf]
      %v260 = vld [vmem:[%s166 + $0x154] sm:$0xf]
      %v261 = vld [vmem:[%s166 + $0x158] sm:$0xf]
      %v262 = vld [vmem:[%s166 + $0x15c] sm:$0xf]
      %v263 = vld [vmem:[%s166 + $0x160] sm:$0xf]
      %v264 = vld [vmem:[%s166 + $0x164] sm:$0xf]
      %v265 = vld [vmem:[%s166 + $0x168] sm:$0xf]
      %v266 = vld [vmem:[%s166 + $0x16c] sm:$0xf]
      %v267 = vld [vmem:[%s166 + $0x170] sm:$0xf]
      %v268 = vld [vmem:[%s166 + $0x174] sm:$0xf]
      %v269 = vld [vmem:[%s166 + $0x178] sm:$0xf]
      %v270 = vld [vmem:[%s166 + $0x17c] sm:$0xf]
      %v271 = vld [vmem:[%s166 + $0x180] sm:$0xf]
      %v272 = vld [vmem:[%s166 + $0x184] sm:$0xf]
      %v273 = vld [vmem:[%s166 + $0x188] sm:$0xf]
      %v274 = vld [vmem:[%s166 + $0x18c] sm:$0xf]
      %v275 = vld [vmem:[%s166 + $0x190] sm:$0xf]
      %v276 = vld [vmem:[%s166 + $0x194] sm:$0xf]
      %v277 = vld [vmem:[%s166 + $0x198] sm:$0xf]
      %v278 = vld [vmem:[%s166 + $0x19c] sm:$0xf]
      %v279 = vld [vmem:[%s166 + $0x1a0] sm:$0xf]
      %v280 = vld [vmem:[%s166 + $0x1a4] sm:$0xf]
      %v281 = vld [vmem:[%s166 + $0x1a8] sm:$0xf]
      %v282 = vld [vmem:[%s166 + $0x1ac] sm:$0xf]
      %v283 = vld [vmem:[%s166 + $0x1b0] sm:$0xf]
      %v284 = vld [vmem:[%s166 + $0x1b4] sm:$0xf]
      %v285 = vld [vmem:[%s166 + $0x1b8] sm:$0xf]
      %v286 = vld [vmem:[%s166 + $0x1bc] sm:$0xf]
      %v287 = vld [vmem:[%s166 + $0x1c0] sm:$0xf]
      %v288 = vld [vmem:[%s166 + $0x1c4] sm:$0xf]
      %v289 = vld [vmem:[%s166 + $0x1c8] sm:$0xf]
      %v290 = vld [vmem:[%s166 + $0x1cc] sm:$0xf]
      %v291 = vld [vmem:[%s166 + $0x1d0] sm:$0xf]
      %v292 = vld [vmem:[%s166 + $0x1d4] sm:$0xf]
      %v293 = vld [vmem:[%s166 + $0x1d8] sm:$0xf]
      %v294 = vld [vmem:[%s166 + $0x1dc] sm:$0xf]
      %v295 = vld [vmem:[%s166 + $0x1e0] sm:$0xf]
      %v296 = vld [vmem:[%s166 + $0x1e4] sm:$0xf]
      %v297 = vld [vmem:[%s166 + $0x1e8] sm:$0xf]
      %v298 = vld [vmem:[%s166 + $0x1ec] sm:$0xf]
      %v299 = vld [vmem:[%s166 + $0x1f0] sm:$0xf]
      %v300 = vld [vmem:[%s166 + $0x1f4] sm:$0xf]
      %v301 = vld [vmem:[%s166 + $0x1f8] sm:$0xf]
      %v302 = vld [vmem:[%s166 + $0x1fc] sm:$0xf]
      %v303 = vld [vmem:[%s1] sm:$0xf]
      %v304 = vld [vmem:[%s1 + $0x4] sm:$0xf]
      %v305 = vld [vmem:[%s1 + $0x8] sm:$0xf]
      %v306 = vld [vmem:[%s1 + $0xc] sm:$0x3]
      %v307 = vld [vmem:[%s2] sm:$0x1]
      %v309 = vlaneseq
      %v310 = vshrl.u32 %v309, 7
      %v311 = vsub.s32 0, %v310
      %v312 = vrot.slane %v307, %v311
      %v442 = vunpack.c.l.b16 %v175
      %v443 = vunpack.c.l.b16 %v176
      %v444 = vunpack.c.l.b16 %v177
      %v445 = vunpack.c.l.b16 %v178
      %v446 = vunpack.c.l.b16 %v179
      %v447 = vunpack.c.l.b16 %v180
      %v448 = vunpack.c.l.b16 %v181
      %v449 = vunpack.c.l.b16 %v182
      %v450 = vunpack.c.l.b16 %v183
      %v451 = vunpack.c.l.b16 %v184
      %v452 = vunpack.c.l.b16 %v185
      %v453 = vunpack.c.l.b16 %v186
      %v454 = vunpack.c.l.b16 %v187
      %v455 = vunpack.c.l.b16 %v188
      %v456 = vunpack.c.l.b16 %v189
      %v457 = vunpack.c.l.b16 %v190
      %v458 = vunpack.c.l.b16 %v191
      %v459 = vunpack.c.l.b16 %v192
      %v460 = vunpack.c.l.b16 %v193
      %v461 = vunpack.c.l.b16 %v194
      %v462 = vunpack.c.l.b16 %v195
      %v463 = vunpack.c.l.b16 %v196
      %v464 = vunpack.c.l.b16 %v197
      %v465 = vunpack.c.l.b16 %v198
      %v466 = vunpack.c.l.b16 %v199
      %v467 = vunpack.c.l.b16 %v200
      %v468 = vunpack.c.l.b16 %v201
      %v469 = vunpack.c.l.b16 %v202
      %v470 = vunpack.c.l.b16 %v203
      %v471 = vunpack.c.l.b16 %v204
      %v472 = vunpack.c.l.b16 %v205
      %v473 = vunpack.c.l.b16 %v206
      %v474 = vunpack.c.l.b16 %v207
      %v475 = vunpack.c.l.b16 %v208
      %v476 = vunpack.c.l.b16 %v209
      %v477 = vunpack.c.l.b16 %v210
      %v478 = vunpack.c.l.b16 %v211
      %v479 = vunpack.c.l.b16 %v212
      %v480 = vunpack.c.l.b16 %v213
      %v481 = vunpack.c.l.b16 %v214
      %v482 = vunpack.c.l.b16 %v215
      %v483 = vunpack.c.l.b16 %v216
      %v484 = vunpack.c.l.b16 %v217
      %v485 = vunpack.c.l.b16 %v218
      %v486 = vunpack.c.l.b16 %v219
      %v487 = vunpack.c.l.b16 %v220
      %v488 = vunpack.c.l.b16 %v221
      %v489 = vunpack.c.l.b16 %v222
      %v490 = vunpack.c.l.b16 %v223
      %v491 = vunpack.c.l.b16 %v224
      %v492 = vunpack.c.l.b16 %v225
      %v493 = vunpack.c.l.b16 %v226
      %v494 = vunpack.c.l.b16 %v227
      %v495 = vunpack.c.l.b16 %v228
      %v496 = vunpack.c.l.b16 %v229
      %v497 = vunpack.c.l.b16 %v230
      %v498 = vunpack.c.l.b16 %v231
      %v499 = vunpack.c.l.b16 %v232
      %v500 = vunpack.c.l.b16 %v233
      %v501 = vunpack.c.l.b16 %v234
      %v502 = vunpack.c.l.b16 %v235
      %v503 = vunpack.c.l.b16 %v236
      %v504 = vunpack.c.l.b16 %v237
      %v505 = vunpack.c.l.b16 %v238
      %v506 = vunpack.c.l.b16 %v239
      %v507 = vunpack.c.l.b16 %v240
      %v508 = vunpack.c.l.b16 %v241
      %v509 = vunpack.c.l.b16 %v242
      %v510 = vunpack.c.l.b16 %v243
      %v511 = vunpack.c.l.b16 %v244
      %v512 = vunpack.c.l.b16 %v245
      %v513 = vunpack.c.l.b16 %v246
      %v514 = vunpack.c.l.b16 %v247
      %v515 = vunpack.c.l.b16 %v248
      %v516 = vunpack.c.l.b16 %v249
      %v517 = vunpack.c.l.b16 %v250
      %v518 = vunpack.c.l.b16 %v251
      %v519 = vunpack.c.l.b16 %v252
      %v520 = vunpack.c.l.b16 %v253
      %v521 = vunpack.c.l.b16 %v254
      %v522 = vunpack.c.l.b16 %v255
      %v523 = vunpack.c.l.b16 %v256
      %v524 = vunpack.c.l.b16 %v257
      %v525 = vunpack.c.l.b16 %v258
      %v526 = vunpack.c.l.b16 %v259
      %v527 = vunpack.c.l.b16 %v260
      %v528 = vunpack.c.l.b16 %v261
      %v529 = vunpack.c.l.b16 %v262
      %v530 = vunpack.c.l.b16 %v263
      %v531 = vunpack.c.l.b16 %v264
      %v532 = vunpack.c.l.b16 %v265
      %v533 = vunpack.c.l.b16 %v266
      %v534 = vunpack.c.l.b16 %v267
      %v535 = vunpack.c.l.b16 %v268
      %v536 = vunpack.c.l.b16 %v269
      %v537 = vunpack.c.l.b16 %v270
      %v538 = vunpack.c.l.b16 %v271
      %v539 = vunpack.c.l.b16 %v272
      %v540 = vunpack.c.l.b16 %v273
      %v541 = vunpack.c.l.b16 %v274
      %v542 = vunpack.c.l.b16 %v275
      %v543 = vunpack.c.l.b16 %v276
      %v544 = vunpack.c.l.b16 %v277
      %v545 = vunpack.c.l.b16 %v278
      %v546 = vunpack.c.l.b16 %v279
      %v547 = vunpack.c.l.b16 %v280
      %v548 = vunpack.c.l.b16 %v281
      %v549 = vunpack.c.l.b16 %v282
      %v550 = vunpack.c.l.b16 %v283
      %v551 = vunpack.c.l.b16 %v284
      %v552 = vunpack.c.l.b16 %v285
      %v553 = vunpack.c.l.b16 %v286
      %v554 = vunpack.c.l.b16 %v287
      %v555 = vunpack.c.l.b16 %v288
      %v556 = vunpack.c.l.b16 %v289
      %v557 = vunpack.c.l.b16 %v290
      %v558 = vunpack.c.l.b16 %v291
      %v559 = vunpack.c.l.b16 %v292
      %v560 = vunpack.c.l.b16 %v293
      %v561 = vunpack.c.l.b16 %v294
      %v562 = vunpack.c.l.b16 %v295
      %v563 = vunpack.c.l.b16 %v296
      %v564 = vunpack.c.l.b16 %v297
      %v565 = vunpack.c.l.b16 %v298
      %v566 = vunpack.c.l.b16 %v299
      %v567 = vunpack.c.l.b16 %v300
      %v568 = vunpack.c.l.b16 %v301
      %v569 = vunpack.c.l.b16 %v302
      %v570 = vpack.c.b16 %v443, %v442
      %v571 = vpack.c.b16 %v445, %v444
      %v572 = vpack.c.b16 %v447, %v446
      %v573 = vpack.c.b16 %v449, %v448
      %v574 = vpack.c.b16 %v451, %v450
      %v575 = vpack.c.b16 %v453, %v452
      %v576 = vpack.c.b16 %v455, %v454
      %v577 = vpack.c.b16 %v457, %v456
      %v578 = vpack.c.b16 %v459, %v458
      %v579 = vpack.c.b16 %v461, %v460
      %v580 = vpack.c.b16 %v463, %v462
      %v581 = vpack.c.b16 %v465, %v464
      %v582 = vpack.c.b16 %v467, %v466
      %v583 = vpack.c.b16 %v469, %v468
      %v584 = vpack.c.b16 %v471, %v470
      %v585 = vpack.c.b16 %v473, %v472
      %v586 = vpack.c.b16 %v475, %v474
      %v587 = vpack.c.b16 %v477, %v476
      %v588 = vpack.c.b16 %v479, %v478
      %v589 = vpack.c.b16 %v481, %v480
      %v590 = vpack.c.b16 %v483, %v482
      %v591 = vpack.c.b16 %v485, %v484
      %v592 = vpack.c.b16 %v487, %v486
      %v593 = vpack.c.b16 %v489, %v488
      %v594 = vpack.c.b16 %v491, %v490
      %v595 = vpack.c.b16 %v493, %v492
      %v596 = vpack.c.b16 %v495, %v494
      %v597 = vpack.c.b16 %v497, %v496
      %v598 = vpack.c.b16 %v499, %v498
      %v599 = vpack.c.b16 %v501, %v500
      %v600 = vpack.c.b16 %v503, %v502
      %v601 = vpack.c.b16 %v505, %v504
      %v602 = vpack.c.b16 %v507, %v506
      %v603 = vpack.c.b16 %v509, %v508
      %v604 = vpack.c.b16 %v511, %v510
      %v605 = vpack.c.b16 %v513, %v512
      %v606 = vpack.c.b16 %v515, %v514
      %v607 = vpack.c.b16 %v517, %v516
      %v608 = vpack.c.b16 %v519, %v518
      %v609 = vpack.c.b16 %v521, %v520
      %v610 = vpack.c.b16 %v523, %v522
      %v611 = vpack.c.b16 %v525, %v524
      %v612 = vpack.c.b16 %v527, %v526
      %v613 = vpack.c.b16 %v529, %v528
      %v614 = vpack.c.b16 %v531, %v530
      %v615 = vpack.c.b16 %v533, %v532
      %v616 = vpack.c.b16 %v535, %v534
      %v617 = vpack.c.b16 %v537, %v536
      %v618 = vpack.c.b16 %v539, %v538
      %v619 = vpack.c.b16 %v541, %v540
      %v620 = vpack.c.b16 %v543, %v542
      %v621 = vpack.c.b16 %v545, %v544
      %v622 = vpack.c.b16 %v547, %v546
      %v623 = vpack.c.b16 %v549, %v548
      %v624 = vpack.c.b16 %v551, %v550
      %v625 = vpack.c.b16 %v553, %v552
      %v626 = vpack.c.b16 %v555, %v554
      %v627 = vpack.c.b16 %v557, %v556
      %v628 = vpack.c.b16 %v559, %v558
      %v629 = vpack.c.b16 %v561, %v560
      %v630 = vpack.c.b16 %v563, %v562
      %v631 = vpack.c.b16 %v565, %v564
      %v632 = vpack.c.b16 %v567, %v566
      %v633 = vpack.c.b16 %v569, %v568
      %v638 = vunpack.c.l.b16 %v303
      %v639 = vunpack.c.l.b16 %v304
      %v640 = vunpack.c.l.b16 %v305
      %v641 = vunpack.c.l.b16 %v306
      %v642 = vpack.c.b16 %v639, %v638
      %v643 = vpack.c.b16 %v641, %v640
      %vm645 = vcmask 220160
      %v647 = vsel %vm645, %v570, 0
      %v650 = vsel %vm645, %v571, 0
      %v653 = vsel %vm645, %v572, 0
      %v656 = vsel %vm645, %v573, 0
      %v659 = vsel %vm645, %v574, 0
      %v662 = vsel %vm645, %v575, 0
      %v665 = vsel %vm645, %v576, 0
      %v668 = vsel %vm645, %v577, 0
      %v671 = vsel %vm645, %v578, 0
      %v674 = vsel %vm645, %v579, 0
      %v677 = vsel %vm645, %v580, 0
      %v680 = vsel %vm645, %v581, 0
      %v683 = vsel %vm645, %v582, 0
      %v686 = vsel %vm645, %v583, 0
      %v689 = vsel %vm645, %v584, 0
      %v692 = vsel %vm645, %v585, 0
      %v695 = vsel %vm645, %v586, 0
      %v698 = vsel %vm645, %v587, 0
      %v701 = vsel %vm645, %v588, 0
      %v704 = vsel %vm645, %v589, 0
      %v707 = vsel %vm645, %v590, 0
      %v710 = vsel %vm645, %v591, 0
      %v713 = vsel %vm645, %v592, 0
      %v716 = vsel %vm645, %v593, 0
      %v719 = vsel %vm645, %v594, 0
      %v722 = vsel %vm645, %v595, 0
      %v725 = vsel %vm645, %v596, 0
      %v728 = vsel %vm645, %v597, 0
      %v731 = vsel %vm645, %v598, 0
      %v734 = vsel %vm645, %v599, 0
      %v737 = vsel %vm645, %v600, 0
      %v740 = vsel %vm645, %v601, 0
      %v743 = vsel %vm645, %v602, 0
      %v746 = vsel %vm645, %v603, 0
      %v749 = vsel %vm645, %v604, 0
      %v752 = vsel %vm645, %v605, 0
      %v755 = vsel %vm645, %v606, 0
      %v758 = vsel %vm645, %v607, 0
      %v761 = vsel %vm645, %v608, 0
      %v764 = vsel %vm645, %v609, 0
      %v767 = vsel %vm645, %v610, 0
      %v770 = vsel %vm645, %v611, 0
      %v773 = vsel %vm645, %v612, 0
      %v776 = vsel %vm645, %v613, 0
      %v779 = vsel %vm645, %v614, 0
      %v782 = vsel %vm645, %v615, 0
      %v785 = vsel %vm645, %v616, 0
      %v788 = vsel %vm645, %v617, 0
      %v791 = vsel %vm645, %v618, 0
      %v794 = vsel %vm645, %v619, 0
      %v797 = vsel %vm645, %v620, 0
      %v800 = vsel %vm645, %v621, 0
      %v803 = vsel %vm645, %v622, 0
      %v806 = vsel %vm645, %v623, 0
      %v809 = vsel %vm645, %v624, 0
      %v812 = vsel %vm645, %v625, 0
      %v815 = vsel %vm645, %v626, 0
      %v818 = vsel %vm645, %v627, 0
      %v821 = vsel %vm645, %v628, 0
      %v824 = vsel %vm645, %v629, 0
      %v827 = vsel %vm645, %v630, 0
      %v830 = vsel %vm645, %v631, 0
      %v833 = vsel %vm645, %v632, 0
      %v836 = vsel %vm645, %v633, 0
      %vm838 = vcmask 1044480
      %vm839 = vcmask 1045504
      %v840 = vsel %vm838, 4294967295, 65535
      %v841 = vsel %vm839, %v840, 0
      %v843 = vand.u32 %v643, %v841
      %845 = vmatprep.subr.bf16.mxu0 0
      %846 = vmatpush1.bf16.msra.mxu0 0
      %847 = vmatprep.subr.bf16.mxu0 0
      %848 = vmatpush1.bf16.msra.mxu0 0
      %849 = vmatprep.subr.bf16.mxu0 0
      %850 = vmatpush1.bf16.msra.mxu0 0
      %851 = vmatprep.subr.bf16.mxu0 0
      %852 = vmatpush1.bf16.msra.mxu0 0
      %853 = vmatprep.subr.bf16.mxu0 0
      %854 = vmatpush1.bf16.msra.mxu0 0
      %855 = vmatprep.subr.bf16.mxu0 0
      %856 = vmatpush1.bf16.msra.mxu0 0
      %857 = vmatprep.subr.bf16.mxu0 0
      %858 = vmatpush1.bf16.msra.mxu0 %v843
      %859 = vmatprep.subr.bf16.mxu0 0
      %860 = vmatpush1.bf16.msra.mxu0 %v642
      %861 = vmatprep.subr.bf16.mxu0 0
      %862 = vmatpush2.bf16.msra.mxu0 0
      %863 = vmatprep.subr.bf16.mxu0 0
      %864 = vmatpush2.bf16.msra.mxu0 0
      %865 = vmatprep.subr.bf16.mxu0 0
      %866 = vmatpush2.bf16.msra.mxu0 0
      %867 = vmatprep.subr.bf16.mxu0 0
      %868 = vmatpush2.bf16.msra.mxu0 0
      %869 = vmatprep.subr.bf16.mxu0 0
      %870 = vmatpush2.bf16.msra.mxu0 0
      %871 = vmatprep.subr.bf16.mxu0 0
      %872 = vmatpush2.bf16.msra.mxu0 0
      %873 = vmatprep.subr.bf16.mxu0 0
      %874 = vmatpush2.bf16.msra.mxu0 0
      %875 = vmatprep.subr.bf16.mxu0 0
      %876 = vmatpush2.bf16.msra.mxu0 0
      %877 = vmatprep.mubr.bf16.mxu0 0
      %878 = vmatmul.mubr.bf16.gmra.mxu0 %v647
      %v879 = vpop.f32.mrf.mxu0
      %v880 = vadd.f32 %v312, %v879
      %v881 = vpop.f32.mrf.mxu0
      %v882 = vpop.f32.mrf.mxu0
      %v883 = vadd.f32 %v312, %v882
      %v884 = vpop.f32.mrf.mxu0
      %885 = vmatprep.mubr.bf16.mxu0 0
      %886 = vmatmul.mubr.bf16.gmra.mxu0 %v650
      %v887 = vpop.f32.mrf.mxu0
      %v888 = vadd.f32 %v312, %v887
      %v889 = vpop.f32.mrf.mxu0
      %v890 = vpop.f32.mrf.mxu0
      %v891 = vadd.f32 %v312, %v890
      %v892 = vpop.f32.mrf.mxu0
      %893 = vmatprep.mubr.bf16.mxu0 0
      %894 = vmatmul.mubr.bf16.gmra.mxu0 %v653
      %v895 = vpop.f32.mrf.mxu0
      %v896 = vadd.f32 %v312, %v895
      %v897 = vpop.f32.mrf.mxu0
      %v898 = vpop.f32.mrf.mxu0
      %v899 = vadd.f32 %v312, %v898
      %v900 = vpop.f32.mrf.mxu0
      %901 = vmatprep.mubr.bf16.mxu0 0
      %902 = vmatmul.mubr.bf16.gmra.mxu0 %v656
      %v903 = vpop.f32.mrf.mxu0
      %v904 = vadd.f32 %v312, %v903
      %v905 = vpop.f32.mrf.mxu0
      %v906 = vpop.f32.mrf.mxu0
      %v907 = vadd.f32 %v312, %v906
      %v908 = vpop.f32.mrf.mxu0
      %909 = vmatprep.mubr.bf16.mxu0 0
      %910 = vmatmul.mubr.bf16.gmra.mxu0 %v659
      %v911 = vpop.f32.mrf.mxu0
      %v912 = vadd.f32 %v312, %v911
      %v913 = vpop.f32.mrf.mxu0
      %v914 = vpop.f32.mrf.mxu0
      %v915 = vadd.f32 %v312, %v914
      %v916 = vpop.f32.mrf.mxu0
      %917 = vmatprep.mubr.bf16.mxu0 0
      %918 = vmatmul.mubr.bf16.gmra.mxu0 %v662
      %v919 = vpop.f32.mrf.mxu0
      %v920 = vadd.f32 %v312, %v919
      %v921 = vpop.f32.mrf.mxu0
      %v922 = vpop.f32.mrf.mxu0
      %v923 = vadd.f32 %v312, %v922
      %v924 = vpop.f32.mrf.mxu0
      %925 = vmatprep.mubr.bf16.mxu0 0
      %926 = vmatmul.mubr.bf16.gmra.mxu0 %v665
      %v927 = vpop.f32.mrf.mxu0
      %v928 = vadd.f32 %v312, %v927
      %v929 = vpop.f32.mrf.mxu0
      %v930 = vpop.f32.mrf.mxu0
      %v931 = vadd.f32 %v312, %v930
      %v932 = vpop.f32.mrf.mxu0
      %933 = vmatprep.mubr.bf16.mxu0 0
      %934 = vmatmul.mubr.bf16.gmra.mxu0 %v668
      %v935 = vpop.f32.mrf.mxu0
      %v936 = vadd.f32 %v312, %v935
      %v937 = vpop.f32.mrf.mxu0
      %v938 = vpop.f32.mrf.mxu0
      %v939 = vadd.f32 %v312, %v938
      %v940 = vpop.f32.mrf.mxu0
      %941 = vmatprep.mubr.bf16.mxu0 0
      %942 = vmatmul.mubr.bf16.gmra.mxu0 %v671
      %v943 = vpop.f32.mrf.mxu0
      %v944 = vadd.f32 %v312, %v943
      %v945 = vpop.f32.mrf.mxu0
      %v946 = vpop.f32.mrf.mxu0
      %v947 = vadd.f32 %v312, %v946
      %v948 = vpop.f32.mrf.mxu0
      %949 = vmatprep.mubr.bf16.mxu0 0
      %950 = vmatmul.mubr.bf16.gmra.mxu0 %v674
      %v951 = vpop.f32.mrf.mxu0
      %v952 = vadd.f32 %v312, %v951
      %v953 = vpop.f32.mrf.mxu0
      %v954 = vpop.f32.mrf.mxu0
      %v955 = vadd.f32 %v312, %v954
      %v956 = vpop.f32.mrf.mxu0
      %957 = vmatprep.mubr.bf16.mxu0 0
      %958 = vmatmul.mubr.bf16.gmra.mxu0 %v677
      %v959 = vpop.f32.mrf.mxu0
      %v960 = vadd.f32 %v312, %v959
      %v961 = vpop.f32.mrf.mxu0
      %v962 = vpop.f32.mrf.mxu0
      %v963 = vadd.f32 %v312, %v962
      %v964 = vpop.f32.mrf.mxu0
      %965 = vmatprep.mubr.bf16.mxu0 0
      %966 = vmatmul.mubr.bf16.gmra.mxu0 %v680
      %v967 = vpop.f32.mrf.mxu0
      %v968 = vadd.f32 %v312, %v967
      %v969 = vpop.f32.mrf.mxu0
      %v970 = vpop.f32.mrf.mxu0
      %v971 = vadd.f32 %v312, %v970
      %v972 = vpop.f32.mrf.mxu0
      %973 = vmatprep.mubr.bf16.mxu0 0
      %974 = vmatmul.mubr.bf16.gmra.mxu0 %v683
      %v975 = vpop.f32.mrf.mxu0
      %v976 = vadd.f32 %v312, %v975
      %v977 = vpop.f32.mrf.mxu0
      %v978 = vpop.f32.mrf.mxu0
      %v979 = vadd.f32 %v312, %v978
      %v980 = vpop.f32.mrf.mxu0
      %981 = vmatprep.mubr.bf16.mxu0 0
      %982 = vmatmul.mubr.bf16.gmra.mxu0 %v686
      %v983 = vpop.f32.mrf.mxu0
      %v984 = vadd.f32 %v312, %v983
      %v985 = vpop.f32.mrf.mxu0
      %v986 = vpop.f32.mrf.mxu0
      %v987 = vadd.f32 %v312, %v986
      %v988 = vpop.f32.mrf.mxu0
      %989 = vmatprep.mubr.bf16.mxu0 0
      %990 = vmatmul.mubr.bf16.gmra.mxu0 %v689
      %v991 = vpop.f32.mrf.mxu0
      %v992 = vadd.f32 %v312, %v991
      %v993 = vpop.f32.mrf.mxu0
      %v994 = vpop.f32.mrf.mxu0
      %v995 = vadd.f32 %v312, %v994
      %v996 = vpop.f32.mrf.mxu0
      %997 = vmatprep.mubr.bf16.mxu0 0
      %998 = vmatmul.mubr.bf16.gmra.mxu0 %v692
      %v999 = vpop.f32.mrf.mxu0
      %v1000 = vadd.f32 %v312, %v999
      %v1001 = vpop.f32.mrf.mxu0
      %v1002 = vpop.f32.mrf.mxu0
      %v1003 = vadd.f32 %v312, %v1002
      %v1004 = vpop.f32.mrf.mxu0
      %1005 = vmatprep.mubr.bf16.mxu0 0
      %1006 = vmatmul.mubr.bf16.gmra.mxu0 %v695
      %v1007 = vpop.f32.mrf.mxu0
      %v1008 = vadd.f32 %v312, %v1007
      %v1009 = vpop.f32.mrf.mxu0
      %v1010 = vpop.f32.mrf.mxu0
      %v1011 = vadd.f32 %v312, %v1010
      %v1012 = vpop.f32.mrf.mxu0
      %1013 = vmatprep.mubr.bf16.mxu0 0
      %1014 = vmatmul.mubr.bf16.gmra.mxu0 %v698
      %v1015 = vpop.f32.mrf.mxu0
      %v1016 = vadd.f32 %v312, %v1015
      %v1017 = vpop.f32.mrf.mxu0
      %v1018 = vpop.f32.mrf.mxu0
      %v1019 = vadd.f32 %v312, %v1018
      %v1020 = vpop.f32.mrf.mxu0
      %1021 = vmatprep.mubr.bf16.mxu0 0
      %1022 = vmatmul.mubr.bf16.gmra.mxu0 %v701
      %v1023 = vpop.f32.mrf.mxu0
      %v1024 = vadd.f32 %v312, %v1023
      %v1025 = vpop.f32.mrf.mxu0
      %v1026 = vpop.f32.mrf.mxu0
      %v1027 = vadd.f32 %v312, %v1026
      %v1028 = vpop.f32.mrf.mxu0
      %1029 = vmatprep.mubr.bf16.mxu0 0
      %1030 = vmatmul.mubr.bf16.gmra.mxu0 %v704
      %v1031 = vpop.f32.mrf.mxu0
      %v1032 = vadd.f32 %v312, %v1031
      %v1033 = vpop.f32.mrf.mxu0
      %v1034 = vpop.f32.mrf.mxu0
      %v1035 = vadd.f32 %v312, %v1034
      %v1036 = vpop.f32.mrf.mxu0
      %1037 = vmatprep.mubr.bf16.mxu0 0
      %1038 = vmatmul.mubr.bf16.gmra.mxu0 %v707
      %v1039 = vpop.f32.mrf.mxu0
      %v1040 = vadd.f32 %v312, %v1039
      %v1041 = vpop.f32.mrf.mxu0
      %v1042 = vpop.f32.mrf.mxu0
      %v1043 = vadd.f32 %v312, %v1042
      %v1044 = vpop.f32.mrf.mxu0
      %1045 = vmatprep.mubr.bf16.mxu0 0
      %1046 = vmatmul.mubr.bf16.gmra.mxu0 %v710
      %v1047 = vpop.f32.mrf.mxu0
      %v1048 = vadd.f32 %v312, %v1047
      %v1049 = vpop.f32.mrf.mxu0
      %v1050 = vpop.f32.mrf.mxu0
      %v1051 = vadd.f32 %v312, %v1050
      %v1052 = vpop.f32.mrf.mxu0
      %1053 = vmatprep.mubr.bf16.mxu0 0
      %1054 = vmatmul.mubr.bf16.gmra.mxu0 %v713
      %v1055 = vpop.f32.mrf.mxu0
      %v1056 = vadd.f32 %v312, %v1055
      %v1057 = vpop.f32.mrf.mxu0
      %v1058 = vpop.f32.mrf.mxu0
      %v1059 = vadd.f32 %v312, %v1058
      %v1060 = vpop.f32.mrf.mxu0
      %1061 = vmatprep.mubr.bf16.mxu0 0
      %1062 = vmatmul.mubr.bf16.gmra.mxu0 %v716
      %v1063 = vpop.f32.mrf.mxu0
      %v1064 = vadd.f32 %v312, %v1063
      %v1065 = vpop.f32.mrf.mxu0
      %v1066 = vpop.f32.mrf.mxu0
      %v1067 = vadd.f32 %v312, %v1066
      %v1068 = vpop.f32.mrf.mxu0
      %1069 = vmatprep.mubr.bf16.mxu0 0
      %1070 = vmatmul.mubr.bf16.gmra.mxu0 %v719
      %v1071 = vpop.f32.mrf.mxu0
      %v1072 = vadd.f32 %v312, %v1071
      %v1073 = vpop.f32.mrf.mxu0
      %v1074 = vpop.f32.mrf.mxu0
      %v1075 = vadd.f32 %v312, %v1074
      %v1076 = vpop.f32.mrf.mxu0
      %1077 = vmatprep.mubr.bf16.mxu0 0
      %1078 = vmatmul.mubr.bf16.gmra.mxu0 %v722
      %v1079 = vpop.f32.mrf.mxu0
      %v1080 = vadd.f32 %v312, %v1079
      %v1081 = vpop.f32.mrf.mxu0
      %v1082 = vpop.f32.mrf.mxu0
      %v1083 = vadd.f32 %v312, %v1082
      %v1084 = vpop.f32.mrf.mxu0
      %1085 = vmatprep.mubr.bf16.mxu0 0
      %1086 = vmatmul.mubr.bf16.gmra.mxu0 %v725
      %v1087 = vpop.f32.mrf.mxu0
      %v1088 = vadd.f32 %v312, %v1087
      %v1089 = vpop.f32.mrf.mxu0
      %v1090 = vpop.f32.mrf.mxu0
      %v1091 = vadd.f32 %v312, %v1090
      %v1092 = vpop.f32.mrf.mxu0
      %1093 = vmatprep.mubr.bf16.mxu0 0
      %1094 = vmatmul.mubr.bf16.gmra.mxu0 %v728
      %v1095 = vpop.f32.mrf.mxu0
      %v1096 = vadd.f32 %v312, %v1095
      %v1097 = vpop.f32.mrf.mxu0
      %v1098 = vpop.f32.mrf.mxu0
      %v1099 = vadd.f32 %v312, %v1098
      %v1100 = vpop.f32.mrf.mxu0
      %1101 = vmatprep.mubr.bf16.mxu0 0
      %1102 = vmatmul.mubr.bf16.gmra.mxu0 %v731
      %v1103 = vpop.f32.mrf.mxu0
      %v1104 = vadd.f32 %v312, %v1103
      %v1105 = vpop.f32.mrf.mxu0
      %v1106 = vpop.f32.mrf.mxu0
      %v1107 = vadd.f32 %v312, %v1106
      %v1108 = vpop.f32.mrf.mxu0
      %1109 = vmatprep.mubr.bf16.mxu0 0
      %1110 = vmatmul.mubr.bf16.gmra.mxu0 %v734
      %v1111 = vpop.f32.mrf.mxu0
      %v1112 = vadd.f32 %v312, %v1111
      %v1113 = vpop.f32.mrf.mxu0
      %v1114 = vpop.f32.mrf.mxu0
      %v1115 = vadd.f32 %v312, %v1114
      %v1116 = vpop.f32.mrf.mxu0
      %1117 = vmatprep.mubr.bf16.mxu0 0
      %1118 = vmatmul.mubr.bf16.gmra.mxu0 %v737
      %v1119 = vpop.f32.mrf.mxu0
      %v1120 = vadd.f32 %v312, %v1119
      %v1121 = vpop.f32.mrf.mxu0
      %v1122 = vpop.f32.mrf.mxu0
      %v1123 = vadd.f32 %v312, %v1122
      %v1124 = vpop.f32.mrf.mxu0
      %1125 = vmatprep.mubr.bf16.mxu0 0
      %1126 = vmatmul.mubr.bf16.gmra.mxu0 %v740
      %v1127 = vpop.f32.mrf.mxu0
      %v1128 = vadd.f32 %v312, %v1127
      %v1129 = vpop.f32.mrf.mxu0
      %v1130 = vpop.f32.mrf.mxu0
      %v1131 = vadd.f32 %v312, %v1130
      %v1132 = vpop.f32.mrf.mxu0
      %1133 = vmatprep.mubr.bf16.mxu0 0
      %1134 = vmatmul.mubr.bf16.gmra.mxu0 %v743
      %v1135 = vpop.f32.mrf.mxu0
      %v1136 = vadd.f32 %v312, %v1135
      %v1137 = vpop.f32.mrf.mxu0
      %v1138 = vpop.f32.mrf.mxu0
      %v1139 = vadd.f32 %v312, %v1138
      %v1140 = vpop.f32.mrf.mxu0
      %1141 = vmatprep.mubr.bf16.mxu0 0
      %1142 = vmatmul.mubr.bf16.gmra.mxu0 %v746
      %v1143 = vpop.f32.mrf.mxu0
      %v1144 = vadd.f32 %v312, %v1143
      %v1145 = vpop.f32.mrf.mxu0
      %v1146 = vpop.f32.mrf.mxu0
      %v1147 = vadd.f32 %v312, %v1146
      %v1148 = vpop.f32.mrf.mxu0
      %1149 = vmatprep.mubr.bf16.mxu0 0
      %1150 = vmatmul.mubr.bf16.gmra.mxu0 %v749
      %v1151 = vpop.f32.mrf.mxu0
      %v1152 = vadd.f32 %v312, %v1151
      %v1153 = vpop.f32.mrf.mxu0
      %v1154 = vpop.f32.mrf.mxu0
      %v1155 = vadd.f32 %v312, %v1154
      %v1156 = vpop.f32.mrf.mxu0
      %1157 = vmatprep.mubr.bf16.mxu0 0
      %1158 = vmatmul.mubr.bf16.gmra.mxu0 %v752
      %v1159 = vpop.f32.mrf.mxu0
      %v1160 = vadd.f32 %v312, %v1159
      %v1161 = vpop.f32.mrf.mxu0
      %v1162 = vpop.f32.mrf.mxu0
      %v1163 = vadd.f32 %v312, %v1162
      %v1164 = vpop.f32.mrf.mxu0
      %1165 = vmatprep.mubr.bf16.mxu0 0
      %1166 = vmatmul.mubr.bf16.gmra.mxu0 %v755
      %v1167 = vpop.f32.mrf.mxu0
      %v1168 = vadd.f32 %v312, %v1167
      %v1169 = vpop.f32.mrf.mxu0
      %v1170 = vpop.f32.mrf.mxu0
      %v1171 = vadd.f32 %v312, %v1170
      %v1172 = vpop.f32.mrf.mxu0
      %1173 = vmatprep.mubr.bf16.mxu0 0
      %1174 = vmatmul.mubr.bf16.gmra.mxu0 %v758
      %v1175 = vpop.f32.mrf.mxu0
      %v1176 = vadd.f32 %v312, %v1175
      %v1177 = vpop.f32.mrf.mxu0
      %v1178 = vpop.f32.mrf.mxu0
      %v1179 = vadd.f32 %v312, %v1178
      %v1180 = vpop.f32.mrf.mxu0
      %1181 = vmatprep.mubr.bf16.mxu0 0
      %1182 = vmatmul.mubr.bf16.gmra.mxu0 %v761
      %v1183 = vpop.f32.mrf.mxu0
      %v1184 = vadd.f32 %v312, %v1183
      %v1185 = vpop.f32.mrf.mxu0
      %v1186 = vpop.f32.mrf.mxu0
      %v1187 = vadd.f32 %v312, %v1186
      %v1188 = vpop.f32.mrf.mxu0
      %1189 = vmatprep.mubr.bf16.mxu0 0
      %1190 = vmatmul.mubr.bf16.gmra.mxu0 %v764
      %v1191 = vpop.f32.mrf.mxu0
      %v1192 = vadd.f32 %v312, %v1191
      %v1193 = vpop.f32.mrf.mxu0
      %v1194 = vpop.f32.mrf.mxu0
      %v1195 = vadd.f32 %v312, %v1194
      %v1196 = vpop.f32.mrf.mxu0
      %1197 = vmatprep.mubr.bf16.mxu0 0
      %1198 = vmatmul.mubr.bf16.gmra.mxu0 %v767
      %v1199 = vpop.f32.mrf.mxu0
      %v1200 = vadd.f32 %v312, %v1199
      %v1201 = vpop.f32.mrf.mxu0
      %v1202 = vpop.f32.mrf.mxu0
      %v1203 = vadd.f32 %v312, %v1202
      %v1204 = vpop.f32.mrf.mxu0
      %1205 = vmatprep.mubr.bf16.mxu0 0
      %1206 = vmatmul.mubr.bf16.gmra.mxu0 %v770
      %v1207 = vpop.f32.mrf.mxu0
      %v1208 = vadd.f32 %v312, %v1207
      %v1209 = vpop.f32.mrf.mxu0
      %v1210 = vpop.f32.mrf.mxu0
      %v1211 = vadd.f32 %v312, %v1210
      %v1212 = vpop.f32.mrf.mxu0
      %1213 = vmatprep.mubr.bf16.mxu0 0
      %1214 = vmatmul.mubr.bf16.gmra.mxu0 %v773
      %v1215 = vpop.f32.mrf.mxu0
      %v1216 = vadd.f32 %v312, %v1215
      %v1217 = vpop.f32.mrf.mxu0
      %v1218 = vpop.f32.mrf.mxu0
      %v1219 = vadd.f32 %v312, %v1218
      %v1220 = vpop.f32.mrf.mxu0
      %1221 = vmatprep.mubr.bf16.mxu0 0
      %1222 = vmatmul.mubr.bf16.gmra.mxu0 %v776
      %v1223 = vpop.f32.mrf.mxu0
      %v1224 = vadd.f32 %v312, %v1223
      %v1225 = vpop.f32.mrf.mxu0
      %v1226 = vpop.f32.mrf.mxu0
      %v1227 = vadd.f32 %v312, %v1226
      %v1228 = vpop.f32.mrf.mxu0
      %1229 = vmatprep.mubr.bf16.mxu0 0
      %1230 = vmatmul.mubr.bf16.gmra.mxu0 %v779
      %v1231 = vpop.f32.mrf.mxu0
      %v1232 = vadd.f32 %v312, %v1231
      %v1233 = vpop.f32.mrf.mxu0
      %v1234 = vpop.f32.mrf.mxu0
      %v1235 = vadd.f32 %v312, %v1234
      %v1236 = vpop.f32.mrf.mxu0
      %1237 = vmatprep.mubr.bf16.mxu0 0
      %1238 = vmatmul.mubr.bf16.gmra.mxu0 %v782
      %v1239 = vpop.f32.mrf.mxu0
      %v1240 = vadd.f32 %v312, %v1239
      %v1241 = vpop.f32.mrf.mxu0
      %v1242 = vpop.f32.mrf.mxu0
      %v1243 = vadd.f32 %v312, %v1242
      %v1244 = vpop.f32.mrf.mxu0
      %1245 = vmatprep.mubr.bf16.mxu0 0
      %1246 = vmatmul.mubr.bf16.gmra.mxu0 %v785
      %v1247 = vpop.f32.mrf.mxu0
      %v1248 = vadd.f32 %v312, %v1247
      %v1249 = vpop.f32.mrf.mxu0
      %v1250 = vpop.f32.mrf.mxu0
      %v1251 = vadd.f32 %v312, %v1250
      %v1252 = vpop.f32.mrf.mxu0
      %1253 = vmatprep.mubr.bf16.mxu0 0
      %1254 = vmatmul.mubr.bf16.gmra.mxu0 %v788
      %v1255 = vpop.f32.mrf.mxu0
      %v1256 = vadd.f32 %v312, %v1255
      %v1257 = vpop.f32.mrf.mxu0
      %v1258 = vpop.f32.mrf.mxu0
      %v1259 = vadd.f32 %v312, %v1258
      %v1260 = vpop.f32.mrf.mxu0
      %1261 = vmatprep.mubr.bf16.mxu0 0
      %1262 = vmatmul.mubr.bf16.gmra.mxu0 %v791
      %v1263 = vpop.f32.mrf.mxu0
      %v1264 = vadd.f32 %v312, %v1263
      %v1265 = vpop.f32.mrf.mxu0
      %v1266 = vpop.f32.mrf.mxu0
      %v1267 = vadd.f32 %v312, %v1266
      %v1268 = vpop.f32.mrf.mxu0
      %1269 = vmatprep.mubr.bf16.mxu0 0
      %1270 = vmatmul.mubr.bf16.gmra.mxu0 %v794
      %v1271 = vpop.f32.mrf.mxu0
      %v1272 = vadd.f32 %v312, %v1271
      %v1273 = vpop.f32.mrf.mxu0
      %v1274 = vpop.f32.mrf.mxu0
      %v1275 = vadd.f32 %v312, %v1274
      %v1276 = vpop.f32.mrf.mxu0
      %1277 = vmatprep.mubr.bf16.mxu0 0
      %1278 = vmatmul.mubr.bf16.gmra.mxu0 %v797
      %v1279 = vpop.f32.mrf.mxu0
      %v1280 = vadd.f32 %v312, %v1279
      %v1281 = vpop.f32.mrf.mxu0
      %v1282 = vpop.f32.mrf.mxu0
      %v1283 = vadd.f32 %v312, %v1282
      %v1284 = vpop.f32.mrf.mxu0
      %1285 = vmatprep.mubr.bf16.mxu0 0
      %1286 = vmatmul.mubr.bf16.gmra.mxu0 %v800
      %v1287 = vpop.f32.mrf.mxu0
      %v1288 = vadd.f32 %v312, %v1287
      %v1289 = vpop.f32.mrf.mxu0
      %v1290 = vpop.f32.mrf.mxu0
      %v1291 = vadd.f32 %v312, %v1290
      %v1292 = vpop.f32.mrf.mxu0
      %1293 = vmatprep.mubr.bf16.mxu0 0
      %1294 = vmatmul.mubr.bf16.gmra.mxu0 %v803
      %v1295 = vpop.f32.mrf.mxu0
      %v1296 = vadd.f32 %v312, %v1295
      %v1297 = vpop.f32.mrf.mxu0
      %v1298 = vpop.f32.mrf.mxu0
      %v1299 = vadd.f32 %v312, %v1298
      %v1300 = vpop.f32.mrf.mxu0
      %1301 = vmatprep.mubr.bf16.mxu0 0
      %1302 = vmatmul.mubr.bf16.gmra.mxu0 %v806
      %v1303 = vpop.f32.mrf.mxu0
      %v1304 = vadd.f32 %v312, %v1303
      %v1305 = vpop.f32.mrf.mxu0
      %v1306 = vpop.f32.mrf.mxu0
      %v1307 = vadd.f32 %v312, %v1306
      %v1308 = vpop.f32.mrf.mxu0
      %1309 = vmatprep.mubr.bf16.mxu0 0
      %1310 = vmatmul.mubr.bf16.gmra.mxu0 %v809
      %v1311 = vpop.f32.mrf.mxu0
      %v1312 = vadd.f32 %v312, %v1311
      %v1313 = vpop.f32.mrf.mxu0
      %v1314 = vpop.f32.mrf.mxu0
      %v1315 = vadd.f32 %v312, %v1314
      %v1316 = vpop.f32.mrf.mxu0
      %1317 = vmatprep.mubr.bf16.mxu0 0
      %1318 = vmatmul.mubr.bf16.gmra.mxu0 %v812
      %v1319 = vpop.f32.mrf.mxu0
      %v1320 = vadd.f32 %v312, %v1319
      %v1321 = vpop.f32.mrf.mxu0
      %v1322 = vpop.f32.mrf.mxu0
      %v1323 = vadd.f32 %v312, %v1322
      %v1324 = vpop.f32.mrf.mxu0
      %1325 = vmatprep.mubr.bf16.mxu0 0
      %1326 = vmatmul.mubr.bf16.gmra.mxu0 %v815
      %v1327 = vpop.f32.mrf.mxu0
      %v1328 = vadd.f32 %v312, %v1327
      %v1329 = vpop.f32.mrf.mxu0
      %v1330 = vpop.f32.mrf.mxu0
      %v1331 = vadd.f32 %v312, %v1330
      %v1332 = vpop.f32.mrf.mxu0
      %1333 = vmatprep.mubr.bf16.mxu0 0
      %1334 = vmatmul.mubr.bf16.gmra.mxu0 %v818
      %v1335 = vpop.f32.mrf.mxu0
      %v1336 = vadd.f32 %v312, %v1335
      %v1337 = vpop.f32.mrf.mxu0
      %v1338 = vpop.f32.mrf.mxu0
      %v1339 = vadd.f32 %v312, %v1338
      %v1340 = vpop.f32.mrf.mxu0
      %1341 = vmatprep.mubr.bf16.mxu0 0
      %1342 = vmatmul.mubr.bf16.gmra.mxu0 %v821
      %v1343 = vpop.f32.mrf.mxu0
      %v1344 = vadd.f32 %v312, %v1343
      %v1345 = vpop.f32.mrf.mxu0
      %v1346 = vpop.f32.mrf.mxu0
      %v1347 = vadd.f32 %v312, %v1346
      %v1348 = vpop.f32.mrf.mxu0
      %1349 = vmatprep.mubr.bf16.mxu0 0
      %1350 = vmatmul.mubr.bf16.gmra.mxu0 %v824
      %v1351 = vpop.f32.mrf.mxu0
      %v1352 = vadd.f32 %v312, %v1351
      %v1353 = vpop.f32.mrf.mxu0
      %v1354 = vpop.f32.mrf.mxu0
      %v1355 = vadd.f32 %v312, %v1354
      %v1356 = vpop.f32.mrf.mxu0
      %1357 = vmatprep.mubr.bf16.mxu0 0
      %1358 = vmatmul.mubr.bf16.gmra.mxu0 %v827
      %v1359 = vpop.f32.mrf.mxu0
      %v1360 = vadd.f32 %v312, %v1359
      %v1361 = vpop.f32.mrf.mxu0
      %v1362 = vpop.f32.mrf.mxu0
      %v1363 = vadd.f32 %v312, %v1362
      %v1364 = vpop.f32.mrf.mxu0
      %1365 = vmatprep.mubr.bf16.mxu0 0
      %1366 = vmatmul.mubr.bf16.gmra.mxu0 %v830
      %v1367 = vpop.f32.mrf.mxu0
      %v1368 = vadd.f32 %v312, %v1367
      %v1369 = vpop.f32.mrf.mxu0
      %v1370 = vpop.f32.mrf.mxu0
      %v1371 = vadd.f32 %v312, %v1370
      %v1372 = vpop.f32.mrf.mxu0
      %1373 = vmatprep.mubr.bf16.mxu0 0
      %1374 = vmatmul.mubr.bf16.gmra.mxu0 %v833
      %v1375 = vpop.f32.mrf.mxu0
      %v1376 = vadd.f32 %v312, %v1375
      %v1377 = vpop.f32.mrf.mxu0
      %v1378 = vpop.f32.mrf.mxu0
      %v1379 = vadd.f32 %v312, %v1378
      %v1380 = vpop.f32.mrf.mxu0
      %1381 = vmatprep.mubr.bf16.mxu0 0
      %1382 = vmatmul.mubr.bf16.gmra.mxu0 %v836
      %v1383 = vpop.f32.mrf.mxu0
      %v1384 = vadd.f32 %v312, %v1383
      %v1385 = vpop.f32.mrf.mxu0
      %v1386 = vpop.f32.mrf.mxu0
      %v1387 = vadd.f32 %v312, %v1386
      %v1388 = vpop.f32.mrf.mxu0
      %1389 = vdwg.mxu0
      %v1390 = vmax.f32 %v880, 0.0
      %v1391 = vmax.f32 %v883, 0.0
      %v1392 = vmax.f32 %v888, 0.0
      %v1393 = vmax.f32 %v891, 0.0
      %v1394 = vmax.f32 %v896, 0.0
      %v1395 = vmax.f32 %v899, 0.0
      %v1396 = vmax.f32 %v904, 0.0
      %v1397 = vmax.f32 %v907, 0.0
      %v1398 = vmax.f32 %v912, 0.0
      %v1399 = vmax.f32 %v915, 0.0
      %v1400 = vmax.f32 %v920, 0.0
      %v1401 = vmax.f32 %v923, 0.0
      %v1402 = vmax.f32 %v928, 0.0
      %v1403 = vmax.f32 %v931, 0.0
      %v1404 = vmax.f32 %v936, 0.0
      %v1405 = vmax.f32 %v939, 0.0
      %v1406 = vmax.f32 %v944, 0.0
      %v1407 = vmax.f32 %v947, 0.0
      %v1408 = vmax.f32 %v952, 0.0
      %v1409 = vmax.f32 %v955, 0.0
      %v1410 = vmax.f32 %v960, 0.0
      %v1411 = vmax.f32 %v963, 0.0
      %v1412 = vmax.f32 %v968, 0.0
      %v1413 = vmax.f32 %v971, 0.0
      %v1414 = vmax.f32 %v976, 0.0
      %v1415 = vmax.f32 %v979, 0.0
      %v1416 = vmax.f32 %v984, 0.0
      %v1417 = vmax.f32 %v987, 0.0
      %v1418 = vmax.f32 %v992, 0.0
      %v1419 = vmax.f32 %v995, 0.0
      %v1420 = vmax.f32 %v1000, 0.0
      %v1421 = vmax.f32 %v1003, 0.0
      %v1422 = vmax.f32 %v1008, 0.0
      %v1423 = vmax.f32 %v1011, 0.0
      %v1424 = vmax.f32 %v1016, 0.0
      %v1425 = vmax.f32 %v1019, 0.0
      %v1426 = vmax.f32 %v1024, 0.0
      %v1427 = vmax.f32 %v1027, 0.0
      %v1428 = vmax.f32 %v1032, 0.0
      %v1429 = vmax.f32 %v1035, 0.0
      %v1430 = vmax.f32 %v1040, 0.0
      %v1431 = vmax.f32 %v1043, 0.0
      %v1432 = vmax.f32 %v1048, 0.0
      %v1433 = vmax.f32 %v1051, 0.0
      %v1434 = vmax.f32 %v1056, 0.0
      %v1435 = vmax.f32 %v1059, 0.0
      %v1436 = vmax.f32 %v1064, 0.0
      %v1437 = vmax.f32 %v1067, 0.0
      %v1438 = vmax.f32 %v1072, 0.0
      %v1439 = vmax.f32 %v1075, 0.0
      %v1440 = vmax.f32 %v1080, 0.0
      %v1441 = vmax.f32 %v1083, 0.0
      %v1442 = vmax.f32 %v1088, 0.0
      %v1443 = vmax.f32 %v1091, 0.0
      %v1444 = vmax.f32 %v1096, 0.0
      %v1445 = vmax.f32 %v1099, 0.0
      %v1446 = vmax.f32 %v1104, 0.0
      %v1447 = vmax.f32 %v1107, 0.0
      %v1448 = vmax.f32 %v1112, 0.0
      %v1449 = vmax.f32 %v1115, 0.0
      %v1450 = vmax.f32 %v1120, 0.0
      %v1451 = vmax.f32 %v1123, 0.0
      %v1452 = vmax.f32 %v1128, 0.0
      %v1453 = vmax.f32 %v1131, 0.0
      %v1454 = vmax.f32 %v1136, 0.0
      %v1455 = vmax.f32 %v1139, 0.0
      %v1456 = vmax.f32 %v1144, 0.0
      %v1457 = vmax.f32 %v1147, 0.0
      %v1458 = vmax.f32 %v1152, 0.0
      %v1459 = vmax.f32 %v1155, 0.0
      %v1460 = vmax.f32 %v1160, 0.0
      %v1461 = vmax.f32 %v1163, 0.0
      %v1462 = vmax.f32 %v1168, 0.0
      %v1463 = vmax.f32 %v1171, 0.0
      %v1464 = vmax.f32 %v1176, 0.0
      %v1465 = vmax.f32 %v1179, 0.0
      %v1466 = vmax.f32 %v1184, 0.0
      %v1467 = vmax.f32 %v1187, 0.0
      %v1468 = vmax.f32 %v1192, 0.0
      %v1469 = vmax.f32 %v1195, 0.0
      %v1470 = vmax.f32 %v1200, 0.0
      %v1471 = vmax.f32 %v1203, 0.0
      %v1472 = vmax.f32 %v1208, 0.0
      %v1473 = vmax.f32 %v1211, 0.0
      %v1474 = vmax.f32 %v1216, 0.0
      %v1475 = vmax.f32 %v1219, 0.0
      %v1476 = vmax.f32 %v1224, 0.0
      %v1477 = vmax.f32 %v1227, 0.0
      %v1478 = vmax.f32 %v1232, 0.0
      %v1479 = vmax.f32 %v1235, 0.0
      %v1480 = vmax.f32 %v1240, 0.0
      %v1481 = vmax.f32 %v1243, 0.0
      %v1482 = vmax.f32 %v1248, 0.0
      %v1483 = vmax.f32 %v1251, 0.0
      %v1484 = vmax.f32 %v1256, 0.0
      %v1485 = vmax.f32 %v1259, 0.0
      %v1486 = vmax.f32 %v1264, 0.0
      %v1487 = vmax.f32 %v1267, 0.0
      %v1488 = vmax.f32 %v1272, 0.0
      %v1489 = vmax.f32 %v1275, 0.0
      %v1490 = vmax.f32 %v1280, 0.0
      %v1491 = vmax.f32 %v1283, 0.0
      %v1492 = vmax.f32 %v1288, 0.0
      %v1493 = vmax.f32 %v1291, 0.0
      %v1494 = vmax.f32 %v1296, 0.0
      %v1495 = vmax.f32 %v1299, 0.0
      %v1496 = vmax.f32 %v1304, 0.0
      %v1497 = vmax.f32 %v1307, 0.0
      %v1498 = vmax.f32 %v1312, 0.0
      %v1499 = vmax.f32 %v1315, 0.0
      %v1500 = vmax.f32 %v1320, 0.0
      %v1501 = vmax.f32 %v1323, 0.0
      %v1502 = vmax.f32 %v1328, 0.0
      %v1503 = vmax.f32 %v1331, 0.0
      %v1504 = vmax.f32 %v1336, 0.0
      %v1505 = vmax.f32 %v1339, 0.0
      %v1506 = vmax.f32 %v1344, 0.0
      %v1507 = vmax.f32 %v1347, 0.0
      %v1508 = vmax.f32 %v1352, 0.0
      %v1509 = vmax.f32 %v1355, 0.0
      %v1510 = vmax.f32 %v1360, 0.0
      %v1511 = vmax.f32 %v1363, 0.0
      %v1512 = vmax.f32 %v1368, 0.0
      %v1513 = vmax.f32 %v1371, 0.0
      %v1514 = vmax.f32 %v1376, 0.0
      %v1515 = vmax.f32 %v1379, 0.0
      %v1516 = vmax.f32 %v1384, 0.0
      %v1517 = vmax.f32 %v1387, 0.0
      %vm1518 = vcmask 64512
      %1519 = vst.msk [vmem:[%s172] sm:$0xff] %vm1518, %v1390
      %1520 = vst.msk [vmem:[%s172 + $0x8] sm:$0xff] %vm1518, %v1391
      %1521 = vst.msk [vmem:[%s172 + $0x10] sm:$0xff] %vm1518, %v1392
      %1522 = vst.msk [vmem:[%s172 + $0x18] sm:$0xff] %vm1518, %v1393
      %1523 = vst.msk [vmem:[%s172 + $0x20] sm:$0xff] %vm1518, %v1394
      %1524 = vst.msk [vmem:[%s172 + $0x28] sm:$0xff] %vm1518, %v1395
      %1525 = vst.msk [vmem:[%s172 + $0x30] sm:$0xff] %vm1518, %v1396
      %1526 = vst.msk [vmem:[%s172 + $0x38] sm:$0xff] %vm1518, %v1397
      %1527 = vst.msk [vmem:[%s172 + $0x40] sm:$0xff] %vm1518, %v1398
      %1528 = vst.msk [vmem:[%s172 + $0x48] sm:$0xff] %vm1518, %v1399
      %1529 = vst.msk [vmem:[%s172 + $0x50] sm:$0xff] %vm1518, %v1400
      %1530 = vst.msk [vmem:[%s172 + $0x58] sm:$0xff] %vm1518, %v1401
      %1531 = vst.msk [vmem:[%s172 + $0x60] sm:$0xff] %vm1518, %v1402
      %1532 = vst.msk [vmem:[%s172 + $0x68] sm:$0xff] %vm1518, %v1403
      %1533 = vst.msk [vmem:[%s172 + $0x70] sm:$0xff] %vm1518, %v1404
      %1534 = vst.msk [vmem:[%s172 + $0x78] sm:$0xff] %vm1518, %v1405
      %1535 = vst.msk [vmem:[%s172 + $0x80] sm:$0xff] %vm1518, %v1406
      %1536 = vst.msk [vmem:[%s172 + $0x88] sm:$0xff] %vm1518, %v1407
      %1537 = vst.msk [vmem:[%s172 + $0x90] sm:$0xff] %vm1518, %v1408
      %1538 = vst.msk [vmem:[%s172 + $0x98] sm:$0xff] %vm1518, %v1409
      %1539 = vst.msk [vmem:[%s172 + $0xa0] sm:$0xff] %vm1518, %v1410
      %1540 = vst.msk [vmem:[%s172 + $0xa8] sm:$0xff] %vm1518, %v1411
      %1541 = vst.msk [vmem:[%s172 + $0xb0] sm:$0xff] %vm1518, %v1412
      %1542 = vst.msk [vmem:[%s172 + $0xb8] sm:$0xff] %vm1518, %v1413
      %1543 = vst.msk [vmem:[%s172 + $0xc0] sm:$0xff] %vm1518, %v1414
      %1544 = vst.msk [vmem:[%s172 + $0xc8] sm:$0xff] %vm1518, %v1415
      %1545 = vst.msk [vmem:[%s172 + $0xd0] sm:$0xff] %vm1518, %v1416
      %1546 = vst.msk [vmem:[%s172 + $0xd8] sm:$0xff] %vm1518, %v1417
      %1547 = vst.msk [vmem:[%s172 + $0xe0] sm:$0xff] %vm1518, %v1418
      %1548 = vst.msk [vmem:[%s172 + $0xe8] sm:$0xff] %vm1518, %v1419
      %1549 = vst.msk [vmem:[%s172 + $0xf0] sm:$0xff] %vm1518, %v1420
      %1550 = vst.msk [vmem:[%s172 + $0xf8] sm:$0xff] %vm1518, %v1421
      %1551 = vst.msk [vmem:[%s172 + $0x100] sm:$0xff] %vm1518, %v1422
      %1552 = vst.msk [vmem:[%s172 + $0x108] sm:$0xff] %vm1518, %v1423
      %1553 = vst.msk [vmem:[%s172 + $0x110] sm:$0xff] %vm1518, %v1424
      %1554 = vst.msk [vmem:[%s172 + $0x118] sm:$0xff] %vm1518, %v1425
      %1555 = vst.msk [vmem:[%s172 + $0x120] sm:$0xff] %vm1518, %v1426
      %1556 = vst.msk [vmem:[%s172 + $0x128] sm:$0xff] %vm1518, %v1427
      %1557 = vst.msk [vmem:[%s172 + $0x130] sm:$0xff] %vm1518, %v1428
      %1558 = vst.msk [vmem:[%s172 + $0x138] sm:$0xff] %vm1518, %v1429
      %1559 = vst.msk [vmem:[%s172 + $0x140] sm:$0xff] %vm1518, %v1430
      %1560 = vst.msk [vmem:[%s172 + $0x148] sm:$0xff] %vm1518, %v1431
      %1561 = vst.msk [vmem:[%s172 + $0x150] sm:$0xff] %vm1518, %v1432
      %1562 = vst.msk [vmem:[%s172 + $0x158] sm:$0xff] %vm1518, %v1433
      %1563 = vst.msk [vmem:[%s172 + $0x160] sm:$0xff] %vm1518, %v1434
      %1564 = vst.msk [vmem:[%s172 + $0x168] sm:$0xff] %vm1518, %v1435
      %1565 = vst.msk [vmem:[%s172 + $0x170] sm:$0xff] %vm1518, %v1436
      %1566 = vst.msk [vmem:[%s172 + $0x178] sm:$0xff] %vm1518, %v1437
      %1567 = vst.msk [vmem:[%s172 + $0x180] sm:$0xff] %vm1518, %v1438
      %1568 = vst.msk [vmem:[%s172 + $0x188] sm:$0xff] %vm1518, %v1439
      %1569 = vst.msk [vmem:[%s172 + $0x190] sm:$0xff] %vm1518, %v1440
      %1570 = vst.msk [vmem:[%s172 + $0x198] sm:$0xff] %vm1518, %v1441
      %1571 = vst.msk [vmem:[%s172 + $0x1a0] sm:$0xff] %vm1518, %v1442
      %1572 = vst.msk [vmem:[%s172 + $0x1a8] sm:$0xff] %vm1518, %v1443
      %1573 = vst.msk [vmem:[%s172 + $0x1b0] sm:$0xff] %vm1518, %v1444
      %1574 = vst.msk [vmem:[%s172 + $0x1b8] sm:$0xff] %vm1518, %v1445
      %1575 = vst.msk [vmem:[%s172 + $0x1c0] sm:$0xff] %vm1518, %v1446
      %1576 = vst.msk [vmem:[%s172 + $0x1c8] sm:$0xff] %vm1518, %v1447
      %1577 = vst.msk [vmem:[%s172 + $0x1d0] sm:$0xff] %vm1518, %v1448
      %1578 = vst.msk [vmem:[%s172 + $0x1d8] sm:$0xff] %vm1518, %v1449
      %1579 = vst.msk [vmem:[%s172 + $0x1e0] sm:$0xff] %vm1518, %v1450
      %1580 = vst.msk [vmem:[%s172 + $0x1e8] sm:$0xff] %vm1518, %v1451
      %1581 = vst.msk [vmem:[%s172 + $0x1f0] sm:$0xff] %vm1518, %v1452
      %1582 = vst.msk [vmem:[%s172 + $0x1f8] sm:$0xff] %vm1518, %v1453
      %1583 = vst.msk [vmem:[%s172 + $0x200] sm:$0xff] %vm1518, %v1454
      %1584 = vst.msk [vmem:[%s172 + $0x208] sm:$0xff] %vm1518, %v1455
      %1585 = vst.msk [vmem:[%s172 + $0x210] sm:$0xff] %vm1518, %v1456
      %1586 = vst.msk [vmem:[%s172 + $0x218] sm:$0xff] %vm1518, %v1457
      %1587 = vst.msk [vmem:[%s172 + $0x220] sm:$0xff] %vm1518, %v1458
      %1588 = vst.msk [vmem:[%s172 + $0x228] sm:$0xff] %vm1518, %v1459
      %1589 = vst.msk [vmem:[%s172 + $0x230] sm:$0xff] %vm1518, %v1460
      %1590 = vst.msk [vmem:[%s172 + $0x238] sm:$0xff] %vm1518, %v1461
      %1591 = vst.msk [vmem:[%s172 + $0x240] sm:$0xff] %vm1518, %v1462
      %1592 = vst.msk [vmem:[%s172 + $0x248] sm:$0xff] %vm1518, %v1463
      %1593 = vst.msk [vmem:[%s172 + $0x250] sm:$0xff] %vm1518, %v1464
      %1594 = vst.msk [vmem:[%s172 + $0x258] sm:$0xff] %vm1518, %v1465
      %1595 = vst.msk [vmem:[%s172 + $0x260] sm:$0xff] %vm1518, %v1466
      %1596 = vst.msk [vmem:[%s172 + $0x268] sm:$0xff] %vm1518, %v1467
      %1597 = vst.msk [vmem:[%s172 + $0x270] sm:$0xff] %vm1518, %v1468
      %1598 = vst.msk [vmem:[%s172 + $0x278] sm:$0xff] %vm1518, %v1469
      %1599 = vst.msk [vmem:[%s172 + $0x280] sm:$0xff] %vm1518, %v1470
      %1600 = vst.msk [vmem:[%s172 + $0x288] sm:$0xff] %vm1518, %v1471
      %1601 = vst.msk [vmem:[%s172 + $0x290] sm:$0xff] %vm1518, %v1472
      %1602 = vst.msk [vmem:[%s172 + $0x298] sm:$0xff] %vm1518, %v1473
      %1603 = vst.msk [vmem:[%s172 + $0x2a0] sm:$0xff] %vm1518, %v1474
      %1604 = vst.msk [vmem:[%s172 + $0x2a8] sm:$0xff] %vm1518, %v1475
      %1605 = vst.msk [vmem:[%s172 + $0x2b0] sm:$0xff] %vm1518, %v1476
      %1606 = vst.msk [vmem:[%s172 + $0x2b8] sm:$0xff] %vm1518, %v1477
      %1607 = vst.msk [vmem:[%s172 + $0x2c0] sm:$0xff] %vm1518, %v1478
      %1608 = vst.msk [vmem:[%s172 + $0x2c8] sm:$0xff] %vm1518, %v1479
      %1609 = vst.msk [vmem:[%s172 + $0x2d0] sm:$0xff] %vm1518, %v1480
      %1610 = vst.msk [vmem:[%s172 + $0x2d8] sm:$0xff] %vm1518, %v1481
      %1611 = vst.msk [vmem:[%s172 + $0x2e0] sm:$0xff] %vm1518, %v1482
      %1612 = vst.msk [vmem:[%s172 + $0x2e8] sm:$0xff] %vm1518, %v1483
      %1613 = vst.msk [vmem:[%s172 + $0x2f0] sm:$0xff] %vm1518, %v1484
      %1614 = vst.msk [vmem:[%s172 + $0x2f8] sm:$0xff] %vm1518, %v1485
      %1615 = vst.msk [vmem:[%s172 + $0x300] sm:$0xff] %vm1518, %v1486
      %1616 = vst.msk [vmem:[%s172 + $0x308] sm:$0xff] %vm1518, %v1487
      %1617 = vst.msk [vmem:[%s172 + $0x310] sm:$0xff] %vm1518, %v1488
      %1618 = vst.msk [vmem:[%s172 + $0x318] sm:$0xff] %vm1518, %v1489
      %1619 = vst.msk [vmem:[%s172 + $0x320] sm:$0xff] %vm1518, %v1490
      %1620 = vst.msk [vmem:[%s172 + $0x328] sm:$0xff] %vm1518, %v1491
      %1621 = vst.msk [vmem:[%s172 + $0x330] sm:$0xff] %vm1518, %v1492
      %1622 = vst.msk [vmem:[%s172 + $0x338] sm:$0xff] %vm1518, %v1493
      %1623 = vst.msk [vmem:[%s172 + $0x340] sm:$0xff] %vm1518, %v1494
      %1624 = vst.msk [vmem:[%s172 + $0x348] sm:$0xff] %vm1518, %v1495
      %1625 = vst.msk [vmem:[%s172 + $0x350] sm:$0xff] %vm1518, %v1496
      %1626 = vst.msk [vmem:[%s172 + $0x358] sm:$0xff] %vm1518, %v1497
      %1627 = vst.msk [vmem:[%s172 + $0x360] sm:$0xff] %vm1518, %v1498
      %1628 = vst.msk [vmem:[%s172 + $0x368] sm:$0xff] %vm1518, %v1499
      %1629 = vst.msk [vmem:[%s172 + $0x370] sm:$0xff] %vm1518, %v1500
      %1630 = vst.msk [vmem:[%s172 + $0x378] sm:$0xff] %vm1518, %v1501
      %1631 = vst.msk [vmem:[%s172 + $0x380] sm:$0xff] %vm1518, %v1502
      %1632 = vst.msk [vmem:[%s172 + $0x388] sm:$0xff] %vm1518, %v1503
      %1633 = vst.msk [vmem:[%s172 + $0x390] sm:$0xff] %vm1518, %v1504
      %1634 = vst.msk [vmem:[%s172 + $0x398] sm:$0xff] %vm1518, %v1505
      %1635 = vst.msk [vmem:[%s172 + $0x3a0] sm:$0xff] %vm1518, %v1506
      %1636 = vst.msk [vmem:[%s172 + $0x3a8] sm:$0xff] %vm1518, %v1507
      %1637 = vst.msk [vmem:[%s172 + $0x3b0] sm:$0xff] %vm1518, %v1508
      %1638 = vst.msk [vmem:[%s172 + $0x3b8] sm:$0xff] %vm1518, %v1509
      %1639 = vst.msk [vmem:[%s172 + $0x3c0] sm:$0xff] %vm1518, %v1510
      %1640 = vst.msk [vmem:[%s172 + $0x3c8] sm:$0xff] %vm1518, %v1511
      %1641 = vst.msk [vmem:[%s172 + $0x3d0] sm:$0xff] %vm1518, %v1512
      %1642 = vst.msk [vmem:[%s172 + $0x3d8] sm:$0xff] %vm1518, %v1513
      %1643 = vst.msk [vmem:[%s172 + $0x3e0] sm:$0xff] %vm1518, %v1514
      %1644 = vst.msk [vmem:[%s172 + $0x3e8] sm:$0xff] %vm1518, %v1515
      %1645 = vst.msk [vmem:[%s172 + $0x3f0] sm:$0xff] %vm1518, %v1516
      %1646 = vst.msk [vmem:[%s172 + $0x3f8] sm:$0xff] %vm1518, %v1517
      %s1647 = smul.u32 128, %s14
      %p1648 = scmp.lt.s32.totalorder %s1647, 255
      %s1649 = scalar_select %p1648, %s1647, 255
      %s1650 = smul.addr %s1649, 8
      %s1651 = scalar_lea.vmem %s3, %s1650
      // Predicated region
      $region33: #{sst_forward.28} parent=31 // pred_check
        %p1652 = pneg %p100
      $region34: #{sst_forward.28} parent=31 // pred_check_branch
        %1654 = sbr.rel (%p1652) target = $region36
      $region35: #{sst_forward.28} parent=31 // pred_region
        %s1655 = smul.u32 128, %s14
      $region36: #{sst_forward.28} parent=31 // pred_fallthru
        _
    $region32: #{sst_forward.28} parent=5 // pred_fallthru
      _
    %p1656 = scmp.le.s32.totalorder 2, %s9
    // Predicated region
    $region37: #{sst_forward.28} parent=5 // pred_check
      %p1657 = pneg %p1656
    $region38: #{sst_forward.28} parent=5 // pred_check_branch
      %1659 = sbr.rel (%p1657) target = $region40
    $region39: #{sst_forward.28} parent=5 // pred_region
      %s1660 = ssub.s32 %s9, 2
      // Predicated region
      $region41: #{sst_forward.28} parent=39 // pred_check
        %p1661 = pneg %p106
      $region42: #{sst_forward.28} parent=39 // pred_check_branch
        %1663 = sbr.rel (%p1661) target = $region44
      $region43: #{sst_forward.28} parent=39 // pred_region
        %s1664 = smul.u32 128, %s15
        %p1665 = scmp.lt.s32.totalorder %s1664, 255
        %s1666 = scalar_select %p1665, %s1664, 255
        %s1667 = smul.addr %s1666, 8
        %s1668 = scalar_lea.vmem %s3, %s1667
      $region44: #{sst_forward.28} parent=39 // pred_fallthru
        _
    $region40: #{sst_forward.28} parent=5 // pred_fallthru
      _
  $region6: #{sst_forward.28} parent=0 // loop_footer
    %s13 = sadd.s32 1, %s9
  $region7: #{sst_forward.28} parent=0 // loop_footer_branch
    %8 = sbr.rel target = $region3
  $region8: #{sst_forward.28} parent=0 // loop_exit
    _

// kernel: sst_forward.29
$region0: #{sst_forward.29}
  #allocation0 [shape = 'u32[]', space=smem, size = 0x4, offset = 0x4, fixed_abs, tag = 'smem constant byte address 0x4 - core index']
  #allocation1 [shape = 'u32[144,128]{1,0:T(1,128)}', space=vmem, size = 0x12000, scoped, tag = 'internal scratch']
  %s0 = inlined_call_operand.vmem [shape: bf16[2048,72], index: 0, kind: input, shape index: {}]
  %s1 = inlined_call_operand.vmem [shape: bf16[72,8], index: 1, kind: input, shape index: {}]
  %s2 = inlined_call_operand.vmem [shape: f32[1,8], index: 2, kind: input, shape index: {}]
  %s3 = inlined_call_operand.vmem [shape: f32[2048,8], index: 3, kind: output, shape index: {}]
  %s4 = sld [smem:[#allocation0]]
  $region45: #{sst_forward.29} parent=0
    _
  %s6 = ssub.s32 1, %s4
  %s7 = scalar_select 0, %s6, %s4
  loop: start=0, step=1, limit=4
  $region2: #{sst_forward.29} parent=0 // loop_pre_header
    _
  $region3: #{sst_forward.29} parent=0 // loop_header
    %s9 = sphi 0, %s13
    %p10 = scmp.ge.s32.totalorder %s9, 4
    %s19 = sphi 0, %s21
    %s22 = sphi 0, %s19
    %s23 = sphi 0, %s22
    %s39 = sphi 0, %s23
    %s43 = sphi 0, %s43
    %s45 = sphi 0, %s43
    %s46 = sphi 0, %s45
    %s60 = sphi 0, %s46
    %s64 = sphi 0, %s64
    %s66 = sphi 0, %s64
    %s67 = sphi 0, %s66
    %s81 = sphi 0, %s67
    %s87 = sphi 0, %s89
    %s90 = sphi 0, %s87
    %s91 = sphi 0, %s90
    %s107 = sphi 0, %s91
  $region4: #{sst_forward.29} parent=0 // loop_header_branch
    %12 = sbr.rel (%p10) target = $region8
  $region5: #{sst_forward.29} parent=0 // loop_body
    %s14 = ssub.s32 %s9, 1
    %s15 = ssub.s32 %s9, 2
    %s16 = sadd.s32 %s9, 1
    %s17 = ssub.s32 %s9, %s16
    %p18 = scmp.eq.s32.totalorder %s17, 0
    %s20 = sadd.s32 %s19, 1
    %s21 = scalar_select %p18, %s19, %s20
    %p24 = pneg %p18
    %p25 = scmp.eq.s32.totalorder %s9, 1
    %p26 = por %p24, %p25
    %p27 = scmp.ne.s32.totalorder %s19, %s22
    %p28 = scmp.eq.s32.totalorder %s9, 0
    %p29 = por %p27, %p28
    %p30 = scmp.ne.s32.totalorder %s19, %s22
    %p31 = scmp.eq.s32.totalorder %s14, 1
    %p32 = por %p30, %p31
    %p33 = scmp.ne.s32.totalorder %s22, %s23
    %p34 = scmp.eq.s32.totalorder %s14, 0
    %p35 = por %p33, %p34
    %p36 = scmp.ne.s32.totalorder %s22, %s23
    %p37 = scmp.eq.s32.totalorder %s15, 1
    %p38 = por %p36, %p37
    %p40 = scmp.ne.s32.totalorder %s23, %s39
    %p41 = scmp.eq.s32.totalorder %s15, 0
    %p42 = por %p40, %p41
    %s44 = sadd.s32 %s43, 1
    %p47 = scmp.eq.s32.totalorder %s9, 1
    %p48 = scmp.ne.s32.totalorder %s43, %s45
    %p49 = scmp.eq.s32.totalorder %s9, 0
    %p50 = por %p48, %p49
    %p51 = scmp.ne.s32.totalorder %s43, %s45
    %p52 = scmp.eq.s32.totalorder %s14, 1
    %p53 = por %p51, %p52
    %p54 = scmp.ne.s32.totalorder %s45, %s46
    %p55 = scmp.eq.s32.totalorder %s14, 0
    %p56 = por %p54, %p55
    %p57 = scmp.ne.s32.totalorder %s45, %s46
    %p58 = scmp.eq.s32.totalorder %s15, 1
    %p59 = por %p57, %p58
    %p61 = scmp.ne.s32.totalorder %s46, %s60
    %p62 = scmp.eq.s32.totalorder %s15, 0
    %p63 = por %p61, %p62
    %s65 = sadd.s32 %s64, 1
    %p68 = scmp.eq.s32.totalorder %s9, 1
    %p69 = scmp.ne.s32.totalorder %s64, %s66
    %p70 = scmp.eq.s32.totalorder %s9, 0
    %p71 = por %p69, %p70
    %p72 = scmp.ne.s32.totalorder %s64, %s66
    %p73 = scmp.eq.s32.totalorder %s14, 1
    %p74 = por %p72, %p73
    %p75 = scmp.ne.s32.totalorder %s66, %s67
    %p76 = scmp.eq.s32.totalorder %s14, 0
    %p77 = por %p75, %p76
    %p78 = scmp.ne.s32.totalorder %s66, %s67
    %p79 = scmp.eq.s32.totalorder %s15, 1
    %p80 = por %p78, %p79
    %p82 = scmp.ne.s32.totalorder %s67, %s81
    %p83 = scmp.eq.s32.totalorder %s15, 0
    %p84 = por %p82, %p83
    %s85 = ssub.s32 %s9, %s16
    %p86 = scmp.eq.s32.totalorder %s85, 0
    %s88 = sadd.s32 %s87, 1
    %s89 = scalar_select %p86, %s87, %s88
    %p92 = pneg %p86
    %p93 = scmp.eq.s32.totalorder %s9, 1
    %p94 = por %p92, %p93
    %p95 = scmp.ne.s32.totalorder %s87, %s90
    %p96 = scmp.eq.s32.totalorder %s9, 0
    %p97 = por %p95, %p96
    %p98 = scmp.ne.s32.totalorder %s87, %s90
    %p99 = scmp.eq.s32.totalorder %s14, 1
    %p100 = por %p98, %p99
    %p101 = scmp.ne.s32.totalorder %s90, %s91
    %p102 = scmp.eq.s32.totalorder %s14, 0
    %p103 = por %p101, %p102
    %p104 = scmp.ne.s32.totalorder %s90, %s91
    %p105 = scmp.eq.s32.totalorder %s15, 1
    %p106 = por %p104, %p105
    %p108 = scmp.ne.s32.totalorder %s91, %s107
    %p109 = scmp.eq.s32.totalorder %s15, 0
    %p110 = por %p108, %p109
    %p111 = scmp.le.s32.totalorder 1, %s9
    %p112 = scmp.lt.s32.totalorder %s9, 3
    %p113 = pnand %p111, %p112
    %p114 = pneg %p113
    // Predicated region
    $region9: #{sst_forward.29} parent=5 // pred_check
      _
    $region10: #{sst_forward.29} parent=5 // pred_check_branch
      %116 = sbr.rel (%p113) target = $region12
    $region11: #{sst_forward.29} parent=5 // pred_region
      %s117 = ssub.s32 %s9, 1
      // Predicated region
      $region13: #{sst_forward.29} parent=11 // pred_check
        %p118 = pneg %p56
      $region14: #{sst_forward.29} parent=11 // pred_check_branch
        %120 = sbr.rel (%p118) target = $region16
      $region15: #{sst_forward.29} parent=11 // pred_region
        _
      $region16: #{sst_forward.29} parent=11 // pred_fallthru
        _
      // Predicated region
      $region17: #{sst_forward.29} parent=11 // pred_check
        %p121 = pneg %p77
      $region18: #{sst_forward.29} parent=11 // pred_check_branch
        %123 = sbr.rel (%p121) target = $region20
      $region19: #{sst_forward.29} parent=11 // pred_region
        _
      $region20: #{sst_forward.29} parent=11 // pred_fallthru
        _
    $region12: #{sst_forward.29} parent=5 // pred_fallthru
      _
    %p124 = scmp.lt.s32.totalorder %s9, 2
    // Predicated region
    $region21: #{sst_forward.29} parent=5 // pred_check
      %p125 = pneg %p124
    $region22: #{sst_forward.29} parent=5 // pred_check_branch
      %127 = sbr.rel (%p125) target = $region24
    $region23: #{sst_forward.29} parent=5 // pred_region
      // Predicated region
      $region25: #{sst_forward.29} parent=23 // pred_check
        %p128 = pneg %p29
      $region26: #{sst_forward.29} parent=23 // pred_check_branch
        %130 = sbr.rel (%p128) target = $region28
      $region27: #{sst_forward.29} parent=23 // pred_region
        %s131 = smul.u32 128, %s9
        %p132 = scmp.lt.s32.totalorder %s131, 255
        %s133 = scalar_select %p132, %s131, 255
        %s134 = smul.addr %s133, 4
        %s135 = scalar_lea.vmem %s0, %s134
        %s136 = smul.u32 128, %s9
      $region28: #{sst_forward.29} parent=23 // pred_fallthru
        _
    $region24: #{sst_forward.29} parent=5 // pred_fallthru
      _
    %p137 = scmp.le.s32.totalorder 1, %s9
    %p138 = scmp.lt.s32.totalorder %s9, 3
    %p139 = pnand %p137, %p138
    %p140 = pneg %p139
    // Predicated region
    $region29: #{sst_forward.29} parent=5 // pred_check
      _
    $region30: #{sst_forward.29} parent=5 // pred_check_branch
      %142 = sbr.rel (%p139) target = $region32
    $region31: #{sst_forward.29} parent=5 // pred_region
      %s143 = ssub.s32 %s9, 1
      %s144 = smul.u32 128, %s14
      %p145 = scmp.lt.s32.totalorder %s144, 255
      %s146 = scalar_select %p145, %s144, 255
      %s147 = smul.addr %s146, 4
      %s148 = scalar_lea.vmem %s0, %s147
      %p149 = pneg %p35
      %p150 = pneg %p32
      %p151 = pneg %p56
      %p152 = pneg %p53
      %p153 = pneg %p77
      %p154 = pneg %p74
      %p155 = pneg %p103
      %p156 = pneg %p100
      %s157 = smul.u32 128, %s14
      %p158 = scmp.lt.s32.totalorder %s157, 255
      %s159 = scalar_select %p158, %s157, 255
      %s160 = smul.addr %s159, 8
      %s161 = scalar_lea.vmem %s3, %s160
      %s162 = smul.u32 128, %s14
      %p163 = scmp.lt.s32.totalorder %s162, 255
      %s164 = scalar_select %p163, %s162, 255
      %s165 = smul.addr %s164, 4
      %s166 = scalar_lea.vmem %s0, %s165
      %s167 = smul.u32 128, %s14
      %s168 = smul.u32 128, %s14
      %p169 = scmp.lt.s32.totalorder %s168, 255
      %s170 = scalar_select %p169, %s168, 255
      %s171 = smul.addr %s170, 8
      %s172 = scalar_lea.vmem %s3, %s171
      %s173 = smul.u32 128, %s14
      %v175 = vld [vmem:[%s166] sm:$0xf]
      %v176 = vld [vmem:[%s166 + $0x4] sm:$0xf]
      %v177 = vld [vmem:[%s166 + $0x8] sm:$0xf]
      %v178 = vld [vmem:[%s166 + $0xc] sm:$0xf]
      %v179 = vld [vmem:[%s166 + $0x10] sm:$0xf]
      %v180 = vld [vmem:[%s166 + $0x14] sm:$0xf]
      %v181 = vld [vmem:[%s166 + $0x18] sm:$0xf]
      %v182 = vld [vmem:[%s166 + $0x1c] sm:$0xf]
      %v183 = vld [vmem:[%s166 + $0x20] sm:$0xf]
      %v184 = vld [vmem:[%s166 + $0x24] sm:$0xf]
      %v185 = vld [vmem:[%s166 + $0x28] sm:$0xf]
      %v186 = vld [vmem:[%s166 + $0x2c] sm:$0xf]
      %v187 = vld [vmem:[%s166 + $0x30] sm:$0xf]
      %v188 = vld [vmem:[%s166 + $0x34] sm:$0xf]
      %v189 = vld [vmem:[%s166 + $0x38] sm:$0xf]
      %v190 = vld [vmem:[%s166 + $0x3c] sm:$0xf]
      %v191 = vld [vmem:[%s166 + $0x40] sm:$0xf]
      %v192 = vld [vmem:[%s166 + $0x44] sm:$0xf]
      %v193 = vld [vmem:[%s166 + $0x48] sm:$0xf]
      %v194 = vld [vmem:[%s166 + $0x4c] sm:$0xf]
      %v195 = vld [vmem:[%s166 + $0x50] sm:$0xf]
      %v196 = vld [vmem:[%s166 + $0x54] sm:$0xf]
      %v197 = vld [vmem:[%s166 + $0x58] sm:$0xf]
      %v198 = vld [vmem:[%s166 + $0x5c] sm:$0xf]
      %v199 = vld [vmem:[%s166 + $0x60] sm:$0xf]
      %v200 = vld [vmem:[%s166 + $0x64] sm:$0xf]
      %v201 = vld [vmem:[%s166 + $0x68] sm:$0xf]
      %v202 = vld [vmem:[%s166 + $0x6c] sm:$0xf]
      %v203 = vld [vmem:[%s166 + $0x70] sm:$0xf]
      %v204 = vld [vmem:[%s166 + $0x74] sm:$0xf]
      %v205 = vld [vmem:[%s166 + $0x78] sm:$0xf]
      %v206 = vld [vmem:[%s166 + $0x7c] sm:$0xf]
      %v207 = vld [vmem:[%s166 + $0x80] sm:$0xf]
      %v208 = vld [vmem:[%s166 + $0x84] sm:$0xf]
      %v209 = vld [vmem:[%s166 + $0x88] sm:$0xf]
      %v210 = vld [vmem:[%s166 + $0x8c] sm:$0xf]
      %v211 = vld [vmem:[%s166 + $0x90] sm:$0xf]
      %v212 = vld [vmem:[%s166 + $0x94] sm:$0xf]
      %v213 = vld [vmem:[%s166 + $0x98] sm:$0xf]
      %v214 = vld [vmem:[%s166 + $0x9c] sm:$0xf]
      %v215 = vld [vmem:[%s166 + $0xa0] sm:$0xf]
      %v216 = vld [vmem:[%s166 + $0xa4] sm:$0xf]
      %v217 = vld [vmem:[%s166 + $0xa8] sm:$0xf]
      %v218 = vld [vmem:[%s166 + $0xac] sm:$0xf]
      %v219 = vld [vmem:[%s166 + $0xb0] sm:$0xf]
      %v220 = vld [vmem:[%s166 + $0xb4] sm:$0xf]
      %v221 = vld [vmem:[%s166 + $0xb8] sm:$0xf]
      %v222 = vld [vmem:[%s166 + $0xbc] sm:$0xf]
      %v223 = vld [vmem:[%s166 + $0xc0] sm:$0xf]
      %v224 = vld [vmem:[%s166 + $0xc4] sm:$0xf]
      %v225 = vld [vmem:[%s166 + $0xc8] sm:$0xf]
      %v226 = vld [vmem:[%s166 + $0xcc] sm:$0xf]
      %v227 = vld [vmem:[%s166 + $0xd0] sm:$0xf]
      %v228 = vld [vmem:[%s166 + $0xd4] sm:$0xf]
      %v229 = vld [vmem:[%s166 + $0xd8] sm:$0xf]
      %v230 = vld [vmem:[%s166 + $0xdc] sm:$0xf]
      %v231 = vld [vmem:[%s166 + $0xe0] sm:$0xf]
      %v232 = vld [vmem:[%s166 + $0xe4] sm:$0xf]
      %v233 = vld [vmem:[%s166 + $0xe8] sm:$0xf]
      %v234 = vld [vmem:[%s166 + $0xec] sm:$0xf]
      %v235 = vld [vmem:[%s166 + $0xf0] sm:$0xf]
      %v236 = vld [vmem:[%s166 + $0xf4] sm:$0xf]
      %v237 = vld [vmem:[%s166 + $0xf8] sm:$0xf]
      %v238 = vld [vmem:[%s166 + $0xfc] sm:$0xf]
      %v239 = vld [vmem:[%s166 + $0x100] sm:$0xf]
      %v240 = vld [vmem:[%s166 + $0x104] sm:$0xf]
      %v241 = vld [vmem:[%s166 + $0x108] sm:$0xf]
      %v242 = vld [vmem:[%s166 + $0x10c] sm:$0xf]
      %v243 = vld [vmem:[%s166 + $0x110] sm:$0xf]
      %v244 = vld [vmem:[%s166 + $0x114] sm:$0xf]
      %v245 = vld [vmem:[%s166 + $0x118] sm:$0xf]
      %v246 = vld [vmem:[%s166 + $0x11c] sm:$0xf]
      %v247 = vld [vmem:[%s166 + $0x120] sm:$0xf]
      %v248 = vld [vmem:[%s166 + $0x124] sm:$0xf]
      %v249 = vld [vmem:[%s166 + $0x128] sm:$0xf]
      %v250 = vld [vmem:[%s166 + $0x12c] sm:$0xf]
      %v251 = vld [vmem:[%s166 + $0x130] sm:$0xf]
      %v252 = vld [vmem:[%s166 + $0x134] sm:$0xf]
      %v253 = vld [vmem:[%s166 + $0x138] sm:$0xf]
      %v254 = vld [vmem:[%s166 + $0x13c] sm:$0xf]
      %v255 = vld [vmem:[%s166 + $0x140] sm:$0xf]
      %v256 = vld [vmem:[%s166 + $0x144] sm:$0xf]
      %v257 = vld [vmem:[%s166 + $0x148] sm:$0xf]
      %v258 = vld [vmem:[%s166 + $0x14c] sm:$0xf]
      %v259 = vld [vmem:[%s166 + $0x150] sm:$0xf]
      %v260 = vld [vmem:[%s166 + $0x154] sm:$0xf]
      %v261 = vld [vmem:[%s166 + $0x158] sm:$0xf]
      %v262 = vld [vmem:[%s166 + $0x15c] sm:$0xf]
      %v263 = vld [vmem:[%s166 + $0x160] sm:$0xf]
      %v264 = vld [vmem:[%s166 + $0x164] sm:$0xf]
      %v265 = vld [vmem:[%s166 + $0x168] sm:$0xf]
      %v266 = vld [vmem:[%s166 + $0x16c] sm:$0xf]
      %v267 = vld [vmem:[%s166 + $0x170] sm:$0xf]
      %v268 = vld [vmem:[%s166 + $0x174] sm:$0xf]
      %v269 = vld [vmem:[%s166 + $0x178] sm:$0xf]
      %v270 = vld [vmem:[%s166 + $0x17c] sm:$0xf]
      %v271 = vld [vmem:[%s166 + $0x180] sm:$0xf]
      %v272 = vld [vmem:[%s166 + $0x184] sm:$0xf]
      %v273 = vld [vmem:[%s166 + $0x188] sm:$0xf]
      %v274 = vld [vmem:[%s166 + $0x18c] sm:$0xf]
      %v275 = vld [vmem:[%s166 + $0x190] sm:$0xf]
      %v276 = vld [vmem:[%s166 + $0x194] sm:$0xf]
      %v277 = vld [vmem:[%s166 + $0x198] sm:$0xf]
      %v278 = vld [vmem:[%s166 + $0x19c] sm:$0xf]
      %v279 = vld [vmem:[%s166 + $0x1a0] sm:$0xf]
      %v280 = vld [vmem:[%s166 + $0x1a4] sm:$0xf]
      %v281 = vld [vmem:[%s166 + $0x1a8] sm:$0xf]
      %v282 = vld [vmem:[%s166 + $0x1ac] sm:$0xf]
      %v283 = vld [vmem:[%s166 + $0x1b0] sm:$0xf]
      %v284 = vld [vmem:[%s166 + $0x1b4] sm:$0xf]
      %v285 = vld [vmem:[%s166 + $0x1b8] sm:$0xf]
      %v286 = vld [vmem:[%s166 + $0x1bc] sm:$0xf]
      %v287 = vld [vmem:[%s166 + $0x1c0] sm:$0xf]
      %v288 = vld [vmem:[%s166 + $0x1c4] sm:$0xf]
      %v289 = vld [vmem:[%s166 + $0x1c8] sm:$0xf]
      %v290 = vld [vmem:[%s166 + $0x1cc] sm:$0xf]
      %v291 = vld [vmem:[%s166 + $0x1d0] sm:$0xf]
      %v292 = vld [vmem:[%s166 + $0x1d4] sm:$0xf]
      %v293 = vld [vmem:[%s166 + $0x1d8] sm:$0xf]
      %v294 = vld [vmem:[%s166 + $0x1dc] sm:$0xf]
      %v295 = vld [vmem:[%s166 + $0x1e0] sm:$0xf]
      %v296 = vld [vmem:[%s166 + $0x1e4] sm:$0xf]
      %v297 = vld [vmem:[%s166 + $0x1e8] sm:$0xf]
      %v298 = vld [vmem:[%s166 + $0x1ec] sm:$0xf]
      %v299 = vld [vmem:[%s166 + $0x1f0] sm:$0xf]
      %v300 = vld [vmem:[%s166 + $0x1f4] sm:$0xf]
      %v301 = vld [vmem:[%s166 + $0x1f8] sm:$0xf]
      %v302 = vld [vmem:[%s166 + $0x1fc] sm:$0xf]
      %v303 = vld [vmem:[%s1] sm:$0xf]
      %v304 = vld [vmem:[%s1 + $0x4] sm:$0xf]
      %v305 = vld [vmem:[%s1 + $0x8] sm:$0xf]
      %v306 = vld [vmem:[%s1 + $0xc] sm:$0xf]
      %v307 = vld [vmem:[%s1 + $0x10] sm:$0xf]
      %v308 = vld [vmem:[%s1 + $0x14] sm:$0xf]
      %v309 = vld [vmem:[%s1 + $0x18] sm:$0xf]
      %v310 = vld [vmem:[%s1 + $0x1c] sm:$0xf]
      %v311 = vld [vmem:[%s1 + $0x20] sm:$0xf]
      %v312 = vld [vmem:[%s2] sm:$0x1]
      %v314 = vlaneseq
      %v315 = vshrl.u32 %v314, 7
      %v316 = vsub.s32 0, %v315
      %v317 = vrot.slane %v312, %v316
      %v447 = vunpack.c.l.b16 %v175
      %v448 = vunpack.c.l.b16 %v176
      %v449 = vunpack.c.l.b16 %v177
      %v450 = vunpack.c.l.b16 %v178
      %v451 = vunpack.c.l.b16 %v179
      %v452 = vunpack.c.l.b16 %v180
      %v453 = vunpack.c.l.b16 %v181
      %v454 = vunpack.c.l.b16 %v182
      %v455 = vunpack.c.l.b16 %v183
      %v456 = vunpack.c.l.b16 %v184
      %v457 = vunpack.c.l.b16 %v185
      %v458 = vunpack.c.l.b16 %v186
      %v459 = vunpack.c.l.b16 %v187
      %v460 = vunpack.c.l.b16 %v188
      %v461 = vunpack.c.l.b16 %v189
      %v462 = vunpack.c.l.b16 %v190
      %v463 = vunpack.c.l.b16 %v191
      %v464 = vunpack.c.l.b16 %v192
      %v465 = vunpack.c.l.b16 %v193
      %v466 = vunpack.c.l.b16 %v194
      %v467 = vunpack.c.l.b16 %v195
      %v468 = vunpack.c.l.b16 %v196
      %v469 = vunpack.c.l.b16 %v197
      %v470 = vunpack.c.l.b16 %v198
      %v471 = vunpack.c.l.b16 %v199
      %v472 = vunpack.c.l.b16 %v200
      %v473 = vunpack.c.l.b16 %v201
      %v474 = vunpack.c.l.b16 %v202
      %v475 = vunpack.c.l.b16 %v203
      %v476 = vunpack.c.l.b16 %v204
      %v477 = vunpack.c.l.b16 %v205
      %v478 = vunpack.c.l.b16 %v206
      %v479 = vunpack.c.l.b16 %v207
      %v480 = vunpack.c.l.b16 %v208
      %v481 = vunpack.c.l.b16 %v209
      %v482 = vunpack.c.l.b16 %v210
      %v483 = vunpack.c.l.b16 %v211
      %v484 = vunpack.c.l.b16 %v212
      %v485 = vunpack.c.l.b16 %v213
      %v486 = vunpack.c.l.b16 %v214
      %v487 = vunpack.c.l.b16 %v215
      %v488 = vunpack.c.l.b16 %v216
      %v489 = vunpack.c.l.b16 %v217
      %v490 = vunpack.c.l.b16 %v218
      %v491 = vunpack.c.l.b16 %v219
      %v492 = vunpack.c.l.b16 %v220
      %v493 = vunpack.c.l.b16 %v221
      %v494 = vunpack.c.l.b16 %v222
      %v495 = vunpack.c.l.b16 %v223
      %v496 = vunpack.c.l.b16 %v224
      %v497 = vunpack.c.l.b16 %v225
      %v498 = vunpack.c.l.b16 %v226
      %v499 = vunpack.c.l.b16 %v227
      %v500 = vunpack.c.l.b16 %v228
      %v501 = vunpack.c.l.b16 %v229
      %v502 = vunpack.c.l.b16 %v230
      %v503 = vunpack.c.l.b16 %v231
      %v504 = vunpack.c.l.b16 %v232
      %v505 = vunpack.c.l.b16 %v233
      %v506 = vunpack.c.l.b16 %v234
      %v507 = vunpack.c.l.b16 %v235
      %v508 = vunpack.c.l.b16 %v236
      %v509 = vunpack.c.l.b16 %v237
      %v510 = vunpack.c.l.b16 %v238
      %v511 = vunpack.c.l.b16 %v239
      %v512 = vunpack.c.l.b16 %v240
      %v513 = vunpack.c.l.b16 %v241
      %v514 = vunpack.c.l.b16 %v242
      %v515 = vunpack.c.l.b16 %v243
      %v516 = vunpack.c.l.b16 %v244
      %v517 = vunpack.c.l.b16 %v245
      %v518 = vunpack.c.l.b16 %v246
      %v519 = vunpack.c.l.b16 %v247
      %v520 = vunpack.c.l.b16 %v248
      %v521 = vunpack.c.l.b16 %v249
      %v522 = vunpack.c.l.b16 %v250
      %v523 = vunpack.c.l.b16 %v251
      %v524 = vunpack.c.l.b16 %v252
      %v525 = vunpack.c.l.b16 %v253
      %v526 = vunpack.c.l.b16 %v254
      %v527 = vunpack.c.l.b16 %v255
      %v528 = vunpack.c.l.b16 %v256
      %v529 = vunpack.c.l.b16 %v257
      %v530 = vunpack.c.l.b16 %v258
      %v531 = vunpack.c.l.b16 %v259
      %v532 = vunpack.c.l.b16 %v260
      %v533 = vunpack.c.l.b16 %v261
      %v534 = vunpack.c.l.b16 %v262
      %v535 = vunpack.c.l.b16 %v263
      %v536 = vunpack.c.l.b16 %v264
      %v537 = vunpack.c.l.b16 %v265
      %v538 = vunpack.c.l.b16 %v266
      %v539 = vunpack.c.l.b16 %v267
      %v540 = vunpack.c.l.b16 %v268
      %v541 = vunpack.c.l.b16 %v269
      %v542 = vunpack.c.l.b16 %v270
      %v543 = vunpack.c.l.b16 %v271
      %v544 = vunpack.c.l.b16 %v272
      %v545 = vunpack.c.l.b16 %v273
      %v546 = vunpack.c.l.b16 %v274
      %v547 = vunpack.c.l.b16 %v275
      %v548 = vunpack.c.l.b16 %v276
      %v549 = vunpack.c.l.b16 %v277
      %v550 = vunpack.c.l.b16 %v278
      %v551 = vunpack.c.l.b16 %v279
      %v552 = vunpack.c.l.b16 %v280
      %v553 = vunpack.c.l.b16 %v281
      %v554 = vunpack.c.l.b16 %v282
      %v555 = vunpack.c.l.b16 %v283
      %v556 = vunpack.c.l.b16 %v284
      %v557 = vunpack.c.l.b16 %v285
      %v558 = vunpack.c.l.b16 %v286
      %v559 = vunpack.c.l.b16 %v287
      %v560 = vunpack.c.l.b16 %v288
      %v561 = vunpack.c.l.b16 %v289
      %v562 = vunpack.c.l.b16 %v290
      %v563 = vunpack.c.l.b16 %v291
      %v564 = vunpack.c.l.b16 %v292
      %v565 = vunpack.c.l.b16 %v293
      %v566 = vunpack.c.l.b16 %v294
      %v567 = vunpack.c.l.b16 %v295
      %v568 = vunpack.c.l.b16 %v296
      %v569 = vunpack.c.l.b16 %v297
      %v570 = vunpack.c.l.b16 %v298
      %v571 = vunpack.c.l.b16 %v299
      %v572 = vunpack.c.l.b16 %v300
      %v573 = vunpack.c.l.b16 %v301
      %v574 = vunpack.c.l.b16 %v302
      %v575 = vpack.c.b16 %v448, %v447
      %v576 = vpack.c.b16 %v450, %v449
      %v577 = vpack.c.b16 %v452, %v451
      %v578 = vpack.c.b16 %v454, %v453
      %v579 = vpack.c.b16 %v456, %v455
      %v580 = vpack.c.b16 %v458, %v457
      %v581 = vpack.c.b16 %v460, %v459
      %v582 = vpack.c.b16 %v462, %v461
      %v583 = vpack.c.b16 %v464, %v463
      %v584 = vpack.c.b16 %v466, %v465
      %v585 = vpack.c.b16 %v468, %v467
      %v586 = vpack.c.b16 %v470, %v469
      %v587 = vpack.c.b16 %v472, %v471
      %v588 = vpack.c.b16 %v474, %v473
      %v589 = vpack.c.b16 %v476, %v475
      %v590 = vpack.c.b16 %v478, %v477
      %v591 = vpack.c.b16 %v480, %v479
      %v592 = vpack.c.b16 %v482, %v481
      %v593 = vpack.c.b16 %v484, %v483
      %v594 = vpack.c.b16 %v486, %v485
      %v595 = vpack.c.b16 %v488, %v487
      %v596 = vpack.c.b16 %v490, %v489
      %v597 = vpack.c.b16 %v492, %v491
      %v598 = vpack.c.b16 %v494, %v493
      %v599 = vpack.c.b16 %v496, %v495
      %v600 = vpack.c.b16 %v498, %v497
      %v601 = vpack.c.b16 %v500, %v499
      %v602 = vpack.c.b16 %v502, %v501
      %v603 = vpack.c.b16 %v504, %v503
      %v604 = vpack.c.b16 %v506, %v505
      %v605 = vpack.c.b16 %v508, %v507
      %v606 = vpack.c.b16 %v510, %v509
      %v607 = vpack.c.b16 %v512, %v511
      %v608 = vpack.c.b16 %v514, %v513
      %v609 = vpack.c.b16 %v516, %v515
      %v610 = vpack.c.b16 %v518, %v517
      %v611 = vpack.c.b16 %v520, %v519
      %v612 = vpack.c.b16 %v522, %v521
      %v613 = vpack.c.b16 %v524, %v523
      %v614 = vpack.c.b16 %v526, %v525
      %v615 = vpack.c.b16 %v528, %v527
      %v616 = vpack.c.b16 %v530, %v529
      %v617 = vpack.c.b16 %v532, %v531
      %v618 = vpack.c.b16 %v534, %v533
      %v619 = vpack.c.b16 %v536, %v535
      %v620 = vpack.c.b16 %v538, %v537
      %v621 = vpack.c.b16 %v540, %v539
      %v622 = vpack.c.b16 %v542, %v541
      %v623 = vpack.c.b16 %v544, %v543
      %v624 = vpack.c.b16 %v546, %v545
      %v625 = vpack.c.b16 %v548, %v547
      %v626 = vpack.c.b16 %v550, %v549
      %v627 = vpack.c.b16 %v552, %v551
      %v628 = vpack.c.b16 %v554, %v553
      %v629 = vpack.c.b16 %v556, %v555
      %v630 = vpack.c.b16 %v558, %v557
      %v631 = vpack.c.b16 %v560, %v559
      %v632 = vpack.c.b16 %v562, %v561
      %v633 = vpack.c.b16 %v564, %v563
      %v634 = vpack.c.b16 %v566, %v565
      %v635 = vpack.c.b16 %v568, %v567
      %v636 = vpack.c.b16 %v570, %v569
      %v637 = vpack.c.b16 %v572, %v571
      %v638 = vpack.c.b16 %v574, %v573
      %v648 = vunpack.c.l.b16 %v303
      %v649 = vunpack.c.l.b16 %v304
      %v650 = vunpack.c.l.b16 %v305
      %v651 = vunpack.c.l.b16 %v306
      %v652 = vunpack.c.l.b16 %v307
      %v653 = vunpack.c.l.b16 %v308
      %v654 = vunpack.c.l.b16 %v309
      %v655 = vunpack.c.l.b16 %v310
      %v656 = vunpack.c.l.b16 %v311
      %v657 = vpack.c.b16 %v649, %v648
      %v658 = vpack.c.b16 %v651, %v650
      %v659 = vpack.c.b16 %v653, %v652
      %v660 = vpack.c.b16 %v655, %v654
      %v661 = vpack.c.b16 %v656, %v656
      %vm666 = vcmask 588800
      %v668 = vsel %vm666, %v575, 0
      %v671 = vsel %vm666, %v576, 0
      %v674 = vsel %vm666, %v577, 0
      %v677 = vsel %vm666, %v578, 0
      %v680 = vsel %vm666, %v579, 0
      %v683 = vsel %vm666, %v580, 0
      %v686 = vsel %vm666, %v581, 0
      %v689 = vsel %vm666, %v582, 0
      %v692 = vsel %vm666, %v583, 0
      %v695 = vsel %vm666, %v584, 0
      %v698 = vsel %vm666, %v585, 0
      %v701 = vsel %vm666, %v586, 0
      %v704 = vsel %vm666, %v587, 0
      %v707 = vsel %vm666, %v588, 0
      %v710 = vsel %vm666, %v589, 0
      %v713 = vsel %vm666, %v590, 0
      %v716 = vsel %vm666, %v591, 0
      %v719 = vsel %vm666, %v592, 0
      %v722 = vsel %vm666, %v593, 0
      %v725 = vsel %vm666, %v594, 0
      %v728 = vsel %vm666, %v595, 0
      %v731 = vsel %vm666, %v596, 0
      %v734 = vsel %vm666, %v597, 0
      %v737 = vsel %vm666, %v598, 0
      %v740 = vsel %vm666, %v599, 0
      %v743 = vsel %vm666, %v600, 0
      %v746 = vsel %vm666, %v601, 0
      %v749 = vsel %vm666, %v602, 0
      %v752 = vsel %vm666, %v603, 0
      %v755 = vsel %vm666, %v604, 0
      %v758 = vsel %vm666, %v605, 0
      %v761 = vsel %vm666, %v606, 0
      %v764 = vsel %vm666, %v607, 0
      %v767 = vsel %vm666, %v608, 0
      %v770 = vsel %vm666, %v609, 0
      %v773 = vsel %vm666, %v610, 0
      %v776 = vsel %vm666, %v611, 0
      %v779 = vsel %vm666, %v612, 0
      %v782 = vsel %vm666, %v613, 0
      %v785 = vsel %vm666, %v614, 0
      %v788 = vsel %vm666, %v615, 0
      %v791 = vsel %vm666, %v616, 0
      %v794 = vsel %vm666, %v617, 0
      %v797 = vsel %vm666, %v618, 0
      %v800 = vsel %vm666, %v619, 0
      %v803 = vsel %vm666, %v620, 0
      %v806 = vsel %vm666, %v621, 0
      %v809 = vsel %vm666, %v622, 0
      %v812 = vsel %vm666, %v623, 0
      %v815 = vsel %vm666, %v624, 0
      %v818 = vsel %vm666, %v625, 0
      %v821 = vsel %vm666, %v626, 0
      %v824 = vsel %vm666, %v627, 0
      %v827 = vsel %vm666, %v628, 0
      %v830 = vsel %vm666, %v629, 0
      %v833 = vsel %vm666, %v630, 0
      %v836 = vsel %vm666, %v631, 0
      %v839 = vsel %vm666, %v632, 0
      %v842 = vsel %vm666, %v633, 0
      %v845 = vsel %vm666, %v634, 0
      %v848 = vsel %vm666, %v635, 0
      %v851 = vsel %vm666, %v636, 0
      %v854 = vsel %vm666, %v637, 0
      %v857 = vsel %vm666, %v638, 0
      %vm859 = vcmask 1043456
      %v861 = vsel %vm859, %v661, 0
      %863 = vmatprep.subr.bf16.mxu0 0
      %864 = vmatpush1.bf16.msra.mxu0 0
      %865 = vmatprep.subr.bf16.mxu0 0
      %866 = vmatpush1.bf16.msra.mxu0 0
      %867 = vmatprep.subr.bf16.mxu0 0
      %868 = vmatpush1.bf16.msra.mxu0 0
      %869 = vmatprep.subr.bf16.mxu0 0
      %870 = vmatpush1.bf16.msra.mxu0 %v861
      %871 = vmatprep.subr.bf16.mxu0 0
      %872 = vmatpush1.bf16.msra.mxu0 %v660
      %873 = vmatprep.subr.bf16.mxu0 0
      %874 = vmatpush1.bf16.msra.mxu0 %v659
      %875 = vmatprep.subr.bf16.mxu0 0
      %876 = vmatpush1.bf16.msra.mxu0 %v658
      %877 = vmatprep.subr.bf16.mxu0 0
      %878 = vmatpush1.bf16.msra.mxu0 %v657
      %879 = vmatprep.subr.bf16.mxu0 0
      %880 = vmatpush2.bf16.msra.mxu0 0
      %881 = vmatprep.subr.bf16.mxu0 0
      %882 = vmatpush2.bf16.msra.mxu0 0
      %883 = vmatprep.subr.bf16.mxu0 0
      %884 = vmatpush2.bf16.msra.mxu0 0
      %885 = vmatprep.subr.bf16.mxu0 0
      %886 = vmatpush2.bf16.msra.mxu0 0
      %887 = vmatprep.subr.bf16.mxu0 0
      %888 = vmatpush2.bf16.msra.mxu0 0
      %889 = vmatprep.subr.bf16.mxu0 0
      %890 = vmatpush2.bf16.msra.mxu0 0
      %891 = vmatprep.subr.bf16.mxu0 0
      %892 = vmatpush2.bf16.msra.mxu0 0
      %893 = vmatprep.subr.bf16.mxu0 0
      %894 = vmatpush2.bf16.msra.mxu0 0
      %895 = vmatprep.mubr.bf16.mxu0 0
      %896 = vmatmul.mubr.bf16.gmra.mxu0 %v668
      %v897 = vpop.f32.mrf.mxu0
      %v898 = vadd.f32 %v317, %v897
      %v899 = vpop.f32.mrf.mxu0
      %v900 = vpop.f32.mrf.mxu0
      %v901 = vadd.f32 %v317, %v900
      %v902 = vpop.f32.mrf.mxu0
      %903 = vmatprep.mubr.bf16.mxu0 0
      %904 = vmatmul.mubr.bf16.gmra.mxu0 %v671
      %v905 = vpop.f32.mrf.mxu0
      %v906 = vadd.f32 %v317, %v905
      %v907 = vpop.f32.mrf.mxu0
      %v908 = vpop.f32.mrf.mxu0
      %v909 = vadd.f32 %v317, %v908
      %v910 = vpop.f32.mrf.mxu0
      %911 = vmatprep.mubr.bf16.mxu0 0
      %912 = vmatmul.mubr.bf16.gmra.mxu0 %v674
      %v913 = vpop.f32.mrf.mxu0
      %v914 = vadd.f32 %v317, %v913
      %v915 = vpop.f32.mrf.mxu0
      %v916 = vpop.f32.mrf.mxu0
      %v917 = vadd.f32 %v317, %v916
      %v918 = vpop.f32.mrf.mxu0
      %919 = vmatprep.mubr.bf16.mxu0 0
      %920 = vmatmul.mubr.bf16.gmra.mxu0 %v677
      %v921 = vpop.f32.mrf.mxu0
      %v922 = vadd.f32 %v317, %v921
      %v923 = vpop.f32.mrf.mxu0
      %v924 = vpop.f32.mrf.mxu0
      %v925 = vadd.f32 %v317, %v924
      %v926 = vpop.f32.mrf.mxu0
      %927 = vmatprep.mubr.bf16.mxu0 0
      %928 = vmatmul.mubr.bf16.gmra.mxu0 %v680
      %v929 = vpop.f32.mrf.mxu0
      %v930 = vadd.f32 %v317, %v929
      %v931 = vpop.f32.mrf.mxu0
      %v932 = vpop.f32.mrf.mxu0
      %v933 = vadd.f32 %v317, %v932
      %v934 = vpop.f32.mrf.mxu0
      %935 = vmatprep.mubr.bf16.mxu0 0
      %936 = vmatmul.mubr.bf16.gmra.mxu0 %v683
      %v937 = vpop.f32.mrf.mxu0
      %v938 = vadd.f32 %v317, %v937
      %v939 = vpop.f32.mrf.mxu0
      %v940 = vpop.f32.mrf.mxu0
      %v941 = vadd.f32 %v317, %v940
      %v942 = vpop.f32.mrf.mxu0
      %943 = vmatprep.mubr.bf16.mxu0 0
      %944 = vmatmul.mubr.bf16.gmra.mxu0 %v686
      %v945 = vpop.f32.mrf.mxu0
      %v946 = vadd.f32 %v317, %v945
      %v947 = vpop.f32.mrf.mxu0
      %v948 = vpop.f32.mrf.mxu0
      %v949 = vadd.f32 %v317, %v948
      %v950 = vpop.f32.mrf.mxu0
      %951 = vmatprep.mubr.bf16.mxu0 0
      %952 = vmatmul.mubr.bf16.gmra.mxu0 %v689
      %v953 = vpop.f32.mrf.mxu0
      %v954 = vadd.f32 %v317, %v953
      %v955 = vpop.f32.mrf.mxu0
      %v956 = vpop.f32.mrf.mxu0
      %v957 = vadd.f32 %v317, %v956
      %v958 = vpop.f32.mrf.mxu0
      %959 = vmatprep.mubr.bf16.mxu0 0
      %960 = vmatmul.mubr.bf16.gmra.mxu0 %v692
      %v961 = vpop.f32.mrf.mxu0
      %v962 = vadd.f32 %v317, %v961
      %v963 = vpop.f32.mrf.mxu0
      %v964 = vpop.f32.mrf.mxu0
      %v965 = vadd.f32 %v317, %v964
      %v966 = vpop.f32.mrf.mxu0
      %967 = vmatprep.mubr.bf16.mxu0 0
      %968 = vmatmul.mubr.bf16.gmra.mxu0 %v695
      %v969 = vpop.f32.mrf.mxu0
      %v970 = vadd.f32 %v317, %v969
      %v971 = vpop.f32.mrf.mxu0
      %v972 = vpop.f32.mrf.mxu0
      %v973 = vadd.f32 %v317, %v972
      %v974 = vpop.f32.mrf.mxu0
      %975 = vmatprep.mubr.bf16.mxu0 0
      %976 = vmatmul.mubr.bf16.gmra.mxu0 %v698
      %v977 = vpop.f32.mrf.mxu0
      %v978 = vadd.f32 %v317, %v977
      %v979 = vpop.f32.mrf.mxu0
      %v980 = vpop.f32.mrf.mxu0
      %v981 = vadd.f32 %v317, %v980
      %v982 = vpop.f32.mrf.mxu0
      %983 = vmatprep.mubr.bf16.mxu0 0
      %984 = vmatmul.mubr.bf16.gmra.mxu0 %v701
      %v985 = vpop.f32.mrf.mxu0
      %v986 = vadd.f32 %v317, %v985
      %v987 = vpop.f32.mrf.mxu0
      %v988 = vpop.f32.mrf.mxu0
      %v989 = vadd.f32 %v317, %v988
      %v990 = vpop.f32.mrf.mxu0
      %991 = vmatprep.mubr.bf16.mxu0 0
      %992 = vmatmul.mubr.bf16.gmra.mxu0 %v704
      %v993 = vpop.f32.mrf.mxu0
      %v994 = vadd.f32 %v317, %v993
      %v995 = vpop.f32.mrf.mxu0
      %v996 = vpop.f32.mrf.mxu0
      %v997 = vadd.f32 %v317, %v996
      %v998 = vpop.f32.mrf.mxu0
      %999 = vmatprep.mubr.bf16.mxu0 0
      %1000 = vmatmul.mubr.bf16.gmra.mxu0 %v707
      %v1001 = vpop.f32.mrf.mxu0
      %v1002 = vadd.f32 %v317, %v1001
      %v1003 = vpop.f32.mrf.mxu0
      %v1004 = vpop.f32.mrf.mxu0
      %v1005 = vadd.f32 %v317, %v1004
      %v1006 = vpop.f32.mrf.mxu0
      %1007 = vmatprep.mubr.bf16.mxu0 0
      %1008 = vmatmul.mubr.bf16.gmra.mxu0 %v710
      %v1009 = vpop.f32.mrf.mxu0
      %v1010 = vadd.f32 %v317, %v1009
      %v1011 = vpop.f32.mrf.mxu0
      %v1012 = vpop.f32.mrf.mxu0
      %v1013 = vadd.f32 %v317, %v1012
      %v1014 = vpop.f32.mrf.mxu0
      %1015 = vmatprep.mubr.bf16.mxu0 0
      %1016 = vmatmul.mubr.bf16.gmra.mxu0 %v713
      %v1017 = vpop.f32.mrf.mxu0
      %v1018 = vadd.f32 %v317, %v1017
      %v1019 = vpop.f32.mrf.mxu0
      %v1020 = vpop.f32.mrf.mxu0
      %v1021 = vadd.f32 %v317, %v1020
      %v1022 = vpop.f32.mrf.mxu0
      %1023 = vmatprep.mubr.bf16.mxu0 0
      %1024 = vmatmul.mubr.bf16.gmra.mxu0 %v716
      %v1025 = vpop.f32.mrf.mxu0
      %v1026 = vadd.f32 %v317, %v1025
      %v1027 = vpop.f32.mrf.mxu0
      %v1028 = vpop.f32.mrf.mxu0
      %v1029 = vadd.f32 %v317, %v1028
      %v1030 = vpop.f32.mrf.mxu0
      %1031 = vmatprep.mubr.bf16.mxu0 0
      %1032 = vmatmul.mubr.bf16.gmra.mxu0 %v719
      %v1033 = vpop.f32.mrf.mxu0
      %v1034 = vadd.f32 %v317, %v1033
      %v1035 = vpop.f32.mrf.mxu0
      %v1036 = vpop.f32.mrf.mxu0
      %v1037 = vadd.f32 %v317, %v1036
      %v1038 = vpop.f32.mrf.mxu0
      %1039 = vmatprep.mubr.bf16.mxu0 0
      %1040 = vmatmul.mubr.bf16.gmra.mxu0 %v722
      %v1041 = vpop.f32.mrf.mxu0
      %v1042 = vadd.f32 %v317, %v1041
      %v1043 = vpop.f32.mrf.mxu0
      %v1044 = vpop.f32.mrf.mxu0
      %v1045 = vadd.f32 %v317, %v1044
      %v1046 = vpop.f32.mrf.mxu0
      %1047 = vmatprep.mubr.bf16.mxu0 0
      %1048 = vmatmul.mubr.bf16.gmra.mxu0 %v725
      %v1049 = vpop.f32.mrf.mxu0
      %v1050 = vadd.f32 %v317, %v1049
      %v1051 = vpop.f32.mrf.mxu0
      %v1052 = vpop.f32.mrf.mxu0
      %v1053 = vadd.f32 %v317, %v1052
      %v1054 = vpop.f32.mrf.mxu0
      %1055 = vmatprep.mubr.bf16.mxu0 0
      %1056 = vmatmul.mubr.bf16.gmra.mxu0 %v728
      %v1057 = vpop.f32.mrf.mxu0
      %v1058 = vadd.f32 %v317, %v1057
      %v1059 = vpop.f32.mrf.mxu0
      %v1060 = vpop.f32.mrf.mxu0
      %v1061 = vadd.f32 %v317, %v1060
      %v1062 = vpop.f32.mrf.mxu0
      %1063 = vmatprep.mubr.bf16.mxu0 0
      %1064 = vmatmul.mubr.bf16.gmra.mxu0 %v731
      %v1065 = vpop.f32.mrf.mxu0
      %v1066 = vadd.f32 %v317, %v1065
      %v1067 = vpop.f32.mrf.mxu0
      %v1068 = vpop.f32.mrf.mxu0
      %v1069 = vadd.f32 %v317, %v1068
      %v1070 = vpop.f32.mrf.mxu0
      %1071 = vmatprep.mubr.bf16.mxu0 0
      %1072 = vmatmul.mubr.bf16.gmra.mxu0 %v734
      %v1073 = vpop.f32.mrf.mxu0
      %v1074 = vadd.f32 %v317, %v1073
      %v1075 = vpop.f32.mrf.mxu0
      %v1076 = vpop.f32.mrf.mxu0
      %v1077 = vadd.f32 %v317, %v1076
      %v1078 = vpop.f32.mrf.mxu0
      %1079 = vmatprep.mubr.bf16.mxu0 0
      %1080 = vmatmul.mubr.bf16.gmra.mxu0 %v737
      %v1081 = vpop.f32.mrf.mxu0
      %v1082 = vadd.f32 %v317, %v1081
      %v1083 = vpop.f32.mrf.mxu0
      %v1084 = vpop.f32.mrf.mxu0
      %v1085 = vadd.f32 %v317, %v1084
      %v1086 = vpop.f32.mrf.mxu0
      %1087 = vmatprep.mubr.bf16.mxu0 0
      %1088 = vmatmul.mubr.bf16.gmra.mxu0 %v740
      %v1089 = vpop.f32.mrf.mxu0
      %v1090 = vadd.f32 %v317, %v1089
      %v1091 = vpop.f32.mrf.mxu0
      %v1092 = vpop.f32.mrf.mxu0
      %v1093 = vadd.f32 %v317, %v1092
      %v1094 = vpop.f32.mrf.mxu0
      %1095 = vmatprep.mubr.bf16.mxu0 0
      %1096 = vmatmul.mubr.bf16.gmra.mxu0 %v743
      %v1097 = vpop.f32.mrf.mxu0
      %v1098 = vadd.f32 %v317, %v1097
      %v1099 = vpop.f32.mrf.mxu0
      %v1100 = vpop.f32.mrf.mxu0
      %v1101 = vadd.f32 %v317, %v1100
      %v1102 = vpop.f32.mrf.mxu0
      %1103 = vmatprep.mubr.bf16.mxu0 0
      %1104 = vmatmul.mubr.bf16.gmra.mxu0 %v746
      %v1105 = vpop.f32.mrf.mxu0
      %v1106 = vadd.f32 %v317, %v1105
      %v1107 = vpop.f32.mrf.mxu0
      %v1108 = vpop.f32.mrf.mxu0
      %v1109 = vadd.f32 %v317, %v1108
      %v1110 = vpop.f32.mrf.mxu0
      %1111 = vmatprep.mubr.bf16.mxu0 0
      %1112 = vmatmul.mubr.bf16.gmra.mxu0 %v749
      %v1113 = vpop.f32.mrf.mxu0
      %v1114 = vadd.f32 %v317, %v1113
      %v1115 = vpop.f32.mrf.mxu0
      %v1116 = vpop.f32.mrf.mxu0
      %v1117 = vadd.f32 %v317, %v1116
      %v1118 = vpop.f32.mrf.mxu0
      %1119 = vmatprep.mubr.bf16.mxu0 0
      %1120 = vmatmul.mubr.bf16.gmra.mxu0 %v752
      %v1121 = vpop.f32.mrf.mxu0
      %v1122 = vadd.f32 %v317, %v1121
      %v1123 = vpop.f32.mrf.mxu0
      %v1124 = vpop.f32.mrf.mxu0
      %v1125 = vadd.f32 %v317, %v1124
      %v1126 = vpop.f32.mrf.mxu0
      %1127 = vmatprep.mubr.bf16.mxu0 0
      %1128 = vmatmul.mubr.bf16.gmra.mxu0 %v755
      %v1129 = vpop.f32.mrf.mxu0
      %v1130 = vadd.f32 %v317, %v1129
      %v1131 = vpop.f32.mrf.mxu0
      %v1132 = vpop.f32.mrf.mxu0
      %v1133 = vadd.f32 %v317, %v1132
      %v1134 = vpop.f32.mrf.mxu0
      %1135 = vmatprep.mubr.bf16.mxu0 0
      %1136 = vmatmul.mubr.bf16.gmra.mxu0 %v758
      %v1137 = vpop.f32.mrf.mxu0
      %v1138 = vadd.f32 %v317, %v1137
      %v1139 = vpop.f32.mrf.mxu0
      %v1140 = vpop.f32.mrf.mxu0
      %v1141 = vadd.f32 %v317, %v1140
      %v1142 = vpop.f32.mrf.mxu0
      %1143 = vmatprep.mubr.bf16.mxu0 0
      %1144 = vmatmul.mubr.bf16.gmra.mxu0 %v761
      %v1145 = vpop.f32.mrf.mxu0
      %v1146 = vadd.f32 %v317, %v1145
      %v1147 = vpop.f32.mrf.mxu0
      %v1148 = vpop.f32.mrf.mxu0
      %v1149 = vadd.f32 %v317, %v1148
      %v1150 = vpop.f32.mrf.mxu0
      %1151 = vmatprep.mubr.bf16.mxu0 0
      %1152 = vmatmul.mubr.bf16.gmra.mxu0 %v764
      %v1153 = vpop.f32.mrf.mxu0
      %v1154 = vadd.f32 %v317, %v1153
      %v1155 = vpop.f32.mrf.mxu0
      %v1156 = vpop.f32.mrf.mxu0
      %v1157 = vadd.f32 %v317, %v1156
      %v1158 = vpop.f32.mrf.mxu0
      %1159 = vmatprep.mubr.bf16.mxu0 0
      %1160 = vmatmul.mubr.bf16.gmra.mxu0 %v767
      %v1161 = vpop.f32.mrf.mxu0
      %v1162 = vadd.f32 %v317, %v1161
      %v1163 = vpop.f32.mrf.mxu0
      %v1164 = vpop.f32.mrf.mxu0
      %v1165 = vadd.f32 %v317, %v1164
      %v1166 = vpop.f32.mrf.mxu0
      %1167 = vmatprep.mubr.bf16.mxu0 0
      %1168 = vmatmul.mubr.bf16.gmra.mxu0 %v770
      %v1169 = vpop.f32.mrf.mxu0
      %v1170 = vadd.f32 %v317, %v1169
      %v1171 = vpop.f32.mrf.mxu0
      %v1172 = vpop.f32.mrf.mxu0
      %v1173 = vadd.f32 %v317, %v1172
      %v1174 = vpop.f32.mrf.mxu0
      %1175 = vmatprep.mubr.bf16.mxu0 0
      %1176 = vmatmul.mubr.bf16.gmra.mxu0 %v773
      %v1177 = vpop.f32.mrf.mxu0
      %v1178 = vadd.f32 %v317, %v1177
      %v1179 = vpop.f32.mrf.mxu0
      %v1180 = vpop.f32.mrf.mxu0
      %v1181 = vadd.f32 %v317, %v1180
      %v1182 = vpop.f32.mrf.mxu0
      %1183 = vmatprep.mubr.bf16.mxu0 0
      %1184 = vmatmul.mubr.bf16.gmra.mxu0 %v776
      %v1185 = vpop.f32.mrf.mxu0
      %v1186 = vadd.f32 %v317, %v1185
      %v1187 = vpop.f32.mrf.mxu0
      %v1188 = vpop.f32.mrf.mxu0
      %v1189 = vadd.f32 %v317, %v1188
      %v1190 = vpop.f32.mrf.mxu0
      %1191 = vmatprep.mubr.bf16.mxu0 0
      %1192 = vmatmul.mubr.bf16.gmra.mxu0 %v779
      %v1193 = vpop.f32.mrf.mxu0
      %v1194 = vadd.f32 %v317, %v1193
      %v1195 = vpop.f32.mrf.mxu0
      %v1196 = vpop.f32.mrf.mxu0
      %v1197 = vadd.f32 %v317, %v1196
      %v1198 = vpop.f32.mrf.mxu0
      %1199 = vmatprep.mubr.bf16.mxu0 0
      %1200 = vmatmul.mubr.bf16.gmra.mxu0 %v782
      %v1201 = vpop.f32.mrf.mxu0
      %v1202 = vadd.f32 %v317, %v1201
      %v1203 = vpop.f32.mrf.mxu0
      %v1204 = vpop.f32.mrf.mxu0
      %v1205 = vadd.f32 %v317, %v1204
      %v1206 = vpop.f32.mrf.mxu0
      %1207 = vmatprep.mubr.bf16.mxu0 0
      %1208 = vmatmul.mubr.bf16.gmra.mxu0 %v785
      %v1209 = vpop.f32.mrf.mxu0
      %v1210 = vadd.f32 %v317, %v1209
      %v1211 = vpop.f32.mrf.mxu0
      %v1212 = vpop.f32.mrf.mxu0
      %v1213 = vadd.f32 %v317, %v1212
      %v1214 = vpop.f32.mrf.mxu0
      %1215 = vmatprep.mubr.bf16.mxu0 0
      %1216 = vmatmul.mubr.bf16.gmra.mxu0 %v788
      %v1217 = vpop.f32.mrf.mxu0
      %v1218 = vadd.f32 %v317, %v1217
      %v1219 = vpop.f32.mrf.mxu0
      %v1220 = vpop.f32.mrf.mxu0
      %v1221 = vadd.f32 %v317, %v1220
      %v1222 = vpop.f32.mrf.mxu0
      %1223 = vmatprep.mubr.bf16.mxu0 0
      %1224 = vmatmul.mubr.bf16.gmra.mxu0 %v791
      %v1225 = vpop.f32.mrf.mxu0
      %v1226 = vadd.f32 %v317, %v1225
      %v1227 = vpop.f32.mrf.mxu0
      %v1228 = vpop.f32.mrf.mxu0
      %v1229 = vadd.f32 %v317, %v1228
      %v1230 = vpop.f32.mrf.mxu0
      %1231 = vmatprep.mubr.bf16.mxu0 0
      %1232 = vmatmul.mubr.bf16.gmra.mxu0 %v794
      %v1233 = vpop.f32.mrf.mxu0
      %v1234 = vadd.f32 %v317, %v1233
      %v1235 = vpop.f32.mrf.mxu0
      %v1236 = vpop.f32.mrf.mxu0
      %v1237 = vadd.f32 %v317, %v1236
      %v1238 = vpop.f32.mrf.mxu0
      %1239 = vmatprep.mubr.bf16.mxu0 0
      %1240 = vmatmul.mubr.bf16.gmra.mxu0 %v797
      %v1241 = vpop.f32.mrf.mxu0
      %v1242 = vadd.f32 %v317, %v1241
      %v1243 = vpop.f32.mrf.mxu0
      %v1244 = vpop.f32.mrf.mxu0
      %v1245 = vadd.f32 %v317, %v1244
      %v1246 = vpop.f32.mrf.mxu0
      %1247 = vmatprep.mubr.bf16.mxu0 0
      %1248 = vmatmul.mubr.bf16.gmra.mxu0 %v800
      %v1249 = vpop.f32.mrf.mxu0
      %v1250 = vadd.f32 %v317, %v1249
      %v1251 = vpop.f32.mrf.mxu0
      %v1252 = vpop.f32.mrf.mxu0
      %v1253 = vadd.f32 %v317, %v1252
      %v1254 = vpop.f32.mrf.mxu0
      %1255 = vmatprep.mubr.bf16.mxu0 0
      %1256 = vmatmul.mubr.bf16.gmra.mxu0 %v803
      %v1257 = vpop.f32.mrf.mxu0
      %v1258 = vadd.f32 %v317, %v1257
      %v1259 = vpop.f32.mrf.mxu0
      %v1260 = vpop.f32.mrf.mxu0
      %v1261 = vadd.f32 %v317, %v1260
      %v1262 = vpop.f32.mrf.mxu0
      %1263 = vmatprep.mubr.bf16.mxu0 0
      %1264 = vmatmul.mubr.bf16.gmra.mxu0 %v806
      %v1265 = vpop.f32.mrf.mxu0
      %v1266 = vadd.f32 %v317, %v1265
      %v1267 = vpop.f32.mrf.mxu0
      %v1268 = vpop.f32.mrf.mxu0
      %v1269 = vadd.f32 %v317, %v1268
      %v1270 = vpop.f32.mrf.mxu0
      %1271 = vmatprep.mubr.bf16.mxu0 0
      %1272 = vmatmul.mubr.bf16.gmra.mxu0 %v809
      %v1273 = vpop.f32.mrf.mxu0
      %v1274 = vadd.f32 %v317, %v1273
      %v1275 = vpop.f32.mrf.mxu0
      %v1276 = vpop.f32.mrf.mxu0
      %v1277 = vadd.f32 %v317, %v1276
      %v1278 = vpop.f32.mrf.mxu0
      %1279 = vmatprep.mubr.bf16.mxu0 0
      %1280 = vmatmul.mubr.bf16.gmra.mxu0 %v812
      %v1281 = vpop.f32.mrf.mxu0
      %v1282 = vadd.f32 %v317, %v1281
      %v1283 = vpop.f32.mrf.mxu0
      %v1284 = vpop.f32.mrf.mxu0
      %v1285 = vadd.f32 %v317, %v1284
      %v1286 = vpop.f32.mrf.mxu0
      %1287 = vmatprep.mubr.bf16.mxu0 0
      %1288 = vmatmul.mubr.bf16.gmra.mxu0 %v815
      %v1289 = vpop.f32.mrf.mxu0
      %v1290 = vadd.f32 %v317, %v1289
      %v1291 = vpop.f32.mrf.mxu0
      %v1292 = vpop.f32.mrf.mxu0
      %v1293 = vadd.f32 %v317, %v1292
      %v1294 = vpop.f32.mrf.mxu0
      %1295 = vmatprep.mubr.bf16.mxu0 0
      %1296 = vmatmul.mubr.bf16.gmra.mxu0 %v818
      %v1297 = vpop.f32.mrf.mxu0
      %v1298 = vadd.f32 %v317, %v1297
      %v1299 = vpop.f32.mrf.mxu0
      %v1300 = vpop.f32.mrf.mxu0
      %v1301 = vadd.f32 %v317, %v1300
      %v1302 = vpop.f32.mrf.mxu0
      %1303 = vmatprep.mubr.bf16.mxu0 0
      %1304 = vmatmul.mubr.bf16.gmra.mxu0 %v821
      %v1305 = vpop.f32.mrf.mxu0
      %v1306 = vadd.f32 %v317, %v1305
      %v1307 = vpop.f32.mrf.mxu0
      %v1308 = vpop.f32.mrf.mxu0
      %v1309 = vadd.f32 %v317, %v1308
      %v1310 = vpop.f32.mrf.mxu0
      %1311 = vmatprep.mubr.bf16.mxu0 0
      %1312 = vmatmul.mubr.bf16.gmra.mxu0 %v824
      %v1313 = vpop.f32.mrf.mxu0
      %v1314 = vadd.f32 %v317, %v1313
      %v1315 = vpop.f32.mrf.mxu0
      %v1316 = vpop.f32.mrf.mxu0
      %v1317 = vadd.f32 %v317, %v1316
      %v1318 = vpop.f32.mrf.mxu0
      %1319 = vmatprep.mubr.bf16.mxu0 0
      %1320 = vmatmul.mubr.bf16.gmra.mxu0 %v827
      %v1321 = vpop.f32.mrf.mxu0
      %v1322 = vadd.f32 %v317, %v1321
      %v1323 = vpop.f32.mrf.mxu0
      %v1324 = vpop.f32.mrf.mxu0
      %v1325 = vadd.f32 %v317, %v1324
      %v1326 = vpop.f32.mrf.mxu0
      %1327 = vmatprep.mubr.bf16.mxu0 0
      %1328 = vmatmul.mubr.bf16.gmra.mxu0 %v830
      %v1329 = vpop.f32.mrf.mxu0
      %v1330 = vadd.f32 %v317, %v1329
      %v1331 = vpop.f32.mrf.mxu0
      %v1332 = vpop.f32.mrf.mxu0
      %v1333 = vadd.f32 %v317, %v1332
      %v1334 = vpop.f32.mrf.mxu0
      %1335 = vmatprep.mubr.bf16.mxu0 0
      %1336 = vmatmul.mubr.bf16.gmra.mxu0 %v833
      %v1337 = vpop.f32.mrf.mxu0
      %v1338 = vadd.f32 %v317, %v1337
      %v1339 = vpop.f32.mrf.mxu0
      %v1340 = vpop.f32.mrf.mxu0
      %v1341 = vadd.f32 %v317, %v1340
      %v1342 = vpop.f32.mrf.mxu0
      %1343 = vmatprep.mubr.bf16.mxu0 0
      %1344 = vmatmul.mubr.bf16.gmra.mxu0 %v836
      %v1345 = vpop.f32.mrf.mxu0
      %v1346 = vadd.f32 %v317, %v1345
      %v1347 = vpop.f32.mrf.mxu0
      %v1348 = vpop.f32.mrf.mxu0
      %v1349 = vadd.f32 %v317, %v1348
      %v1350 = vpop.f32.mrf.mxu0
      %1351 = vmatprep.mubr.bf16.mxu0 0
      %1352 = vmatmul.mubr.bf16.gmra.mxu0 %v839
      %v1353 = vpop.f32.mrf.mxu0
      %v1354 = vadd.f32 %v317, %v1353
      %v1355 = vpop.f32.mrf.mxu0
      %v1356 = vpop.f32.mrf.mxu0
      %v1357 = vadd.f32 %v317, %v1356
      %v1358 = vpop.f32.mrf.mxu0
      %1359 = vmatprep.mubr.bf16.mxu0 0
      %1360 = vmatmul.mubr.bf16.gmra.mxu0 %v842
      %v1361 = vpop.f32.mrf.mxu0
      %v1362 = vadd.f32 %v317, %v1361
      %v1363 = vpop.f32.mrf.mxu0
      %v1364 = vpop.f32.mrf.mxu0
      %v1365 = vadd.f32 %v317, %v1364
      %v1366 = vpop.f32.mrf.mxu0
      %1367 = vmatprep.mubr.bf16.mxu0 0
      %1368 = vmatmul.mubr.bf16.gmra.mxu0 %v845
      %v1369 = vpop.f32.mrf.mxu0
      %v1370 = vadd.f32 %v317, %v1369
      %v1371 = vpop.f32.mrf.mxu0
      %v1372 = vpop.f32.mrf.mxu0
      %v1373 = vadd.f32 %v317, %v1372
      %v1374 = vpop.f32.mrf.mxu0
      %1375 = vmatprep.mubr.bf16.mxu0 0
      %1376 = vmatmul.mubr.bf16.gmra.mxu0 %v848
      %v1377 = vpop.f32.mrf.mxu0
      %v1378 = vadd.f32 %v317, %v1377
      %v1379 = vpop.f32.mrf.mxu0
      %v1380 = vpop.f32.mrf.mxu0
      %v1381 = vadd.f32 %v317, %v1380
      %v1382 = vpop.f32.mrf.mxu0
      %1383 = vmatprep.mubr.bf16.mxu0 0
      %1384 = vmatmul.mubr.bf16.gmra.mxu0 %v851
      %v1385 = vpop.f32.mrf.mxu0
      %v1386 = vadd.f32 %v317, %v1385
      %v1387 = vpop.f32.mrf.mxu0
      %v1388 = vpop.f32.mrf.mxu0
      %v1389 = vadd.f32 %v317, %v1388
      %v1390 = vpop.f32.mrf.mxu0
      %1391 = vmatprep.mubr.bf16.mxu0 0
      %1392 = vmatmul.mubr.bf16.gmra.mxu0 %v854
      %v1393 = vpop.f32.mrf.mxu0
      %v1394 = vadd.f32 %v317, %v1393
      %v1395 = vpop.f32.mrf.mxu0
      %v1396 = vpop.f32.mrf.mxu0
      %v1397 = vadd.f32 %v317, %v1396
      %v1398 = vpop.f32.mrf.mxu0
      %1399 = vmatprep.mubr.bf16.mxu0 0
      %1400 = vmatmul.mubr.bf16.gmra.mxu0 %v857
      %v1401 = vpop.f32.mrf.mxu0
      %v1402 = vadd.f32 %v317, %v1401
      %v1403 = vpop.f32.mrf.mxu0
      %v1404 = vpop.f32.mrf.mxu0
      %v1405 = vadd.f32 %v317, %v1404
      %v1406 = vpop.f32.mrf.mxu0
      %1407 = vdwg.mxu0
      %v1408 = vmax.f32 %v898, 0.0
      %v1409 = vmax.f32 %v901, 0.0
      %v1410 = vmax.f32 %v906, 0.0
      %v1411 = vmax.f32 %v909, 0.0
      %v1412 = vmax.f32 %v914, 0.0
      %v1413 = vmax.f32 %v917, 0.0
      %v1414 = vmax.f32 %v922, 0.0
      %v1415 = vmax.f32 %v925, 0.0
      %v1416 = vmax.f32 %v930, 0.0
      %v1417 = vmax.f32 %v933, 0.0
      %v1418 = vmax.f32 %v938, 0.0
      %v1419 = vmax.f32 %v941, 0.0
      %v1420 = vmax.f32 %v946, 0.0
      %v1421 = vmax.f32 %v949, 0.0
      %v1422 = vmax.f32 %v954, 0.0
      %v1423 = vmax.f32 %v957, 0.0
      %v1424 = vmax.f32 %v962, 0.0
      %v1425 = vmax.f32 %v965, 0.0
      %v1426 = vmax.f32 %v970, 0.0
      %v1427 = vmax.f32 %v973, 0.0
      %v1428 = vmax.f32 %v978, 0.0
      %v1429 = vmax.f32 %v981, 0.0
      %v1430 = vmax.f32 %v986, 0.0
      %v1431 = vmax.f32 %v989, 0.0
      %v1432 = vmax.f32 %v994, 0.0
      %v1433 = vmax.f32 %v997, 0.0
      %v1434 = vmax.f32 %v1002, 0.0
      %v1435 = vmax.f32 %v1005, 0.0
      %v1436 = vmax.f32 %v1010, 0.0
      %v1437 = vmax.f32 %v1013, 0.0
      %v1438 = vmax.f32 %v1018, 0.0
      %v1439 = vmax.f32 %v1021, 0.0
      %v1440 = vmax.f32 %v1026, 0.0
      %v1441 = vmax.f32 %v1029, 0.0
      %v1442 = vmax.f32 %v1034, 0.0
      %v1443 = vmax.f32 %v1037, 0.0
      %v1444 = vmax.f32 %v1042, 0.0
      %v1445 = vmax.f32 %v1045, 0.0
      %v1446 = vmax.f32 %v1050, 0.0
      %v1447 = vmax.f32 %v1053, 0.0
      %v1448 = vmax.f32 %v1058, 0.0
      %v1449 = vmax.f32 %v1061, 0.0
      %v1450 = vmax.f32 %v1066, 0.0
      %v1451 = vmax.f32 %v1069, 0.0
      %v1452 = vmax.f32 %v1074, 0.0
      %v1453 = vmax.f32 %v1077, 0.0
      %v1454 = vmax.f32 %v1082, 0.0
      %v1455 = vmax.f32 %v1085, 0.0
      %v1456 = vmax.f32 %v1090, 0.0
      %v1457 = vmax.f32 %v1093, 0.0
      %v1458 = vmax.f32 %v1098, 0.0
      %v1459 = vmax.f32 %v1101, 0.0
      %v1460 = vmax.f32 %v1106, 0.0
      %v1461 = vmax.f32 %v1109, 0.0
      %v1462 = vmax.f32 %v1114, 0.0
      %v1463 = vmax.f32 %v1117, 0.0
      %v1464 = vmax.f32 %v1122, 0.0
      %v1465 = vmax.f32 %v1125, 0.0
      %v1466 = vmax.f32 %v1130, 0.0
      %v1467 = vmax.f32 %v1133, 0.0
      %v1468 = vmax.f32 %v1138, 0.0
      %v1469 = vmax.f32 %v1141, 0.0
      %v1470 = vmax.f32 %v1146, 0.0
      %v1471 = vmax.f32 %v1149, 0.0
      %v1472 = vmax.f32 %v1154, 0.0
      %v1473 = vmax.f32 %v1157, 0.0
      %v1474 = vmax.f32 %v1162, 0.0
      %v1475 = vmax.f32 %v1165, 0.0
      %v1476 = vmax.f32 %v1170, 0.0
      %v1477 = vmax.f32 %v1173, 0.0
      %v1478 = vmax.f32 %v1178, 0.0
      %v1479 = vmax.f32 %v1181, 0.0
      %v1480 = vmax.f32 %v1186, 0.0
      %v1481 = vmax.f32 %v1189, 0.0
      %v1482 = vmax.f32 %v1194, 0.0
      %v1483 = vmax.f32 %v1197, 0.0
      %v1484 = vmax.f32 %v1202, 0.0
      %v1485 = vmax.f32 %v1205, 0.0
      %v1486 = vmax.f32 %v1210, 0.0
      %v1487 = vmax.f32 %v1213, 0.0
      %v1488 = vmax.f32 %v1218, 0.0
      %v1489 = vmax.f32 %v1221, 0.0
      %v1490 = vmax.f32 %v1226, 0.0
      %v1491 = vmax.f32 %v1229, 0.0
      %v1492 = vmax.f32 %v1234, 0.0
      %v1493 = vmax.f32 %v1237, 0.0
      %v1494 = vmax.f32 %v1242, 0.0
      %v1495 = vmax.f32 %v1245, 0.0
      %v1496 = vmax.f32 %v1250, 0.0
      %v1497 = vmax.f32 %v1253, 0.0
      %v1498 = vmax.f32 %v1258, 0.0
      %v1499 = vmax.f32 %v1261, 0.0
      %v1500 = vmax.f32 %v1266, 0.0
      %v1501 = vmax.f32 %v1269, 0.0
      %v1502 = vmax.f32 %v1274, 0.0
      %v1503 = vmax.f32 %v1277, 0.0
      %v1504 = vmax.f32 %v1282, 0.0
      %v1505 = vmax.f32 %v1285, 0.0
      %v1506 = vmax.f32 %v1290, 0.0
      %v1507 = vmax.f32 %v1293, 0.0
      %v1508 = vmax.f32 %v1298, 0.0
      %v1509 = vmax.f32 %v1301, 0.0
      %v1510 = vmax.f32 %v1306, 0.0
      %v1511 = vmax.f32 %v1309, 0.0
      %v1512 = vmax.f32 %v1314, 0.0
      %v1513 = vmax.f32 %v1317, 0.0
      %v1514 = vmax.f32 %v1322, 0.0
      %v1515 = vmax.f32 %v1325, 0.0
      %v1516 = vmax.f32 %v1330, 0.0
      %v1517 = vmax.f32 %v1333, 0.0
      %v1518 = vmax.f32 %v1338, 0.0
      %v1519 = vmax.f32 %v1341, 0.0
      %v1520 = vmax.f32 %v1346, 0.0
      %v1521 = vmax.f32 %v1349, 0.0
      %v1522 = vmax.f32 %v1354, 0.0
      %v1523 = vmax.f32 %v1357, 0.0
      %v1524 = vmax.f32 %v1362, 0.0
      %v1525 = vmax.f32 %v1365, 0.0
      %v1526 = vmax.f32 %v1370, 0.0
      %v1527 = vmax.f32 %v1373, 0.0
      %v1528 = vmax.f32 %v1378, 0.0
      %v1529 = vmax.f32 %v1381, 0.0
      %v1530 = vmax.f32 %v1386, 0.0
      %v1531 = vmax.f32 %v1389, 0.0
      %v1532 = vmax.f32 %v1394, 0.0
      %v1533 = vmax.f32 %v1397, 0.0
      %v1534 = vmax.f32 %v1402, 0.0
      %v1535 = vmax.f32 %v1405, 0.0
      %vm1536 = vcmask 64512
      %1537 = vst.msk [vmem:[%s172] sm:$0xff] %vm1536, %v1408
      %1538 = vst.msk [vmem:[%s172 + $0x8] sm:$0xff] %vm1536, %v1409
      %1539 = vst.msk [vmem:[%s172 + $0x10] sm:$0xff] %vm1536, %v1410
      %1540 = vst.msk [vmem:[%s172 + $0x18] sm:$0xff] %vm1536, %v1411
      %1541 = vst.msk [vmem:[%s172 + $0x20] sm:$0xff] %vm1536, %v1412
      %1542 = vst.msk [vmem:[%s172 + $0x28] sm:$0xff] %vm1536, %v1413
      %1543 = vst.msk [vmem:[%s172 + $0x30] sm:$0xff] %vm1536, %v1414
      %1544 = vst.msk [vmem:[%s172 + $0x38] sm:$0xff] %vm1536, %v1415
      %1545 = vst.msk [vmem:[%s172 + $0x40] sm:$0xff] %vm1536, %v1416
      %1546 = vst.msk [vmem:[%s172 + $0x48] sm:$0xff] %vm1536, %v1417
      %1547 = vst.msk [vmem:[%s172 + $0x50] sm:$0xff] %vm1536, %v1418
      %1548 = vst.msk [vmem:[%s172 + $0x58] sm:$0xff] %vm1536, %v1419
      %1549 = vst.msk [vmem:[%s172 + $0x60] sm:$0xff] %vm1536, %v1420
      %1550 = vst.msk [vmem:[%s172 + $0x68] sm:$0xff] %vm1536, %v1421
      %1551 = vst.msk [vmem:[%s172 + $0x70] sm:$0xff] %vm1536, %v1422
      %1552 = vst.msk [vmem:[%s172 + $0x78] sm:$0xff] %vm1536, %v1423
      %1553 = vst.msk [vmem:[%s172 + $0x80] sm:$0xff] %vm1536, %v1424
      %1554 = vst.msk [vmem:[%s172 + $0x88] sm:$0xff] %vm1536, %v1425
      %1555 = vst.msk [vmem:[%s172 + $0x90] sm:$0xff] %vm1536, %v1426
      %1556 = vst.msk [vmem:[%s172 + $0x98] sm:$0xff] %vm1536, %v1427
      %1557 = vst.msk [vmem:[%s172 + $0xa0] sm:$0xff] %vm1536, %v1428
      %1558 = vst.msk [vmem:[%s172 + $0xa8] sm:$0xff] %vm1536, %v1429
      %1559 = vst.msk [vmem:[%s172 + $0xb0] sm:$0xff] %vm1536, %v1430
      %1560 = vst.msk [vmem:[%s172 + $0xb8] sm:$0xff] %vm1536, %v1431
      %1561 = vst.msk [vmem:[%s172 + $0xc0] sm:$0xff] %vm1536, %v1432
      %1562 = vst.msk [vmem:[%s172 + $0xc8] sm:$0xff] %vm1536, %v1433
      %1563 = vst.msk [vmem:[%s172 + $0xd0] sm:$0xff] %vm1536, %v1434
      %1564 = vst.msk [vmem:[%s172 + $0xd8] sm:$0xff] %vm1536, %v1435
      %1565 = vst.msk [vmem:[%s172 + $0xe0] sm:$0xff] %vm1536, %v1436
      %1566 = vst.msk [vmem:[%s172 + $0xe8] sm:$0xff] %vm1536, %v1437
      %1567 = vst.msk [vmem:[%s172 + $0xf0] sm:$0xff] %vm1536, %v1438
      %1568 = vst.msk [vmem:[%s172 + $0xf8] sm:$0xff] %vm1536, %v1439
      %1569 = vst.msk [vmem:[%s172 + $0x100] sm:$0xff] %vm1536, %v1440
      %1570 = vst.msk [vmem:[%s172 + $0x108] sm:$0xff] %vm1536, %v1441
      %1571 = vst.msk [vmem:[%s172 + $0x110] sm:$0xff] %vm1536, %v1442
      %1572 = vst.msk [vmem:[%s172 + $0x118] sm:$0xff] %vm1536, %v1443
      %1573 = vst.msk [vmem:[%s172 + $0x120] sm:$0xff] %vm1536, %v1444
      %1574 = vst.msk [vmem:[%s172 + $0x128] sm:$0xff] %vm1536, %v1445
      %1575 = vst.msk [vmem:[%s172 + $0x130] sm:$0xff] %vm1536, %v1446
      %1576 = vst.msk [vmem:[%s172 + $0x138] sm:$0xff] %vm1536, %v1447
      %1577 = vst.msk [vmem:[%s172 + $0x140] sm:$0xff] %vm1536, %v1448
      %1578 = vst.msk [vmem:[%s172 + $0x148] sm:$0xff] %vm1536, %v1449
      %1579 = vst.msk [vmem:[%s172 + $0x150] sm:$0xff] %vm1536, %v1450
      %1580 = vst.msk [vmem:[%s172 + $0x158] sm:$0xff] %vm1536, %v1451
      %1581 = vst.msk [vmem:[%s172 + $0x160] sm:$0xff] %vm1536, %v1452
      %1582 = vst.msk [vmem:[%s172 + $0x168] sm:$0xff] %vm1536, %v1453
      %1583 = vst.msk [vmem:[%s172 + $0x170] sm:$0xff] %vm1536, %v1454
      %1584 = vst.msk [vmem:[%s172 + $0x178] sm:$0xff] %vm1536, %v1455
      %1585 = vst.msk [vmem:[%s172 + $0x180] sm:$0xff] %vm1536, %v1456
      %1586 = vst.msk [vmem:[%s172 + $0x188] sm:$0xff] %vm1536, %v1457
      %1587 = vst.msk [vmem:[%s172 + $0x190] sm:$0xff] %vm1536, %v1458
      %1588 = vst.msk [vmem:[%s172 + $0x198] sm:$0xff] %vm1536, %v1459
      %1589 = vst.msk [vmem:[%s172 + $0x1a0] sm:$0xff] %vm1536, %v1460
      %1590 = vst.msk [vmem:[%s172 + $0x1a8] sm:$0xff] %vm1536, %v1461
      %1591 = vst.msk [vmem:[%s172 + $0x1b0] sm:$0xff] %vm1536, %v1462
      %1592 = vst.msk [vmem:[%s172 + $0x1b8] sm:$0xff] %vm1536, %v1463
      %1593 = vst.msk [vmem:[%s172 + $0x1c0] sm:$0xff] %vm1536, %v1464
      %1594 = vst.msk [vmem:[%s172 + $0x1c8] sm:$0xff] %vm1536, %v1465
      %1595 = vst.msk [vmem:[%s172 + $0x1d0] sm:$0xff] %vm1536, %v1466
      %1596 = vst.msk [vmem:[%s172 + $0x1d8] sm:$0xff] %vm1536, %v1467
      %1597 = vst.msk [vmem:[%s172 + $0x1e0] sm:$0xff] %vm1536, %v1468
      %1598 = vst.msk [vmem:[%s172 + $0x1e8] sm:$0xff] %vm1536, %v1469
      %1599 = vst.msk [vmem:[%s172 + $0x1f0] sm:$0xff] %vm1536, %v1470
      %1600 = vst.msk [vmem:[%s172 + $0x1f8] sm:$0xff] %vm1536, %v1471
      %1601 = vst.msk [vmem:[%s172 + $0x200] sm:$0xff] %vm1536, %v1472
      %1602 = vst.msk [vmem:[%s172 + $0x208] sm:$0xff] %vm1536, %v1473
      %1603 = vst.msk [vmem:[%s172 + $0x210] sm:$0xff] %vm1536, %v1474
      %1604 = vst.msk [vmem:[%s172 + $0x218] sm:$0xff] %vm1536, %v1475
      %1605 = vst.msk [vmem:[%s172 + $0x220] sm:$0xff] %vm1536, %v1476
      %1606 = vst.msk [vmem:[%s172 + $0x228] sm:$0xff] %vm1536, %v1477
      %1607 = vst.msk [vmem:[%s172 + $0x230] sm:$0xff] %vm1536, %v1478
      %1608 = vst.msk [vmem:[%s172 + $0x238] sm:$0xff] %vm1536, %v1479
      %1609 = vst.msk [vmem:[%s172 + $0x240] sm:$0xff] %vm1536, %v1480
      %1610 = vst.msk [vmem:[%s172 + $0x248] sm:$0xff] %vm1536, %v1481
      %1611 = vst.msk [vmem:[%s172 + $0x250] sm:$0xff] %vm1536, %v1482
      %1612 = vst.msk [vmem:[%s172 + $0x258] sm:$0xff] %vm1536, %v1483
      %1613 = vst.msk [vmem:[%s172 + $0x260] sm:$0xff] %vm1536, %v1484
      %1614 = vst.msk [vmem:[%s172 + $0x268] sm:$0xff] %vm1536, %v1485
      %1615 = vst.msk [vmem:[%s172 + $0x270] sm:$0xff] %vm1536, %v1486
      %1616 = vst.msk [vmem:[%s172 + $0x278] sm:$0xff] %vm1536, %v1487
      %1617 = vst.msk [vmem:[%s172 + $0x280] sm:$0xff] %vm1536, %v1488
      %1618 = vst.msk [vmem:[%s172 + $0x288] sm:$0xff] %vm1536, %v1489
      %1619 = vst.msk [vmem:[%s172 + $0x290] sm:$0xff] %vm1536, %v1490
      %1620 = vst.msk [vmem:[%s172 + $0x298] sm:$0xff] %vm1536, %v1491
      %1621 = vst.msk [vmem:[%s172 + $0x2a0] sm:$0xff] %vm1536, %v1492
      %1622 = vst.msk [vmem:[%s172 + $0x2a8] sm:$0xff] %vm1536, %v1493
      %1623 = vst.msk [vmem:[%s172 + $0x2b0] sm:$0xff] %vm1536, %v1494
      %1624 = vst.msk [vmem:[%s172 + $0x2b8] sm:$0xff] %vm1536, %v1495
      %1625 = vst.msk [vmem:[%s172 + $0x2c0] sm:$0xff] %vm1536, %v1496
      %1626 = vst.msk [vmem:[%s172 + $0x2c8] sm:$0xff] %vm1536, %v1497
      %1627 = vst.msk [vmem:[%s172 + $0x2d0] sm:$0xff] %vm1536, %v1498
      %1628 = vst.msk [vmem:[%s172 + $0x2d8] sm:$0xff] %vm1536, %v1499
      %1629 = vst.msk [vmem:[%s172 + $0x2e0] sm:$0xff] %vm1536, %v1500
      %1630 = vst.msk [vmem:[%s172 + $0x2e8] sm:$0xff] %vm1536, %v1501
      %1631 = vst.msk [vmem:[%s172 + $0x2f0] sm:$0xff] %vm1536, %v1502
      %1632 = vst.msk [vmem:[%s172 + $0x2f8] sm:$0xff] %vm1536, %v1503
      %1633 = vst.msk [vmem:[%s172 + $0x300] sm:$0xff] %vm1536, %v1504
      %1634 = vst.msk [vmem:[%s172 + $0x308] sm:$0xff] %vm1536, %v1505
      %1635 = vst.msk [vmem:[%s172 + $0x310] sm:$0xff] %vm1536, %v1506
      %1636 = vst.msk [vmem:[%s172 + $0x318] sm:$0xff] %vm1536, %v1507
      %1637 = vst.msk [vmem:[%s172 + $0x320] sm:$0xff] %vm1536, %v1508
      %1638 = vst.msk [vmem:[%s172 + $0x328] sm:$0xff] %vm1536, %v1509
      %1639 = vst.msk [vmem:[%s172 + $0x330] sm:$0xff] %vm1536, %v1510
      %1640 = vst.msk [vmem:[%s172 + $0x338] sm:$0xff] %vm1536, %v1511
      %1641 = vst.msk [vmem:[%s172 + $0x340] sm:$0xff] %vm1536, %v1512
      %1642 = vst.msk [vmem:[%s172 + $0x348] sm:$0xff] %vm1536, %v1513
      %1643 = vst.msk [vmem:[%s172 + $0x350] sm:$0xff] %vm1536, %v1514
      %1644 = vst.msk [vmem:[%s172 + $0x358] sm:$0xff] %vm1536, %v1515
      %1645 = vst.msk [vmem:[%s172 + $0x360] sm:$0xff] %vm1536, %v1516
      %1646 = vst.msk [vmem:[%s172 + $0x368] sm:$0xff] %vm1536, %v1517
      %1647 = vst.msk [vmem:[%s172 + $0x370] sm:$0xff] %vm1536, %v1518
      %1648 = vst.msk [vmem:[%s172 + $0x378] sm:$0xff] %vm1536, %v1519
      %1649 = vst.msk [vmem:[%s172 + $0x380] sm:$0xff] %vm1536, %v1520
      %1650 = vst.msk [vmem:[%s172 + $0x388] sm:$0xff] %vm1536, %v1521
      %1651 = vst.msk [vmem:[%s172 + $0x390] sm:$0xff] %vm1536, %v1522
      %1652 = vst.msk [vmem:[%s172 + $0x398] sm:$0xff] %vm1536, %v1523
      %1653 = vst.msk [vmem:[%s172 + $0x3a0] sm:$0xff] %vm1536, %v1524
      %1654 = vst.msk [vmem:[%s172 + $0x3a8] sm:$0xff] %vm1536, %v1525
      %1655 = vst.msk [vmem:[%s172 + $0x3b0] sm:$0xff] %vm1536, %v1526
      %1656 = vst.msk [vmem:[%s172 + $0x3b8] sm:$0xff] %vm1536, %v1527
      %1657 = vst.msk [vmem:[%s172 + $0x3c0] sm:$0xff] %vm1536, %v1528
      %1658 = vst.msk [vmem:[%s172 + $0x3c8] sm:$0xff] %vm1536, %v1529
      %1659 = vst.msk [vmem:[%s172 + $0x3d0] sm:$0xff] %vm1536, %v1530
      %1660 = vst.msk [vmem:[%s172 + $0x3d8] sm:$0xff] %vm1536, %v1531
      %1661 = vst.msk [vmem:[%s172 + $0x3e0] sm:$0xff] %vm1536, %v1532
      %1662 = vst.msk [vmem:[%s172 + $0x3e8] sm:$0xff] %vm1536, %v1533
      %1663 = vst.msk [vmem:[%s172 + $0x3f0] sm:$0xff] %vm1536, %v1534
      %1664 = vst.msk [vmem:[%s172 + $0x3f8] sm:$0xff] %vm1536, %v1535
      %s1665 = smul.u32 128, %s14
      %p1666 = scmp.lt.s32.totalorder %s1665, 255
      %s1667 = scalar_select %p1666, %s1665, 255
      %s1668 = smul.addr %s1667, 8
      %s1669 = scalar_lea.vmem %s3, %s1668
      // Predicated region
      $region33: #{sst_forward.29} parent=31 // pred_check
        %p1670 = pneg %p100
      $region34: #{sst_forward.29} parent=31 // pred_check_branch
        %1672 = sbr.rel (%p1670) target = $region36
      $region35: #{sst_forward.29} parent=31 // pred_region
        %s1673 = smul.u32 128, %s14
      $region36: #{sst_forward.29} parent=31 // pred_fallthru
        _
    $region32: #{sst_forward.29} parent=5 // pred_fallthru
      _
    %p1674 = scmp.le.s32.totalorder 2, %s9
    // Predicated region
    $region37: #{sst_forward.29} parent=5 // pred_check
      %p1675 = pneg %p1674
    $region38: #{sst_forward.29} parent=5 // pred_check_branch
      %1677 = sbr.rel (%p1675) target = $region40
    $region39: #{sst_forward.29} parent=5 // pred_region
      %s1678 = ssub.s32 %s9, 2
      // Predicated region
      $region41: #{sst_forward.29} parent=39 // pred_check
        %p1679 = pneg %p106
      $region42: #{sst_forward.29} parent=39 // pred_check_branch
        %1681 = sbr.rel (%p1679) target = $region44
      $region43: #{sst_forward.29} parent=39 // pred_region
        %s1682 = smul.u32 128, %s15
        %p1683 = scmp.lt.s32.totalorder %s1682, 255
        %s1684 = scalar_select %p1683, %s1682, 255
        %s1685 = smul.addr %s1684, 8
        %s1686 = scalar_lea.vmem %s3, %s1685
      $region44: #{sst_forward.29} parent=39 // pred_fallthru
        _
    $region40: #{sst_forward.29} parent=5 // pred_fallthru
      _
  $region6: #{sst_forward.29} parent=0 // loop_footer
    %s13 = sadd.s32 1, %s9
  $region7: #{sst_forward.29} parent=0 // loop_footer_branch
    %8 = sbr.rel target = $region3
  $region8: #{sst_forward.29} parent=0 // loop_exit
    _

// kernel: sst_forward.30
$region0: #{sst_forward.30}
  #allocation0 [shape = 'u32[]', space=smem, size = 0x4, offset = 0x4, fixed_abs, tag = 'smem constant byte address 0x4 - core index']
  #allocation1 [shape = 'u32[144,128]{1,0:T(1,128)}', space=vmem, size = 0x12000, scoped, tag = 'internal scratch']
  %s0 = inlined_call_operand.vmem [shape: bf16[512,72], index: 0, kind: input, shape index: {}]
  %s1 = inlined_call_operand.vmem [shape: bf16[72,16], index: 1, kind: input, shape index: {}]
  %s2 = inlined_call_operand.vmem [shape: f32[1,16], index: 2, kind: input, shape index: {}]
  %s3 = inlined_call_operand.vmem [shape: f32[512,16], index: 3, kind: output, shape index: {}]
  %s4 = sld [smem:[#allocation0]]
  $region22: #{sst_forward.30} parent=0
    _
  %s6 = ssub.s32 1, %s4
  %s7 = scalar_select 0, %s6, %s4
  // Predicated region
  $region2: #{sst_forward.30} parent=0 // pred_check
    _
  $region3: #{sst_forward.30} parent=0 // pred_check_branch
    %9 = sbr.rel (0) target = $region5
  $region4: #{sst_forward.30} parent=0 // pred_region
    _
  $region5: #{sst_forward.30} parent=0 // pred_fallthru
    _
  // Predicated region
  $region6: #{sst_forward.30} parent=0 // pred_check
    _
  $region7: #{sst_forward.30} parent=0 // pred_check_branch
    %11 = sbr.rel (0) target = $region9
  $region8: #{sst_forward.30} parent=0 // pred_region
    _
  $region9: #{sst_forward.30} parent=0 // pred_fallthru
    _
  // Predicated region
  $region10: #{sst_forward.30} parent=0 // pred_check
    _
  $region11: #{sst_forward.30} parent=0 // pred_check_branch
    %13 = sbr.rel (0) target = $region13
  $region12: #{sst_forward.30} parent=0 // pred_region
    _
  $region13: #{sst_forward.30} parent=0 // pred_fallthru
    _
  %v15 = vld [vmem:[%s0] sm:$0xf]
  %v16 = vld [vmem:[%s0 + $0x4] sm:$0xf]
  %v17 = vld [vmem:[%s0 + $0x8] sm:$0xf]
  %v18 = vld [vmem:[%s0 + $0xc] sm:$0xf]
  %v19 = vld [vmem:[%s0 + $0x10] sm:$0xf]
  %v20 = vld [vmem:[%s0 + $0x14] sm:$0xf]
  %v21 = vld [vmem:[%s0 + $0x18] sm:$0xf]
  %v22 = vld [vmem:[%s0 + $0x1c] sm:$0xf]
  %v23 = vld [vmem:[%s0 + $0x20] sm:$0xf]
  %v24 = vld [vmem:[%s0 + $0x24] sm:$0xf]
  %v25 = vld [vmem:[%s0 + $0x28] sm:$0xf]
  %v26 = vld [vmem:[%s0 + $0x2c] sm:$0xf]
  %v27 = vld [vmem:[%s0 + $0x30] sm:$0xf]
  %v28 = vld [vmem:[%s0 + $0x34] sm:$0xf]
  %v29 = vld [vmem:[%s0 + $0x38] sm:$0xf]
  %v30 = vld [vmem:[%s0 + $0x3c] sm:$0xf]
  %v31 = vld [vmem:[%s0 + $0x40] sm:$0xf]
  %v32 = vld [vmem:[%s0 + $0x44] sm:$0xf]
  %v33 = vld [vmem:[%s0 + $0x48] sm:$0xf]
  %v34 = vld [vmem:[%s0 + $0x4c] sm:$0xf]
  %v35 = vld [vmem:[%s0 + $0x50] sm:$0xf]
  %v36 = vld [vmem:[%s0 + $0x54] sm:$0xf]
  %v37 = vld [vmem:[%s0 + $0x58] sm:$0xf]
  %v38 = vld [vmem:[%s0 + $0x5c] sm:$0xf]
  %v39 = vld [vmem:[%s0 + $0x60] sm:$0xf]
  %v40 = vld [vmem:[%s0 + $0x64] sm:$0xf]
  %v41 = vld [vmem:[%s0 + $0x68] sm:$0xf]
  %v42 = vld [vmem:[%s0 + $0x6c] sm:$0xf]
  %v43 = vld [vmem:[%s0 + $0x70] sm:$0xf]
  %v44 = vld [vmem:[%s0 + $0x74] sm:$0xf]
  %v45 = vld [vmem:[%s0 + $0x78] sm:$0xf]
  %v46 = vld [vmem:[%s0 + $0x7c] sm:$0xf]
  %v47 = vld [vmem:[%s0 + $0x80] sm:$0xf]
  %v48 = vld [vmem:[%s0 + $0x84] sm:$0xf]
  %v49 = vld [vmem:[%s0 + $0x88] sm:$0xf]
  %v50 = vld [vmem:[%s0 + $0x8c] sm:$0xf]
  %v51 = vld [vmem:[%s0 + $0x90] sm:$0xf]
  %v52 = vld [vmem:[%s0 + $0x94] sm:$0xf]
  %v53 = vld [vmem:[%s0 + $0x98] sm:$0xf]
  %v54 = vld [vmem:[%s0 + $0x9c] sm:$0xf]
  %v55 = vld [vmem:[%s0 + $0xa0] sm:$0xf]
  %v56 = vld [vmem:[%s0 + $0xa4] sm:$0xf]
  %v57 = vld [vmem:[%s0 + $0xa8] sm:$0xf]
  %v58 = vld [vmem:[%s0 + $0xac] sm:$0xf]
  %v59 = vld [vmem:[%s0 + $0xb0] sm:$0xf]
  %v60 = vld [vmem:[%s0 + $0xb4] sm:$0xf]
  %v61 = vld [vmem:[%s0 + $0xb8] sm:$0xf]
  %v62 = vld [vmem:[%s0 + $0xbc] sm:$0xf]
  %v63 = vld [vmem:[%s0 + $0xc0] sm:$0xf]
  %v64 = vld [vmem:[%s0 + $0xc4] sm:$0xf]
  %v65 = vld [vmem:[%s0 + $0xc8] sm:$0xf]
  %v66 = vld [vmem:[%s0 + $0xcc] sm:$0xf]
  %v67 = vld [vmem:[%s0 + $0xd0] sm:$0xf]
  %v68 = vld [vmem:[%s0 + $0xd4] sm:$0xf]
  %v69 = vld [vmem:[%s0 + $0xd8] sm:$0xf]
  %v70 = vld [vmem:[%s0 + $0xdc] sm:$0xf]
  %v71 = vld [vmem:[%s0 + $0xe0] sm:$0xf]
  %v72 = vld [vmem:[%s0 + $0xe4] sm:$0xf]
  %v73 = vld [vmem:[%s0 + $0xe8] sm:$0xf]
  %v74 = vld [vmem:[%s0 + $0xec] sm:$0xf]
  %v75 = vld [vmem:[%s0 + $0xf0] sm:$0xf]
  %v76 = vld [vmem:[%s0 + $0xf4] sm:$0xf]
  %v77 = vld [vmem:[%s0 + $0xf8] sm:$0xf]
  %v78 = vld [vmem:[%s0 + $0xfc] sm:$0xf]
  %v79 = vld [vmem:[%s1] sm:$0xf]
  %v80 = vld [vmem:[%s1 + $0x4] sm:$0xf]
  %v81 = vld [vmem:[%s1 + $0x8] sm:$0xf]
  %v82 = vld [vmem:[%s1 + $0xc] sm:$0xf]
  %v83 = vld [vmem:[%s1 + $0x10] sm:$0xf]
  %v84 = vld [vmem:[%s1 + $0x14] sm:$0xf]
  %v85 = vld [vmem:[%s1 + $0x18] sm:$0xf]
  %v86 = vld [vmem:[%s1 + $0x1c] sm:$0xf]
  %v87 = vld [vmem:[%s1 + $0x20] sm:$0xf]
  %v88 = vld [vmem:[%s2] sm:$0x1]
  %v90 = vlaneseq
  %v91 = vshrl.u32 %v90, 7
  %v92 = vsub.s32 0, %v91
  %v93 = vrot.slane %v88, %v92
  %v159 = vunpack.c.l.b16 %v15
  %v160 = vunpack.c.l.b16 %v16
  %v161 = vunpack.c.l.b16 %v17
  %v162 = vunpack.c.l.b16 %v18
  %v163 = vunpack.c.l.b16 %v19
  %v164 = vunpack.c.l.b16 %v20
  %v165 = vunpack.c.l.b16 %v21
  %v166 = vunpack.c.l.b16 %v22
  %v167 = vunpack.c.l.b16 %v23
  %v168 = vunpack.c.l.b16 %v24
  %v169 = vunpack.c.l.b16 %v25
  %v170 = vunpack.c.l.b16 %v26
  %v171 = vunpack.c.l.b16 %v27
  %v172 = vunpack.c.l.b16 %v28
  %v173 = vunpack.c.l.b16 %v29
  %v174 = vunpack.c.l.b16 %v30
  %v175 = vunpack.c.l.b16 %v31
  %v176 = vunpack.c.l.b16 %v32
  %v177 = vunpack.c.l.b16 %v33
  %v178 = vunpack.c.l.b16 %v34
  %v179 = vunpack.c.l.b16 %v35
  %v180 = vunpack.c.l.b16 %v36
  %v181 = vunpack.c.l.b16 %v37
  %v182 = vunpack.c.l.b16 %v38
  %v183 = vunpack.c.l.b16 %v39
  %v184 = vunpack.c.l.b16 %v40
  %v185 = vunpack.c.l.b16 %v41
  %v186 = vunpack.c.l.b16 %v42
  %v187 = vunpack.c.l.b16 %v43
  %v188 = vunpack.c.l.b16 %v44
  %v189 = vunpack.c.l.b16 %v45
  %v190 = vunpack.c.l.b16 %v46
  %v191 = vunpack.c.l.b16 %v47
  %v192 = vunpack.c.l.b16 %v48
  %v193 = vunpack.c.l.b16 %v49
  %v194 = vunpack.c.l.b16 %v50
  %v195 = vunpack.c.l.b16 %v51
  %v196 = vunpack.c.l.b16 %v52
  %v197 = vunpack.c.l.b16 %v53
  %v198 = vunpack.c.l.b16 %v54
  %v199 = vunpack.c.l.b16 %v55
  %v200 = vunpack.c.l.b16 %v56
  %v201 = vunpack.c.l.b16 %v57
  %v202 = vunpack.c.l.b16 %v58
  %v203 = vunpack.c.l.b16 %v59
  %v204 = vunpack.c.l.b16 %v60
  %v205 = vunpack.c.l.b16 %v61
  %v206 = vunpack.c.l.b16 %v62
  %v207 = vunpack.c.l.b16 %v63
  %v208 = vunpack.c.l.b16 %v64
  %v209 = vunpack.c.l.b16 %v65
  %v210 = vunpack.c.l.b16 %v66
  %v211 = vunpack.c.l.b16 %v67
  %v212 = vunpack.c.l.b16 %v68
  %v213 = vunpack.c.l.b16 %v69
  %v214 = vunpack.c.l.b16 %v70
  %v215 = vunpack.c.l.b16 %v71
  %v216 = vunpack.c.l.b16 %v72
  %v217 = vunpack.c.l.b16 %v73
  %v218 = vunpack.c.l.b16 %v74
  %v219 = vunpack.c.l.b16 %v75
  %v220 = vunpack.c.l.b16 %v76
  %v221 = vunpack.c.l.b16 %v77
  %v222 = vunpack.c.l.b16 %v78
  %v223 = vpack.c.b16 %v160, %v159
  %v224 = vpack.c.b16 %v162, %v161
  %v225 = vpack.c.b16 %v164, %v163
  %v226 = vpack.c.b16 %v166, %v165
  %v227 = vpack.c.b16 %v168, %v167
  %v228 = vpack.c.b16 %v170, %v169
  %v229 = vpack.c.b16 %v172, %v171
  %v230 = vpack.c.b16 %v174, %v173
  %v231 = vpack.c.b16 %v176, %v175
  %v232 = vpack.c.b16 %v178, %v177
  %v233 = vpack.c.b16 %v180, %v179
  %v234 = vpack.c.b16 %v182, %v181
  %v235 = vpack.c.b16 %v184, %v183
  %v236 = vpack.c.b16 %v186, %v185
  %v237 = vpack.c.b16 %v188, %v187
  %v238 = vpack.c.b16 %v190, %v189
  %v239 = vpack.c.b16 %v192, %v191
  %v240 = vpack.c.b16 %v194, %v193
  %v241 = vpack.c.b16 %v196, %v195
  %v242 = vpack.c.b16 %v198, %v197
  %v243 = vpack.c.b16 %v200, %v199
  %v244 = vpack.c.b16 %v202, %v201
  %v245 = vpack.c.b16 %v204, %v203
  %v246 = vpack.c.b16 %v206, %v205
  %v247 = vpack.c.b16 %v208, %v207
  %v248 = vpack.c.b16 %v210, %v209
  %v249 = vpack.c.b16 %v212, %v211
  %v250 = vpack.c.b16 %v214, %v213
  %v251 = vpack.c.b16 %v216, %v215
  %v252 = vpack.c.b16 %v218, %v217
  %v253 = vpack.c.b16 %v220, %v219
  %v254 = vpack.c.b16 %v222, %v221
  %v264 = vunpack.c.l.b16 %v79
  %v265 = vunpack.c.l.b16 %v80
  %v266 = vunpack.c.l.b16 %v81
  %v267 = vunpack.c.l.b16 %v82
  %v268 = vunpack.c.l.b16 %v83
  %v269 = vunpack.c.l.b16 %v84
  %v270 = vunpack.c.l.b16 %v85
  %v271 = vunpack.c.l.b16 %v86
  %v272 = vunpack.c.l.b16 %v87
  %v273 = vpack.c.b16 %v265, %v264
  %v274 = vpack.c.b16 %v267, %v266
  %v275 = vpack.c.b16 %v269, %v268
  %v276 = vpack.c.b16 %v271, %v270
  %v277 = vpack.c.b16 %v272, %v272
  %vm282 = vcmask 588800
  %v284 = vsel %vm282, %v223, 0
  %v287 = vsel %vm282, %v224, 0
  %v290 = vsel %vm282, %v225, 0
  %v293 = vsel %vm282, %v226, 0
  %v296 = vsel %vm282, %v227, 0
  %v299 = vsel %vm282, %v228, 0
  %v302 = vsel %vm282, %v229, 0
  %v305 = vsel %vm282, %v230, 0
  %v308 = vsel %vm282, %v231, 0
  %v311 = vsel %vm282, %v232, 0
  %v314 = vsel %vm282, %v233, 0
  %v317 = vsel %vm282, %v234, 0
  %v320 = vsel %vm282, %v235, 0
  %v323 = vsel %vm282, %v236, 0
  %v326 = vsel %vm282, %v237, 0
  %v329 = vsel %vm282, %v238, 0
  %v332 = vsel %vm282, %v239, 0
  %v335 = vsel %vm282, %v240, 0
  %v338 = vsel %vm282, %v241, 0
  %v341 = vsel %vm282, %v242, 0
  %v344 = vsel %vm282, %v243, 0
  %v347 = vsel %vm282, %v244, 0
  %v350 = vsel %vm282, %v245, 0
  %v353 = vsel %vm282, %v246, 0
  %v356 = vsel %vm282, %v247, 0
  %v359 = vsel %vm282, %v248, 0
  %v362 = vsel %vm282, %v249, 0
  %v365 = vsel %vm282, %v250, 0
  %v368 = vsel %vm282, %v251, 0
  %v371 = vsel %vm282, %v252, 0
  %v374 = vsel %vm282, %v253, 0
  %v377 = vsel %vm282, %v254, 0
  %vm379 = vcmask 1043456
  %v381 = vsel %vm379, %v277, 0
  %383 = vmatprep.subr.bf16.mxu0 0
  %384 = vmatpush1.bf16.msra.mxu0 0
  %385 = vmatprep.subr.bf16.mxu0 0
  %386 = vmatpush1.bf16.msra.mxu0 0
  %387 = vmatprep.subr.bf16.mxu0 0
  %388 = vmatpush1.bf16.msra.mxu0 0
  %389 = vmatprep.subr.bf16.mxu0 0
  %390 = vmatpush1.bf16.msra.mxu0 %v381
  %391 = vmatprep.subr.bf16.mxu0 0
  %392 = vmatpush1.bf16.msra.mxu0 %v276
  %393 = vmatprep.subr.bf16.mxu0 0
  %394 = vmatpush1.bf16.msra.mxu0 %v275
  %395 = vmatprep.subr.bf16.mxu0 0
  %396 = vmatpush1.bf16.msra.mxu0 %v274
  %397 = vmatprep.subr.bf16.mxu0 0
  %398 = vmatpush1.bf16.msra.mxu0 %v273
  %399 = vmatprep.subr.bf16.mxu0 0
  %400 = vmatpush2.bf16.msra.mxu0 0
  %401 = vmatprep.subr.bf16.mxu0 0
  %402 = vmatpush2.bf16.msra.mxu0 0
  %403 = vmatprep.subr.bf16.mxu0 0
  %404 = vmatpush2.bf16.msra.mxu0 0
  %405 = vmatprep.subr.bf16.mxu0 0
  %406 = vmatpush2.bf16.msra.mxu0 0
  %407 = vmatprep.subr.bf16.mxu0 0
  %408 = vmatpush2.bf16.msra.mxu0 0
  %409 = vmatprep.subr.bf16.mxu0 0
  %410 = vmatpush2.bf16.msra.mxu0 0
  %411 = vmatprep.subr.bf16.mxu0 0
  %412 = vmatpush2.bf16.msra.mxu0 0
  %413 = vmatprep.subr.bf16.mxu0 0
  %414 = vmatpush2.bf16.msra.mxu0 0
  %415 = vmatprep.mubr.bf16.mxu0 0
  %416 = vmatmul.mubr.bf16.gmra.mxu0 %v284
  %v417 = vpop.f32.mrf.mxu0
  %v418 = vadd.f32 %v93, %v417
  %v419 = vpop.f32.mrf.mxu0
  %v420 = vpop.f32.mrf.mxu0
  %v421 = vadd.f32 %v93, %v420
  %v422 = vpop.f32.mrf.mxu0
  %423 = vmatprep.mubr.bf16.mxu0 0
  %424 = vmatmul.mubr.bf16.gmra.mxu0 %v287
  %v425 = vpop.f32.mrf.mxu0
  %v426 = vadd.f32 %v93, %v425
  %v427 = vpop.f32.mrf.mxu0
  %v428 = vpop.f32.mrf.mxu0
  %v429 = vadd.f32 %v93, %v428
  %v430 = vpop.f32.mrf.mxu0
  %431 = vmatprep.mubr.bf16.mxu0 0
  %432 = vmatmul.mubr.bf16.gmra.mxu0 %v290
  %v433 = vpop.f32.mrf.mxu0
  %v434 = vadd.f32 %v93, %v433
  %v435 = vpop.f32.mrf.mxu0
  %v436 = vpop.f32.mrf.mxu0
  %v437 = vadd.f32 %v93, %v436
  %v438 = vpop.f32.mrf.mxu0
  %439 = vmatprep.mubr.bf16.mxu0 0
  %440 = vmatmul.mubr.bf16.gmra.mxu0 %v293
  %v441 = vpop.f32.mrf.mxu0
  %v442 = vadd.f32 %v93, %v441
  %v443 = vpop.f32.mrf.mxu0
  %v444 = vpop.f32.mrf.mxu0
  %v445 = vadd.f32 %v93, %v444
  %v446 = vpop.f32.mrf.mxu0
  %447 = vmatprep.mubr.bf16.mxu0 0
  %448 = vmatmul.mubr.bf16.gmra.mxu0 %v296
  %v449 = vpop.f32.mrf.mxu0
  %v450 = vadd.f32 %v93, %v449
  %v451 = vpop.f32.mrf.mxu0
  %v452 = vpop.f32.mrf.mxu0
  %v453 = vadd.f32 %v93, %v452
  %v454 = vpop.f32.mrf.mxu0
  %455 = vmatprep.mubr.bf16.mxu0 0
  %456 = vmatmul.mubr.bf16.gmra.mxu0 %v299
  %v457 = vpop.f32.mrf.mxu0
  %v458 = vadd.f32 %v93, %v457
  %v459 = vpop.f32.mrf.mxu0
  %v460 = vpop.f32.mrf.mxu0
  %v461 = vadd.f32 %v93, %v460
  %v462 = vpop.f32.mrf.mxu0
  %463 = vmatprep.mubr.bf16.mxu0 0
  %464 = vmatmul.mubr.bf16.gmra.mxu0 %v302
  %v465 = vpop.f32.mrf.mxu0
  %v466 = vadd.f32 %v93, %v465
  %v467 = vpop.f32.mrf.mxu0
  %v468 = vpop.f32.mrf.mxu0
  %v469 = vadd.f32 %v93, %v468
  %v470 = vpop.f32.mrf.mxu0
  %471 = vmatprep.mubr.bf16.mxu0 0
  %472 = vmatmul.mubr.bf16.gmra.mxu0 %v305
  %v473 = vpop.f32.mrf.mxu0
  %v474 = vadd.f32 %v93, %v473
  %v475 = vpop.f32.mrf.mxu0
  %v476 = vpop.f32.mrf.mxu0
  %v477 = vadd.f32 %v93, %v476
  %v478 = vpop.f32.mrf.mxu0
  %479 = vmatprep.mubr.bf16.mxu0 0
  %480 = vmatmul.mubr.bf16.gmra.mxu0 %v308
  %v481 = vpop.f32.mrf.mxu0
  %v482 = vadd.f32 %v93, %v481
  %v483 = vpop.f32.mrf.mxu0
  %v484 = vpop.f32.mrf.mxu0
  %v485 = vadd.f32 %v93, %v484
  %v486 = vpop.f32.mrf.mxu0
  %487 = vmatprep.mubr.bf16.mxu0 0
  %488 = vmatmul.mubr.bf16.gmra.mxu0 %v311
  %v489 = vpop.f32.mrf.mxu0
  %v490 = vadd.f32 %v93, %v489
  %v491 = vpop.f32.mrf.mxu0
  %v492 = vpop.f32.mrf.mxu0
  %v493 = vadd.f32 %v93, %v492
  %v494 = vpop.f32.mrf.mxu0
  %495 = vmatprep.mubr.bf16.mxu0 0
  %496 = vmatmul.mubr.bf16.gmra.mxu0 %v314
  %v497 = vpop.f32.mrf.mxu0
  %v498 = vadd.f32 %v93, %v497
  %v499 = vpop.f32.mrf.mxu0
  %v500 = vpop.f32.mrf.mxu0
  %v501 = vadd.f32 %v93, %v500
  %v502 = vpop.f32.mrf.mxu0
  %503 = vmatprep.mubr.bf16.mxu0 0
  %504 = vmatmul.mubr.bf16.gmra.mxu0 %v317
  %v505 = vpop.f32.mrf.mxu0
  %v506 = vadd.f32 %v93, %v505
  %v507 = vpop.f32.mrf.mxu0
  %v508 = vpop.f32.mrf.mxu0
  %v509 = vadd.f32 %v93, %v508
  %v510 = vpop.f32.mrf.mxu0
  %511 = vmatprep.mubr.bf16.mxu0 0
  %512 = vmatmul.mubr.bf16.gmra.mxu0 %v320
  %v513 = vpop.f32.mrf.mxu0
  %v514 = vadd.f32 %v93, %v513
  %v515 = vpop.f32.mrf.mxu0
  %v516 = vpop.f32.mrf.mxu0
  %v517 = vadd.f32 %v93, %v516
  %v518 = vpop.f32.mrf.mxu0
  %519 = vmatprep.mubr.bf16.mxu0 0
  %520 = vmatmul.mubr.bf16.gmra.mxu0 %v323
  %v521 = vpop.f32.mrf.mxu0
  %v522 = vadd.f32 %v93, %v521
  %v523 = vpop.f32.mrf.mxu0
  %v524 = vpop.f32.mrf.mxu0
  %v525 = vadd.f32 %v93, %v524
  %v526 = vpop.f32.mrf.mxu0
  %527 = vmatprep.mubr.bf16.mxu0 0
  %528 = vmatmul.mubr.bf16.gmra.mxu0 %v326
  %v529 = vpop.f32.mrf.mxu0
  %v530 = vadd.f32 %v93, %v529
  %v531 = vpop.f32.mrf.mxu0
  %v532 = vpop.f32.mrf.mxu0
  %v533 = vadd.f32 %v93, %v532
  %v534 = vpop.f32.mrf.mxu0
  %535 = vmatprep.mubr.bf16.mxu0 0
  %536 = vmatmul.mubr.bf16.gmra.mxu0 %v329
  %v537 = vpop.f32.mrf.mxu0
  %v538 = vadd.f32 %v93, %v537
  %v539 = vpop.f32.mrf.mxu0
  %v540 = vpop.f32.mrf.mxu0
  %v541 = vadd.f32 %v93, %v540
  %v542 = vpop.f32.mrf.mxu0
  %543 = vmatprep.mubr.bf16.mxu0 0
  %544 = vmatmul.mubr.bf16.gmra.mxu0 %v332
  %v545 = vpop.f32.mrf.mxu0
  %v546 = vadd.f32 %v93, %v545
  %v547 = vpop.f32.mrf.mxu0
  %v548 = vpop.f32.mrf.mxu0
  %v549 = vadd.f32 %v93, %v548
  %v550 = vpop.f32.mrf.mxu0
  %551 = vmatprep.mubr.bf16.mxu0 0
  %552 = vmatmul.mubr.bf16.gmra.mxu0 %v335
  %v553 = vpop.f32.mrf.mxu0
  %v554 = vadd.f32 %v93, %v553
  %v555 = vpop.f32.mrf.mxu0
  %v556 = vpop.f32.mrf.mxu0
  %v557 = vadd.f32 %v93, %v556
  %v558 = vpop.f32.mrf.mxu0
  %559 = vmatprep.mubr.bf16.mxu0 0
  %560 = vmatmul.mubr.bf16.gmra.mxu0 %v338
  %v561 = vpop.f32.mrf.mxu0
  %v562 = vadd.f32 %v93, %v561
  %v563 = vpop.f32.mrf.mxu0
  %v564 = vpop.f32.mrf.mxu0
  %v565 = vadd.f32 %v93, %v564
  %v566 = vpop.f32.mrf.mxu0
  %567 = vmatprep.mubr.bf16.mxu0 0
  %568 = vmatmul.mubr.bf16.gmra.mxu0 %v341
  %v569 = vpop.f32.mrf.mxu0
  %v570 = vadd.f32 %v93, %v569
  %v571 = vpop.f32.mrf.mxu0
  %v572 = vpop.f32.mrf.mxu0
  %v573 = vadd.f32 %v93, %v572
  %v574 = vpop.f32.mrf.mxu0
  %575 = vmatprep.mubr.bf16.mxu0 0
  %576 = vmatmul.mubr.bf16.gmra.mxu0 %v344
  %v577 = vpop.f32.mrf.mxu0
  %v578 = vadd.f32 %v93, %v577
  %v579 = vpop.f32.mrf.mxu0
  %v580 = vpop.f32.mrf.mxu0
  %v581 = vadd.f32 %v93, %v580
  %v582 = vpop.f32.mrf.mxu0
  %583 = vmatprep.mubr.bf16.mxu0 0
  %584 = vmatmul.mubr.bf16.gmra.mxu0 %v347
  %v585 = vpop.f32.mrf.mxu0
  %v586 = vadd.f32 %v93, %v585
  %v587 = vpop.f32.mrf.mxu0
  %v588 = vpop.f32.mrf.mxu0
  %v589 = vadd.f32 %v93, %v588
  %v590 = vpop.f32.mrf.mxu0
  %591 = vmatprep.mubr.bf16.mxu0 0
  %592 = vmatmul.mubr.bf16.gmra.mxu0 %v350
  %v593 = vpop.f32.mrf.mxu0
  %v594 = vadd.f32 %v93, %v593
  %v595 = vpop.f32.mrf.mxu0
  %v596 = vpop.f32.mrf.mxu0
  %v597 = vadd.f32 %v93, %v596
  %v598 = vpop.f32.mrf.mxu0
  %599 = vmatprep.mubr.bf16.mxu0 0
  %600 = vmatmul.mubr.bf16.gmra.mxu0 %v353
  %v601 = vpop.f32.mrf.mxu0
  %v602 = vadd.f32 %v93, %v601
  %v603 = vpop.f32.mrf.mxu0
  %v604 = vpop.f32.mrf.mxu0
  %v605 = vadd.f32 %v93, %v604
  %v606 = vpop.f32.mrf.mxu0
  %607 = vmatprep.mubr.bf16.mxu0 0
  %608 = vmatmul.mubr.bf16.gmra.mxu0 %v356
  %v609 = vpop.f32.mrf.mxu0
  %v610 = vadd.f32 %v93, %v609
  %v611 = vpop.f32.mrf.mxu0
  %v612 = vpop.f32.mrf.mxu0
  %v613 = vadd.f32 %v93, %v612
  %v614 = vpop.f32.mrf.mxu0
  %615 = vmatprep.mubr.bf16.mxu0 0
  %616 = vmatmul.mubr.bf16.gmra.mxu0 %v359
  %v617 = vpop.f32.mrf.mxu0
  %v618 = vadd.f32 %v93, %v617
  %v619 = vpop.f32.mrf.mxu0
  %v620 = vpop.f32.mrf.mxu0
  %v621 = vadd.f32 %v93, %v620
  %v622 = vpop.f32.mrf.mxu0
  %623 = vmatprep.mubr.bf16.mxu0 0
  %624 = vmatmul.mubr.bf16.gmra.mxu0 %v362
  %v625 = vpop.f32.mrf.mxu0
  %v626 = vadd.f32 %v93, %v625
  %v627 = vpop.f32.mrf.mxu0
  %v628 = vpop.f32.mrf.mxu0
  %v629 = vadd.f32 %v93, %v628
  %v630 = vpop.f32.mrf.mxu0
  %631 = vmatprep.mubr.bf16.mxu0 0
  %632 = vmatmul.mubr.bf16.gmra.mxu0 %v365
  %v633 = vpop.f32.mrf.mxu0
  %v634 = vadd.f32 %v93, %v633
  %v635 = vpop.f32.mrf.mxu0
  %v636 = vpop.f32.mrf.mxu0
  %v637 = vadd.f32 %v93, %v636
  %v638 = vpop.f32.mrf.mxu0
  %639 = vmatprep.mubr.bf16.mxu0 0
  %640 = vmatmul.mubr.bf16.gmra.mxu0 %v368
  %v641 = vpop.f32.mrf.mxu0
  %v642 = vadd.f32 %v93, %v641
  %v643 = vpop.f32.mrf.mxu0
  %v644 = vpop.f32.mrf.mxu0
  %v645 = vadd.f32 %v93, %v644
  %v646 = vpop.f32.mrf.mxu0
  %647 = vmatprep.mubr.bf16.mxu0 0
  %648 = vmatmul.mubr.bf16.gmra.mxu0 %v371
  %v649 = vpop.f32.mrf.mxu0
  %v650 = vadd.f32 %v93, %v649
  %v651 = vpop.f32.mrf.mxu0
  %v652 = vpop.f32.mrf.mxu0
  %v653 = vadd.f32 %v93, %v652
  %v654 = vpop.f32.mrf.mxu0
  %655 = vmatprep.mubr.bf16.mxu0 0
  %656 = vmatmul.mubr.bf16.gmra.mxu0 %v374
  %v657 = vpop.f32.mrf.mxu0
  %v658 = vadd.f32 %v93, %v657
  %v659 = vpop.f32.mrf.mxu0
  %v660 = vpop.f32.mrf.mxu0
  %v661 = vadd.f32 %v93, %v660
  %v662 = vpop.f32.mrf.mxu0
  %663 = vmatprep.mubr.bf16.mxu0 0
  %664 = vmatmul.mubr.bf16.gmra.mxu0 %v377
  %v665 = vpop.f32.mrf.mxu0
  %v666 = vadd.f32 %v93, %v665
  %v667 = vpop.f32.mrf.mxu0
  %v668 = vpop.f32.mrf.mxu0
  %v669 = vadd.f32 %v93, %v668
  %v670 = vpop.f32.mrf.mxu0
  %671 = vdwg.mxu0
  %v672 = vmax.f32 %v418, 0.0
  %v673 = vmax.f32 %v421, 0.0
  %v674 = vmax.f32 %v426, 0.0
  %v675 = vmax.f32 %v429, 0.0
  %v676 = vmax.f32 %v434, 0.0
  %v677 = vmax.f32 %v437, 0.0
  %v678 = vmax.f32 %v442, 0.0
  %v679 = vmax.f32 %v445, 0.0
  %v680 = vmax.f32 %v450, 0.0
  %v681 = vmax.f32 %v453, 0.0
  %v682 = vmax.f32 %v458, 0.0
  %v683 = vmax.f32 %v461, 0.0
  %v684 = vmax.f32 %v466, 0.0
  %v685 = vmax.f32 %v469, 0.0
  %v686 = vmax.f32 %v474, 0.0
  %v687 = vmax.f32 %v477, 0.0
  %v688 = vmax.f32 %v482, 0.0
  %v689 = vmax.f32 %v485, 0.0
  %v690 = vmax.f32 %v490, 0.0
  %v691 = vmax.f32 %v493, 0.0
  %v692 = vmax.f32 %v498, 0.0
  %v693 = vmax.f32 %v501, 0.0
  %v694 = vmax.f32 %v506, 0.0
  %v695 = vmax.f32 %v509, 0.0
  %v696 = vmax.f32 %v514, 0.0
  %v697 = vmax.f32 %v517, 0.0
  %v698 = vmax.f32 %v522, 0.0
  %v699 = vmax.f32 %v525, 0.0
  %v700 = vmax.f32 %v530, 0.0
  %v701 = vmax.f32 %v533, 0.0
  %v702 = vmax.f32 %v538, 0.0
  %v703 = vmax.f32 %v541, 0.0
  %v704 = vmax.f32 %v546, 0.0
  %v705 = vmax.f32 %v549, 0.0
  %v706 = vmax.f32 %v554, 0.0
  %v707 = vmax.f32 %v557, 0.0
  %v708 = vmax.f32 %v562, 0.0
  %v709 = vmax.f32 %v565, 0.0
  %v710 = vmax.f32 %v570, 0.0
  %v711 = vmax.f32 %v573, 0.0
  %v712 = vmax.f32 %v578, 0.0
  %v713 = vmax.f32 %v581, 0.0
  %v714 = vmax.f32 %v586, 0.0
  %v715 = vmax.f32 %v589, 0.0
  %v716 = vmax.f32 %v594, 0.0
  %v717 = vmax.f32 %v597, 0.0
  %v718 = vmax.f32 %v602, 0.0
  %v719 = vmax.f32 %v605, 0.0
  %v720 = vmax.f32 %v610, 0.0
  %v721 = vmax.f32 %v613, 0.0
  %v722 = vmax.f32 %v618, 0.0
  %v723 = vmax.f32 %v621, 0.0
  %v724 = vmax.f32 %v626, 0.0
  %v725 = vmax.f32 %v629, 0.0
  %v726 = vmax.f32 %v634, 0.0
  %v727 = vmax.f32 %v637, 0.0
  %v728 = vmax.f32 %v642, 0.0
  %v729 = vmax.f32 %v645, 0.0
  %v730 = vmax.f32 %v650, 0.0
  %v731 = vmax.f32 %v653, 0.0
  %v732 = vmax.f32 %v658, 0.0
  %v733 = vmax.f32 %v661, 0.0
  %v734 = vmax.f32 %v666, 0.0
  %v735 = vmax.f32 %v669, 0.0
  %vm736 = vcmask 130048
  %737 = vst.msk [vmem:[%s3] sm:$0xff] %vm736, %v672
  %738 = vst.msk [vmem:[%s3 + $0x8] sm:$0xff] %vm736, %v673
  %739 = vst.msk [vmem:[%s3 + $0x10] sm:$0xff] %vm736, %v674
  %740 = vst.msk [vmem:[%s3 + $0x18] sm:$0xff] %vm736, %v675
  %741 = vst.msk [vmem:[%s3 + $0x20] sm:$0xff] %vm736, %v676
  %742 = vst.msk [vmem:[%s3 + $0x28] sm:$0xff] %vm736, %v677
  %743 = vst.msk [vmem:[%s3 + $0x30] sm:$0xff] %vm736, %v678
  %744 = vst.msk [vmem:[%s3 + $0x38] sm:$0xff] %vm736, %v679
  %745 = vst.msk [vmem:[%s3 + $0x40] sm:$0xff] %vm736, %v680
  %746 = vst.msk [vmem:[%s3 + $0x48] sm:$0xff] %vm736, %v681
  %747 = vst.msk [vmem:[%s3 + $0x50] sm:$0xff] %vm736, %v682
  %748 = vst.msk [vmem:[%s3 + $0x58] sm:$0xff] %vm736, %v683
  %749 = vst.msk [vmem:[%s3 + $0x60] sm:$0xff] %vm736, %v684
  %750 = vst.msk [vmem:[%s3 + $0x68] sm:$0xff] %vm736, %v685
  %751 = vst.msk [vmem:[%s3 + $0x70] sm:$0xff] %vm736, %v686
  %752 = vst.msk [vmem:[%s3 + $0x78] sm:$0xff] %vm736, %v687
  %753 = vst.msk [vmem:[%s3 + $0x80] sm:$0xff] %vm736, %v688
  %754 = vst.msk [vmem:[%s3 + $0x88] sm:$0xff] %vm736, %v689
  %755 = vst.msk [vmem:[%s3 + $0x90] sm:$0xff] %vm736, %v690
  %756 = vst.msk [vmem:[%s3 + $0x98] sm:$0xff] %vm736, %v691
  %757 = vst.msk [vmem:[%s3 + $0xa0] sm:$0xff] %vm736, %v692
  %758 = vst.msk [vmem:[%s3 + $0xa8] sm:$0xff] %vm736, %v693
  %759 = vst.msk [vmem:[%s3 + $0xb0] sm:$0xff] %vm736, %v694
  %760 = vst.msk [vmem:[%s3 + $0xb8] sm:$0xff] %vm736, %v695
  %761 = vst.msk [vmem:[%s3 + $0xc0] sm:$0xff] %vm736, %v696
  %762 = vst.msk [vmem:[%s3 + $0xc8] sm:$0xff] %vm736, %v697
  %763 = vst.msk [vmem:[%s3 + $0xd0] sm:$0xff] %vm736, %v698
  %764 = vst.msk [vmem:[%s3 + $0xd8] sm:$0xff] %vm736, %v699
  %765 = vst.msk [vmem:[%s3 + $0xe0] sm:$0xff] %vm736, %v700
  %766 = vst.msk [vmem:[%s3 + $0xe8] sm:$0xff] %vm736, %v701
  %767 = vst.msk [vmem:[%s3 + $0xf0] sm:$0xff] %vm736, %v702
  %768 = vst.msk [vmem:[%s3 + $0xf8] sm:$0xff] %vm736, %v703
  %769 = vst.msk [vmem:[%s3 + $0x100] sm:$0xff] %vm736, %v704
  %770 = vst.msk [vmem:[%s3 + $0x108] sm:$0xff] %vm736, %v705
  %771 = vst.msk [vmem:[%s3 + $0x110] sm:$0xff] %vm736, %v706
  %772 = vst.msk [vmem:[%s3 + $0x118] sm:$0xff] %vm736, %v707
  %773 = vst.msk [vmem:[%s3 + $0x120] sm:$0xff] %vm736, %v708
  %774 = vst.msk [vmem:[%s3 + $0x128] sm:$0xff] %vm736, %v709
  %775 = vst.msk [vmem:[%s3 + $0x130] sm:$0xff] %vm736, %v710
  %776 = vst.msk [vmem:[%s3 + $0x138] sm:$0xff] %vm736, %v711
  %777 = vst.msk [vmem:[%s3 + $0x140] sm:$0xff] %vm736, %v712
  %778 = vst.msk [vmem:[%s3 + $0x148] sm:$0xff] %vm736, %v713
  %779 = vst.msk [vmem:[%s3 + $0x150] sm:$0xff] %vm736, %v714
  %780 = vst.msk [vmem:[%s3 + $0x158] sm:$0xff] %vm736, %v715
  %781 = vst.msk [vmem:[%s3 + $0x160] sm:$0xff] %vm736, %v716
  %782 = vst.msk [vmem:[%s3 + $0x168] sm:$0xff] %vm736, %v717
  %783 = vst.msk [vmem:[%s3 + $0x170] sm:$0xff] %vm736, %v718
  %784 = vst.msk [vmem:[%s3 + $0x178] sm:$0xff] %vm736, %v719
  %785 = vst.msk [vmem:[%s3 + $0x180] sm:$0xff] %vm736, %v720
  %786 = vst.msk [vmem:[%s3 + $0x188] sm:$0xff] %vm736, %v721
  %787 = vst.msk [vmem:[%s3 + $0x190] sm:$0xff] %vm736, %v722
  %788 = vst.msk [vmem:[%s3 + $0x198] sm:$0xff] %vm736, %v723
  %789 = vst.msk [vmem:[%s3 + $0x1a0] sm:$0xff] %vm736, %v724
  %790 = vst.msk [vmem:[%s3 + $0x1a8] sm:$0xff] %vm736, %v725
  %791 = vst.msk [vmem:[%s3 + $0x1b0] sm:$0xff] %vm736, %v726
  %792 = vst.msk [vmem:[%s3 + $0x1b8] sm:$0xff] %vm736, %v727
  %793 = vst.msk [vmem:[%s3 + $0x1c0] sm:$0xff] %vm736, %v728
  %794 = vst.msk [vmem:[%s3 + $0x1c8] sm:$0xff] %vm736, %v729
  %795 = vst.msk [vmem:[%s3 + $0x1d0] sm:$0xff] %vm736, %v730
  %796 = vst.msk [vmem:[%s3 + $0x1d8] sm:$0xff] %vm736, %v731
  %797 = vst.msk [vmem:[%s3 + $0x1e0] sm:$0xff] %vm736, %v732
  %798 = vst.msk [vmem:[%s3 + $0x1e8] sm:$0xff] %vm736, %v733
  %799 = vst.msk [vmem:[%s3 + $0x1f0] sm:$0xff] %vm736, %v734
  %800 = vst.msk [vmem:[%s3 + $0x1f8] sm:$0xff] %vm736, %v735
  // Predicated region
  $region14: #{sst_forward.30} parent=0 // pred_check
    _
  $region15: #{sst_forward.30} parent=0 // pred_check_branch
    %802 = sbr.rel (0) target = $region17
  $region16: #{sst_forward.30} parent=0 // pred_region
    _
  $region17: #{sst_forward.30} parent=0 // pred_fallthru
    _
  // Predicated region
  $region18: #{sst_forward.30} parent=0 // pred_check
    _
  $region19: #{sst_forward.30} parent=0 // pred_check_branch
    %804 = sbr.rel (0) target = $region21
  $region20: #{sst_forward.30} parent=0 // pred_region
    _
  $region21: #{sst_forward.30} parent=0 // pred_fallthru
    _

// kernel: sst_forward.31
$region0: #{sst_forward.31}
  #allocation0 [shape = 'u32[]', space=smem, size = 0x4, offset = 0x4, fixed_abs, tag = 'smem constant byte address 0x4 - core index']
  #allocation1 [shape = 'u32[144,128]{1,0:T(1,128)}', space=vmem, size = 0x12000, scoped, tag = 'internal scratch']
  %s0 = inlined_call_operand.vmem [shape: bf16[512,144], index: 0, kind: input, shape index: {}]
  %s1 = inlined_call_operand.vmem [shape: bf16[144,16], index: 1, kind: input, shape index: {}]
  %s2 = inlined_call_operand.vmem [shape: f32[1,16], index: 2, kind: input, shape index: {}]
  %s3 = inlined_call_operand.vmem [shape: f32[512,16], index: 3, kind: output, shape index: {}]
  %s4 = sld [smem:[#allocation0]]
  $region22: #{sst_forward.31} parent=0
    _
  %s6 = ssub.s32 1, %s4
  %s7 = scalar_select 0, %s6, %s4
  // Predicated region
  $region2: #{sst_forward.31} parent=0 // pred_check
    _
  $region3: #{sst_forward.31} parent=0 // pred_check_branch
    %9 = sbr.rel (0) target = $region5
  $region4: #{sst_forward.31} parent=0 // pred_region
    _
  $region5: #{sst_forward.31} parent=0 // pred_fallthru
    _
  // Predicated region
  $region6: #{sst_forward.31} parent=0 // pred_check
    _
  $region7: #{sst_forward.31} parent=0 // pred_check_branch
    %11 = sbr.rel (0) target = $region9
  $region8: #{sst_forward.31} parent=0 // pred_region
    _
  $region9: #{sst_forward.31} parent=0 // pred_fallthru
    _
  // Predicated region
  $region10: #{sst_forward.31} parent=0 // pred_check
    _
  $region11: #{sst_forward.31} parent=0 // pred_check_branch
    %13 = sbr.rel (0) target = $region13
  $region12: #{sst_forward.31} parent=0 // pred_region
    _
  $region13: #{sst_forward.31} parent=0 // pred_fallthru
    _
  %v15 = vld [vmem:[%s0] sm:$0xff]
  %v16 = vld [vmem:[%s0 + $0x8] sm:$0xff]
  %v17 = vld [vmem:[%s0 + $0x10] sm:$0xff]
  %v18 = vld [vmem:[%s0 + $0x18] sm:$0xff]
  %v19 = vld [vmem:[%s0 + $0x20] sm:$0xff]
  %v20 = vld [vmem:[%s0 + $0x28] sm:$0xff]
  %v21 = vld [vmem:[%s0 + $0x30] sm:$0xff]
  %v22 = vld [vmem:[%s0 + $0x38] sm:$0xff]
  %v23 = vld [vmem:[%s0 + $0x40] sm:$0xff]
  %v24 = vld [vmem:[%s0 + $0x48] sm:$0xff]
  %v25 = vld [vmem:[%s0 + $0x50] sm:$0xff]
  %v26 = vld [vmem:[%s0 + $0x58] sm:$0xff]
  %v27 = vld [vmem:[%s0 + $0x60] sm:$0xff]
  %v28 = vld [vmem:[%s0 + $0x68] sm:$0xff]
  %v29 = vld [vmem:[%s0 + $0x70] sm:$0xff]
  %v30 = vld [vmem:[%s0 + $0x78] sm:$0xff]
  %v31 = vld [vmem:[%s0 + $0x80] sm:$0xff]
  %v32 = vld [vmem:[%s0 + $0x88] sm:$0xff]
  %v33 = vld [vmem:[%s0 + $0x90] sm:$0xff]
  %v34 = vld [vmem:[%s0 + $0x98] sm:$0xff]
  %v35 = vld [vmem:[%s0 + $0xa0] sm:$0xff]
  %v36 = vld [vmem:[%s0 + $0xa8] sm:$0xff]
  %v37 = vld [vmem:[%s0 + $0xb0] sm:$0xff]
  %v38 = vld [vmem:[%s0 + $0xb8] sm:$0xff]
  %v39 = vld [vmem:[%s0 + $0xc0] sm:$0xff]
  %v40 = vld [vmem:[%s0 + $0xc8] sm:$0xff]
  %v41 = vld [vmem:[%s0 + $0xd0] sm:$0xff]
  %v42 = vld [vmem:[%s0 + $0xd8] sm:$0xff]
  %v43 = vld [vmem:[%s0 + $0xe0] sm:$0xff]
  %v44 = vld [vmem:[%s0 + $0xe8] sm:$0xff]
  %v45 = vld [vmem:[%s0 + $0xf0] sm:$0xff]
  %v46 = vld [vmem:[%s0 + $0xf8] sm:$0xff]
  %v47 = vld [vmem:[%s0 + $0x100] sm:$0xff]
  %v48 = vld [vmem:[%s0 + $0x108] sm:$0xff]
  %v49 = vld [vmem:[%s0 + $0x110] sm:$0xff]
  %v50 = vld [vmem:[%s0 + $0x118] sm:$0xff]
  %v51 = vld [vmem:[%s0 + $0x120] sm:$0xff]
  %v52 = vld [vmem:[%s0 + $0x128] sm:$0xff]
  %v53 = vld [vmem:[%s0 + $0x130] sm:$0xff]
  %v54 = vld [vmem:[%s0 + $0x138] sm:$0xff]
  %v55 = vld [vmem:[%s0 + $0x140] sm:$0xff]
  %v56 = vld [vmem:[%s0 + $0x148] sm:$0xff]
  %v57 = vld [vmem:[%s0 + $0x150] sm:$0xff]
  %v58 = vld [vmem:[%s0 + $0x158] sm:$0xff]
  %v59 = vld [vmem:[%s0 + $0x160] sm:$0xff]
  %v60 = vld [vmem:[%s0 + $0x168] sm:$0xff]
  %v61 = vld [vmem:[%s0 + $0x170] sm:$0xff]
  %v62 = vld [vmem:[%s0 + $0x178] sm:$0xff]
  %v63 = vld [vmem:[%s0 + $0x180] sm:$0xff]
  %v64 = vld [vmem:[%s0 + $0x188] sm:$0xff]
  %v65 = vld [vmem:[%s0 + $0x190] sm:$0xff]
  %v66 = vld [vmem:[%s0 + $0x198] sm:$0xff]
  %v67 = vld [vmem:[%s0 + $0x1a0] sm:$0xff]
  %v68 = vld [vmem:[%s0 + $0x1a8] sm:$0xff]
  %v69 = vld [vmem:[%s0 + $0x1b0] sm:$0xff]
  %v70 = vld [vmem:[%s0 + $0x1b8] sm:$0xff]
  %v71 = vld [vmem:[%s0 + $0x1c0] sm:$0xff]
  %v72 = vld [vmem:[%s0 + $0x1c8] sm:$0xff]
  %v73 = vld [vmem:[%s0 + $0x1d0] sm:$0xff]
  %v74 = vld [vmem:[%s0 + $0x1d8] sm:$0xff]
  %v75 = vld [vmem:[%s0 + $0x1e0] sm:$0xff]
  %v76 = vld [vmem:[%s0 + $0x1e8] sm:$0xff]
  %v77 = vld [vmem:[%s0 + $0x1f0] sm:$0xff]
  %v78 = vld [vmem:[%s0 + $0x1f8] sm:$0xff]
  %v79 = vld [vmem:[%s1] sm:$0xf]
  %v80 = vld [vmem:[%s1 + $0x4] sm:$0xf]
  %v81 = vld [vmem:[%s1 + $0x8] sm:$0xf]
  %v82 = vld [vmem:[%s1 + $0xc] sm:$0xf]
  %v83 = vld [vmem:[%s1 + $0x10] sm:$0xf]
  %v84 = vld [vmem:[%s1 + $0x14] sm:$0xf]
  %v85 = vld [vmem:[%s1 + $0x18] sm:$0xf]
  %v86 = vld [vmem:[%s1 + $0x1c] sm:$0xf]
  %v87 = vld [vmem:[%s1 + $0x20] sm:$0xf]
  %v88 = vld [vmem:[%s1 + $0x24] sm:$0xf]
  %v89 = vld [vmem:[%s1 + $0x28] sm:$0xf]
  %v90 = vld [vmem:[%s1 + $0x2c] sm:$0xf]
  %v91 = vld [vmem:[%s1 + $0x30] sm:$0xf]
  %v92 = vld [vmem:[%s1 + $0x34] sm:$0xf]
  %v93 = vld [vmem:[%s1 + $0x38] sm:$0xf]
  %v94 = vld [vmem:[%s1 + $0x3c] sm:$0xf]
  %v95 = vld [vmem:[%s1 + $0x40] sm:$0xf]
  %v96 = vld [vmem:[%s1 + $0x44] sm:$0xf]
  %v97 = vld [vmem:[%s2] sm:$0x1]
  %v99 = vlaneseq
  %v100 = vshrl.u32 %v99, 7
  %v101 = vsub.s32 0, %v100
  %v102 = vrot.slane %v97, %v101
  %v168 = vunpack.c.l.b16 %v15
  %v169 = vunpack.c.h.b16 %v15
  %v170 = vunpack.c.l.b16 %v16
  %v171 = vunpack.c.h.b16 %v16
  %v172 = vunpack.c.l.b16 %v17
  %v173 = vunpack.c.h.b16 %v17
  %v174 = vunpack.c.l.b16 %v18
  %v175 = vunpack.c.h.b16 %v18
  %v176 = vunpack.c.l.b16 %v19
  %v177 = vunpack.c.h.b16 %v19
  %v178 = vunpack.c.l.b16 %v20
  %v179 = vunpack.c.h.b16 %v20
  %v180 = vunpack.c.l.b16 %v21
  %v181 = vunpack.c.h.b16 %v21
  %v182 = vunpack.c.l.b16 %v22
  %v183 = vunpack.c.h.b16 %v22
  %v184 = vunpack.c.l.b16 %v23
  %v185 = vunpack.c.h.b16 %v23
  %v186 = vunpack.c.l.b16 %v24
  %v187 = vunpack.c.h.b16 %v24
  %v188 = vunpack.c.l.b16 %v25
  %v189 = vunpack.c.h.b16 %v25
  %v190 = vunpack.c.l.b16 %v26
  %v191 = vunpack.c.h.b16 %v26
  %v192 = vunpack.c.l.b16 %v27
  %v193 = vunpack.c.h.b16 %v27
  %v194 = vunpack.c.l.b16 %v28
  %v195 = vunpack.c.h.b16 %v28
  %v196 = vunpack.c.l.b16 %v29
  %v197 = vunpack.c.h.b16 %v29
  %v198 = vunpack.c.l.b16 %v30
  %v199 = vunpack.c.h.b16 %v30
  %v200 = vunpack.c.l.b16 %v31
  %v201 = vunpack.c.h.b16 %v31
  %v202 = vunpack.c.l.b16 %v32
  %v203 = vunpack.c.h.b16 %v32
  %v204 = vunpack.c.l.b16 %v33
  %v205 = vunpack.c.h.b16 %v33
  %v206 = vunpack.c.l.b16 %v34
  %v207 = vunpack.c.h.b16 %v34
  %v208 = vunpack.c.l.b16 %v35
  %v209 = vunpack.c.h.b16 %v35
  %v210 = vunpack.c.l.b16 %v36
  %v211 = vunpack.c.h.b16 %v36
  %v212 = vunpack.c.l.b16 %v37
  %v213 = vunpack.c.h.b16 %v37
  %v214 = vunpack.c.l.b16 %v38
  %v215 = vunpack.c.h.b16 %v38
  %v216 = vunpack.c.l.b16 %v39
  %v217 = vunpack.c.h.b16 %v39
  %v218 = vunpack.c.l.b16 %v40
  %v219 = vunpack.c.h.b16 %v40
  %v220 = vunpack.c.l.b16 %v41
  %v221 = vunpack.c.h.b16 %v41
  %v222 = vunpack.c.l.b16 %v42
  %v223 = vunpack.c.h.b16 %v42
  %v224 = vunpack.c.l.b16 %v43
  %v225 = vunpack.c.h.b16 %v43
  %v226 = vunpack.c.l.b16 %v44
  %v227 = vunpack.c.h.b16 %v44
  %v228 = vunpack.c.l.b16 %v45
  %v229 = vunpack.c.h.b16 %v45
  %v230 = vunpack.c.l.b16 %v46
  %v231 = vunpack.c.h.b16 %v46
  %v232 = vunpack.c.l.b16 %v47
  %v233 = vunpack.c.h.b16 %v47
  %v234 = vunpack.c.l.b16 %v48
  %v235 = vunpack.c.h.b16 %v48
  %v236 = vunpack.c.l.b16 %v49
  %v237 = vunpack.c.h.b16 %v49
  %v238 = vunpack.c.l.b16 %v50
  %v239 = vunpack.c.h.b16 %v50
  %v240 = vunpack.c.l.b16 %v51
  %v241 = vunpack.c.h.b16 %v51
  %v242 = vunpack.c.l.b16 %v52
  %v243 = vunpack.c.h.b16 %v52
  %v244 = vunpack.c.l.b16 %v53
  %v245 = vunpack.c.h.b16 %v53
  %v246 = vunpack.c.l.b16 %v54
  %v247 = vunpack.c.h.b16 %v54
  %v248 = vunpack.c.l.b16 %v55
  %v249 = vunpack.c.h.b16 %v55
  %v250 = vunpack.c.l.b16 %v56
  %v251 = vunpack.c.h.b16 %v56
  %v252 = vunpack.c.l.b16 %v57
  %v253 = vunpack.c.h.b16 %v57
  %v254 = vunpack.c.l.b16 %v58
  %v255 = vunpack.c.h.b16 %v58
  %v256 = vunpack.c.l.b16 %v59
  %v257 = vunpack.c.h.b16 %v59
  %v258 = vunpack.c.l.b16 %v60
  %v259 = vunpack.c.h.b16 %v60
  %v260 = vunpack.c.l.b16 %v61
  %v261 = vunpack.c.h.b16 %v61
  %v262 = vunpack.c.l.b16 %v62
  %v263 = vunpack.c.h.b16 %v62
  %v264 = vunpack.c.l.b16 %v63
  %v265 = vunpack.c.h.b16 %v63
  %v266 = vunpack.c.l.b16 %v64
  %v267 = vunpack.c.h.b16 %v64
  %v268 = vunpack.c.l.b16 %v65
  %v269 = vunpack.c.h.b16 %v65
  %v270 = vunpack.c.l.b16 %v66
  %v271 = vunpack.c.h.b16 %v66
  %v272 = vunpack.c.l.b16 %v67
  %v273 = vunpack.c.h.b16 %v67
  %v274 = vunpack.c.l.b16 %v68
  %v275 = vunpack.c.h.b16 %v68
  %v276 = vunpack.c.l.b16 %v69
  %v277 = vunpack.c.h.b16 %v69
  %v278 = vunpack.c.l.b16 %v70
  %v279 = vunpack.c.h.b16 %v70
  %v280 = vunpack.c.l.b16 %v71
  %v281 = vunpack.c.h.b16 %v71
  %v282 = vunpack.c.l.b16 %v72
  %v283 = vunpack.c.h.b16 %v72
  %v284 = vunpack.c.l.b16 %v73
  %v285 = vunpack.c.h.b16 %v73
  %v286 = vunpack.c.l.b16 %v74
  %v287 = vunpack.c.h.b16 %v74
  %v288 = vunpack.c.l.b16 %v75
  %v289 = vunpack.c.h.b16 %v75
  %v290 = vunpack.c.l.b16 %v76
  %v291 = vunpack.c.h.b16 %v76
  %v292 = vunpack.c.l.b16 %v77
  %v293 = vunpack.c.h.b16 %v77
  %v294 = vunpack.c.l.b16 %v78
  %v295 = vunpack.c.h.b16 %v78
  %v296 = vpack.c.b16 %v170, %v168
  %v297 = vpack.c.b16 %v171, %v169
  %v298 = vpack.c.b16 %v174, %v172
  %v299 = vpack.c.b16 %v175, %v173
  %v300 = vpack.c.b16 %v178, %v176
  %v301 = vpack.c.b16 %v179, %v177
  %v302 = vpack.c.b16 %v182, %v180
  %v303 = vpack.c.b16 %v183, %v181
  %v304 = vpack.c.b16 %v186, %v184
  %v305 = vpack.c.b16 %v187, %v185
  %v306 = vpack.c.b16 %v190, %v188
  %v307 = vpack.c.b16 %v191, %v189
  %v308 = vpack.c.b16 %v194, %v192
  %v309 = vpack.c.b16 %v195, %v193
  %v310 = vpack.c.b16 %v198, %v196
  %v311 = vpack.c.b16 %v199, %v197
  %v312 = vpack.c.b16 %v202, %v200
  %v313 = vpack.c.b16 %v203, %v201
  %v314 = vpack.c.b16 %v206, %v204
  %v315 = vpack.c.b16 %v207, %v205
  %v316 = vpack.c.b16 %v210, %v208
  %v317 = vpack.c.b16 %v211, %v209
  %v318 = vpack.c.b16 %v214, %v212
  %v319 = vpack.c.b16 %v215, %v213
  %v320 = vpack.c.b16 %v218, %v216
  %v321 = vpack.c.b16 %v219, %v217
  %v322 = vpack.c.b16 %v222, %v220
  %v323 = vpack.c.b16 %v223, %v221
  %v324 = vpack.c.b16 %v226, %v224
  %v325 = vpack.c.b16 %v227, %v225
  %v326 = vpack.c.b16 %v230, %v228
  %v327 = vpack.c.b16 %v231, %v229
  %v328 = vpack.c.b16 %v234, %v232
  %v329 = vpack.c.b16 %v235, %v233
  %v330 = vpack.c.b16 %v238, %v236
  %v331 = vpack.c.b16 %v239, %v237
  %v332 = vpack.c.b16 %v242, %v240
  %v333 = vpack.c.b16 %v243, %v241
  %v334 = vpack.c.b16 %v246, %v244
  %v335 = vpack.c.b16 %v247, %v245
  %v336 = vpack.c.b16 %v250, %v248
  %v337 = vpack.c.b16 %v251, %v249
  %v338 = vpack.c.b16 %v254, %v252
  %v339 = vpack.c.b16 %v255, %v253
  %v340 = vpack.c.b16 %v258, %v256
  %v341 = vpack.c.b16 %v259, %v257
  %v342 = vpack.c.b16 %v262, %v260
  %v343 = vpack.c.b16 %v263, %v261
  %v344 = vpack.c.b16 %v266, %v264
  %v345 = vpack.c.b16 %v267, %v265
  %v346 = vpack.c.b16 %v270, %v268
  %v347 = vpack.c.b16 %v271, %v269
  %v348 = vpack.c.b16 %v274, %v272
  %v349 = vpack.c.b16 %v275, %v273
  %v350 = vpack.c.b16 %v278, %v276
  %v351 = vpack.c.b16 %v279, %v277
  %v352 = vpack.c.b16 %v282, %v280
  %v353 = vpack.c.b16 %v283, %v281
  %v354 = vpack.c.b16 %v286, %v284
  %v355 = vpack.c.b16 %v287, %v285
  %v356 = vpack.c.b16 %v290, %v288
  %v357 = vpack.c.b16 %v291, %v289
  %v358 = vpack.c.b16 %v294, %v292
  %v359 = vpack.c.b16 %v295, %v293
  %v410 = vunpack.c.l.b16 %v79
  %v411 = vunpack.c.l.b16 %v80
  %v412 = vunpack.c.l.b16 %v81
  %v413 = vunpack.c.l.b16 %v82
  %v414 = vunpack.c.l.b16 %v83
  %v415 = vunpack.c.l.b16 %v84
  %v416 = vunpack.c.l.b16 %v85
  %v417 = vunpack.c.l.b16 %v86
  %v418 = vunpack.c.l.b16 %v87
  %v419 = vunpack.c.l.b16 %v88
  %v420 = vunpack.c.l.b16 %v89
  %v421 = vunpack.c.l.b16 %v90
  %v422 = vunpack.c.l.b16 %v91
  %v423 = vunpack.c.l.b16 %v92
  %v424 = vunpack.c.l.b16 %v93
  %v425 = vunpack.c.l.b16 %v94
  %v426 = vunpack.c.l.b16 %v95
  %v427 = vunpack.c.l.b16 %v96
  %v428 = vpack.c.b16 %v411, %v410
  %v429 = vpack.c.b16 %v413, %v412
  %v430 = vpack.c.b16 %v415, %v414
  %v431 = vpack.c.b16 %v417, %v416
  %v432 = vpack.c.b16 %v419, %v418
  %v433 = vpack.c.b16 %v421, %v420
  %v434 = vpack.c.b16 %v423, %v422
  %v435 = vpack.c.b16 %v425, %v424
  %v436 = vpack.c.b16 %v427, %v426
  %vm446 = vcmask 130048
  %v448 = vsel %vm446, %v297, 0
  %v451 = vsel %vm446, %v299, 0
  %v454 = vsel %vm446, %v301, 0
  %v457 = vsel %vm446, %v303, 0
  %v460 = vsel %vm446, %v305, 0
  %v463 = vsel %vm446, %v307, 0
  %v466 = vsel %vm446, %v309, 0
  %v469 = vsel %vm446, %v311, 0
  %v472 = vsel %vm446, %v313, 0
  %v475 = vsel %vm446, %v315, 0
  %v478 = vsel %vm446, %v317, 0
  %v481 = vsel %vm446, %v319, 0
  %v484 = vsel %vm446, %v321, 0
  %v487 = vsel %vm446, %v323, 0
  %v490 = vsel %vm446, %v325, 0
  %v493 = vsel %vm446, %v327, 0
  %v496 = vsel %vm446, %v329, 0
  %v499 = vsel %vm446, %v331, 0
  %v502 = vsel %vm446, %v333, 0
  %v505 = vsel %vm446, %v335, 0
  %v508 = vsel %vm446, %v337, 0
  %v511 = vsel %vm446, %v339, 0
  %v514 = vsel %vm446, %v341, 0
  %v517 = vsel %vm446, %v343, 0
  %v520 = vsel %vm446, %v345, 0
  %v523 = vsel %vm446, %v347, 0
  %v526 = vsel %vm446, %v349, 0
  %v529 = vsel %vm446, %v351, 0
  %v532 = vsel %vm446, %v353, 0
  %v535 = vsel %vm446, %v355, 0
  %v538 = vsel %vm446, %v357, 0
  %v541 = vsel %vm446, %v359, 0
  %543 = vmatprep.subr.bf16.mxu0 0
  %544 = vmatpush1.bf16.msra.mxu0 %v435
  %545 = vmatprep.subr.bf16.mxu0 0
  %546 = vmatpush1.bf16.msra.mxu0 %v434
  %547 = vmatprep.subr.bf16.mxu0 0
  %548 = vmatpush1.bf16.msra.mxu0 %v433
  %549 = vmatprep.subr.bf16.mxu0 0
  %550 = vmatpush1.bf16.msra.mxu0 %v432
  %551 = vmatprep.subr.bf16.mxu0 0
  %552 = vmatpush1.bf16.msra.mxu0 %v431
  %553 = vmatprep.subr.bf16.mxu0 0
  %554 = vmatpush1.bf16.msra.mxu0 %v430
  %555 = vmatprep.subr.bf16.mxu0 0
  %556 = vmatpush1.bf16.msra.mxu0 %v429
  %557 = vmatprep.subr.bf16.mxu0 0
  %558 = vmatpush1.bf16.msra.mxu0 %v428
  %559 = vmatprep.subr.bf16.mxu0 0
  %560 = vmatpush2.bf16.msra.mxu0 0
  %561 = vmatprep.subr.bf16.mxu0 0
  %562 = vmatpush2.bf16.msra.mxu0 0
  %563 = vmatprep.subr.bf16.mxu0 0
  %564 = vmatpush2.bf16.msra.mxu0 0
  %565 = vmatprep.subr.bf16.mxu0 0
  %566 = vmatpush2.bf16.msra.mxu0 0
  %567 = vmatprep.subr.bf16.mxu0 0
  %568 = vmatpush2.bf16.msra.mxu0 0
  %569 = vmatprep.subr.bf16.mxu0 0
  %570 = vmatpush2.bf16.msra.mxu0 0
  %571 = vmatprep.subr.bf16.mxu0 0
  %572 = vmatpush2.bf16.msra.mxu0 0
  %573 = vmatprep.subr.bf16.mxu0 0
  %574 = vmatpush2.bf16.msra.mxu0 %v436
  %575 = vmatprep.mubr.bf16.mxu0 %v448
  %576 = vmatmul.mubr.bf16.gmra.mxu0 %v296
  %v577 = vpop.f32.mrf.mxu0
  %v578 = vadd.f32 %v102, %v577
  %v579 = vpop.f32.mrf.mxu0
  %v580 = vpop.f32.mrf.mxu0
  %v581 = vadd.f32 %v102, %v580
  %v582 = vpop.f32.mrf.mxu0
  %583 = vmatprep.mubr.bf16.mxu0 %v451
  %584 = vmatmul.mubr.bf16.gmra.mxu0 %v298
  %v585 = vpop.f32.mrf.mxu0
  %v586 = vadd.f32 %v102, %v585
  %v587 = vpop.f32.mrf.mxu0
  %v588 = vpop.f32.mrf.mxu0
  %v589 = vadd.f32 %v102, %v588
  %v590 = vpop.f32.mrf.mxu0
  %591 = vmatprep.mubr.bf16.mxu0 %v454
  %592 = vmatmul.mubr.bf16.gmra.mxu0 %v300
  %v593 = vpop.f32.mrf.mxu0
  %v594 = vadd.f32 %v102, %v593
  %v595 = vpop.f32.mrf.mxu0
  %v596 = vpop.f32.mrf.mxu0
  %v597 = vadd.f32 %v102, %v596
  %v598 = vpop.f32.mrf.mxu0
  %599 = vmatprep.mubr.bf16.mxu0 %v457
  %600 = vmatmul.mubr.bf16.gmra.mxu0 %v302
  %v601 = vpop.f32.mrf.mxu0
  %v602 = vadd.f32 %v102, %v601
  %v603 = vpop.f32.mrf.mxu0
  %v604 = vpop.f32.mrf.mxu0
  %v605 = vadd.f32 %v102, %v604
  %v606 = vpop.f32.mrf.mxu0
  %607 = vmatprep.mubr.bf16.mxu0 %v460
  %608 = vmatmul.mubr.bf16.gmra.mxu0 %v304
  %v609 = vpop.f32.mrf.mxu0
  %v610 = vadd.f32 %v102, %v609
  %v611 = vpop.f32.mrf.mxu0
  %v612 = vpop.f32.mrf.mxu0
  %v613 = vadd.f32 %v102, %v612
  %v614 = vpop.f32.mrf.mxu0
  %615 = vmatprep.mubr.bf16.mxu0 %v463
  %616 = vmatmul.mubr.bf16.gmra.mxu0 %v306
  %v617 = vpop.f32.mrf.mxu0
  %v618 = vadd.f32 %v102, %v617
  %v619 = vpop.f32.mrf.mxu0
  %v620 = vpop.f32.mrf.mxu0
  %v621 = vadd.f32 %v102, %v620
  %v622 = vpop.f32.mrf.mxu0
  %623 = vmatprep.mubr.bf16.mxu0 %v466
  %624 = vmatmul.mubr.bf16.gmra.mxu0 %v308
  %v625 = vpop.f32.mrf.mxu0
  %v626 = vadd.f32 %v102, %v625
  %v627 = vpop.f32.mrf.mxu0
  %v628 = vpop.f32.mrf.mxu0
  %v629 = vadd.f32 %v102, %v628
  %v630 = vpop.f32.mrf.mxu0
  %631 = vmatprep.mubr.bf16.mxu0 %v469
  %632 = vmatmul.mubr.bf16.gmra.mxu0 %v310
  %v633 = vpop.f32.mrf.mxu0
  %v634 = vadd.f32 %v102, %v633
  %v635 = vpop.f32.mrf.mxu0
  %v636 = vpop.f32.mrf.mxu0
  %v637 = vadd.f32 %v102, %v636
  %v638 = vpop.f32.mrf.mxu0
  %639 = vmatprep.mubr.bf16.mxu0 %v472
  %640 = vmatmul.mubr.bf16.gmra.mxu0 %v312
  %v641 = vpop.f32.mrf.mxu0
  %v642 = vadd.f32 %v102, %v641
  %v643 = vpop.f32.mrf.mxu0
  %v644 = vpop.f32.mrf.mxu0
  %v645 = vadd.f32 %v102, %v644
  %v646 = vpop.f32.mrf.mxu0
  %647 = vmatprep.mubr.bf16.mxu0 %v475
  %648 = vmatmul.mubr.bf16.gmra.mxu0 %v314
  %v649 = vpop.f32.mrf.mxu0
  %v650 = vadd.f32 %v102, %v649
  %v651 = vpop.f32.mrf.mxu0
  %v652 = vpop.f32.mrf.mxu0
  %v653 = vadd.f32 %v102, %v652
  %v654 = vpop.f32.mrf.mxu0
  %655 = vmatprep.mubr.bf16.mxu0 %v478
  %656 = vmatmul.mubr.bf16.gmra.mxu0 %v316
  %v657 = vpop.f32.mrf.mxu0
  %v658 = vadd.f32 %v102, %v657
  %v659 = vpop.f32.mrf.mxu0
  %v660 = vpop.f32.mrf.mxu0
  %v661 = vadd.f32 %v102, %v660
  %v662 = vpop.f32.mrf.mxu0
  %663 = vmatprep.mubr.bf16.mxu0 %v481
  %664 = vmatmul.mubr.bf16.gmra.mxu0 %v318
  %v665 = vpop.f32.mrf.mxu0
  %v666 = vadd.f32 %v102, %v665
  %v667 = vpop.f32.mrf.mxu0
  %v668 = vpop.f32.mrf.mxu0
  %v669 = vadd.f32 %v102, %v668
  %v670 = vpop.f32.mrf.mxu0
  %671 = vmatprep.mubr.bf16.mxu0 %v484
  %672 = vmatmul.mubr.bf16.gmra.mxu0 %v320
  %v673 = vpop.f32.mrf.mxu0
  %v674 = vadd.f32 %v102, %v673
  %v675 = vpop.f32.mrf.mxu0
  %v676 = vpop.f32.mrf.mxu0
  %v677 = vadd.f32 %v102, %v676
  %v678 = vpop.f32.mrf.mxu0
  %679 = vmatprep.mubr.bf16.mxu0 %v487
  %680 = vmatmul.mubr.bf16.gmra.mxu0 %v322
  %v681 = vpop.f32.mrf.mxu0
  %v682 = vadd.f32 %v102, %v681
  %v683 = vpop.f32.mrf.mxu0
  %v684 = vpop.f32.mrf.mxu0
  %v685 = vadd.f32 %v102, %v684
  %v686 = vpop.f32.mrf.mxu0
  %687 = vmatprep.mubr.bf16.mxu0 %v490
  %688 = vmatmul.mubr.bf16.gmra.mxu0 %v324
  %v689 = vpop.f32.mrf.mxu0
  %v690 = vadd.f32 %v102, %v689
  %v691 = vpop.f32.mrf.mxu0
  %v692 = vpop.f32.mrf.mxu0
  %v693 = vadd.f32 %v102, %v692
  %v694 = vpop.f32.mrf.mxu0
  %695 = vmatprep.mubr.bf16.mxu0 %v493
  %696 = vmatmul.mubr.bf16.gmra.mxu0 %v326
  %v697 = vpop.f32.mrf.mxu0
  %v698 = vadd.f32 %v102, %v697
  %v699 = vpop.f32.mrf.mxu0
  %v700 = vpop.f32.mrf.mxu0
  %v701 = vadd.f32 %v102, %v700
  %v702 = vpop.f32.mrf.mxu0
  %703 = vmatprep.mubr.bf16.mxu0 %v496
  %704 = vmatmul.mubr.bf16.gmra.mxu0 %v328
  %v705 = vpop.f32.mrf.mxu0
  %v706 = vadd.f32 %v102, %v705
  %v707 = vpop.f32.mrf.mxu0
  %v708 = vpop.f32.mrf.mxu0
  %v709 = vadd.f32 %v102, %v708
  %v710 = vpop.f32.mrf.mxu0
  %711 = vmatprep.mubr.bf16.mxu0 %v499
  %712 = vmatmul.mubr.bf16.gmra.mxu0 %v330
  %v713 = vpop.f32.mrf.mxu0
  %v714 = vadd.f32 %v102, %v713
  %v715 = vpop.f32.mrf.mxu0
  %v716 = vpop.f32.mrf.mxu0
  %v717 = vadd.f32 %v102, %v716
  %v718 = vpop.f32.mrf.mxu0
  %719 = vmatprep.mubr.bf16.mxu0 %v502
  %720 = vmatmul.mubr.bf16.gmra.mxu0 %v332
  %v721 = vpop.f32.mrf.mxu0
  %v722 = vadd.f32 %v102, %v721
  %v723 = vpop.f32.mrf.mxu0
  %v724 = vpop.f32.mrf.mxu0
  %v725 = vadd.f32 %v102, %v724
  %v726 = vpop.f32.mrf.mxu0
  %727 = vmatprep.mubr.bf16.mxu0 %v505
  %728 = vmatmul.mubr.bf16.gmra.mxu0 %v334
  %v729 = vpop.f32.mrf.mxu0
  %v730 = vadd.f32 %v102, %v729
  %v731 = vpop.f32.mrf.mxu0
  %v732 = vpop.f32.mrf.mxu0
  %v733 = vadd.f32 %v102, %v732
  %v734 = vpop.f32.mrf.mxu0
  %735 = vmatprep.mubr.bf16.mxu0 %v508
  %736 = vmatmul.mubr.bf16.gmra.mxu0 %v336
  %v737 = vpop.f32.mrf.mxu0
  %v738 = vadd.f32 %v102, %v737
  %v739 = vpop.f32.mrf.mxu0
  %v740 = vpop.f32.mrf.mxu0
  %v741 = vadd.f32 %v102, %v740
  %v742 = vpop.f32.mrf.mxu0
  %743 = vmatprep.mubr.bf16.mxu0 %v511
  %744 = vmatmul.mubr.bf16.gmra.mxu0 %v338
  %v745 = vpop.f32.mrf.mxu0
  %v746 = vadd.f32 %v102, %v745
  %v747 = vpop.f32.mrf.mxu0
  %v748 = vpop.f32.mrf.mxu0
  %v749 = vadd.f32 %v102, %v748
  %v750 = vpop.f32.mrf.mxu0
  %751 = vmatprep.mubr.bf16.mxu0 %v514
  %752 = vmatmul.mubr.bf16.gmra.mxu0 %v340
  %v753 = vpop.f32.mrf.mxu0
  %v754 = vadd.f32 %v102, %v753
  %v755 = vpop.f32.mrf.mxu0
  %v756 = vpop.f32.mrf.mxu0
  %v757 = vadd.f32 %v102, %v756
  %v758 = vpop.f32.mrf.mxu0
  %759 = vmatprep.mubr.bf16.mxu0 %v517
  %760 = vmatmul.mubr.bf16.gmra.mxu0 %v342
  %v761 = vpop.f32.mrf.mxu0
  %v762 = vadd.f32 %v102, %v761
  %v763 = vpop.f32.mrf.mxu0
  %v764 = vpop.f32.mrf.mxu0
  %v765 = vadd.f32 %v102, %v764
  %v766 = vpop.f32.mrf.mxu0
  %767 = vmatprep.mubr.bf16.mxu0 %v520
  %768 = vmatmul.mubr.bf16.gmra.mxu0 %v344
  %v769 = vpop.f32.mrf.mxu0
  %v770 = vadd.f32 %v102, %v769
  %v771 = vpop.f32.mrf.mxu0
  %v772 = vpop.f32.mrf.mxu0
  %v773 = vadd.f32 %v102, %v772
  %v774 = vpop.f32.mrf.mxu0
  %775 = vmatprep.mubr.bf16.mxu0 %v523
  %776 = vmatmul.mubr.bf16.gmra.mxu0 %v346
  %v777 = vpop.f32.mrf.mxu0
  %v778 = vadd.f32 %v102, %v777
  %v779 = vpop.f32.mrf.mxu0
  %v780 = vpop.f32.mrf.mxu0
  %v781 = vadd.f32 %v102, %v780
  %v782 = vpop.f32.mrf.mxu0
  %783 = vmatprep.mubr.bf16.mxu0 %v526
  %784 = vmatmul.mubr.bf16.gmra.mxu0 %v348
  %v785 = vpop.f32.mrf.mxu0
  %v786 = vadd.f32 %v102, %v785
  %v787 = vpop.f32.mrf.mxu0
  %v788 = vpop.f32.mrf.mxu0
  %v789 = vadd.f32 %v102, %v788
  %v790 = vpop.f32.mrf.mxu0
  %791 = vmatprep.mubr.bf16.mxu0 %v529
  %792 = vmatmul.mubr.bf16.gmra.mxu0 %v350
  %v793 = vpop.f32.mrf.mxu0
  %v794 = vadd.f32 %v102, %v793
  %v795 = vpop.f32.mrf.mxu0
  %v796 = vpop.f32.mrf.mxu0
  %v797 = vadd.f32 %v102, %v796
  %v798 = vpop.f32.mrf.mxu0
  %799 = vmatprep.mubr.bf16.mxu0 %v532
  %800 = vmatmul.mubr.bf16.gmra.mxu0 %v352
  %v801 = vpop.f32.mrf.mxu0
  %v802 = vadd.f32 %v102, %v801
  %v803 = vpop.f32.mrf.mxu0
  %v804 = vpop.f32.mrf.mxu0
  %v805 = vadd.f32 %v102, %v804
  %v806 = vpop.f32.mrf.mxu0
  %807 = vmatprep.mubr.bf16.mxu0 %v535
  %808 = vmatmul.mubr.bf16.gmra.mxu0 %v354
  %v809 = vpop.f32.mrf.mxu0
  %v810 = vadd.f32 %v102, %v809
  %v811 = vpop.f32.mrf.mxu0
  %v812 = vpop.f32.mrf.mxu0
  %v813 = vadd.f32 %v102, %v812
  %v814 = vpop.f32.mrf.mxu0
  %815 = vmatprep.mubr.bf16.mxu0 %v538
  %816 = vmatmul.mubr.bf16.gmra.mxu0 %v356
  %v817 = vpop.f32.mrf.mxu0
  %v818 = vadd.f32 %v102, %v817
  %v819 = vpop.f32.mrf.mxu0
  %v820 = vpop.f32.mrf.mxu0
  %v821 = vadd.f32 %v102, %v820
  %v822 = vpop.f32.mrf.mxu0
  %823 = vmatprep.mubr.bf16.mxu0 %v541
  %824 = vmatmul.mubr.bf16.gmra.mxu0 %v358
  %v825 = vpop.f32.mrf.mxu0
  %v826 = vadd.f32 %v102, %v825
  %v827 = vpop.f32.mrf.mxu0
  %v828 = vpop.f32.mrf.mxu0
  %v829 = vadd.f32 %v102, %v828
  %v830 = vpop.f32.mrf.mxu0
  %831 = vdwg.mxu0
  %v832 = vmax.f32 %v578, 0.0
  %v833 = vmax.f32 %v581, 0.0
  %v834 = vmax.f32 %v586, 0.0
  %v835 = vmax.f32 %v589, 0.0
  %v836 = vmax.f32 %v594, 0.0
  %v837 = vmax.f32 %v597, 0.0
  %v838 = vmax.f32 %v602, 0.0
  %v839 = vmax.f32 %v605, 0.0
  %v840 = vmax.f32 %v610, 0.0
  %v841 = vmax.f32 %v613, 0.0
  %v842 = vmax.f32 %v618, 0.0
  %v843 = vmax.f32 %v621, 0.0
  %v844 = vmax.f32 %v626, 0.0
  %v845 = vmax.f32 %v629, 0.0
  %v846 = vmax.f32 %v634, 0.0
  %v847 = vmax.f32 %v637, 0.0
  %v848 = vmax.f32 %v642, 0.0
  %v849 = vmax.f32 %v645, 0.0
  %v850 = vmax.f32 %v650, 0.0
  %v851 = vmax.f32 %v653, 0.0
  %v852 = vmax.f32 %v658, 0.0
  %v853 = vmax.f32 %v661, 0.0
  %v854 = vmax.f32 %v666, 0.0
  %v855 = vmax.f32 %v669, 0.0
  %v856 = vmax.f32 %v674, 0.0
  %v857 = vmax.f32 %v677, 0.0
  %v858 = vmax.f32 %v682, 0.0
  %v859 = vmax.f32 %v685, 0.0
  %v860 = vmax.f32 %v690, 0.0
  %v861 = vmax.f32 %v693, 0.0
  %v862 = vmax.f32 %v698, 0.0
  %v863 = vmax.f32 %v701, 0.0
  %v864 = vmax.f32 %v706, 0.0
  %v865 = vmax.f32 %v709, 0.0
  %v866 = vmax.f32 %v714, 0.0
  %v867 = vmax.f32 %v717, 0.0
  %v868 = vmax.f32 %v722, 0.0
  %v869 = vmax.f32 %v725, 0.0
  %v870 = vmax.f32 %v730, 0.0
  %v871 = vmax.f32 %v733, 0.0
  %v872 = vmax.f32 %v738, 0.0
  %v873 = vmax.f32 %v741, 0.0
  %v874 = vmax.f32 %v746, 0.0
  %v875 = vmax.f32 %v749, 0.0
  %v876 = vmax.f32 %v754, 0.0
  %v877 = vmax.f32 %v757, 0.0
  %v878 = vmax.f32 %v762, 0.0
  %v879 = vmax.f32 %v765, 0.0
  %v880 = vmax.f32 %v770, 0.0
  %v881 = vmax.f32 %v773, 0.0
  %v882 = vmax.f32 %v778, 0.0
  %v883 = vmax.f32 %v781, 0.0
  %v884 = vmax.f32 %v786, 0.0
  %v885 = vmax.f32 %v789, 0.0
  %v886 = vmax.f32 %v794, 0.0
  %v887 = vmax.f32 %v797, 0.0
  %v888 = vmax.f32 %v802, 0.0
  %v889 = vmax.f32 %v805, 0.0
  %v890 = vmax.f32 %v810, 0.0
  %v891 = vmax.f32 %v813, 0.0
  %v892 = vmax.f32 %v818, 0.0
  %v893 = vmax.f32 %v821, 0.0
  %v894 = vmax.f32 %v826, 0.0
  %v895 = vmax.f32 %v829, 0.0
  %896 = vst.msk [vmem:[%s3] sm:$0xff] %vm446, %v832
  %897 = vst.msk [vmem:[%s3 + $0x8] sm:$0xff] %vm446, %v833
  %898 = vst.msk [vmem:[%s3 + $0x10] sm:$0xff] %vm446, %v834
  %899 = vst.msk [vmem:[%s3 + $0x18] sm:$0xff] %vm446, %v835
  %900 = vst.msk [vmem:[%s3 + $0x20] sm:$0xff] %vm446, %v836
  %901 = vst.msk [vmem:[%s3 + $0x28] sm:$0xff] %vm446, %v837
  %902 = vst.msk [vmem:[%s3 + $0x30] sm:$0xff] %vm446, %v838
  %903 = vst.msk [vmem:[%s3 + $0x38] sm:$0xff] %vm446, %v839
  %904 = vst.msk [vmem:[%s3 + $0x40] sm:$0xff] %vm446, %v840
  %905 = vst.msk [vmem:[%s3 + $0x48] sm:$0xff] %vm446, %v841
  %906 = vst.msk [vmem:[%s3 + $0x50] sm:$0xff] %vm446, %v842
  %907 = vst.msk [vmem:[%s3 + $0x58] sm:$0xff] %vm446, %v843
  %908 = vst.msk [vmem:[%s3 + $0x60] sm:$0xff] %vm446, %v844
  %909 = vst.msk [vmem:[%s3 + $0x68] sm:$0xff] %vm446, %v845
  %910 = vst.msk [vmem:[%s3 + $0x70] sm:$0xff] %vm446, %v846
  %911 = vst.msk [vmem:[%s3 + $0x78] sm:$0xff] %vm446, %v847
  %912 = vst.msk [vmem:[%s3 + $0x80] sm:$0xff] %vm446, %v848
  %913 = vst.msk [vmem:[%s3 + $0x88] sm:$0xff] %vm446, %v849
  %914 = vst.msk [vmem:[%s3 + $0x90] sm:$0xff] %vm446, %v850
  %915 = vst.msk [vmem:[%s3 + $0x98] sm:$0xff] %vm446, %v851
  %916 = vst.msk [vmem:[%s3 + $0xa0] sm:$0xff] %vm446, %v852
  %917 = vst.msk [vmem:[%s3 + $0xa8] sm:$0xff] %vm446, %v853
  %918 = vst.msk [vmem:[%s3 + $0xb0] sm:$0xff] %vm446, %v854
  %919 = vst.msk [vmem:[%s3 + $0xb8] sm:$0xff] %vm446, %v855
  %920 = vst.msk [vmem:[%s3 + $0xc0] sm:$0xff] %vm446, %v856
  %921 = vst.msk [vmem:[%s3 + $0xc8] sm:$0xff] %vm446, %v857
  %922 = vst.msk [vmem:[%s3 + $0xd0] sm:$0xff] %vm446, %v858
  %923 = vst.msk [vmem:[%s3 + $0xd8] sm:$0xff] %vm446, %v859
  %924 = vst.msk [vmem:[%s3 + $0xe0] sm:$0xff] %vm446, %v860
  %925 = vst.msk [vmem:[%s3 + $0xe8] sm:$0xff] %vm446, %v861
  %926 = vst.msk [vmem:[%s3 + $0xf0] sm:$0xff] %vm446, %v862
  %927 = vst.msk [vmem:[%s3 + $0xf8] sm:$0xff] %vm446, %v863
  %928 = vst.msk [vmem:[%s3 + $0x100] sm:$0xff] %vm446, %v864
  %929 = vst.msk [vmem:[%s3 + $0x108] sm:$0xff] %vm446, %v865
  %930 = vst.msk [vmem:[%s3 + $0x110] sm:$0xff] %vm446, %v866
  %931 = vst.msk [vmem:[%s3 + $0x118] sm:$0xff] %vm446, %v867
  %932 = vst.msk [vmem:[%s3 + $0x120] sm:$0xff] %vm446, %v868
  %933 = vst.msk [vmem:[%s3 + $0x128] sm:$0xff] %vm446, %v869
  %934 = vst.msk [vmem:[%s3 + $0x130] sm:$0xff] %vm446, %v870
  %935 = vst.msk [vmem:[%s3 + $0x138] sm:$0xff] %vm446, %v871
  %936 = vst.msk [vmem:[%s3 + $0x140] sm:$0xff] %vm446, %v872
  %937 = vst.msk [vmem:[%s3 + $0x148] sm:$0xff] %vm446, %v873
  %938 = vst.msk [vmem:[%s3 + $0x150] sm:$0xff] %vm446, %v874
  %939 = vst.msk [vmem:[%s3 + $0x158] sm:$0xff] %vm446, %v875
  %940 = vst.msk [vmem:[%s3 + $0x160] sm:$0xff] %vm446, %v876
  %941 = vst.msk [vmem:[%s3 + $0x168] sm:$0xff] %vm446, %v877
  %942 = vst.msk [vmem:[%s3 + $0x170] sm:$0xff] %vm446, %v878
  %943 = vst.msk [vmem:[%s3 + $0x178] sm:$0xff] %vm446, %v879
  %944 = vst.msk [vmem:[%s3 + $0x180] sm:$0xff] %vm446, %v880
  %945 = vst.msk [vmem:[%s3 + $0x188] sm:$0xff] %vm446, %v881
  %946 = vst.msk [vmem:[%s3 + $0x190] sm:$0xff] %vm446, %v882
  %947 = vst.msk [vmem:[%s3 + $0x198] sm:$0xff] %vm446, %v883
  %948 = vst.msk [vmem:[%s3 + $0x1a0] sm:$0xff] %vm446, %v884
  %949 = vst.msk [vmem:[%s3 + $0x1a8] sm:$0xff] %vm446, %v885
  %950 = vst.msk [vmem:[%s3 + $0x1b0] sm:$0xff] %vm446, %v886
  %951 = vst.msk [vmem:[%s3 + $0x1b8] sm:$0xff] %vm446, %v887
  %952 = vst.msk [vmem:[%s3 + $0x1c0] sm:$0xff] %vm446, %v888
  %953 = vst.msk [vmem:[%s3 + $0x1c8] sm:$0xff] %vm446, %v889
  %954 = vst.msk [vmem:[%s3 + $0x1d0] sm:$0xff] %vm446, %v890
  %955 = vst.msk [vmem:[%s3 + $0x1d8] sm:$0xff] %vm446, %v891
  %956 = vst.msk [vmem:[%s3 + $0x1e0] sm:$0xff] %vm446, %v892
  %957 = vst.msk [vmem:[%s3 + $0x1e8] sm:$0xff] %vm446, %v893
  %958 = vst.msk [vmem:[%s3 + $0x1f0] sm:$0xff] %vm446, %v894
  %959 = vst.msk [vmem:[%s3 + $0x1f8] sm:$0xff] %vm446, %v895
  // Predicated region
  $region14: #{sst_forward.31} parent=0 // pred_check
    _
  $region15: #{sst_forward.31} parent=0 // pred_check_branch
    %961 = sbr.rel (0) target = $region17
  $region16: #{sst_forward.31} parent=0 // pred_region
    _
  $region17: #{sst_forward.31} parent=0 // pred_fallthru
    _
  // Predicated region
  $region18: #{sst_forward.31} parent=0 // pred_check
    _
  $region19: #{sst_forward.31} parent=0 // pred_check_branch
    %963 = sbr.rel (0) target = $region21
  $region20: #{sst_forward.31} parent=0 // pred_region
    _
  $region21: #{sst_forward.31} parent=0 // pred_fallthru
    _

// kernel: sst_forward.32
$region0: #{sst_forward.32}
  #allocation0 [shape = 'u32[]', space=smem, size = 0x4, offset = 0x4, fixed_abs, tag = 'smem constant byte address 0x4 - core index']
  #allocation1 [shape = 'u32[144,128]{1,0:T(1,128)}', space=vmem, size = 0x12000, scoped, tag = 'internal scratch']
  %s0 = inlined_call_operand.vmem [shape: bf16[128,144], index: 0, kind: input, shape index: {}]
  %s1 = inlined_call_operand.vmem [shape: bf16[144,16], index: 1, kind: input, shape index: {}]
  %s2 = inlined_call_operand.vmem [shape: f32[1,16], index: 2, kind: input, shape index: {}]
  %s3 = inlined_call_operand.vmem [shape: f32[128,16], index: 3, kind: output, shape index: {}]
  %s4 = sld [smem:[#allocation0]]
  $region22: #{sst_forward.32} parent=0
    _
  %s6 = ssub.s32 1, %s4
  %s7 = scalar_select 0, %s6, %s4
  // Predicated region
  $region2: #{sst_forward.32} parent=0 // pred_check
    _
  $region3: #{sst_forward.32} parent=0 // pred_check_branch
    %9 = sbr.rel (0) target = $region5
  $region4: #{sst_forward.32} parent=0 // pred_region
    _
  $region5: #{sst_forward.32} parent=0 // pred_fallthru
    _
  // Predicated region
  $region6: #{sst_forward.32} parent=0 // pred_check
    _
  $region7: #{sst_forward.32} parent=0 // pred_check_branch
    %11 = sbr.rel (0) target = $region9
  $region8: #{sst_forward.32} parent=0 // pred_region
    _
  $region9: #{sst_forward.32} parent=0 // pred_fallthru
    _
  // Predicated region
  $region10: #{sst_forward.32} parent=0 // pred_check
    _
  $region11: #{sst_forward.32} parent=0 // pred_check_branch
    %13 = sbr.rel (0) target = $region13
  $region12: #{sst_forward.32} parent=0 // pred_region
    _
  $region13: #{sst_forward.32} parent=0 // pred_fallthru
    _
  %v15 = vld [vmem:[%s0] sm:$0xff]
  %v16 = vld [vmem:[%s0 + $0x8] sm:$0xff]
  %v17 = vld [vmem:[%s0 + $0x10] sm:$0xff]
  %v18 = vld [vmem:[%s0 + $0x18] sm:$0xff]
  %v19 = vld [vmem:[%s0 + $0x20] sm:$0xff]
  %v20 = vld [vmem:[%s0 + $0x28] sm:$0xff]
  %v21 = vld [vmem:[%s0 + $0x30] sm:$0xff]
  %v22 = vld [vmem:[%s0 + $0x38] sm:$0xff]
  %v23 = vld [vmem:[%s0 + $0x40] sm:$0xff]
  %v24 = vld [vmem:[%s0 + $0x48] sm:$0xff]
  %v25 = vld [vmem:[%s0 + $0x50] sm:$0xff]
  %v26 = vld [vmem:[%s0 + $0x58] sm:$0xff]
  %v27 = vld [vmem:[%s0 + $0x60] sm:$0xff]
  %v28 = vld [vmem:[%s0 + $0x68] sm:$0xff]
  %v29 = vld [vmem:[%s0 + $0x70] sm:$0xff]
  %v30 = vld [vmem:[%s0 + $0x78] sm:$0xff]
  %v31 = vld [vmem:[%s1] sm:$0xf]
  %v32 = vld [vmem:[%s1 + $0x4] sm:$0xf]
  %v33 = vld [vmem:[%s1 + $0x8] sm:$0xf]
  %v34 = vld [vmem:[%s1 + $0xc] sm:$0xf]
  %v35 = vld [vmem:[%s1 + $0x10] sm:$0xf]
  %v36 = vld [vmem:[%s1 + $0x14] sm:$0xf]
  %v37 = vld [vmem:[%s1 + $0x18] sm:$0xf]
  %v38 = vld [vmem:[%s1 + $0x1c] sm:$0xf]
  %v39 = vld [vmem:[%s1 + $0x20] sm:$0xf]
  %v40 = vld [vmem:[%s1 + $0x24] sm:$0xf]
  %v41 = vld [vmem:[%s1 + $0x28] sm:$0xf]
  %v42 = vld [vmem:[%s1 + $0x2c] sm:$0xf]
  %v43 = vld [vmem:[%s1 + $0x30] sm:$0xf]
  %v44 = vld [vmem:[%s1 + $0x34] sm:$0xf]
  %v45 = vld [vmem:[%s1 + $0x38] sm:$0xf]
  %v46 = vld [vmem:[%s1 + $0x3c] sm:$0xf]
  %v47 = vld [vmem:[%s1 + $0x40] sm:$0xf]
  %v48 = vld [vmem:[%s1 + $0x44] sm:$0xf]
  %v49 = vld [vmem:[%s2] sm:$0x1]
  %v51 = vlaneseq
  %v52 = vshrl.u32 %v51, 7
  %v53 = vsub.s32 0, %v52
  %v54 = vrot.slane %v49, %v53
  %v72 = vunpack.c.l.b16 %v15
  %v73 = vunpack.c.h.b16 %v15
  %v74 = vunpack.c.l.b16 %v16
  %v75 = vunpack.c.h.b16 %v16
  %v76 = vunpack.c.l.b16 %v17
  %v77 = vunpack.c.h.b16 %v17
  %v78 = vunpack.c.l.b16 %v18
  %v79 = vunpack.c.h.b16 %v18
  %v80 = vunpack.c.l.b16 %v19
  %v81 = vunpack.c.h.b16 %v19
  %v82 = vunpack.c.l.b16 %v20
  %v83 = vunpack.c.h.b16 %v20
  %v84 = vunpack.c.l.b16 %v21
  %v85 = vunpack.c.h.b16 %v21
  %v86 = vunpack.c.l.b16 %v22
  %v87 = vunpack.c.h.b16 %v22
  %v88 = vunpack.c.l.b16 %v23
  %v89 = vunpack.c.h.b16 %v23
  %v90 = vunpack.c.l.b16 %v24
  %v91 = vunpack.c.h.b16 %v24
  %v92 = vunpack.c.l.b16 %v25
  %v93 = vunpack.c.h.b16 %v25
  %v94 = vunpack.c.l.b16 %v26
  %v95 = vunpack.c.h.b16 %v26
  %v96 = vunpack.c.l.b16 %v27
  %v97 = vunpack.c.h.b16 %v27
  %v98 = vunpack.c.l.b16 %v28
  %v99 = vunpack.c.h.b16 %v28
  %v100 = vunpack.c.l.b16 %v29
  %v101 = vunpack.c.h.b16 %v29
  %v102 = vunpack.c.l.b16 %v30
  %v103 = vunpack.c.h.b16 %v30
  %v104 = vpack.c.b16 %v74, %v72
  %v105 = vpack.c.b16 %v75, %v73
  %v106 = vpack.c.b16 %v78, %v76
  %v107 = vpack.c.b16 %v79, %v77
  %v108 = vpack.c.b16 %v82, %v80
  %v109 = vpack.c.b16 %v83, %v81
  %v110 = vpack.c.b16 %v86, %v84
  %v111 = vpack.c.b16 %v87, %v85
  %v112 = vpack.c.b16 %v90, %v88
  %v113 = vpack.c.b16 %v91, %v89
  %v114 = vpack.c.b16 %v94, %v92
  %v115 = vpack.c.b16 %v95, %v93
  %v116 = vpack.c.b16 %v98, %v96
  %v117 = vpack.c.b16 %v99, %v97
  %v118 = vpack.c.b16 %v102, %v100
  %v119 = vpack.c.b16 %v103, %v101
  %v146 = vunpack.c.l.b16 %v31
  %v147 = vunpack.c.l.b16 %v32
  %v148 = vunpack.c.l.b16 %v33
  %v149 = vunpack.c.l.b16 %v34
  %v150 = vunpack.c.l.b16 %v35
  %v151 = vunpack.c.l.b16 %v36
  %v152 = vunpack.c.l.b16 %v37
  %v153 = vunpack.c.l.b16 %v38
  %v154 = vunpack.c.l.b16 %v39
  %v155 = vunpack.c.l.b16 %v40
  %v156 = vunpack.c.l.b16 %v41
  %v157 = vunpack.c.l.b16 %v42
  %v158 = vunpack.c.l.b16 %v43
  %v159 = vunpack.c.l.b16 %v44
  %v160 = vunpack.c.l.b16 %v45
  %v161 = vunpack.c.l.b16 %v46
  %v162 = vunpack.c.l.b16 %v47
  %v163 = vunpack.c.l.b16 %v48
  %v164 = vpack.c.b16 %v147, %v146
  %v165 = vpack.c.b16 %v149, %v148
  %v166 = vpack.c.b16 %v151, %v150
  %v167 = vpack.c.b16 %v153, %v152
  %v168 = vpack.c.b16 %v155, %v154
  %v169 = vpack.c.b16 %v157, %v156
  %v170 = vpack.c.b16 %v159, %v158
  %v171 = vpack.c.b16 %v161, %v160
  %v172 = vpack.c.b16 %v163, %v162
  %vm182 = vcmask 130048
  %v184 = vsel %vm182, %v105, 0
  %v187 = vsel %vm182, %v107, 0
  %v190 = vsel %vm182, %v109, 0
  %v193 = vsel %vm182, %v111, 0
  %v196 = vsel %vm182, %v113, 0
  %v199 = vsel %vm182, %v115, 0
  %v202 = vsel %vm182, %v117, 0
  %v205 = vsel %vm182, %v119, 0
  %207 = vmatprep.subr.bf16.mxu0 0
  %208 = vmatpush1.bf16.msra.mxu0 %v171
  %209 = vmatprep.subr.bf16.mxu0 0
  %210 = vmatpush1.bf16.msra.mxu0 %v170
  %211 = vmatprep.subr.bf16.mxu0 0
  %212 = vmatpush1.bf16.msra.mxu0 %v169
  %213 = vmatprep.subr.bf16.mxu0 0
  %214 = vmatpush1.bf16.msra.mxu0 %v168
  %215 = vmatprep.subr.bf16.mxu0 0
  %216 = vmatpush1.bf16.msra.mxu0 %v167
  %217 = vmatprep.subr.bf16.mxu0 0
  %218 = vmatpush1.bf16.msra.mxu0 %v166
  %219 = vmatprep.subr.bf16.mxu0 0
  %220 = vmatpush1.bf16.msra.mxu0 %v165
  %221 = vmatprep.subr.bf16.mxu0 0
  %222 = vmatpush1.bf16.msra.mxu0 %v164
  %223 = vmatprep.subr.bf16.mxu0 0
  %224 = vmatpush2.bf16.msra.mxu0 0
  %225 = vmatprep.subr.bf16.mxu0 0
  %226 = vmatpush2.bf16.msra.mxu0 0
  %227 = vmatprep.subr.bf16.mxu0 0
  %228 = vmatpush2.bf16.msra.mxu0 0
  %229 = vmatprep.subr.bf16.mxu0 0
  %230 = vmatpush2.bf16.msra.mxu0 0
  %231 = vmatprep.subr.bf16.mxu0 0
  %232 = vmatpush2.bf16.msra.mxu0 0
  %233 = vmatprep.subr.bf16.mxu0 0
  %234 = vmatpush2.bf16.msra.mxu0 0
  %235 = vmatprep.subr.bf16.mxu0 0
  %236 = vmatpush2.bf16.msra.mxu0 0
  %237 = vmatprep.subr.bf16.mxu0 0
  %238 = vmatpush2.bf16.msra.mxu0 %v172
  %239 = vmatprep.mubr.bf16.mxu0 %v184
  %240 = vmatmul.mubr.bf16.gmra.mxu0 %v104
  %v241 = vpop.f32.mrf.mxu0
  %v242 = vadd.f32 %v54, %v241
  %v243 = vpop.f32.mrf.mxu0
  %v244 = vpop.f32.mrf.mxu0
  %v245 = vadd.f32 %v54, %v244
  %v246 = vpop.f32.mrf.mxu0
  %247 = vmatprep.mubr.bf16.mxu0 %v187
  %248 = vmatmul.mubr.bf16.gmra.mxu0 %v106
  %v249 = vpop.f32.mrf.mxu0
  %v250 = vadd.f32 %v54, %v249
  %v251 = vpop.f32.mrf.mxu0
  %v252 = vpop.f32.mrf.mxu0
  %v253 = vadd.f32 %v54, %v252
  %v254 = vpop.f32.mrf.mxu0
  %255 = vmatprep.mubr.bf16.mxu0 %v190
  %256 = vmatmul.mubr.bf16.gmra.mxu0 %v108
  %v257 = vpop.f32.mrf.mxu0
  %v258 = vadd.f32 %v54, %v257
  %v259 = vpop.f32.mrf.mxu0
  %v260 = vpop.f32.mrf.mxu0
  %v261 = vadd.f32 %v54, %v260
  %v262 = vpop.f32.mrf.mxu0
  %263 = vmatprep.mubr.bf16.mxu0 %v193
  %264 = vmatmul.mubr.bf16.gmra.mxu0 %v110
  %v265 = vpop.f32.mrf.mxu0
  %v266 = vadd.f32 %v54, %v265
  %v267 = vpop.f32.mrf.mxu0
  %v268 = vpop.f32.mrf.mxu0
  %v269 = vadd.f32 %v54, %v268
  %v270 = vpop.f32.mrf.mxu0
  %271 = vmatprep.mubr.bf16.mxu0 %v196
  %272 = vmatmul.mubr.bf16.gmra.mxu0 %v112
  %v273 = vpop.f32.mrf.mxu0
  %v274 = vadd.f32 %v54, %v273
  %v275 = vpop.f32.mrf.mxu0
  %v276 = vpop.f32.mrf.mxu0
  %v277 = vadd.f32 %v54, %v276
  %v278 = vpop.f32.mrf.mxu0
  %279 = vmatprep.mubr.bf16.mxu0 %v199
  %280 = vmatmul.mubr.bf16.gmra.mxu0 %v114
  %v281 = vpop.f32.mrf.mxu0
  %v282 = vadd.f32 %v54, %v281
  %v283 = vpop.f32.mrf.mxu0
  %v284 = vpop.f32.mrf.mxu0
  %v285 = vadd.f32 %v54, %v284
  %v286 = vpop.f32.mrf.mxu0
  %287 = vmatprep.mubr.bf16.mxu0 %v202
  %288 = vmatmul.mubr.bf16.gmra.mxu0 %v116
  %v289 = vpop.f32.mrf.mxu0
  %v290 = vadd.f32 %v54, %v289
  %v291 = vpop.f32.mrf.mxu0
  %v292 = vpop.f32.mrf.mxu0
  %v293 = vadd.f32 %v54, %v292
  %v294 = vpop.f32.mrf.mxu0
  %295 = vmatprep.mubr.bf16.mxu0 %v205
  %296 = vmatmul.mubr.bf16.gmra.mxu0 %v118
  %v297 = vpop.f32.mrf.mxu0
  %v298 = vadd.f32 %v54, %v297
  %v299 = vpop.f32.mrf.mxu0
  %v300 = vpop.f32.mrf.mxu0
  %v301 = vadd.f32 %v54, %v300
  %v302 = vpop.f32.mrf.mxu0
  %303 = vdwg.mxu0
  %v304 = vmax.f32 %v242, 0.0
  %v305 = vmax.f32 %v245, 0.0
  %v306 = vmax.f32 %v250, 0.0
  %v307 = vmax.f32 %v253, 0.0
  %v308 = vmax.f32 %v258, 0.0
  %v309 = vmax.f32 %v261, 0.0
  %v310 = vmax.f32 %v266, 0.0
  %v311 = vmax.f32 %v269, 0.0
  %v312 = vmax.f32 %v274, 0.0
  %v313 = vmax.f32 %v277, 0.0
  %v314 = vmax.f32 %v282, 0.0
  %v315 = vmax.f32 %v285, 0.0
  %v316 = vmax.f32 %v290, 0.0
  %v317 = vmax.f32 %v293, 0.0
  %v318 = vmax.f32 %v298, 0.0
  %v319 = vmax.f32 %v301, 0.0
  %320 = vst.msk [vmem:[%s3] sm:$0xff] %vm182, %v304
  %321 = vst.msk [vmem:[%s3 + $0x8] sm:$0xff] %vm182, %v305
  %322 = vst.msk [vmem:[%s3 + $0x10] sm:$0xff] %vm182, %v306
  %323 = vst.msk [vmem:[%s3 + $0x18] sm:$0xff] %vm182, %v307
  %324 = vst.msk [vmem:[%s3 + $0x20] sm:$0xff] %vm182, %v308
  %325 = vst.msk [vmem:[%s3 + $0x28] sm:$0xff] %vm182, %v309
  %326 = vst.msk [vmem:[%s3 + $0x30] sm:$0xff] %vm182, %v310
  %327 = vst.msk [vmem:[%s3 + $0x38] sm:$0xff] %vm182, %v311
  %328 = vst.msk [vmem:[%s3 + $0x40] sm:$0xff] %vm182, %v312
  %329 = vst.msk [vmem:[%s3 + $0x48] sm:$0xff] %vm182, %v313
  %330 = vst.msk [vmem:[%s3 + $0x50] sm:$0xff] %vm182, %v314
  %331 = vst.msk [vmem:[%s3 + $0x58] sm:$0xff] %vm182, %v315
  %332 = vst.msk [vmem:[%s3 + $0x60] sm:$0xff] %vm182, %v316
  %333 = vst.msk [vmem:[%s3 + $0x68] sm:$0xff] %vm182, %v317
  %334 = vst.msk [vmem:[%s3 + $0x70] sm:$0xff] %vm182, %v318
  %335 = vst.msk [vmem:[%s3 + $0x78] sm:$0xff] %vm182, %v319
  // Predicated region
  $region14: #{sst_forward.32} parent=0 // pred_check
    _
  $region15: #{sst_forward.32} parent=0 // pred_check_branch
    %337 = sbr.rel (0) target = $region17
  $region16: #{sst_forward.32} parent=0 // pred_region
    _
  $region17: #{sst_forward.32} parent=0 // pred_fallthru
    _
  // Predicated region
  $region18: #{sst_forward.32} parent=0 // pred_check
    _
  $region19: #{sst_forward.32} parent=0 // pred_check_branch
    %339 = sbr.rel (0) target = $region21
  $region20: #{sst_forward.32} parent=0 // pred_region
    _
  $region21: #{sst_forward.32} parent=0 // pred_fallthru
    _

// kernel: sst_forward.35
$region0: #{sst_forward.35}
  #allocation0 [shape = 'u32[]', space=smem, size = 0x4, offset = 0x4, fixed_abs, tag = 'smem constant byte address 0x4 - core index']
  #allocation1 [shape = 'u32[144,128]{1,0:T(1,128)}', space=vmem, size = 0x12000, scoped, tag = 'internal scratch']
  %s0 = inlined_call_operand.vmem [shape: bf16[32,144], index: 0, kind: input, shape index: {}]
  %s1 = inlined_call_operand.vmem [shape: bf16[144,32], index: 1, kind: input, shape index: {}]
  %s2 = inlined_call_operand.vmem [shape: f32[1,32], index: 2, kind: input, shape index: {}]
  %s3 = inlined_call_operand.vmem [shape: f32[32,32], index: 3, kind: output, shape index: {}]
  %s4 = sld [smem:[#allocation0]]
  $region22: #{sst_forward.35} parent=0
    _
  %s6 = ssub.s32 1, %s4
  %s7 = scalar_select 0, %s6, %s4
  // Predicated region
  $region2: #{sst_forward.35} parent=0 // pred_check
    _
  $region3: #{sst_forward.35} parent=0 // pred_check_branch
    %9 = sbr.rel (0) target = $region5
  $region4: #{sst_forward.35} parent=0 // pred_region
    _
  $region5: #{sst_forward.35} parent=0 // pred_fallthru
    _
  // Predicated region
  $region6: #{sst_forward.35} parent=0 // pred_check
    _
  $region7: #{sst_forward.35} parent=0 // pred_check_branch
    %11 = sbr.rel (0) target = $region9
  $region8: #{sst_forward.35} parent=0 // pred_region
    _
  $region9: #{sst_forward.35} parent=0 // pred_fallthru
    _
  // Predicated region
  $region10: #{sst_forward.35} parent=0 // pred_check
    _
  $region11: #{sst_forward.35} parent=0 // pred_check_branch
    %13 = sbr.rel (0) target = $region13
  $region12: #{sst_forward.35} parent=0 // pred_region
    _
  $region13: #{sst_forward.35} parent=0 // pred_fallthru
    _
  %v15 = vld [vmem:[%s0] sm:$0xff]
  %v16 = vld [vmem:[%s0 + $0x8] sm:$0xff]
  %v17 = vld [vmem:[%s0 + $0x10] sm:$0xff]
  %v18 = vld [vmem:[%s0 + $0x18] sm:$0xff]
  %v19 = vld [vmem:[%s1] sm:$0xf]
  %v20 = vld [vmem:[%s1 + $0x4] sm:$0xf]
  %v21 = vld [vmem:[%s1 + $0x8] sm:$0xf]
  %v22 = vld [vmem:[%s1 + $0xc] sm:$0xf]
  %v23 = vld [vmem:[%s1 + $0x10] sm:$0xf]
  %v24 = vld [vmem:[%s1 + $0x14] sm:$0xf]
  %v25 = vld [vmem:[%s1 + $0x18] sm:$0xf]
  %v26 = vld [vmem:[%s1 + $0x1c] sm:$0xf]
  %v27 = vld [vmem:[%s1 + $0x20] sm:$0xf]
  %v28 = vld [vmem:[%s1 + $0x24] sm:$0xf]
  %v29 = vld [vmem:[%s1 + $0x28] sm:$0xf]
  %v30 = vld [vmem:[%s1 + $0x2c] sm:$0xf]
  %v31 = vld [vmem:[%s1 + $0x30] sm:$0xf]
  %v32 = vld [vmem:[%s1 + $0x34] sm:$0xf]
  %v33 = vld [vmem:[%s1 + $0x38] sm:$0xf]
  %v34 = vld [vmem:[%s1 + $0x3c] sm:$0xf]
  %v35 = vld [vmem:[%s1 + $0x40] sm:$0xf]
  %v36 = vld [vmem:[%s1 + $0x44] sm:$0xf]
  %v37 = vld [vmem:[%s2] sm:$0x1]
  %v39 = vlaneseq
  %v40 = vshrl.u32 %v39, 7
  %v41 = vsub.s32 0, %v40
  %v42 = vrot.slane %v37, %v41
  %v48 = vunpack.c.l.b16 %v15
  %v49 = vunpack.c.h.b16 %v15
  %v50 = vunpack.c.l.b16 %v16
  %v51 = vunpack.c.h.b16 %v16
  %v52 = vunpack.c.l.b16 %v17
  %v53 = vunpack.c.h.b16 %v17
  %v54 = vunpack.c.l.b16 %v18
  %v55 = vunpack.c.h.b16 %v18
  %v56 = vpack.c.b16 %v50, %v48
  %v57 = vpack.c.b16 %v51, %v49
  %v58 = vpack.c.b16 %v54, %v52
  %v59 = vpack.c.b16 %v55, %v53
  %v80 = vunpack.c.l.b16 %v19
  %v81 = vunpack.c.l.b16 %v20
  %v82 = vunpack.c.l.b16 %v21
  %v83 = vunpack.c.l.b16 %v22
  %v84 = vunpack.c.l.b16 %v23
  %v85 = vunpack.c.l.b16 %v24
  %v86 = vunpack.c.l.b16 %v25
  %v87 = vunpack.c.l.b16 %v26
  %v88 = vunpack.c.l.b16 %v27
  %v89 = vunpack.c.l.b16 %v28
  %v90 = vunpack.c.l.b16 %v29
  %v91 = vunpack.c.l.b16 %v30
  %v92 = vunpack.c.l.b16 %v31
  %v93 = vunpack.c.l.b16 %v32
  %v94 = vunpack.c.l.b16 %v33
  %v95 = vunpack.c.l.b16 %v34
  %v96 = vunpack.c.l.b16 %v35
  %v97 = vunpack.c.l.b16 %v36
  %v98 = vpack.c.b16 %v81, %v80
  %v99 = vpack.c.b16 %v83, %v82
  %v100 = vpack.c.b16 %v85, %v84
  %v101 = vpack.c.b16 %v87, %v86
  %v102 = vpack.c.b16 %v89, %v88
  %v103 = vpack.c.b16 %v91, %v90
  %v104 = vpack.c.b16 %v93, %v92
  %v105 = vpack.c.b16 %v95, %v94
  %v106 = vpack.c.b16 %v97, %v96
  %vm116 = vcmask 130048
  %v118 = vsel %vm116, %v57, 0
  %v121 = vsel %vm116, %v59, 0
  %123 = vmatprep.subr.bf16.mxu0 0
  %124 = vmatpush1.bf16.msra.mxu0 %v105
  %125 = vmatprep.subr.bf16.mxu0 0
  %126 = vmatpush1.bf16.msra.mxu0 %v104
  %127 = vmatprep.subr.bf16.mxu0 0
  %128 = vmatpush1.bf16.msra.mxu0 %v103
  %129 = vmatprep.subr.bf16.mxu0 0
  %130 = vmatpush1.bf16.msra.mxu0 %v102
  %131 = vmatprep.subr.bf16.mxu0 0
  %132 = vmatpush1.bf16.msra.mxu0 %v101
  %133 = vmatprep.subr.bf16.mxu0 0
  %134 = vmatpush1.bf16.msra.mxu0 %v100
  %135 = vmatprep.subr.bf16.mxu0 0
  %136 = vmatpush1.bf16.msra.mxu0 %v99
  %137 = vmatprep.subr.bf16.mxu0 0
  %138 = vmatpush1.bf16.msra.mxu0 %v98
  %139 = vmatprep.subr.bf16.mxu0 0
  %140 = vmatpush2.bf16.msra.mxu0 0
  %141 = vmatprep.subr.bf16.mxu0 0
  %142 = vmatpush2.bf16.msra.mxu0 0
  %143 = vmatprep.subr.bf16.mxu0 0
  %144 = vmatpush2.bf16.msra.mxu0 0
  %145 = vmatprep.subr.bf16.mxu0 0
  %146 = vmatpush2.bf16.msra.mxu0 0
  %147 = vmatprep.subr.bf16.mxu0 0
  %148 = vmatpush2.bf16.msra.mxu0 0
  %149 = vmatprep.subr.bf16.mxu0 0
  %150 = vmatpush2.bf16.msra.mxu0 0
  %151 = vmatprep.subr.bf16.mxu0 0
  %152 = vmatpush2.bf16.msra.mxu0 0
  %153 = vmatprep.subr.bf16.mxu0 0
  %154 = vmatpush2.bf16.msra.mxu0 %v106
  %155 = vmatprep.mubr.bf16.mxu0 %v118
  %156 = vmatmul.mubr.bf16.gmra.mxu0 %v56
  %v157 = vpop.f32.mrf.mxu0
  %v158 = vadd.f32 %v42, %v157
  %v159 = vpop.f32.mrf.mxu0
  %v160 = vpop.f32.mrf.mxu0
  %v161 = vadd.f32 %v42, %v160
  %v162 = vpop.f32.mrf.mxu0
  %163 = vmatprep.mubr.bf16.mxu0 %v121
  %164 = vmatmul.mubr.bf16.gmra.mxu0 %v58
  %v165 = vpop.f32.mrf.mxu0
  %v166 = vadd.f32 %v42, %v165
  %v167 = vpop.f32.mrf.mxu0
  %v168 = vpop.f32.mrf.mxu0
  %v169 = vadd.f32 %v42, %v168
  %v170 = vpop.f32.mrf.mxu0
  %171 = vdwg.mxu0
  %v172 = vmax.f32 %v158, 0.0
  %v173 = vmax.f32 %v161, 0.0
  %v174 = vmax.f32 %v166, 0.0
  %v175 = vmax.f32 %v169, 0.0
  %vm176 = vcmask 261120
  %177 = vst.msk [vmem:[%s3] sm:$0xff] %vm176, %v172
  %178 = vst.msk [vmem:[%s3 + $0x8] sm:$0xff] %vm176, %v173
  %179 = vst.msk [vmem:[%s3 + $0x10] sm:$0xff] %vm176, %v174
  %180 = vst.msk [vmem:[%s3 + $0x18] sm:$0xff] %vm176, %v175
  // Predicated region
  $region14: #{sst_forward.35} parent=0 // pred_check
    _
  $region15: #{sst_forward.35} parent=0 // pred_check_branch
    %182 = sbr.rel (0) target = $region17
  $region16: #{sst_forward.35} parent=0 // pred_region
    _
  $region17: #{sst_forward.35} parent=0 // pred_fallthru
    _
  // Predicated region
  $region18: #{sst_forward.35} parent=0 // pred_check
    _
  $region19: #{sst_forward.35} parent=0 // pred_check_branch
    %184 = sbr.rel (0) target = $region21
  $region20: #{sst_forward.35} parent=0 // pred_region
    _
  $region21: #{sst_forward.35} parent=0 // pred_fallthru
    _

// kernel: sst_forward.36
$region0: #{sst_forward.36}
  #allocation0 [shape = 'u32[]', space=smem, size = 0x4, offset = 0x4, fixed_abs, tag = 'smem constant byte address 0x4 - core index']
  #allocation1 [shape = 'u32[144,128]{1,0:T(1,128)}', space=vmem, size = 0x12000, scoped, tag = 'internal scratch']
  %s0 = inlined_call_operand.vmem [shape: bf16[32,288], index: 0, kind: input, shape index: {}]
  %s1 = inlined_call_operand.vmem [shape: bf16[288,32], index: 1, kind: input, shape index: {}]
  %s2 = inlined_call_operand.vmem [shape: f32[1,32], index: 2, kind: input, shape index: {}]
  %s3 = inlined_call_operand.vmem [shape: f32[32,32], index: 3, kind: output, shape index: {}]
  %s4 = sld [smem:[#allocation0]]
  $region22: #{sst_forward.36} parent=0
    _
  %s6 = ssub.s32 1, %s4
  %s7 = scalar_select 0, %s6, %s4
  // Predicated region
  $region2: #{sst_forward.36} parent=0 // pred_check
    _
  $region3: #{sst_forward.36} parent=0 // pred_check_branch
    %9 = sbr.rel (0) target = $region5
  $region4: #{sst_forward.36} parent=0 // pred_region
    _
  $region5: #{sst_forward.36} parent=0 // pred_fallthru
    _
  // Predicated region
  $region6: #{sst_forward.36} parent=0 // pred_check
    _
  $region7: #{sst_forward.36} parent=0 // pred_check_branch
    %11 = sbr.rel (0) target = $region9
  $region8: #{sst_forward.36} parent=0 // pred_region
    _
  $region9: #{sst_forward.36} parent=0 // pred_fallthru
    _
  // Predicated region
  $region10: #{sst_forward.36} parent=0 // pred_check
    _
  $region11: #{sst_forward.36} parent=0 // pred_check_branch
    %13 = sbr.rel (0) target = $region13
  $region12: #{sst_forward.36} parent=0 // pred_region
    _
  $region13: #{sst_forward.36} parent=0 // pred_fallthru
    _
  %v15 = vld [vmem:[%s0] sm:$0xff]
  %v16 = vld [vmem:[%s0 + $0x8] sm:$0xf]
  %v17 = vld [vmem:[%s0 + $0xc] sm:$0xff]
  %v18 = vld [vmem:[%s0 + $0x14] sm:$0xf]
  %v19 = vld [vmem:[%s0 + $0x18] sm:$0xff]
  %v20 = vld [vmem:[%s0 + $0x20] sm:$0xf]
  %v21 = vld [vmem:[%s0 + $0x24] sm:$0xff]
  %v22 = vld [vmem:[%s0 + $0x2c] sm:$0xf]
  %v23 = vld [vmem:[%s1] sm:$0xf]
  %v24 = vld [vmem:[%s1 + $0x4] sm:$0xf]
  %v25 = vld [vmem:[%s1 + $0x8] sm:$0xf]
  %v26 = vld [vmem:[%s1 + $0xc] sm:$0xf]
  %v27 = vld [vmem:[%s1 + $0x10] sm:$0xf]
  %v28 = vld [vmem:[%s1 + $0x14] sm:$0xf]
  %v29 = vld [vmem:[%s1 + $0x18] sm:$0xf]
  %v30 = vld [vmem:[%s1 + $0x1c] sm:$0xf]
  %v31 = vld [vmem:[%s1 + $0x20] sm:$0xf]
  %v32 = vld [vmem:[%s1 + $0x24] sm:$0xf]
  %v33 = vld [vmem:[%s1 + $0x28] sm:$0xf]
  %v34 = vld [vmem:[%s1 + $0x2c] sm:$0xf]
  %v35 = vld [vmem:[%s1 + $0x30] sm:$0xf]
  %v36 = vld [vmem:[%s1 + $0x34] sm:$0xf]
  %v37 = vld [vmem:[%s1 + $0x38] sm:$0xf]
  %v38 = vld [vmem:[%s1 + $0x3c] sm:$0xf]
  %v39 = vld [vmem:[%s1 + $0x40] sm:$0xf]
  %v40 = vld [vmem:[%s1 + $0x44] sm:$0xf]
  %v41 = vld [vmem:[%s1 + $0x48] sm:$0xf]
  %v42 = vld [vmem:[%s1 + $0x4c] sm:$0xf]
  %v43 = vld [vmem:[%s1 + $0x50] sm:$0xf]
  %v44 = vld [vmem:[%s1 + $0x54] sm:$0xf]
  %v45 = vld [vmem:[%s1 + $0x58] sm:$0xf]
  %v46 = vld [vmem:[%s1 + $0x5c] sm:$0xf]
  %v47 = vld [vmem:[%s1 + $0x60] sm:$0xf]
  %v48 = vld [vmem:[%s1 + $0x64] sm:$0xf]
  %v49 = vld [vmem:[%s1 + $0x68] sm:$0xf]
  %v50 = vld [vmem:[%s1 + $0x6c] sm:$0xf]
  %v51 = vld [vmem:[%s1 + $0x70] sm:$0xf]
  %v52 = vld [vmem:[%s1 + $0x74] sm:$0xf]
  %v53 = vld [vmem:[%s1 + $0x78] sm:$0xf]
  %v54 = vld [vmem:[%s1 + $0x7c] sm:$0xf]
  %v55 = vld [vmem:[%s1 + $0x80] sm:$0xf]
  %v56 = vld [vmem:[%s1 + $0x84] sm:$0xf]
  %v57 = vld [vmem:[%s1 + $0x88] sm:$0xf]
  %v58 = vld [vmem:[%s1 + $0x8c] sm:$0xf]
  %v59 = vld [vmem:[%s2] sm:$0x1]
  %v61 = vlaneseq
  %v62 = vshrl.u32 %v61, 7
  %v63 = vsub.s32 0, %v62
  %v64 = vrot.slane %v59, %v63
  %v74 = vunpack.c.l.b16 %v15
  %v75 = vunpack.c.h.b16 %v15
  %v76 = vunpack.c.l.b16 %v16
  %v77 = vunpack.c.l.b16 %v17
  %v78 = vunpack.c.h.b16 %v17
  %v79 = vunpack.c.l.b16 %v18
  %v80 = vunpack.c.l.b16 %v19
  %v81 = vunpack.c.h.b16 %v19
  %v82 = vunpack.c.l.b16 %v20
  %v83 = vunpack.c.l.b16 %v21
  %v84 = vunpack.c.h.b16 %v21
  %v85 = vunpack.c.l.b16 %v22
  %v86 = vpack.c.b16 %v77, %v74
  %v87 = vpack.c.b16 %v78, %v75
  %v88 = vpack.c.b16 %v79, %v76
  %v89 = vpack.c.b16 %v83, %v80
  %v90 = vpack.c.b16 %v84, %v81
  %v91 = vpack.c.b16 %v85, %v82
  %v132 = vunpack.c.l.b16 %v23
  %v133 = vunpack.c.l.b16 %v24
  %v134 = vunpack.c.l.b16 %v25
  %v135 = vunpack.c.l.b16 %v26
  %v136 = vunpack.c.l.b16 %v27
  %v137 = vunpack.c.l.b16 %v28
  %v138 = vunpack.c.l.b16 %v29
  %v139 = vunpack.c.l.b16 %v30
  %v140 = vunpack.c.l.b16 %v31
  %v141 = vunpack.c.l.b16 %v32
  %v142 = vunpack.c.l.b16 %v33
  %v143 = vunpack.c.l.b16 %v34
  %v144 = vunpack.c.l.b16 %v35
  %v145 = vunpack.c.l.b16 %v36
  %v146 = vunpack.c.l.b16 %v37
  %v147 = vunpack.c.l.b16 %v38
  %v148 = vunpack.c.l.b16 %v39
  %v149 = vunpack.c.l.b16 %v40
  %v150 = vunpack.c.l.b16 %v41
  %v151 = vunpack.c.l.b16 %v42
  %v152 = vunpack.c.l.b16 %v43
  %v153 = vunpack.c.l.b16 %v44
  %v154 = vunpack.c.l.b16 %v45
  %v155 = vunpack.c.l.b16 %v46
  %v156 = vunpack.c.l.b16 %v47
  %v157 = vunpack.c.l.b16 %v48
  %v158 = vunpack.c.l.b16 %v49
  %v159 = vunpack.c.l.b16 %v50
  %v160 = vunpack.c.l.b16 %v51
  %v161 = vunpack.c.l.b16 %v52
  %v162 = vunpack.c.l.b16 %v53
  %v163 = vunpack.c.l.b16 %v54
  %v164 = vunpack.c.l.b16 %v55
  %v165 = vunpack.c.l.b16 %v56
  %v166 = vunpack.c.l.b16 %v57
  %v167 = vunpack.c.l.b16 %v58
  %v168 = vpack.c.b16 %v133, %v132
  %v169 = vpack.c.b16 %v135, %v134
  %v170 = vpack.c.b16 %v137, %v136
  %v171 = vpack.c.b16 %v139, %v138
  %v172 = vpack.c.b16 %v141, %v140
  %v173 = vpack.c.b16 %v143, %v142
  %v174 = vpack.c.b16 %v145, %v144
  %v175 = vpack.c.b16 %v147, %v146
  %v176 = vpack.c.b16 %v149, %v148
  %v177 = vpack.c.b16 %v151, %v150
  %v178 = vpack.c.b16 %v153, %v152
  %v179 = vpack.c.b16 %v155, %v154
  %v180 = vpack.c.b16 %v157, %v156
  %v181 = vpack.c.b16 %v159, %v158
  %v182 = vpack.c.b16 %v161, %v160
  %v183 = vpack.c.b16 %v163, %v162
  %v184 = vpack.c.b16 %v165, %v164
  %v185 = vpack.c.b16 %v167, %v166
  %vm204 = vcmask 261120
  %v206 = vsel %vm204, %v88, 0
  %v209 = vsel %vm204, %v91, 0
  %211 = vmatprep.subr.bf16.mxu0 0
  %212 = vmatpush1.bf16.msra.mxu0 %v175
  %213 = vmatprep.subr.bf16.mxu0 0
  %214 = vmatpush1.bf16.msra.mxu0 %v174
  %215 = vmatprep.subr.bf16.mxu0 0
  %216 = vmatpush1.bf16.msra.mxu0 %v173
  %217 = vmatprep.subr.bf16.mxu0 0
  %218 = vmatpush1.bf16.msra.mxu0 %v172
  %219 = vmatprep.subr.bf16.mxu0 0
  %220 = vmatpush1.bf16.msra.mxu0 %v171
  %221 = vmatprep.subr.bf16.mxu0 0
  %222 = vmatpush1.bf16.msra.mxu0 %v170
  %223 = vmatprep.subr.bf16.mxu0 0
  %224 = vmatpush1.bf16.msra.mxu0 %v169
  %225 = vmatprep.subr.bf16.mxu0 0
  %226 = vmatpush1.bf16.msra.mxu0 %v168
  %227 = vmatprep.subr.bf16.mxu0 0
  %228 = vmatpush2.bf16.msra.mxu0 %v183
  %229 = vmatprep.subr.bf16.mxu0 0
  %230 = vmatpush2.bf16.msra.mxu0 %v182
  %231 = vmatprep.subr.bf16.mxu0 0
  %232 = vmatpush2.bf16.msra.mxu0 %v181
  %233 = vmatprep.subr.bf16.mxu0 0
  %234 = vmatpush2.bf16.msra.mxu0 %v180
  %235 = vmatprep.subr.bf16.mxu0 0
  %236 = vmatpush2.bf16.msra.mxu0 %v179
  %237 = vmatprep.subr.bf16.mxu0 0
  %238 = vmatpush2.bf16.msra.mxu0 %v178
  %239 = vmatprep.subr.bf16.mxu0 0
  %240 = vmatpush2.bf16.msra.mxu0 %v177
  %241 = vmatprep.subr.bf16.mxu0 0
  %242 = vmatpush2.bf16.msra.mxu0 %v176
  %243 = vmatprep.mubr.bf16.mxu0 %v87
  %244 = vmatmul.mubr.bf16.gmra.mxu0 %v86
  %v245 = vpop.f32.mrf.mxu0
  %v246 = vadd.f32 %v64, %v245
  %v247 = vpop.f32.mrf.mxu0
  %v248 = vpop.f32.mrf.mxu0
  %v249 = vadd.f32 %v64, %v248
  %v250 = vpop.f32.mrf.mxu0
  %251 = vmatprep.mubr.bf16.mxu0 %v90
  %252 = vmatmul.mubr.bf16.gmra.mxu0 %v89
  %v253 = vpop.f32.mrf.mxu0
  %v254 = vadd.f32 %v64, %v253
  %v255 = vpop.f32.mrf.mxu0
  %v256 = vpop.f32.mrf.mxu0
  %v257 = vadd.f32 %v64, %v256
  %v258 = vpop.f32.mrf.mxu0
  %259 = vdwg.mxu0
  %260 = vmatprep.subr.bf16.mxu0 0
  %261 = vmatpush1.bf16.msra.mxu0 0
  %262 = vmatprep.subr.bf16.mxu0 0
  %263 = vmatpush1.bf16.msra.mxu0 0
  %264 = vmatprep.subr.bf16.mxu0 0
  %265 = vmatpush1.bf16.msra.mxu0 0
  %266 = vmatprep.subr.bf16.mxu0 0
  %267 = vmatpush1.bf16.msra.mxu0 0
  %268 = vmatprep.subr.bf16.mxu0 0
  %269 = vmatpush1.bf16.msra.mxu0 0
  %270 = vmatprep.subr.bf16.mxu0 0
  %271 = vmatpush1.bf16.msra.mxu0 0
  %272 = vmatprep.subr.bf16.mxu0 0
  %273 = vmatpush1.bf16.msra.mxu0 %v185
  %274 = vmatprep.subr.bf16.mxu0 0
  %275 = vmatpush1.bf16.msra.mxu0 %v184
  %276 = vmatprep.subr.bf16.mxu0 0
  %277 = vmatpush2.bf16.msra.mxu0 0
  %278 = vmatprep.subr.bf16.mxu0 0
  %279 = vmatpush2.bf16.msra.mxu0 0
  %280 = vmatprep.subr.bf16.mxu0 0
  %281 = vmatpush2.bf16.msra.mxu0 0
  %282 = vmatprep.subr.bf16.mxu0 0
  %283 = vmatpush2.bf16.msra.mxu0 0
  %284 = vmatprep.subr.bf16.mxu0 0
  %285 = vmatpush2.bf16.msra.mxu0 0
  %286 = vmatprep.subr.bf16.mxu0 0
  %287 = vmatpush2.bf16.msra.mxu0 0
  %288 = vmatprep.subr.bf16.mxu0 0
  %289 = vmatpush2.bf16.msra.mxu0 0
  %290 = vmatprep.subr.bf16.mxu0 0
  %291 = vmatpush2.bf16.msra.mxu0 0
  %292 = vmatprep.mubr.bf16.mxu0 0
  %293 = vmatmul.mubr.bf16.gmra.mxu0 %v206
  %v294 = vpop.f32.mrf.mxu0
  %v295 = vadd.f32 %v246, %v294
  %v296 = vpop.f32.mrf.mxu0
  %v297 = vpop.f32.mrf.mxu0
  %v298 = vadd.f32 %v249, %v297
  %v299 = vpop.f32.mrf.mxu0
  %300 = vmatprep.mubr.bf16.mxu0 0
  %301 = vmatmul.mubr.bf16.gmra.mxu0 %v209
  %v302 = vpop.f32.mrf.mxu0
  %v303 = vadd.f32 %v254, %v302
  %v304 = vpop.f32.mrf.mxu0
  %v305 = vpop.f32.mrf.mxu0
  %v306 = vadd.f32 %v257, %v305
  %v307 = vpop.f32.mrf.mxu0
  %308 = vdwg.mxu0
  %v309 = vmax.f32 %v295, 0.0
  %v310 = vmax.f32 %v298, 0.0
  %v311 = vmax.f32 %v303, 0.0
  %v312 = vmax.f32 %v306, 0.0
  %313 = vst.msk [vmem:[%s3] sm:$0xff] %vm204, %v309
  %314 = vst.msk [vmem:[%s3 + $0x8] sm:$0xff] %vm204, %v310
  %315 = vst.msk [vmem:[%s3 + $0x10] sm:$0xff] %vm204, %v311
  %316 = vst.msk [vmem:[%s3 + $0x18] sm:$0xff] %vm204, %v312
  // Predicated region
  $region14: #{sst_forward.36} parent=0 // pred_check
    _
  $region15: #{sst_forward.36} parent=0 // pred_check_branch
    %318 = sbr.rel (0) target = $region17
  $region16: #{sst_forward.36} parent=0 // pred_region
    _
  $region17: #{sst_forward.36} parent=0 // pred_fallthru
    _
  // Predicated region
  $region18: #{sst_forward.36} parent=0 // pred_check
    _
  $region19: #{sst_forward.36} parent=0 // pred_check_branch
    %320 = sbr.rel (0) target = $region21
  $region20: #{sst_forward.36} parent=0 // pred_region
    _
  $region21: #{sst_forward.36} parent=0 // pred_fallthru
    _

// kernel: sst_forward.38
$region0: #{sst_forward.38}
  #allocation0 [shape = 'u32[]', space=smem, size = 0x4, offset = 0x4, fixed_abs, tag = 'smem constant byte address 0x4 - core index']
  #allocation1 [shape = 'u32[144,128]{1,0:T(1,128)}', space=vmem, size = 0x12000, scoped, tag = 'internal scratch']
  %s0 = inlined_call_operand.vmem [shape: bf16[8,288], index: 0, kind: input, shape index: {}]
  %s1 = inlined_call_operand.vmem [shape: bf16[288,32], index: 1, kind: input, shape index: {}]
  %s2 = inlined_call_operand.vmem [shape: f32[1,32], index: 2, kind: input, shape index: {}]
  %s3 = inlined_call_operand.vmem [shape: f32[8,32], index: 3, kind: output, shape index: {}]
  %s4 = sld [smem:[#allocation0]]
  $region22: #{sst_forward.38} parent=0
    _
  %s6 = ssub.s32 1, %s4
  %s7 = scalar_select 0, %s6, %s4
  // Predicated region
  $region2: #{sst_forward.38} parent=0 // pred_check
    _
  $region3: #{sst_forward.38} parent=0 // pred_check_branch
    %9 = sbr.rel (0) target = $region5
  $region4: #{sst_forward.38} parent=0 // pred_region
    _
  $region5: #{sst_forward.38} parent=0 // pred_fallthru
    _
  // Predicated region
  $region6: #{sst_forward.38} parent=0 // pred_check
    _
  $region7: #{sst_forward.38} parent=0 // pred_check_branch
    %11 = sbr.rel (0) target = $region9
  $region8: #{sst_forward.38} parent=0 // pred_region
    _
  $region9: #{sst_forward.38} parent=0 // pred_fallthru
    _
  // Predicated region
  $region10: #{sst_forward.38} parent=0 // pred_check
    _
  $region11: #{sst_forward.38} parent=0 // pred_check_branch
    %13 = sbr.rel (0) target = $region13
  $region12: #{sst_forward.38} parent=0 // pred_region
    _
  $region13: #{sst_forward.38} parent=0 // pred_fallthru
    _
  %v15 = vld [vmem:[%s0] sm:$0xff]
  %v16 = vld [vmem:[%s0 + $0x8] sm:$0xf]
  %v17 = vld [vmem:[%s1] sm:$0xf]
  %v18 = vld [vmem:[%s1 + $0x4] sm:$0xf]
  %v19 = vld [vmem:[%s1 + $0x8] sm:$0xf]
  %v20 = vld [vmem:[%s1 + $0xc] sm:$0xf]
  %v21 = vld [vmem:[%s1 + $0x10] sm:$0xf]
  %v22 = vld [vmem:[%s1 + $0x14] sm:$0xf]
  %v23 = vld [vmem:[%s1 + $0x18] sm:$0xf]
  %v24 = vld [vmem:[%s1 + $0x1c] sm:$0xf]
  %v25 = vld [vmem:[%s1 + $0x20] sm:$0xf]
  %v26 = vld [vmem:[%s1 + $0x24] sm:$0xf]
  %v27 = vld [vmem:[%s1 + $0x28] sm:$0xf]
  %v28 = vld [vmem:[%s1 + $0x2c] sm:$0xf]
  %v29 = vld [vmem:[%s1 + $0x30] sm:$0xf]
  %v30 = vld [vmem:[%s1 + $0x34] sm:$0xf]
  %v31 = vld [vmem:[%s1 + $0x38] sm:$0xf]
  %v32 = vld [vmem:[%s1 + $0x3c] sm:$0xf]
  %v33 = vld [vmem:[%s1 + $0x40] sm:$0xf]
  %v34 = vld [vmem:[%s1 + $0x44] sm:$0xf]
  %v35 = vld [vmem:[%s1 + $0x48] sm:$0xf]
  %v36 = vld [vmem:[%s1 + $0x4c] sm:$0xf]
  %v37 = vld [vmem:[%s1 + $0x50] sm:$0xf]
  %v38 = vld [vmem:[%s1 + $0x54] sm:$0xf]
  %v39 = vld [vmem:[%s1 + $0x58] sm:$0xf]
  %v40 = vld [vmem:[%s1 + $0x5c] sm:$0xf]
  %v41 = vld [vmem:[%s1 + $0x60] sm:$0xf]
  %v42 = vld [vmem:[%s1 + $0x64] sm:$0xf]
  %v43 = vld [vmem:[%s1 + $0x68] sm:$0xf]
  %v44 = vld [vmem:[%s1 + $0x6c] sm:$0xf]
  %v45 = vld [vmem:[%s1 + $0x70] sm:$0xf]
  %v46 = vld [vmem:[%s1 + $0x74] sm:$0xf]
  %v47 = vld [vmem:[%s1 + $0x78] sm:$0xf]
  %v48 = vld [vmem:[%s1 + $0x7c] sm:$0xf]
  %v49 = vld [vmem:[%s1 + $0x80] sm:$0xf]
  %v50 = vld [vmem:[%s1 + $0x84] sm:$0xf]
  %v51 = vld [vmem:[%s1 + $0x88] sm:$0xf]
  %v52 = vld [vmem:[%s1 + $0x8c] sm:$0xf]
  %v53 = vld [vmem:[%s2] sm:$0x1]
  %v55 = vlaneseq
  %v56 = vshrl.u32 %v55, 7
  %v57 = vsub.s32 0, %v56
  %v58 = vrot.slane %v53, %v57
  %v62 = vunpack.c.l.b16 %v15
  %v63 = vunpack.c.h.b16 %v15
  %v64 = vunpack.c.l.b16 %v16
  %v65 = vpack.c.b16 %v62, %v62
  %v66 = vpack.c.b16 %v63, %v63
  %v67 = vpack.c.b16 %v64, %v64
  %v106 = vunpack.c.l.b16 %v17
  %v107 = vunpack.c.l.b16 %v18
  %v108 = vunpack.c.l.b16 %v19
  %v109 = vunpack.c.l.b16 %v20
  %v110 = vunpack.c.l.b16 %v21
  %v111 = vunpack.c.l.b16 %v22
  %v112 = vunpack.c.l.b16 %v23
  %v113 = vunpack.c.l.b16 %v24
  %v114 = vunpack.c.l.b16 %v25
  %v115 = vunpack.c.l.b16 %v26
  %v116 = vunpack.c.l.b16 %v27
  %v117 = vunpack.c.l.b16 %v28
  %v118 = vunpack.c.l.b16 %v29
  %v119 = vunpack.c.l.b16 %v30
  %v120 = vunpack.c.l.b16 %v31
  %v121 = vunpack.c.l.b16 %v32
  %v122 = vunpack.c.l.b16 %v33
  %v123 = vunpack.c.l.b16 %v34
  %v124 = vunpack.c.l.b16 %v35
  %v125 = vunpack.c.l.b16 %v36
  %v126 = vunpack.c.l.b16 %v37
  %v127 = vunpack.c.l.b16 %v38
  %v128 = vunpack.c.l.b16 %v39
  %v129 = vunpack.c.l.b16 %v40
  %v130 = vunpack.c.l.b16 %v41
  %v131 = vunpack.c.l.b16 %v42
  %v132 = vunpack.c.l.b16 %v43
  %v133 = vunpack.c.l.b16 %v44
  %v134 = vunpack.c.l.b16 %v45
  %v135 = vunpack.c.l.b16 %v46
  %v136 = vunpack.c.l.b16 %v47
  %v137 = vunpack.c.l.b16 %v48
  %v138 = vunpack.c.l.b16 %v49
  %v139 = vunpack.c.l.b16 %v50
  %v140 = vunpack.c.l.b16 %v51
  %v141 = vunpack.c.l.b16 %v52
  %v142 = vpack.c.b16 %v107, %v106
  %v143 = vpack.c.b16 %v109, %v108
  %v144 = vpack.c.b16 %v111, %v110
  %v145 = vpack.c.b16 %v113, %v112
  %v146 = vpack.c.b16 %v115, %v114
  %v147 = vpack.c.b16 %v117, %v116
  %v148 = vpack.c.b16 %v119, %v118
  %v149 = vpack.c.b16 %v121, %v120
  %v150 = vpack.c.b16 %v123, %v122
  %v151 = vpack.c.b16 %v125, %v124
  %v152 = vpack.c.b16 %v127, %v126
  %v153 = vpack.c.b16 %v129, %v128
  %v154 = vpack.c.b16 %v131, %v130
  %v155 = vpack.c.b16 %v133, %v132
  %v156 = vpack.c.b16 %v135, %v134
  %v157 = vpack.c.b16 %v137, %v136
  %v158 = vpack.c.b16 %v139, %v138
  %v159 = vpack.c.b16 %v141, %v140
  %vm178 = vcmask 261120
  %v180 = vsel %vm178, %v67, 0
  %182 = vmatprep.subr.bf16.mxu0 0
  %183 = vmatpush1.bf16.msra.mxu0 %v149
  %184 = vmatprep.subr.bf16.mxu0 0
  %185 = vmatpush1.bf16.msra.mxu0 %v148
  %186 = vmatprep.subr.bf16.mxu0 0
  %187 = vmatpush1.bf16.msra.mxu0 %v147
  %188 = vmatprep.subr.bf16.mxu0 0
  %189 = vmatpush1.bf16.msra.mxu0 %v146
  %190 = vmatprep.subr.bf16.mxu0 0
  %191 = vmatpush1.bf16.msra.mxu0 %v145
  %192 = vmatprep.subr.bf16.mxu0 0
  %193 = vmatpush1.bf16.msra.mxu0 %v144
  %194 = vmatprep.subr.bf16.mxu0 0
  %195 = vmatpush1.bf16.msra.mxu0 %v143
  %196 = vmatprep.subr.bf16.mxu0 0
  %197 = vmatpush1.bf16.msra.mxu0 %v142
  %198 = vmatprep.subr.bf16.mxu0 0
  %199 = vmatpush2.bf16.msra.mxu0 %v157
  %200 = vmatprep.subr.bf16.mxu0 0
  %201 = vmatpush2.bf16.msra.mxu0 %v156
  %202 = vmatprep.subr.bf16.mxu0 0
  %203 = vmatpush2.bf16.msra.mxu0 %v155
  %204 = vmatprep.subr.bf16.mxu0 0
  %205 = vmatpush2.bf16.msra.mxu0 %v154
  %206 = vmatprep.subr.bf16.mxu0 0
  %207 = vmatpush2.bf16.msra.mxu0 %v153
  %208 = vmatprep.subr.bf16.mxu0 0
  %209 = vmatpush2.bf16.msra.mxu0 %v152
  %210 = vmatprep.subr.bf16.mxu0 0
  %211 = vmatpush2.bf16.msra.mxu0 %v151
  %212 = vmatprep.subr.bf16.mxu0 0
  %213 = vmatpush2.bf16.msra.mxu0 %v150
  %214 = vmatprep.mubr.bf16.mxu0 %v66
  %215 = vmatmul.mubr.bf16.gmra.mxu0 %v65
  %v216 = vpop.f32.mrf.mxu0
  %v217 = vadd.f32 %v58, %v216
  %v218 = vpop.f32.mrf.mxu0
  %v219 = vpop.f32.mrf.mxu0
  %v220 = vpop.f32.mrf.mxu0
  %221 = vdwg.mxu0
  %222 = vmatprep.subr.bf16.mxu0 0
  %223 = vmatpush1.bf16.msra.mxu0 0
  %224 = vmatprep.subr.bf16.mxu0 0
  %225 = vmatpush1.bf16.msra.mxu0 0
  %226 = vmatprep.subr.bf16.mxu0 0
  %227 = vmatpush1.bf16.msra.mxu0 0
  %228 = vmatprep.subr.bf16.mxu0 0
  %229 = vmatpush1.bf16.msra.mxu0 0
  %230 = vmatprep.subr.bf16.mxu0 0
  %231 = vmatpush1.bf16.msra.mxu0 0
  %232 = vmatprep.subr.bf16.mxu0 0
  %233 = vmatpush1.bf16.msra.mxu0 0
  %234 = vmatprep.subr.bf16.mxu0 0
  %235 = vmatpush1.bf16.msra.mxu0 %v159
  %236 = vmatprep.subr.bf16.mxu0 0
  %237 = vmatpush1.bf16.msra.mxu0 %v158
  %238 = vmatprep.subr.bf16.mxu0 0
  %239 = vmatpush2.bf16.msra.mxu0 0
  %240 = vmatprep.subr.bf16.mxu0 0
  %241 = vmatpush2.bf16.msra.mxu0 0
  %242 = vmatprep.subr.bf16.mxu0 0
  %243 = vmatpush2.bf16.msra.mxu0 0
  %244 = vmatprep.subr.bf16.mxu0 0
  %245 = vmatpush2.bf16.msra.mxu0 0
  %246 = vmatprep.subr.bf16.mxu0 0
  %247 = vmatpush2.bf16.msra.mxu0 0
  %248 = vmatprep.subr.bf16.mxu0 0
  %249 = vmatpush2.bf16.msra.mxu0 0
  %250 = vmatprep.subr.bf16.mxu0 0
  %251 = vmatpush2.bf16.msra.mxu0 0
  %252 = vmatprep.subr.bf16.mxu0 0
  %253 = vmatpush2.bf16.msra.mxu0 0
  %254 = vmatprep.mubr.bf16.mxu0 0
  %255 = vmatmul.mubr.bf16.gmra.mxu0 %v180
  %v256 = vpop.f32.mrf.mxu0
  %v257 = vadd.f32 %v217, %v256
  %v258 = vpop.f32.mrf.mxu0
  %v259 = vpop.f32.mrf.mxu0
  %v260 = vpop.f32.mrf.mxu0
  %261 = vdwg.mxu0
  %v262 = vmax.f32 %v257, 0.0
  %263 = vst.msk [vmem:[%s3] sm:$0xff] %vm178, %v262
  // Predicated region
  $region14: #{sst_forward.38} parent=0 // pred_check
    _
  $region15: #{sst_forward.38} parent=0 // pred_check_branch
    %265 = sbr.rel (0) target = $region17
  $region16: #{sst_forward.38} parent=0 // pred_region
    _
  $region17: #{sst_forward.38} parent=0 // pred_fallthru
    _
  // Predicated region
  $region18: #{sst_forward.38} parent=0 // pred_check
    _
  $region19: #{sst_forward.38} parent=0 // pred_check_branch
    %267 = sbr.rel (0) target = $region21
  $region20: #{sst_forward.38} parent=0 // pred_region
    _
  $region21: #{sst_forward.38} parent=0 // pred_fallthru
    _

// kernel: sst_forward.42
$region0: #{sst_forward.42}
  #allocation0 [shape = 'u32[]', space=smem, size = 0x4, offset = 0x4, fixed_abs, tag = 'smem constant byte address 0x4 - core index']
  #allocation1 [shape = 'u32[144,128]{1,0:T(1,128)}', space=vmem, size = 0x12000, scoped, tag = 'internal scratch']
  %s0 = inlined_call_operand.vmem [shape: bf16[8,64], index: 0, kind: input, shape index: {}]
  %s1 = inlined_call_operand.vmem [shape: bf16[64,64], index: 1, kind: input, shape index: {}]
  %s2 = inlined_call_operand.vmem [shape: f32[1,64], index: 2, kind: input, shape index: {}]
  %s3 = inlined_call_operand.vmem [shape: f32[8,64], index: 3, kind: output, shape index: {}]
  %s4 = sld [smem:[#allocation0]]
  $region22: #{sst_forward.42} parent=0
    _
  %s6 = ssub.s32 1, %s4
  %s7 = scalar_select 0, %s6, %s4
  // Predicated region
  $region2: #{sst_forward.42} parent=0 // pred_check
    _
  $region3: #{sst_forward.42} parent=0 // pred_check_branch
    %9 = sbr.rel (0) target = $region5
  $region4: #{sst_forward.42} parent=0 // pred_region
    _
  $region5: #{sst_forward.42} parent=0 // pred_fallthru
    _
  // Predicated region
  $region6: #{sst_forward.42} parent=0 // pred_check
    _
  $region7: #{sst_forward.42} parent=0 // pred_check_branch
    %11 = sbr.rel (0) target = $region9
  $region8: #{sst_forward.42} parent=0 // pred_region
    _
  $region9: #{sst_forward.42} parent=0 // pred_fallthru
    _
  // Predicated region
  $region10: #{sst_forward.42} parent=0 // pred_check
    _
  $region11: #{sst_forward.42} parent=0 // pred_check_branch
    %13 = sbr.rel (0) target = $region13
  $region12: #{sst_forward.42} parent=0 // pred_region
    _
  $region13: #{sst_forward.42} parent=0 // pred_fallthru
    _
  %v15 = vld [vmem:[%s0] sm:$0xf]
  %v16 = vld [vmem:[%s1] sm:$0xf]
  %v17 = vld [vmem:[%s1 + $0x4] sm:$0xf]
  %v18 = vld [vmem:[%s1 + $0x8] sm:$0xf]
  %v19 = vld [vmem:[%s1 + $0xc] sm:$0xf]
  %v20 = vld [vmem:[%s1 + $0x10] sm:$0xf]
  %v21 = vld [vmem:[%s1 + $0x14] sm:$0xf]
  %v22 = vld [vmem:[%s1 + $0x18] sm:$0xf]
  %v23 = vld [vmem:[%s1 + $0x1c] sm:$0xf]
  %v24 = vld [vmem:[%s2] sm:$0x1]
  %v26 = vlaneseq
  %v27 = vshrl.u32 %v26, 7
  %v28 = vsub.s32 0, %v27
  %v29 = vrot.slane %v24, %v28
  %v39 = vunpack.c.l.b16 %v16
  %v40 = vunpack.c.l.b16 %v17
  %v41 = vunpack.c.l.b16 %v18
  %v42 = vunpack.c.l.b16 %v19
  %v43 = vunpack.c.l.b16 %v20
  %v44 = vunpack.c.l.b16 %v21
  %v45 = vunpack.c.l.b16 %v22
  %v46 = vunpack.c.l.b16 %v23
  %v47 = vpack.c.b16 %v40, %v39
  %v48 = vpack.c.b16 %v42, %v41
  %v49 = vpack.c.b16 %v44, %v43
  %v50 = vpack.c.b16 %v46, %v45
  %vm55 = vcmask 523264
  %v57 = vsel %vm55, %v15, 0
  %59 = vmatprep.subr.bf16.mxu0 0
  %60 = vmatpush1.bf16.msra.mxu0 0
  %61 = vmatprep.subr.bf16.mxu0 0
  %62 = vmatpush1.bf16.msra.mxu0 0
  %63 = vmatprep.subr.bf16.mxu0 0
  %64 = vmatpush1.bf16.msra.mxu0 0
  %65 = vmatprep.subr.bf16.mxu0 0
  %66 = vmatpush1.bf16.msra.mxu0 0
  %67 = vmatprep.subr.bf16.mxu0 0
  %68 = vmatpush1.bf16.msra.mxu0 %v50
  %69 = vmatprep.subr.bf16.mxu0 0
  %70 = vmatpush1.bf16.msra.mxu0 %v49
  %71 = vmatprep.subr.bf16.mxu0 0
  %72 = vmatpush1.bf16.msra.mxu0 %v48
  %73 = vmatprep.subr.bf16.mxu0 0
  %74 = vmatpush1.bf16.msra.mxu0 %v47
  %75 = vmatprep.subr.bf16.mxu0 0
  %76 = vmatpush2.bf16.msra.mxu0 0
  %77 = vmatprep.subr.bf16.mxu0 0
  %78 = vmatpush2.bf16.msra.mxu0 0
  %79 = vmatprep.subr.bf16.mxu0 0
  %80 = vmatpush2.bf16.msra.mxu0 0
  %81 = vmatprep.subr.bf16.mxu0 0
  %82 = vmatpush2.bf16.msra.mxu0 0
  %83 = vmatprep.subr.bf16.mxu0 0
  %84 = vmatpush2.bf16.msra.mxu0 0
  %85 = vmatprep.subr.bf16.mxu0 0
  %86 = vmatpush2.bf16.msra.mxu0 0
  %87 = vmatprep.subr.bf16.mxu0 0
  %88 = vmatpush2.bf16.msra.mxu0 0
  %89 = vmatprep.subr.bf16.mxu0 0
  %90 = vmatpush2.bf16.msra.mxu0 0
  %91 = vmatprep.mubr.bf16.mxu0 0
  %92 = vmatmul.mubr.bf16.gmra.mxu0 %v57
  %v93 = vpop.f32.mrf.mxu0
  %v94 = vadd.f32 %v29, %v93
  %v95 = vpop.f32.mrf.mxu0
  %v96 = vpop.f32.mrf.mxu0
  %v97 = vpop.f32.mrf.mxu0
  %98 = vdwg.mxu0
  %v99 = vmax.f32 %v94, 0.0
  %100 = vst.msk [vmem:[%s3] sm:$0xff] %vm55, %v99
  // Predicated region
  $region14: #{sst_forward.42} parent=0 // pred_check
    _
  $region15: #{sst_forward.42} parent=0 // pred_check_branch
    %102 = sbr.rel (0) target = $region17
  $region16: #{sst_forward.42} parent=0 // pred_region
    _
  $region17: #{sst_forward.42} parent=0 // pred_fallthru
    _
  // Predicated region
  $region18: #{sst_forward.42} parent=0 // pred_check
    _
  $region19: #{sst_forward.42} parent=0 // pred_check_branch
    %104 = sbr.rel (0) target = $region21
  $region20: #{sst_forward.42} parent=0 // pred_region
    _
  $region21: #{sst_forward.42} parent=0 // pred_fallthru
    _

// kernel: sst_forward.43
$region0: #{sst_forward.43}
  #allocation0 [shape = 'u32[]', space=smem, size = 0x4, offset = 0x4, fixed_abs, tag = 'smem constant byte address 0x4 - core index']
  #allocation1 [shape = 'u32[144,128]{1,0:T(1,128)}', space=vmem, size = 0x12000, scoped, tag = 'internal scratch']
  %s0 = inlined_call_operand.vmem [shape: bf16[8,64], index: 0, kind: input, shape index: {}]
  %s1 = inlined_call_operand.vmem [shape: bf16[64,16], index: 1, kind: input, shape index: {}]
  %s2 = inlined_call_operand.vmem [shape: f32[1,16], index: 2, kind: input, shape index: {}]
  %s3 = inlined_call_operand.vmem [shape: f32[8,16], index: 3, kind: output, shape index: {}]
  %s4 = sld [smem:[#allocation0]]
  $region22: #{sst_forward.43} parent=0
    _
  %s6 = ssub.s32 1, %s4
  %s7 = scalar_select 0, %s6, %s4
  // Predicated region
  $region2: #{sst_forward.43} parent=0 // pred_check
    _
  $region3: #{sst_forward.43} parent=0 // pred_check_branch
    %9 = sbr.rel (0) target = $region5
  $region4: #{sst_forward.43} parent=0 // pred_region
    _
  $region5: #{sst_forward.43} parent=0 // pred_fallthru
    _
  // Predicated region
  $region6: #{sst_forward.43} parent=0 // pred_check
    _
  $region7: #{sst_forward.43} parent=0 // pred_check_branch
    %11 = sbr.rel (0) target = $region9
  $region8: #{sst_forward.43} parent=0 // pred_region
    _
  $region9: #{sst_forward.43} parent=0 // pred_fallthru
    _
  // Predicated region
  $region10: #{sst_forward.43} parent=0 // pred_check
    _
  $region11: #{sst_forward.43} parent=0 // pred_check_branch
    %13 = sbr.rel (0) target = $region13
  $region12: #{sst_forward.43} parent=0 // pred_region
    _
  $region13: #{sst_forward.43} parent=0 // pred_fallthru
    _
  %v15 = vld [vmem:[%s0] sm:$0xf]
  %v16 = vld [vmem:[%s1] sm:$0xf]
  %v17 = vld [vmem:[%s1 + $0x4] sm:$0xf]
  %v18 = vld [vmem:[%s1 + $0x8] sm:$0xf]
  %v19 = vld [vmem:[%s1 + $0xc] sm:$0xf]
  %v20 = vld [vmem:[%s1 + $0x10] sm:$0xf]
  %v21 = vld [vmem:[%s1 + $0x14] sm:$0xf]
  %v22 = vld [vmem:[%s1 + $0x18] sm:$0xf]
  %v23 = vld [vmem:[%s1 + $0x1c] sm:$0xf]
  %v24 = vld [vmem:[%s2] sm:$0x1]
  %v26 = vlaneseq
  %v27 = vshrl.u32 %v26, 7
  %v28 = vsub.s32 0, %v27
  %v29 = vrot.slane %v24, %v28
  %v39 = vunpack.c.l.b16 %v16
  %v40 = vunpack.c.l.b16 %v17
  %v41 = vunpack.c.l.b16 %v18
  %v42 = vunpack.c.l.b16 %v19
  %v43 = vunpack.c.l.b16 %v20
  %v44 = vunpack.c.l.b16 %v21
  %v45 = vunpack.c.l.b16 %v22
  %v46 = vunpack.c.l.b16 %v23
  %v47 = vpack.c.b16 %v40, %v39
  %v48 = vpack.c.b16 %v42, %v41
  %v49 = vpack.c.b16 %v44, %v43
  %v50 = vpack.c.b16 %v46, %v45
  %vm55 = vcmask 523264
  %v57 = vsel %vm55, %v15, 0
  %59 = vmatprep.subr.bf16.mxu0 0
  %60 = vmatpush1.bf16.msra.mxu0 0
  %61 = vmatprep.subr.bf16.mxu0 0
  %62 = vmatpush1.bf16.msra.mxu0 0
  %63 = vmatprep.subr.bf16.mxu0 0
  %64 = vmatpush1.bf16.msra.mxu0 0
  %65 = vmatprep.subr.bf16.mxu0 0
  %66 = vmatpush1.bf16.msra.mxu0 0
  %67 = vmatprep.subr.bf16.mxu0 0
  %68 = vmatpush1.bf16.msra.mxu0 %v50
  %69 = vmatprep.subr.bf16.mxu0 0
  %70 = vmatpush1.bf16.msra.mxu0 %v49
  %71 = vmatprep.subr.bf16.mxu0 0
  %72 = vmatpush1.bf16.msra.mxu0 %v48
  %73 = vmatprep.subr.bf16.mxu0 0
  %74 = vmatpush1.bf16.msra.mxu0 %v47
  %75 = vmatprep.subr.bf16.mxu0 0
  %76 = vmatpush2.bf16.msra.mxu0 0
  %77 = vmatprep.subr.bf16.mxu0 0
  %78 = vmatpush2.bf16.msra.mxu0 0
  %79 = vmatprep.subr.bf16.mxu0 0
  %80 = vmatpush2.bf16.msra.mxu0 0
  %81 = vmatprep.subr.bf16.mxu0 0
  %82 = vmatpush2.bf16.msra.mxu0 0
  %83 = vmatprep.subr.bf16.mxu0 0
  %84 = vmatpush2.bf16.msra.mxu0 0
  %85 = vmatprep.subr.bf16.mxu0 0
  %86 = vmatpush2.bf16.msra.mxu0 0
  %87 = vmatprep.subr.bf16.mxu0 0
  %88 = vmatpush2.bf16.msra.mxu0 0
  %89 = vmatprep.subr.bf16.mxu0 0
  %90 = vmatpush2.bf16.msra.mxu0 0
  %91 = vmatprep.mubr.bf16.mxu0 0
  %92 = vmatmul.mubr.bf16.gmra.mxu0 %v57
  %v93 = vpop.f32.mrf.mxu0
  %v94 = vadd.f32 %v29, %v93
  %v95 = vpop.f32.mrf.mxu0
  %v96 = vpop.f32.mrf.mxu0
  %v97 = vpop.f32.mrf.mxu0
  %98 = vdwg.mxu0
  %v99 = vmax.f32 %v94, 0.0
  %vm100 = vcmask 130048
  %101 = vst.msk [vmem:[%s3] sm:$0xff] %vm100, %v99
  // Predicated region
  $region14: #{sst_forward.43} parent=0 // pred_check
    _
  $region15: #{sst_forward.43} parent=0 // pred_check_branch
    %103 = sbr.rel (0) target = $region17
  $region16: #{sst_forward.43} parent=0 // pred_region
    _
  $region17: #{sst_forward.43} parent=0 // pred_fallthru
    _
  // Predicated region
  $region18: #{sst_forward.43} parent=0 // pred_check
    _
  $region19: #{sst_forward.43} parent=0 // pred_check_branch
    %105 = sbr.rel (0) target = $region21
  $region20: #{sst_forward.43} parent=0 // pred_region
    _
  $region21: #{sst_forward.43} parent=0 // pred_fallthru
    _

// kernel: sst_forward.41
$region0: #{sst_forward.41}
  #allocation0 [shape = 'u32[]', space=smem, size = 0x4, offset = 0x4, fixed_abs, tag = 'smem constant byte address 0x4 - core index']
  #allocation1 [shape = 'u32[144,128]{1,0:T(1,128)}', space=vmem, size = 0x12000, scoped, tag = 'internal scratch']
  %s0 = inlined_call_operand.vmem [shape: bf16[8,288], index: 0, kind: input, shape index: {}]
  %s1 = inlined_call_operand.vmem [shape: bf16[288,64], index: 1, kind: input, shape index: {}]
  %s2 = inlined_call_operand.vmem [shape: f32[1,64], index: 2, kind: input, shape index: {}]
  %s3 = inlined_call_operand.vmem [shape: f32[8,64], index: 3, kind: output, shape index: {}]
  %s4 = sld [smem:[#allocation0]]
  $region22: #{sst_forward.41} parent=0
    _
  %s6 = ssub.s32 1, %s4
  %s7 = scalar_select 0, %s6, %s4
  // Predicated region
  $region2: #{sst_forward.41} parent=0 // pred_check
    _
  $region3: #{sst_forward.41} parent=0 // pred_check_branch
    %9 = sbr.rel (0) target = $region5
  $region4: #{sst_forward.41} parent=0 // pred_region
    _
  $region5: #{sst_forward.41} parent=0 // pred_fallthru
    _
  // Predicated region
  $region6: #{sst_forward.41} parent=0 // pred_check
    _
  $region7: #{sst_forward.41} parent=0 // pred_check_branch
    %11 = sbr.rel (0) target = $region9
  $region8: #{sst_forward.41} parent=0 // pred_region
    _
  $region9: #{sst_forward.41} parent=0 // pred_fallthru
    _
  // Predicated region
  $region10: #{sst_forward.41} parent=0 // pred_check
    _
  $region11: #{sst_forward.41} parent=0 // pred_check_branch
    %13 = sbr.rel (0) target = $region13
  $region12: #{sst_forward.41} parent=0 // pred_region
    _
  $region13: #{sst_forward.41} parent=0 // pred_fallthru
    _
  %v15 = vld [vmem:[%s0] sm:$0xff]
  %v16 = vld [vmem:[%s0 + $0x8] sm:$0xf]
  %v17 = vld [vmem:[%s1] sm:$0xf]
  %v18 = vld [vmem:[%s1 + $0x4] sm:$0xf]
  %v19 = vld [vmem:[%s1 + $0x8] sm:$0xf]
  %v20 = vld [vmem:[%s1 + $0xc] sm:$0xf]
  %v21 = vld [vmem:[%s1 + $0x10] sm:$0xf]
  %v22 = vld [vmem:[%s1 + $0x14] sm:$0xf]
  %v23 = vld [vmem:[%s1 + $0x18] sm:$0xf]
  %v24 = vld [vmem:[%s1 + $0x1c] sm:$0xf]
  %v25 = vld [vmem:[%s1 + $0x20] sm:$0xf]
  %v26 = vld [vmem:[%s1 + $0x24] sm:$0xf]
  %v27 = vld [vmem:[%s1 + $0x28] sm:$0xf]
  %v28 = vld [vmem:[%s1 + $0x2c] sm:$0xf]
  %v29 = vld [vmem:[%s1 + $0x30] sm:$0xf]
  %v30 = vld [vmem:[%s1 + $0x34] sm:$0xf]
  %v31 = vld [vmem:[%s1 + $0x38] sm:$0xf]
  %v32 = vld [vmem:[%s1 + $0x3c] sm:$0xf]
  %v33 = vld [vmem:[%s1 + $0x40] sm:$0xf]
  %v34 = vld [vmem:[%s1 + $0x44] sm:$0xf]
  %v35 = vld [vmem:[%s1 + $0x48] sm:$0xf]
  %v36 = vld [vmem:[%s1 + $0x4c] sm:$0xf]
  %v37 = vld [vmem:[%s1 + $0x50] sm:$0xf]
  %v38 = vld [vmem:[%s1 + $0x54] sm:$0xf]
  %v39 = vld [vmem:[%s1 + $0x58] sm:$0xf]
  %v40 = vld [vmem:[%s1 + $0x5c] sm:$0xf]
  %v41 = vld [vmem:[%s1 + $0x60] sm:$0xf]
  %v42 = vld [vmem:[%s1 + $0x64] sm:$0xf]
  %v43 = vld [vmem:[%s1 + $0x68] sm:$0xf]
  %v44 = vld [vmem:[%s1 + $0x6c] sm:$0xf]
  %v45 = vld [vmem:[%s1 + $0x70] sm:$0xf]
  %v46 = vld [vmem:[%s1 + $0x74] sm:$0xf]
  %v47 = vld [vmem:[%s1 + $0x78] sm:$0xf]
  %v48 = vld [vmem:[%s1 + $0x7c] sm:$0xf]
  %v49 = vld [vmem:[%s1 + $0x80] sm:$0xf]
  %v50 = vld [vmem:[%s1 + $0x84] sm:$0xf]
  %v51 = vld [vmem:[%s1 + $0x88] sm:$0xf]
  %v52 = vld [vmem:[%s1 + $0x8c] sm:$0xf]
  %v53 = vld [vmem:[%s2] sm:$0x1]
  %v55 = vlaneseq
  %v56 = vshrl.u32 %v55, 7
  %v57 = vsub.s32 0, %v56
  %v58 = vrot.slane %v53, %v57
  %v62 = vunpack.c.l.b16 %v15
  %v63 = vunpack.c.h.b16 %v15
  %v64 = vunpack.c.l.b16 %v16
  %v65 = vpack.c.b16 %v62, %v62
  %v66 = vpack.c.b16 %v63, %v63
  %v67 = vpack.c.b16 %v64, %v64
  %v106 = vunpack.c.l.b16 %v17
  %v107 = vunpack.c.l.b16 %v18
  %v108 = vunpack.c.l.b16 %v19
  %v109 = vunpack.c.l.b16 %v20
  %v110 = vunpack.c.l.b16 %v21
  %v111 = vunpack.c.l.b16 %v22
  %v112 = vunpack.c.l.b16 %v23
  %v113 = vunpack.c.l.b16 %v24
  %v114 = vunpack.c.l.b16 %v25
  %v115 = vunpack.c.l.b16 %v26
  %v116 = vunpack.c.l.b16 %v27
  %v117 = vunpack.c.l.b16 %v28
  %v118 = vunpack.c.l.b16 %v29
  %v119 = vunpack.c.l.b16 %v30
  %v120 = vunpack.c.l.b16 %v31
  %v121 = vunpack.c.l.b16 %v32
  %v122 = vunpack.c.l.b16 %v33
  %v123 = vunpack.c.l.b16 %v34
  %v124 = vunpack.c.l.b16 %v35
  %v125 = vunpack.c.l.b16 %v36
  %v126 = vunpack.c.l.b16 %v37
  %v127 = vunpack.c.l.b16 %v38
  %v128 = vunpack.c.l.b16 %v39
  %v129 = vunpack.c.l.b16 %v40
  %v130 = vunpack.c.l.b16 %v41
  %v131 = vunpack.c.l.b16 %v42
  %v132 = vunpack.c.l.b16 %v43
  %v133 = vunpack.c.l.b16 %v44
  %v134 = vunpack.c.l.b16 %v45
  %v135 = vunpack.c.l.b16 %v46
  %v136 = vunpack.c.l.b16 %v47
  %v137 = vunpack.c.l.b16 %v48
  %v138 = vunpack.c.l.b16 %v49
  %v139 = vunpack.c.l.b16 %v50
  %v140 = vunpack.c.l.b16 %v51
  %v141 = vunpack.c.l.b16 %v52
  %v142 = vpack.c.b16 %v107, %v106
  %v143 = vpack.c.b16 %v109, %v108
  %v144 = vpack.c.b16 %v111, %v110
  %v145 = vpack.c.b16 %v113, %v112
  %v146 = vpack.c.b16 %v115, %v114
  %v147 = vpack.c.b16 %v117, %v116
  %v148 = vpack.c.b16 %v119, %v118
  %v149 = vpack.c.b16 %v121, %v120
  %v150 = vpack.c.b16 %v123, %v122
  %v151 = vpack.c.b16 %v125, %v124
  %v152 = vpack.c.b16 %v127, %v126
  %v153 = vpack.c.b16 %v129, %v128
  %v154 = vpack.c.b16 %v131, %v130
  %v155 = vpack.c.b16 %v133, %v132
  %v156 = vpack.c.b16 %v135, %v134
  %v157 = vpack.c.b16 %v137, %v136
  %v158 = vpack.c.b16 %v139, %v138
  %v159 = vpack.c.b16 %v141, %v140
  %vm178 = vcmask 261120
  %v180 = vsel %vm178, %v67, 0
  %182 = vmatprep.subr.bf16.mxu0 0
  %183 = vmatpush1.bf16.msra.mxu0 %v149
  %184 = vmatprep.subr.bf16.mxu0 0
  %185 = vmatpush1.bf16.msra.mxu0 %v148
  %186 = vmatprep.subr.bf16.mxu0 0
  %187 = vmatpush1.bf16.msra.mxu0 %v147
  %188 = vmatprep.subr.bf16.mxu0 0
  %189 = vmatpush1.bf16.msra.mxu0 %v146
  %190 = vmatprep.subr.bf16.mxu0 0
  %191 = vmatpush1.bf16.msra.mxu0 %v145
  %192 = vmatprep.subr.bf16.mxu0 0
  %193 = vmatpush1.bf16.msra.mxu0 %v144
  %194 = vmatprep.subr.bf16.mxu0 0
  %195 = vmatpush1.bf16.msra.mxu0 %v143
  %196 = vmatprep.subr.bf16.mxu0 0
  %197 = vmatpush1.bf16.msra.mxu0 %v142
  %198 = vmatprep.subr.bf16.mxu0 0
  %199 = vmatpush2.bf16.msra.mxu0 %v157
  %200 = vmatprep.subr.bf16.mxu0 0
  %201 = vmatpush2.bf16.msra.mxu0 %v156
  %202 = vmatprep.subr.bf16.mxu0 0
  %203 = vmatpush2.bf16.msra.mxu0 %v155
  %204 = vmatprep.subr.bf16.mxu0 0
  %205 = vmatpush2.bf16.msra.mxu0 %v154
  %206 = vmatprep.subr.bf16.mxu0 0
  %207 = vmatpush2.bf16.msra.mxu0 %v153
  %208 = vmatprep.subr.bf16.mxu0 0
  %209 = vmatpush2.bf16.msra.mxu0 %v152
  %210 = vmatprep.subr.bf16.mxu0 0
  %211 = vmatpush2.bf16.msra.mxu0 %v151
  %212 = vmatprep.subr.bf16.mxu0 0
  %213 = vmatpush2.bf16.msra.mxu0 %v150
  %214 = vmatprep.mubr.bf16.mxu0 %v66
  %215 = vmatmul.mubr.bf16.gmra.mxu0 %v65
  %v216 = vpop.f32.mrf.mxu0
  %v217 = vadd.f32 %v58, %v216
  %v218 = vpop.f32.mrf.mxu0
  %v219 = vpop.f32.mrf.mxu0
  %v220 = vpop.f32.mrf.mxu0
  %221 = vdwg.mxu0
  %222 = vmatprep.subr.bf16.mxu0 0
  %223 = vmatpush1.bf16.msra.mxu0 0
  %224 = vmatprep.subr.bf16.mxu0 0
  %225 = vmatpush1.bf16.msra.mxu0 0
  %226 = vmatprep.subr.bf16.mxu0 0
  %227 = vmatpush1.bf16.msra.mxu0 0
  %228 = vmatprep.subr.bf16.mxu0 0
  %229 = vmatpush1.bf16.msra.mxu0 0
  %230 = vmatprep.subr.bf16.mxu0 0
  %231 = vmatpush1.bf16.msra.mxu0 0
  %232 = vmatprep.subr.bf16.mxu0 0
  %233 = vmatpush1.bf16.msra.mxu0 0
  %234 = vmatprep.subr.bf16.mxu0 0
  %235 = vmatpush1.bf16.msra.mxu0 %v159
  %236 = vmatprep.subr.bf16.mxu0 0
  %237 = vmatpush1.bf16.msra.mxu0 %v158
  %238 = vmatprep.subr.bf16.mxu0 0
  %239 = vmatpush2.bf16.msra.mxu0 0
  %240 = vmatprep.subr.bf16.mxu0 0
  %241 = vmatpush2.bf16.msra.mxu0 0
  %242 = vmatprep.subr.bf16.mxu0 0
  %243 = vmatpush2.bf16.msra.mxu0 0
  %244 = vmatprep.subr.bf16.mxu0 0
  %245 = vmatpush2.bf16.msra.mxu0 0
  %246 = vmatprep.subr.bf16.mxu0 0
  %247 = vmatpush2.bf16.msra.mxu0 0
  %248 = vmatprep.subr.bf16.mxu0 0
  %249 = vmatpush2.bf16.msra.mxu0 0
  %250 = vmatprep.subr.bf16.mxu0 0
  %251 = vmatpush2.bf16.msra.mxu0 0
  %252 = vmatprep.subr.bf16.mxu0 0
  %253 = vmatpush2.bf16.msra.mxu0 0
  %254 = vmatprep.mubr.bf16.mxu0 0
  %255 = vmatmul.mubr.bf16.gmra.mxu0 %v180
  %v256 = vpop.f32.mrf.mxu0
  %v257 = vadd.f32 %v217, %v256
  %v258 = vpop.f32.mrf.mxu0
  %v259 = vpop.f32.mrf.mxu0
  %v260 = vpop.f32.mrf.mxu0
  %261 = vdwg.mxu0
  %v262 = vmax.f32 %v257, 0.0
  %vm263 = vcmask 523264
  %264 = vst.msk [vmem:[%s3] sm:$0xff] %vm263, %v262
  // Predicated region
  $region14: #{sst_forward.41} parent=0 // pred_check
    _
  $region15: #{sst_forward.41} parent=0 // pred_check_branch
    %266 = sbr.rel (0) target = $region17
  $region16: #{sst_forward.41} parent=0 // pred_region
    _
  $region17: #{sst_forward.41} parent=0 // pred_fallthru
    _
  // Predicated region
  $region18: #{sst_forward.41} parent=0 // pred_check
    _
  $region19: #{sst_forward.41} parent=0 // pred_check_branch
    %268 = sbr.rel (0) target = $region21
  $region20: #{sst_forward.41} parent=0 // pred_region
    _
  $region21: #{sst_forward.41} parent=0 // pred_fallthru
    _

// kernel: sst_forward.44
$region0: #{sst_forward.44}
  #allocation0 [shape = 'u32[]', space=smem, size = 0x4, offset = 0x4, fixed_abs, tag = 'smem constant byte address 0x4 - core index']
  #allocation1 [shape = 'u32[144,128]{1,0:T(1,128)}', space=vmem, size = 0x12000, scoped, tag = 'internal scratch']
  %s0 = inlined_call_operand.vmem [shape: bf16[2,144], index: 0, kind: input, shape index: {}]
  %s1 = inlined_call_operand.vmem [shape: bf16[144,32], index: 1, kind: input, shape index: {}]
  %s2 = inlined_call_operand.vmem [shape: f32[1,32], index: 2, kind: input, shape index: {}]
  %s3 = inlined_call_operand.vmem [shape: f32[2,32], index: 3, kind: output, shape index: {0}]
  %s4 = inlined_call_operand.vmem [shape: f32[2,32], index: 4, kind: output, shape index: {1}]
  %5 = xla_tuple %s3, %s4
  %s6 = sld [smem:[#allocation0]]
  $region30: #{sst_forward.44} parent=0
    _
  %s8 = ssub.s32 1, %s6
  %s9 = scalar_select 0, %s8, %s6
  // Predicated region
  $region2: #{sst_forward.44} parent=0 // pred_check
    _
  $region3: #{sst_forward.44} parent=0 // pred_check_branch
    %11 = sbr.rel (0) target = $region5
  $region4: #{sst_forward.44} parent=0 // pred_region
    _
  $region5: #{sst_forward.44} parent=0 // pred_fallthru
    _
  // Predicated region
  $region6: #{sst_forward.44} parent=0 // pred_check
    _
  $region7: #{sst_forward.44} parent=0 // pred_check_branch
    %13 = sbr.rel (0) target = $region9
  $region8: #{sst_forward.44} parent=0 // pred_region
    _
  $region9: #{sst_forward.44} parent=0 // pred_fallthru
    _
  // Predicated region
  $region10: #{sst_forward.44} parent=0 // pred_check
    _
  $region11: #{sst_forward.44} parent=0 // pred_check_branch
    %15 = sbr.rel (0) target = $region13
  $region12: #{sst_forward.44} parent=0 // pred_region
    _
  $region13: #{sst_forward.44} parent=0 // pred_fallthru
    _
  %v17 = vld [vmem:[%s0] sm:$0x3]
  %v18 = vld [vmem:[%s1] sm:$0xf]
  %v19 = vld [vmem:[%s1 + $0x4] sm:$0xf]
  %v20 = vld [vmem:[%s1 + $0x8] sm:$0xf]
  %v21 = vld [vmem:[%s1 + $0xc] sm:$0xf]
  %v22 = vld [vmem:[%s1 + $0x10] sm:$0xf]
  %v23 = vld [vmem:[%s1 + $0x14] sm:$0xf]
  %v24 = vld [vmem:[%s1 + $0x18] sm:$0xf]
  %v25 = vld [vmem:[%s1 + $0x1c] sm:$0xf]
  %v26 = vld [vmem:[%s1 + $0x20] sm:$0xf]
  %v27 = vld [vmem:[%s1 + $0x24] sm:$0xf]
  %v28 = vld [vmem:[%s1 + $0x28] sm:$0xf]
  %v29 = vld [vmem:[%s1 + $0x2c] sm:$0xf]
  %v30 = vld [vmem:[%s1 + $0x30] sm:$0xf]
  %v31 = vld [vmem:[%s1 + $0x34] sm:$0xf]
  %v32 = vld [vmem:[%s1 + $0x38] sm:$0xf]
  %v33 = vld [vmem:[%s1 + $0x3c] sm:$0xf]
  %v34 = vld [vmem:[%s1 + $0x40] sm:$0xf]
  %v35 = vld [vmem:[%s1 + $0x44] sm:$0xf]
  %v36 = vld [vmem:[%s2] sm:$0x1]
  %v38 = vlaneseq
  %v39 = vshrl.u32 %v38, 7
  %v40 = vsub.s32 0, %v39
  %v41 = vrot.slane %v36, %v40
  %v45 = vunpack.c.l.s4 1966171168
  %v46 = vunpack.c.0.s8 %v45
  %v47 = vlaneseq
  %v48 = vshrl.u32 %v47, 7
  %v49 = vsub.s32 %v46, %v48
  %v50 = vrot.slane %v17, %v49
  %v51 = vcombine.high %v50, %v50
  %v53 = vunpack.c.l.s4 1966171168
  %v54 = vunpack.c.0.s8 %v53
  %v55 = vlaneseq
  %v56 = vshrl.u32 %v55, 7
  %v57 = vsub.s32 %v54, %v56
  %v58 = vrot.slane %v50, %v57
  %v60 = vunpack.c.l.s4 1966171168
  %v61 = vunpack.c.0.s8 %v60
  %v62 = vlaneseq
  %v63 = vshrl.u32 %v62, 7
  %v64 = vsub.s32 %v61, %v63
  %v65 = vrot.slane %v51, %v64
  %v85 = vunpack.c.l.b16 %v18
  %v86 = vunpack.c.l.b16 %v19
  %v87 = vunpack.c.l.b16 %v20
  %v88 = vunpack.c.l.b16 %v21
  %v89 = vunpack.c.l.b16 %v22
  %v90 = vunpack.c.l.b16 %v23
  %v91 = vunpack.c.l.b16 %v24
  %v92 = vunpack.c.l.b16 %v25
  %v93 = vunpack.c.l.b16 %v26
  %v94 = vunpack.c.l.b16 %v27
  %v95 = vunpack.c.l.b16 %v28
  %v96 = vunpack.c.l.b16 %v29
  %v97 = vunpack.c.l.b16 %v30
  %v98 = vunpack.c.l.b16 %v31
  %v99 = vunpack.c.l.b16 %v32
  %v100 = vunpack.c.l.b16 %v33
  %v101 = vunpack.c.l.b16 %v34
  %v102 = vunpack.c.l.b16 %v35
  %v103 = vpack.c.b16 %v86, %v85
  %v104 = vpack.c.b16 %v88, %v87
  %v105 = vpack.c.b16 %v90, %v89
  %v106 = vpack.c.b16 %v92, %v91
  %v107 = vpack.c.b16 %v94, %v93
  %v108 = vpack.c.b16 %v96, %v95
  %v109 = vpack.c.b16 %v98, %v97
  %v110 = vpack.c.b16 %v100, %v99
  %v111 = vpack.c.b16 %v102, %v101
  %vm121 = vcmask 130048
  %v123 = vsel %vm121, %v65, 0
  %125 = vmatprep.subr.bf16.mxu0 0
  %126 = vmatpush1.bf16.msra.mxu0 %v110
  %127 = vmatprep.subr.bf16.mxu0 0
  %128 = vmatpush1.bf16.msra.mxu0 %v109
  %129 = vmatprep.subr.bf16.mxu0 0
  %130 = vmatpush1.bf16.msra.mxu0 %v108
  %131 = vmatprep.subr.bf16.mxu0 0
  %132 = vmatpush1.bf16.msra.mxu0 %v107
  %133 = vmatprep.subr.bf16.mxu0 0
  %134 = vmatpush1.bf16.msra.mxu0 %v106
  %135 = vmatprep.subr.bf16.mxu0 0
  %136 = vmatpush1.bf16.msra.mxu0 %v105
  %137 = vmatprep.subr.bf16.mxu0 0
  %138 = vmatpush1.bf16.msra.mxu0 %v104
  %139 = vmatprep.subr.bf16.mxu0 0
  %140 = vmatpush1.bf16.msra.mxu0 %v103
  %141 = vmatprep.subr.bf16.mxu0 0
  %142 = vmatpush2.bf16.msra.mxu0 0
  %143 = vmatprep.subr.bf16.mxu0 0
  %144 = vmatpush2.bf16.msra.mxu0 0
  %145 = vmatprep.subr.bf16.mxu0 0
  %146 = vmatpush2.bf16.msra.mxu0 0
  %147 = vmatprep.subr.bf16.mxu0 0
  %148 = vmatpush2.bf16.msra.mxu0 0
  %149 = vmatprep.subr.bf16.mxu0 0
  %150 = vmatpush2.bf16.msra.mxu0 0
  %151 = vmatprep.subr.bf16.mxu0 0
  %152 = vmatpush2.bf16.msra.mxu0 0
  %153 = vmatprep.subr.bf16.mxu0 0
  %154 = vmatpush2.bf16.msra.mxu0 0
  %155 = vmatprep.subr.bf16.mxu0 0
  %156 = vmatpush2.bf16.msra.mxu0 %v111
  %157 = vmatprep.mubr.bf16.mxu0 %v123
  %158 = vmatmul.mubr.bf16.gmra.mxu0 %v58
  %v159 = vpop.f32.mrf.mxu0
  %v160 = vadd.f32 %v41, %v159
  %v161 = vpop.f32.mrf.mxu0
  %v162 = vpop.f32.mrf.mxu0
  %v163 = vpop.f32.mrf.mxu0
  %164 = vdwg.mxu0
  %vm165 = vcmask 254976
  %166 = vst.msk [vmem:[%s3] sm:$0x3] %vm165, %v160
  %v167 = vmul.f32 %v160, 0.999995
  %v168 = vmax.f32 %v167, 0.0
  %169 = vst.msk [vmem:[%s4] sm:$0x3] %vm165, %v168
  // Predicated region
  $region14: #{sst_forward.44} parent=0 // pred_check
    _
  $region15: #{sst_forward.44} parent=0 // pred_check_branch
    %171 = sbr.rel (0) target = $region17
  $region16: #{sst_forward.44} parent=0 // pred_region
    _
  $region17: #{sst_forward.44} parent=0 // pred_fallthru
    _
  // Predicated region
  $region18: #{sst_forward.44} parent=0 // pred_check
    _
  $region19: #{sst_forward.44} parent=0 // pred_check_branch
    %173 = sbr.rel (0) target = $region21
  $region20: #{sst_forward.44} parent=0 // pred_region
    _
  $region21: #{sst_forward.44} parent=0 // pred_fallthru
    _
  // Predicated region
  $region22: #{sst_forward.44} parent=0 // pred_check
    _
  $region23: #{sst_forward.44} parent=0 // pred_check_branch
    %175 = sbr.rel (0) target = $region25
  $region24: #{sst_forward.44} parent=0 // pred_region
    _
  $region25: #{sst_forward.44} parent=0 // pred_fallthru
    _
  // Predicated region
  $region26: #{sst_forward.44} parent=0 // pred_check
    _
  $region27: #{sst_forward.44} parent=0 // pred_check_branch
    %177 = sbr.rel (0) target = $region29
  $region28: #{sst_forward.44} parent=0 // pred_region
    _
  $region29: #{sst_forward.44} parent=0 // pred_fallthru
    _

// kernel: sst_forward.45
$region0: #{sst_forward.45}
  #allocation0 [shape = 'u32[]', space=smem, size = 0x4, offset = 0x4, fixed_abs, tag = 'smem constant byte address 0x4 - core index']
  #allocation1 [shape = 'u32[144,128]{1,0:T(1,128)}', space=vmem, size = 0x12000, scoped, tag = 'internal scratch']
  %s0 = inlined_call_operand.vmem [shape: bf16[2,32], index: 0, kind: input, shape index: {}]
  %s1 = inlined_call_operand.vmem [shape: bf16[32,16], index: 1, kind: input, shape index: {}]
  %s2 = inlined_call_operand.vmem [shape: f32[1,16], index: 2, kind: input, shape index: {}]
  %s3 = inlined_call_operand.vmem [shape: f32[2,16], index: 3, kind: output, shape index: {}]
  %s4 = sld [smem:[#allocation0]]
  $region22: #{sst_forward.45} parent=0
    _
  %s6 = ssub.s32 1, %s4
  %s7 = scalar_select 0, %s6, %s4
  // Predicated region
  $region2: #{sst_forward.45} parent=0 // pred_check
    _
  $region3: #{sst_forward.45} parent=0 // pred_check_branch
    %9 = sbr.rel (0) target = $region5
  $region4: #{sst_forward.45} parent=0 // pred_region
    _
  $region5: #{sst_forward.45} parent=0 // pred_fallthru
    _
  // Predicated region
  $region6: #{sst_forward.45} parent=0 // pred_check
    _
  $region7: #{sst_forward.45} parent=0 // pred_check_branch
    %11 = sbr.rel (0) target = $region9
  $region8: #{sst_forward.45} parent=0 // pred_region
    _
  $region9: #{sst_forward.45} parent=0 // pred_fallthru
    _
  // Predicated region
  $region10: #{sst_forward.45} parent=0 // pred_check
    _
  $region11: #{sst_forward.45} parent=0 // pred_check_branch
    %13 = sbr.rel (0) target = $region13
  $region12: #{sst_forward.45} parent=0 // pred_region
    _
  $region13: #{sst_forward.45} parent=0 // pred_fallthru
    _
  %v15 = vld [vmem:[%s0] sm:$0x1]
  %v16 = vld [vmem:[%s1] sm:$0xf]
  %v17 = vld [vmem:[%s1 + $0x4] sm:$0xf]
  %v18 = vld [vmem:[%s1 + $0x8] sm:$0xf]
  %v19 = vld [vmem:[%s1 + $0xc] sm:$0xf]
  %v20 = vld [vmem:[%s2] sm:$0x1]
  %v22 = vlaneseq
  %v23 = vshrl.u32 %v22, 7
  %v24 = vsub.s32 0, %v23
  %v25 = vrot.slane %v20, %v24
  %v31 = vunpack.c.l.b16 %v16
  %v32 = vunpack.c.l.b16 %v17
  %v33 = vunpack.c.l.b16 %v18
  %v34 = vunpack.c.l.b16 %v19
  %v35 = vpack.c.b16 %v32, %v31
  %v36 = vpack.c.b16 %v34, %v33
  %vm39 = vcmask 261120
  %v41 = vsel %vm39, %v15, 0
  %43 = vmatprep.subr.bf16.mxu0 0
  %44 = vmatpush1.bf16.msra.mxu0 0
  %45 = vmatprep.subr.bf16.mxu0 0
  %46 = vmatpush1.bf16.msra.mxu0 0
  %47 = vmatprep.subr.bf16.mxu0 0
  %48 = vmatpush1.bf16.msra.mxu0 0
  %49 = vmatprep.subr.bf16.mxu0 0
  %50 = vmatpush1.bf16.msra.mxu0 0
  %51 = vmatprep.subr.bf16.mxu0 0
  %52 = vmatpush1.bf16.msra.mxu0 0
  %53 = vmatprep.subr.bf16.mxu0 0
  %54 = vmatpush1.bf16.msra.mxu0 0
  %55 = vmatprep.subr.bf16.mxu0 0
  %56 = vmatpush1.bf16.msra.mxu0 %v36
  %57 = vmatprep.subr.bf16.mxu0 0
  %58 = vmatpush1.bf16.msra.mxu0 %v35
  %59 = vmatprep.subr.bf16.mxu0 0
  %60 = vmatpush2.bf16.msra.mxu0 0
  %61 = vmatprep.subr.bf16.mxu0 0
  %62 = vmatpush2.bf16.msra.mxu0 0
  %63 = vmatprep.subr.bf16.mxu0 0
  %64 = vmatpush2.bf16.msra.mxu0 0
  %65 = vmatprep.subr.bf16.mxu0 0
  %66 = vmatpush2.bf16.msra.mxu0 0
  %67 = vmatprep.subr.bf16.mxu0 0
  %68 = vmatpush2.bf16.msra.mxu0 0
  %69 = vmatprep.subr.bf16.mxu0 0
  %70 = vmatpush2.bf16.msra.mxu0 0
  %71 = vmatprep.subr.bf16.mxu0 0
  %72 = vmatpush2.bf16.msra.mxu0 0
  %73 = vmatprep.subr.bf16.mxu0 0
  %74 = vmatpush2.bf16.msra.mxu0 0
  %75 = vmatprep.mubr.bf16.mxu0 0
  %76 = vmatmul.mubr.bf16.gmra.mxu0 %v41
  %v77 = vpop.f32.mrf.mxu0
  %v78 = vadd.f32 %v25, %v77
  %v79 = vpop.f32.mrf.mxu0
  %v80 = vpop.f32.mrf.mxu0
  %v81 = vpop.f32.mrf.mxu0
  %82 = vdwg.mxu0
  %v83 = vmax.f32 %v78, 0.0
  %vm84 = vcmask 123904
  %85 = vst.msk [vmem:[%s3] sm:$0x3] %vm84, %v83
  // Predicated region
  $region14: #{sst_forward.45} parent=0 // pred_check
    _
  $region15: #{sst_forward.45} parent=0 // pred_check_branch
    %87 = sbr.rel (0) target = $region17
  $region16: #{sst_forward.45} parent=0 // pred_region
    _
  $region17: #{sst_forward.45} parent=0 // pred_fallthru
    _
  // Predicated region
  $region18: #{sst_forward.45} parent=0 // pred_check
    _
  $region19: #{sst_forward.45} parent=0 // pred_check_branch
    %89 = sbr.rel (0) target = $region21
  $region20: #{sst_forward.45} parent=0 // pred_region
    _
  $region21: #{sst_forward.45} parent=0 // pred_fallthru
    _

// kernel: sst_forward.48
$region0: #{sst_forward.48}
  #allocation0 [shape = 'u32[]', space=smem, size = 0x4, offset = 0x4, fixed_abs, tag = 'smem constant byte address 0x4 - core index']
  #allocation1 [shape = 'u32[144,128]{1,0:T(1,128)}', space=vmem, size = 0x12000, scoped, tag = 'internal scratch']
  %s0 = inlined_call_operand.vmem [shape: bf16[2,144], index: 0, kind: input, shape index: {}]
  %s1 = inlined_call_operand.vmem [shape: bf16[144,32], index: 1, kind: input, shape index: {}]
  %s2 = inlined_call_operand.vmem [shape: f32[1,32], index: 2, kind: input, shape index: {}]
  %s3 = inlined_call_operand.vmem [shape: f32[2,32], index: 3, kind: output, shape index: {0}]
  %s4 = inlined_call_operand.hbm [shape: f32[2,32], index: 4, kind: output, shape index: {1}]
  %5 = xla_tuple %s3, %s4
  %s6 = sld [smem:[#allocation0]]
  $region30: #{sst_forward.48} parent=0
    _
  %s8 = ssub.s32 1, %s6
  %s9 = scalar_select 0, %s8, %s6
  $region1: #{sst_forward.48} parent=0
    #allocation2 [shape = 'u8[1024]{0}', space=vmem, size = 0x400, scoped, tag = 'output window, operand 1, single buffered']
    #allocation3 [shape = 's32[1]{0}', space=sflag, size = 0x4, scoped, tag = 'scoped memory for sst_forward.48']
    %10 = vsyncpa [#allocation3], 0
    // Predicated region
    $region2: #{sst_forward.48} parent=1 // pred_check
      _
    $region3: #{sst_forward.48} parent=1 // pred_check_branch
      %12 = sbr.rel (0) target = $region5
    $region4: #{sst_forward.48} parent=1 // pred_region
      _
    $region5: #{sst_forward.48} parent=1 // pred_fallthru
      _
    // Predicated region
    $region6: #{sst_forward.48} parent=1 // pred_check
      _
    $region7: #{sst_forward.48} parent=1 // pred_check_branch
      %14 = sbr.rel (0) target = $region9
    $region8: #{sst_forward.48} parent=1 // pred_region
      _
    $region9: #{sst_forward.48} parent=1 // pred_fallthru
      _
    // Predicated region
    $region10: #{sst_forward.48} parent=1 // pred_check
      _
    $region11: #{sst_forward.48} parent=1 // pred_check_branch
      %16 = sbr.rel (0) target = $region13
    $region12: #{sst_forward.48} parent=1 // pred_region
      _
    $region13: #{sst_forward.48} parent=1 // pred_fallthru
      _
    %v18 = vld [vmem:[%s0] sm:$0x3]
    %v19 = vld [vmem:[%s1] sm:$0xf]
    %v20 = vld [vmem:[%s1 + $0x4] sm:$0xf]
    %v21 = vld [vmem:[%s1 + $0x8] sm:$0xf]
    %v22 = vld [vmem:[%s1 + $0xc] sm:$0xf]
    %v23 = vld [vmem:[%s1 + $0x10] sm:$0xf]
    %v24 = vld [vmem:[%s1 + $0x14] sm:$0xf]
    %v25 = vld [vmem:[%s1 + $0x18] sm:$0xf]
    %v26 = vld [vmem:[%s1 + $0x1c] sm:$0xf]
    %v27 = vld [vmem:[%s1 + $0x20] sm:$0xf]
    %v28 = vld [vmem:[%s1 + $0x24] sm:$0xf]
    %v29 = vld [vmem:[%s1 + $0x28] sm:$0xf]
    %v30 = vld [vmem:[%s1 + $0x2c] sm:$0xf]
    %v31 = vld [vmem:[%s1 + $0x30] sm:$0xf]
    %v32 = vld [vmem:[%s1 + $0x34] sm:$0xf]
    %v33 = vld [vmem:[%s1 + $0x38] sm:$0xf]
    %v34 = vld [vmem:[%s1 + $0x3c] sm:$0xf]
    %v35 = vld [vmem:[%s1 + $0x40] sm:$0xf]
    %v36 = vld [vmem:[%s1 + $0x44] sm:$0xf]
    %v37 = vld [vmem:[%s2] sm:$0x1]
    %v39 = vlaneseq
    %v40 = vshrl.u32 %v39, 7
    %v41 = vsub.s32 0, %v40
    %v42 = vrot.slane %v37, %v41
    %v46 = vunpack.c.l.s4 1966171168
    %v47 = vunpack.c.0.s8 %v46
    %v48 = vlaneseq
    %v49 = vshrl.u32 %v48, 7
    %v50 = vsub.s32 %v47, %v49
    %v51 = vrot.slane %v18, %v50
    %v52 = vcombine.high %v51, %v51
    %v54 = vunpack.c.l.s4 1966171168
    %v55 = vunpack.c.0.s8 %v54
    %v56 = vlaneseq
    %v57 = vshrl.u32 %v56, 7
    %v58 = vsub.s32 %v55, %v57
    %v59 = vrot.slane %v51, %v58
    %v61 = vunpack.c.l.s4 1966171168
    %v62 = vunpack.c.0.s8 %v61
    %v63 = vlaneseq
    %v64 = vshrl.u32 %v63, 7
    %v65 = vsub.s32 %v62, %v64
    %v66 = vrot.slane %v52, %v65
    %v86 = vunpack.c.l.b16 %v19
    %v87 = vunpack.c.l.b16 %v20
    %v88 = vunpack.c.l.b16 %v21
    %v89 = vunpack.c.l.b16 %v22
    %v90 = vunpack.c.l.b16 %v23
    %v91 = vunpack.c.l.b16 %v24
    %v92 = vunpack.c.l.b16 %v25
    %v93 = vunpack.c.l.b16 %v26
    %v94 = vunpack.c.l.b16 %v27
    %v95 = vunpack.c.l.b16 %v28
    %v96 = vunpack.c.l.b16 %v29
    %v97 = vunpack.c.l.b16 %v30
    %v98 = vunpack.c.l.b16 %v31
    %v99 = vunpack.c.l.b16 %v32
    %v100 = vunpack.c.l.b16 %v33
    %v101 = vunpack.c.l.b16 %v34
    %v102 = vunpack.c.l.b16 %v35
    %v103 = vunpack.c.l.b16 %v36
    %v104 = vpack.c.b16 %v87, %v86
    %v105 = vpack.c.b16 %v89, %v88
    %v106 = vpack.c.b16 %v91, %v90
    %v107 = vpack.c.b16 %v93, %v92
    %v108 = vpack.c.b16 %v95, %v94
    %v109 = vpack.c.b16 %v97, %v96
    %v110 = vpack.c.b16 %v99, %v98
    %v111 = vpack.c.b16 %v101, %v100
    %v112 = vpack.c.b16 %v103, %v102
    %vm122 = vcmask 130048
    %v124 = vsel %vm122, %v66, 0
    %126 = vmatprep.subr.bf16.mxu0 0
    %127 = vmatpush1.bf16.msra.mxu0 %v111
    %128 = vmatprep.subr.bf16.mxu0 0
    %129 = vmatpush1.bf16.msra.mxu0 %v110
    %130 = vmatprep.subr.bf16.mxu0 0
    %131 = vmatpush1.bf16.msra.mxu0 %v109
    %132 = vmatprep.subr.bf16.mxu0 0
    %133 = vmatpush1.bf16.msra.mxu0 %v108
    %134 = vmatprep.subr.bf16.mxu0 0
    %135 = vmatpush1.bf16.msra.mxu0 %v107
    %136 = vmatprep.subr.bf16.mxu0 0
    %137 = vmatpush1.bf16.msra.mxu0 %v106
    %138 = vmatprep.subr.bf16.mxu0 0
    %139 = vmatpush1.bf16.msra.mxu0 %v105
    %140 = vmatprep.subr.bf16.mxu0 0
    %141 = vmatpush1.bf16.msra.mxu0 %v104
    %142 = vmatprep.subr.bf16.mxu0 0
    %143 = vmatpush2.bf16.msra.mxu0 0
    %144 = vmatprep.subr.bf16.mxu0 0
    %145 = vmatpush2.bf16.msra.mxu0 0
    %146 = vmatprep.subr.bf16.mxu0 0
    %147 = vmatpush2.bf16.msra.mxu0 0
    %148 = vmatprep.subr.bf16.mxu0 0
    %149 = vmatpush2.bf16.msra.mxu0 0
    %150 = vmatprep.subr.bf16.mxu0 0
    %151 = vmatpush2.bf16.msra.mxu0 0
    %152 = vmatprep.subr.bf16.mxu0 0
    %153 = vmatpush2.bf16.msra.mxu0 0
    %154 = vmatprep.subr.bf16.mxu0 0
    %155 = vmatpush2.bf16.msra.mxu0 0
    %156 = vmatprep.subr.bf16.mxu0 0
    %157 = vmatpush2.bf16.msra.mxu0 %v112
    %158 = vmatprep.mubr.bf16.mxu0 %v124
    %159 = vmatmul.mubr.bf16.gmra.mxu0 %v59
    %v160 = vpop.f32.mrf.mxu0
    %v161 = vadd.f32 %v42, %v160
    %v162 = vpop.f32.mrf.mxu0
    %v163 = vpop.f32.mrf.mxu0
    %v164 = vpop.f32.mrf.mxu0
    %165 = vdwg.mxu0
    %vm166 = vcmask 254976
    %167 = vst.msk [vmem:[%s3] sm:$0x3] %vm166, %v161
    %v168 = vmul.f32 %v161, 0.999995
    %v169 = vmax.f32 %v168, 0.0
    %170 = vst.msk [vmem:[#allocation2] sm:$0x3] %vm166, %v169
    // Predicated region
    $region14: #{sst_forward.48} parent=1 // pred_check
      _
    $region15: #{sst_forward.48} parent=1 // pred_check_branch
      %172 = sbr.rel (0) target = $region17
    $region16: #{sst_forward.48} parent=1 // pred_region
      _
    $region17: #{sst_forward.48} parent=1 // pred_fallthru
      _
    // Predicated region
    $region18: #{sst_forward.48} parent=1 // pred_check
      _
    $region19: #{sst_forward.48} parent=1 // pred_check_branch
      %174 = sbr.rel (0) target = $region21
    $region20: #{sst_forward.48} parent=1 // pred_region
      %s176 = ssub.s32 32, 32
      %177 = vsyncadd [#allocation3], %s176
      %s179 = sshll.u32 [#allocation2], 4
      %s180 = int_to_ptr.vmem [resolvable:$true] %s179
      %182 = dma.vmem_to_hbm [thread:$0]  %s180, 32, %s4, [#allocation3]
    $region21: #{sst_forward.48} parent=1 // pred_fallthru
      _
    // Predicated region
    $region22: #{sst_forward.48} parent=1 // pred_check
      _
    $region23: #{sst_forward.48} parent=1 // pred_check_branch
      %184 = sbr.rel (0) target = $region25
    $region24: #{sst_forward.48} parent=1 // pred_region
      _
    $region25: #{sst_forward.48} parent=1 // pred_fallthru
      _
    // Predicated region
    $region26: #{sst_forward.48} parent=1 // pred_check
      _
    $region27: #{sst_forward.48} parent=1 // pred_check_branch
      %186 = sbr.rel (0) target = $region29
    $region28: #{sst_forward.48} parent=1 // pred_region
      %187 = dma.done [#allocation3], 32
    $region29: #{sst_forward.48} parent=1 // pred_fallthru
      _
    %188 = vsyncpa [#allocation3], 1

// kernel: sst_forward.54
$region0: #{sst_forward.54}
  #allocation0 [shape = 'u32[]', space=smem, size = 0x4, offset = 0x4, fixed_abs, tag = 'smem constant byte address 0x4 - core index']
  #allocation1 [shape = 'u32[144,128]{1,0:T(1,128)}', space=vmem, size = 0x12000, scoped, tag = 'internal scratch']
  %s0 = inlined_call_operand.vmem [shape: bf16[2,288], index: 0, kind: input, shape index: {}]
  %s1 = inlined_call_operand.vmem [shape: bf16[288,8], index: 1, kind: input, shape index: {}]
  %s2 = inlined_call_operand.vmem [shape: f32[1,8], index: 2, kind: input, shape index: {}]
  %s3 = inlined_call_operand.vmem [shape: f32[2,8], index: 3, kind: output, shape index: {}]
  %s4 = sld [smem:[#allocation0]]
  $region22: #{sst_forward.54} parent=0
    _
  %s6 = ssub.s32 1, %s4
  %s7 = scalar_select 0, %s6, %s4
  // Predicated region
  $region2: #{sst_forward.54} parent=0 // pred_check
    _
  $region3: #{sst_forward.54} parent=0 // pred_check_branch
    %9 = sbr.rel (0) target = $region5
  $region4: #{sst_forward.54} parent=0 // pred_region
    _
  $region5: #{sst_forward.54} parent=0 // pred_fallthru
    _
  // Predicated region
  $region6: #{sst_forward.54} parent=0 // pred_check
    _
  $region7: #{sst_forward.54} parent=0 // pred_check_branch
    %11 = sbr.rel (0) target = $region9
  $region8: #{sst_forward.54} parent=0 // pred_region
    _
  $region9: #{sst_forward.54} parent=0 // pred_fallthru
    _
  // Predicated region
  $region10: #{sst_forward.54} parent=0 // pred_check
    _
  $region11: #{sst_forward.54} parent=0 // pred_check_branch
    %13 = sbr.rel (0) target = $region13
  $region12: #{sst_forward.54} parent=0 // pred_region
    _
  $region13: #{sst_forward.54} parent=0 // pred_fallthru
    _
  %v15 = vld [vmem:[%s0] sm:$0x7]
  %v16 = vld [vmem:[%s1] sm:$0xf]
  %v17 = vld [vmem:[%s1 + $0x4] sm:$0xf]
  %v18 = vld [vmem:[%s1 + $0x8] sm:$0xf]
  %v19 = vld [vmem:[%s1 + $0xc] sm:$0xf]
  %v20 = vld [vmem:[%s1 + $0x10] sm:$0xf]
  %v21 = vld [vmem:[%s1 + $0x14] sm:$0xf]
  %v22 = vld [vmem:[%s1 + $0x18] sm:$0xf]
  %v23 = vld [vmem:[%s1 + $0x1c] sm:$0xf]
  %v24 = vld [vmem:[%s1 + $0x20] sm:$0xf]
  %v25 = vld [vmem:[%s1 + $0x24] sm:$0xf]
  %v26 = vld [vmem:[%s1 + $0x28] sm:$0xf]
  %v27 = vld [vmem:[%s1 + $0x2c] sm:$0xf]
  %v28 = vld [vmem:[%s1 + $0x30] sm:$0xf]
  %v29 = vld [vmem:[%s1 + $0x34] sm:$0xf]
  %v30 = vld [vmem:[%s1 + $0x38] sm:$0xf]
  %v31 = vld [vmem:[%s1 + $0x3c] sm:$0xf]
  %v32 = vld [vmem:[%s1 + $0x40] sm:$0xf]
  %v33 = vld [vmem:[%s1 + $0x44] sm:$0xf]
  %v34 = vld [vmem:[%s1 + $0x48] sm:$0xf]
  %v35 = vld [vmem:[%s1 + $0x4c] sm:$0xf]
  %v36 = vld [vmem:[%s1 + $0x50] sm:$0xf]
  %v37 = vld [vmem:[%s1 + $0x54] sm:$0xf]
  %v38 = vld [vmem:[%s1 + $0x58] sm:$0xf]
  %v39 = vld [vmem:[%s1 + $0x5c] sm:$0xf]
  %v40 = vld [vmem:[%s1 + $0x60] sm:$0xf]
  %v41 = vld [vmem:[%s1 + $0x64] sm:$0xf]
  %v42 = vld [vmem:[%s1 + $0x68] sm:$0xf]
  %v43 = vld [vmem:[%s1 + $0x6c] sm:$0xf]
  %v44 = vld [vmem:[%s1 + $0x70] sm:$0xf]
  %v45 = vld [vmem:[%s1 + $0x74] sm:$0xf]
  %v46 = vld [vmem:[%s1 + $0x78] sm:$0xf]
  %v47 = vld [vmem:[%s1 + $0x7c] sm:$0xf]
  %v48 = vld [vmem:[%s1 + $0x80] sm:$0xf]
  %v49 = vld [vmem:[%s1 + $0x84] sm:$0xf]
  %v50 = vld [vmem:[%s1 + $0x88] sm:$0xf]
  %v51 = vld [vmem:[%s1 + $0x8c] sm:$0xf]
  %v52 = vld [vmem:[%s2] sm:$0x1]
  %v54 = vlaneseq
  %v55 = vshrl.u32 %v54, 7
  %v56 = vsub.s32 0, %v55
  %v57 = vrot.slane %v52, %v56
  %v61 = vunpack.c.l.s4 1966171168
  %v62 = vunpack.c.0.s8 %v61
  %v63 = vlaneseq
  %v64 = vshrl.u32 %v63, 7
  %v65 = vsub.s32 %v62, %v64
  %v66 = vrot.slane %v15, %v65
  %v67 = vcombine.high %v66, %v66
  %v69 = vunpack.c.l.s4 1966171168
  %v70 = vunpack.c.0.s8 %v69
  %v71 = vlaneseq
  %v72 = vshrl.u32 %v71, 7
  %v73 = vsub.s32 %v70, %v72
  %v74 = vrot.slane %v66, %v73
  %v76 = vunpack.c.l.s4 1966171168
  %v77 = vunpack.c.0.s8 %v76
  %v78 = vlaneseq
  %v79 = vshrl.u32 %v78, 7
  %v80 = vsub.s32 %v77, %v79
  %v81 = vrot.slane %v67, %v80
  %v82 = vcombine.high %v74, %v74
  %v121 = vunpack.c.l.b16 %v16
  %v122 = vunpack.c.l.b16 %v17
  %v123 = vunpack.c.l.b16 %v18
  %v124 = vunpack.c.l.b16 %v19
  %v125 = vunpack.c.l.b16 %v20
  %v126 = vunpack.c.l.b16 %v21
  %v127 = vunpack.c.l.b16 %v22
  %v128 = vunpack.c.l.b16 %v23
  %v129 = vunpack.c.l.b16 %v24
  %v130 = vunpack.c.l.b16 %v25
  %v131 = vunpack.c.l.b16 %v26
  %v132 = vunpack.c.l.b16 %v27
  %v133 = vunpack.c.l.b16 %v28
  %v134 = vunpack.c.l.b16 %v29
  %v135 = vunpack.c.l.b16 %v30
  %v136 = vunpack.c.l.b16 %v31
  %v137 = vunpack.c.l.b16 %v32
  %v138 = vunpack.c.l.b16 %v33
  %v139 = vunpack.c.l.b16 %v34
  %v140 = vunpack.c.l.b16 %v35
  %v141 = vunpack.c.l.b16 %v36
  %v142 = vunpack.c.l.b16 %v37
  %v143 = vunpack.c.l.b16 %v38
  %v144 = vunpack.c.l.b16 %v39
  %v145 = vunpack.c.l.b16 %v40
  %v146 = vunpack.c.l.b16 %v41
  %v147 = vunpack.c.l.b16 %v42
  %v148 = vunpack.c.l.b16 %v43
  %v149 = vunpack.c.l.b16 %v44
  %v150 = vunpack.c.l.b16 %v45
  %v151 = vunpack.c.l.b16 %v46
  %v152 = vunpack.c.l.b16 %v47
  %v153 = vunpack.c.l.b16 %v48
  %v154 = vunpack.c.l.b16 %v49
  %v155 = vunpack.c.l.b16 %v50
  %v156 = vunpack.c.l.b16 %v51
  %v157 = vpack.c.b16 %v122, %v121
  %v158 = vpack.c.b16 %v124, %v123
  %v159 = vpack.c.b16 %v126, %v125
  %v160 = vpack.c.b16 %v128, %v127
  %v161 = vpack.c.b16 %v130, %v129
  %v162 = vpack.c.b16 %v132, %v131
  %v163 = vpack.c.b16 %v134, %v133
  %v164 = vpack.c.b16 %v136, %v135
  %v165 = vpack.c.b16 %v138, %v137
  %v166 = vpack.c.b16 %v140, %v139
  %v167 = vpack.c.b16 %v142, %v141
  %v168 = vpack.c.b16 %v144, %v143
  %v169 = vpack.c.b16 %v146, %v145
  %v170 = vpack.c.b16 %v148, %v147
  %v171 = vpack.c.b16 %v150, %v149
  %v172 = vpack.c.b16 %v152, %v151
  %v173 = vpack.c.b16 %v154, %v153
  %v174 = vpack.c.b16 %v156, %v155
  %vm193 = vcmask 261120
  %v195 = vsel %vm193, %v82, 0
  %197 = vmatprep.subr.bf16.mxu0 0
  %198 = vmatpush1.bf16.msra.mxu0 %v164
  %199 = vmatprep.subr.bf16.mxu0 0
  %200 = vmatpush1.bf16.msra.mxu0 %v163
  %201 = vmatprep.subr.bf16.mxu0 0
  %202 = vmatpush1.bf16.msra.mxu0 %v162
  %203 = vmatprep.subr.bf16.mxu0 0
  %204 = vmatpush1.bf16.msra.mxu0 %v161
  %205 = vmatprep.subr.bf16.mxu0 0
  %206 = vmatpush1.bf16.msra.mxu0 %v160
  %207 = vmatprep.subr.bf16.mxu0 0
  %208 = vmatpush1.bf16.msra.mxu0 %v159
  %209 = vmatprep.subr.bf16.mxu0 0
  %210 = vmatpush1.bf16.msra.mxu0 %v158
  %211 = vmatprep.subr.bf16.mxu0 0
  %212 = vmatpush1.bf16.msra.mxu0 %v157
  %213 = vmatprep.subr.bf16.mxu0 0
  %214 = vmatpush2.bf16.msra.mxu0 %v172
  %215 = vmatprep.subr.bf16.mxu0 0
  %216 = vmatpush2.bf16.msra.mxu0 %v171
  %217 = vmatprep.subr.bf16.mxu0 0
  %218 = vmatpush2.bf16.msra.mxu0 %v170
  %219 = vmatprep.subr.bf16.mxu0 0
  %220 = vmatpush2.bf16.msra.mxu0 %v169
  %221 = vmatprep.subr.bf16.mxu0 0
  %222 = vmatpush2.bf16.msra.mxu0 %v168
  %223 = vmatprep.subr.bf16.mxu0 0
  %224 = vmatpush2.bf16.msra.mxu0 %v167
  %225 = vmatprep.subr.bf16.mxu0 0
  %226 = vmatpush2.bf16.msra.mxu0 %v166
  %227 = vmatprep.subr.bf16.mxu0 0
  %228 = vmatpush2.bf16.msra.mxu0 %v165
  %229 = vmatprep.mubr.bf16.mxu0 %v81
  %230 = vmatmul.mubr.bf16.gmra.mxu0 %v74
  %v231 = vpop.f32.mrf.mxu0
  %v232 = vadd.f32 %v57, %v231
  %v233 = vpop.f32.mrf.mxu0
  %v234 = vpop.f32.mrf.mxu0
  %v235 = vpop.f32.mrf.mxu0
  %236 = vdwg.mxu0
  %237 = vmatprep.subr.bf16.mxu0 0
  %238 = vmatpush1.bf16.msra.mxu0 0
  %239 = vmatprep.subr.bf16.mxu0 0
  %240 = vmatpush1.bf16.msra.mxu0 0
  %241 = vmatprep.subr.bf16.mxu0 0
  %242 = vmatpush1.bf16.msra.mxu0 0
  %243 = vmatprep.subr.bf16.mxu0 0
  %244 = vmatpush1.bf16.msra.mxu0 0
  %245 = vmatprep.subr.bf16.mxu0 0
  %246 = vmatpush1.bf16.msra.mxu0 0
  %247 = vmatprep.subr.bf16.mxu0 0
  %248 = vmatpush1.bf16.msra.mxu0 0
  %249 = vmatprep.subr.bf16.mxu0 0
  %250 = vmatpush1.bf16.msra.mxu0 %v174
  %251 = vmatprep.subr.bf16.mxu0 0
  %252 = vmatpush1.bf16.msra.mxu0 %v173
  %253 = vmatprep.subr.bf16.mxu0 0
  %254 = vmatpush2.bf16.msra.mxu0 0
  %255 = vmatprep.subr.bf16.mxu0 0
  %256 = vmatpush2.bf16.msra.mxu0 0
  %257 = vmatprep.subr.bf16.mxu0 0
  %258 = vmatpush2.bf16.msra.mxu0 0
  %259 = vmatprep.subr.bf16.mxu0 0
  %260 = vmatpush2.bf16.msra.mxu0 0
  %261 = vmatprep.subr.bf16.mxu0 0
  %262 = vmatpush2.bf16.msra.mxu0 0
  %263 = vmatprep.subr.bf16.mxu0 0
  %264 = vmatpush2.bf16.msra.mxu0 0
  %265 = vmatprep.subr.bf16.mxu0 0
  %266 = vmatpush2.bf16.msra.mxu0 0
  %267 = vmatprep.subr.bf16.mxu0 0
  %268 = vmatpush2.bf16.msra.mxu0 0
  %269 = vmatprep.mubr.bf16.mxu0 0
  %270 = vmatmul.mubr.bf16.gmra.mxu0 %v195
  %v271 = vpop.f32.mrf.mxu0
  %v272 = vadd.f32 %v232, %v271
  %v273 = vpop.f32.mrf.mxu0
  %v274 = vpop.f32.mrf.mxu0
  %v275 = vpop.f32.mrf.mxu0
  %276 = vdwg.mxu0
  %v277 = vmax.f32 %v272, 0.0
  %vm278 = vcmask 58368
  %279 = vst.msk [vmem:[%s3] sm:$0x3] %vm278, %v277
  // Predicated region
  $region14: #{sst_forward.54} parent=0 // pred_check
    _
  $region15: #{sst_forward.54} parent=0 // pred_check_branch
    %281 = sbr.rel (0) target = $region17
  $region16: #{sst_forward.54} parent=0 // pred_region
    _
  $region17: #{sst_forward.54} parent=0 // pred_fallthru
    _
  // Predicated region
  $region18: #{sst_forward.54} parent=0 // pred_check
    _
  $region19: #{sst_forward.54} parent=0 // pred_check_branch
    %283 = sbr.rel (0) target = $region21
  $region20: #{sst_forward.54} parent=0 // pred_region
    _
  $region21: #{sst_forward.54} parent=0 // pred_fallthru
    _

// kernel: sst_forward.51
$region0: #{sst_forward.51}
  #allocation0 [shape = 'u32[]', space=smem, size = 0x4, offset = 0x4, fixed_abs, tag = 'smem constant byte address 0x4 - core index']
  #allocation1 [shape = 'u32[144,128]{1,0:T(1,128)}', space=vmem, size = 0x12000, scoped, tag = 'internal scratch']
  %s0 = inlined_call_operand.vmem [shape: bf16[8,576], index: 0, kind: input, shape index: {}]
  %s1 = inlined_call_operand.vmem [shape: bf16[576,8], index: 1, kind: input, shape index: {}]
  %s2 = inlined_call_operand.vmem [shape: f32[1,8], index: 2, kind: input, shape index: {}]
  %s3 = inlined_call_operand.vmem [shape: f32[8,8], index: 3, kind: output, shape index: {}]
  %s4 = sld [smem:[#allocation0]]
  $region22: #{sst_forward.51} parent=0
    _
  %s6 = ssub.s32 1, %s4
  %s7 = scalar_select 0, %s6, %s4
  // Predicated region
  $region2: #{sst_forward.51} parent=0 // pred_check
    _
  $region3: #{sst_forward.51} parent=0 // pred_check_branch
    %9 = sbr.rel (0) target = $region5
  $region4: #{sst_forward.51} parent=0 // pred_region
    _
  $region5: #{sst_forward.51} parent=0 // pred_fallthru
    _
  // Predicated region
  $region6: #{sst_forward.51} parent=0 // pred_check
    _
  $region7: #{sst_forward.51} parent=0 // pred_check_branch
    %11 = sbr.rel (0) target = $region9
  $region8: #{sst_forward.51} parent=0 // pred_region
    _
  $region9: #{sst_forward.51} parent=0 // pred_fallthru
    _
  // Predicated region
  $region10: #{sst_forward.51} parent=0 // pred_check
    _
  $region11: #{sst_forward.51} parent=0 // pred_check_branch
    %13 = sbr.rel (0) target = $region13
  $region12: #{sst_forward.51} parent=0 // pred_region
    _
  $region13: #{sst_forward.51} parent=0 // pred_fallthru
    _
  %v15 = vld [vmem:[%s0] sm:$0xff]
  %v16 = vld [vmem:[%s0 + $0x8] sm:$0xff]
  %v17 = vld [vmem:[%s0 + $0x10] sm:$0xf]
  %v18 = vld [vmem:[%s1] sm:$0xf]
  %v19 = vld [vmem:[%s1 + $0x4] sm:$0xf]
  %v20 = vld [vmem:[%s1 + $0x8] sm:$0xf]
  %v21 = vld [vmem:[%s1 + $0xc] sm:$0xf]
  %v22 = vld [vmem:[%s1 + $0x10] sm:$0xf]
  %v23 = vld [vmem:[%s1 + $0x14] sm:$0xf]
  %v24 = vld [vmem:[%s1 + $0x18] sm:$0xf]
  %v25 = vld [vmem:[%s1 + $0x1c] sm:$0xf]
  %v26 = vld [vmem:[%s1 + $0x20] sm:$0xf]
  %v27 = vld [vmem:[%s1 + $0x24] sm:$0xf]
  %v28 = vld [vmem:[%s1 + $0x28] sm:$0xf]
  %v29 = vld [vmem:[%s1 + $0x2c] sm:$0xf]
  %v30 = vld [vmem:[%s1 + $0x30] sm:$0xf]
  %v31 = vld [vmem:[%s1 + $0x34] sm:$0xf]
  %v32 = vld [vmem:[%s1 + $0x38] sm:$0xf]
  %v33 = vld [vmem:[%s1 + $0x3c] sm:$0xf]
  %v34 = vld [vmem:[%s1 + $0x40] sm:$0xf]
  %v35 = vld [vmem:[%s1 + $0x44] sm:$0xf]
  %v36 = vld [vmem:[%s1 + $0x48] sm:$0xf]
  %v37 = vld [vmem:[%s1 + $0x4c] sm:$0xf]
  %v38 = vld [vmem:[%s1 + $0x50] sm:$0xf]
  %v39 = vld [vmem:[%s1 + $0x54] sm:$0xf]
  %v40 = vld [vmem:[%s1 + $0x58] sm:$0xf]
  %v41 = vld [vmem:[%s1 + $0x5c] sm:$0xf]
  %v42 = vld [vmem:[%s1 + $0x60] sm:$0xf]
  %v43 = vld [vmem:[%s1 + $0x64] sm:$0xf]
  %v44 = vld [vmem:[%s1 + $0x68] sm:$0xf]
  %v45 = vld [vmem:[%s1 + $0x6c] sm:$0xf]
  %v46 = vld [vmem:[%s1 + $0x70] sm:$0xf]
  %v47 = vld [vmem:[%s1 + $0x74] sm:$0xf]
  %v48 = vld [vmem:[%s1 + $0x78] sm:$0xf]
  %v49 = vld [vmem:[%s1 + $0x7c] sm:$0xf]
  %v50 = vld [vmem:[%s1 + $0x80] sm:$0xf]
  %v51 = vld [vmem:[%s1 + $0x84] sm:$0xf]
  %v52 = vld [vmem:[%s1 + $0x88] sm:$0xf]
  %v53 = vld [vmem:[%s1 + $0x8c] sm:$0xf]
  %v54 = vld [vmem:[%s1 + $0x90] sm:$0xf]
  %v55 = vld [vmem:[%s1 + $0x94] sm:$0xf]
  %v56 = vld [vmem:[%s1 + $0x98] sm:$0xf]
  %v57 = vld [vmem:[%s1 + $0x9c] sm:$0xf]
  %v58 = vld [vmem:[%s1 + $0xa0] sm:$0xf]
  %v59 = vld [vmem:[%s1 + $0xa4] sm:$0xf]
  %v60 = vld [vmem:[%s1 + $0xa8] sm:$0xf]
  %v61 = vld [vmem:[%s1 + $0xac] sm:$0xf]
  %v62 = vld [vmem:[%s1 + $0xb0] sm:$0xf]
  %v63 = vld [vmem:[%s1 + $0xb4] sm:$0xf]
  %v64 = vld [vmem:[%s1 + $0xb8] sm:$0xf]
  %v65 = vld [vmem:[%s1 + $0xbc] sm:$0xf]
  %v66 = vld [vmem:[%s1 + $0xc0] sm:$0xf]
  %v67 = vld [vmem:[%s1 + $0xc4] sm:$0xf]
  %v68 = vld [vmem:[%s1 + $0xc8] sm:$0xf]
  %v69 = vld [vmem:[%s1 + $0xcc] sm:$0xf]
  %v70 = vld [vmem:[%s1 + $0xd0] sm:$0xf]
  %v71 = vld [vmem:[%s1 + $0xd4] sm:$0xf]
  %v72 = vld [vmem:[%s1 + $0xd8] sm:$0xf]
  %v73 = vld [vmem:[%s1 + $0xdc] sm:$0xf]
  %v74 = vld [vmem:[%s1 + $0xe0] sm:$0xf]
  %v75 = vld [vmem:[%s1 + $0xe4] sm:$0xf]
  %v76 = vld [vmem:[%s1 + $0xe8] sm:$0xf]
  %v77 = vld [vmem:[%s1 + $0xec] sm:$0xf]
  %v78 = vld [vmem:[%s1 + $0xf0] sm:$0xf]
  %v79 = vld [vmem:[%s1 + $0xf4] sm:$0xf]
  %v80 = vld [vmem:[%s1 + $0xf8] sm:$0xf]
  %v81 = vld [vmem:[%s1 + $0xfc] sm:$0xf]
  %v82 = vld [vmem:[%s1 + $0x100] sm:$0xf]
  %v83 = vld [vmem:[%s1 + $0x104] sm:$0xf]
  %v84 = vld [vmem:[%s1 + $0x108] sm:$0xf]
  %v85 = vld [vmem:[%s1 + $0x10c] sm:$0xf]
  %v86 = vld [vmem:[%s1 + $0x110] sm:$0xf]
  %v87 = vld [vmem:[%s1 + $0x114] sm:$0xf]
  %v88 = vld [vmem:[%s1 + $0x118] sm:$0xf]
  %v89 = vld [vmem:[%s1 + $0x11c] sm:$0xf]
  %v90 = vld [vmem:[%s2] sm:$0x1]
  %v92 = vlaneseq
  %v93 = vshrl.u32 %v92, 7
  %v94 = vsub.s32 0, %v93
  %v95 = vrot.slane %v90, %v94
  %v100 = vunpack.c.l.b16 %v15
  %v101 = vunpack.c.h.b16 %v15
  %v102 = vunpack.c.l.b16 %v16
  %v103 = vunpack.c.h.b16 %v16
  %v104 = vunpack.c.l.b16 %v17
  %v105 = vpack.c.b16 %v100, %v100
  %v106 = vpack.c.b16 %v101, %v101
  %v107 = vpack.c.b16 %v102, %v102
  %v108 = vpack.c.b16 %v103, %v103
  %v109 = vpack.c.b16 %v104, %v104
  %v186 = vunpack.c.l.b16 %v18
  %v187 = vunpack.c.l.b16 %v19
  %v188 = vunpack.c.l.b16 %v20
  %v189 = vunpack.c.l.b16 %v21
  %v190 = vunpack.c.l.b16 %v22
  %v191 = vunpack.c.l.b16 %v23
  %v192 = vunpack.c.l.b16 %v24
  %v193 = vunpack.c.l.b16 %v25
  %v194 = vunpack.c.l.b16 %v26
  %v195 = vunpack.c.l.b16 %v27
  %v196 = vunpack.c.l.b16 %v28
  %v197 = vunpack.c.l.b16 %v29
  %v198 = vunpack.c.l.b16 %v30
  %v199 = vunpack.c.l.b16 %v31
  %v200 = vunpack.c.l.b16 %v32
  %v201 = vunpack.c.l.b16 %v33
  %v202 = vunpack.c.l.b16 %v34
  %v203 = vunpack.c.l.b16 %v35
  %v204 = vunpack.c.l.b16 %v36
  %v205 = vunpack.c.l.b16 %v37
  %v206 = vunpack.c.l.b16 %v38
  %v207 = vunpack.c.l.b16 %v39
  %v208 = vunpack.c.l.b16 %v40
  %v209 = vunpack.c.l.b16 %v41
  %v210 = vunpack.c.l.b16 %v42
  %v211 = vunpack.c.l.b16 %v43
  %v212 = vunpack.c.l.b16 %v44
  %v213 = vunpack.c.l.b16 %v45
  %v214 = vunpack.c.l.b16 %v46
  %v215 = vunpack.c.l.b16 %v47
  %v216 = vunpack.c.l.b16 %v48
  %v217 = vunpack.c.l.b16 %v49
  %v218 = vunpack.c.l.b16 %v50
  %v219 = vunpack.c.l.b16 %v51
  %v220 = vunpack.c.l.b16 %v52
  %v221 = vunpack.c.l.b16 %v53
  %v222 = vunpack.c.l.b16 %v54
  %v223 = vunpack.c.l.b16 %v55
  %v224 = vunpack.c.l.b16 %v56
  %v225 = vunpack.c.l.b16 %v57
  %v226 = vunpack.c.l.b16 %v58
  %v227 = vunpack.c.l.b16 %v59
  %v228 = vunpack.c.l.b16 %v60
  %v229 = vunpack.c.l.b16 %v61
  %v230 = vunpack.c.l.b16 %v62
  %v231 = vunpack.c.l.b16 %v63
  %v232 = vunpack.c.l.b16 %v64
  %v233 = vunpack.c.l.b16 %v65
  %v234 = vunpack.c.l.b16 %v66
  %v235 = vunpack.c.l.b16 %v67
  %v236 = vunpack.c.l.b16 %v68
  %v237 = vunpack.c.l.b16 %v69
  %v238 = vunpack.c.l.b16 %v70
  %v239 = vunpack.c.l.b16 %v71
  %v240 = vunpack.c.l.b16 %v72
  %v241 = vunpack.c.l.b16 %v73
  %v242 = vunpack.c.l.b16 %v74
  %v243 = vunpack.c.l.b16 %v75
  %v244 = vunpack.c.l.b16 %v76
  %v245 = vunpack.c.l.b16 %v77
  %v246 = vunpack.c.l.b16 %v78
  %v247 = vunpack.c.l.b16 %v79
  %v248 = vunpack.c.l.b16 %v80
  %v249 = vunpack.c.l.b16 %v81
  %v250 = vunpack.c.l.b16 %v82
  %v251 = vunpack.c.l.b16 %v83
  %v252 = vunpack.c.l.b16 %v84
  %v253 = vunpack.c.l.b16 %v85
  %v254 = vunpack.c.l.b16 %v86
  %v255 = vunpack.c.l.b16 %v87
  %v256 = vunpack.c.l.b16 %v88
  %v257 = vunpack.c.l.b16 %v89
  %v258 = vpack.c.b16 %v187, %v186
  %v259 = vpack.c.b16 %v189, %v188
  %v260 = vpack.c.b16 %v191, %v190
  %v261 = vpack.c.b16 %v193, %v192
  %v262 = vpack.c.b16 %v195, %v194
  %v263 = vpack.c.b16 %v197, %v196
  %v264 = vpack.c.b16 %v199, %v198
  %v265 = vpack.c.b16 %v201, %v200
  %v266 = vpack.c.b16 %v203, %v202
  %v267 = vpack.c.b16 %v205, %v204
  %v268 = vpack.c.b16 %v207, %v206
  %v269 = vpack.c.b16 %v209, %v208
  %v270 = vpack.c.b16 %v211, %v210
  %v271 = vpack.c.b16 %v213, %v212
  %v272 = vpack.c.b16 %v215, %v214
  %v273 = vpack.c.b16 %v217, %v216
  %v274 = vpack.c.b16 %v219, %v218
  %v275 = vpack.c.b16 %v221, %v220
  %v276 = vpack.c.b16 %v223, %v222
  %v277 = vpack.c.b16 %v225, %v224
  %v278 = vpack.c.b16 %v227, %v226
  %v279 = vpack.c.b16 %v229, %v228
  %v280 = vpack.c.b16 %v231, %v230
  %v281 = vpack.c.b16 %v233, %v232
  %v282 = vpack.c.b16 %v235, %v234
  %v283 = vpack.c.b16 %v237, %v236
  %v284 = vpack.c.b16 %v239, %v238
  %v285 = vpack.c.b16 %v241, %v240
  %v286 = vpack.c.b16 %v243, %v242
  %v287 = vpack.c.b16 %v245, %v244
  %v288 = vpack.c.b16 %v247, %v246
  %v289 = vpack.c.b16 %v249, %v248
  %v290 = vpack.c.b16 %v251, %v250
  %v291 = vpack.c.b16 %v253, %v252
  %v292 = vpack.c.b16 %v255, %v254
  %v293 = vpack.c.b16 %v257, %v256
  %vm330 = vcmask 523264
  %v332 = vsel %vm330, %v109, 0
  %334 = vmatprep.subr.bf16.mxu0 0
  %335 = vmatpush1.bf16.msra.mxu0 %v265
  %336 = vmatprep.subr.bf16.mxu0 0
  %337 = vmatpush1.bf16.msra.mxu0 %v264
  %338 = vmatprep.subr.bf16.mxu0 0
  %339 = vmatpush1.bf16.msra.mxu0 %v263
  %340 = vmatprep.subr.bf16.mxu0 0
  %341 = vmatpush1.bf16.msra.mxu0 %v262
  %342 = vmatprep.subr.bf16.mxu0 0
  %343 = vmatpush1.bf16.msra.mxu0 %v261
  %344 = vmatprep.subr.bf16.mxu0 0
  %345 = vmatpush1.bf16.msra.mxu0 %v260
  %346 = vmatprep.subr.bf16.mxu0 0
  %347 = vmatpush1.bf16.msra.mxu0 %v259
  %348 = vmatprep.subr.bf16.mxu0 0
  %349 = vmatpush1.bf16.msra.mxu0 %v258
  %350 = vmatprep.subr.bf16.mxu0 0
  %351 = vmatpush2.bf16.msra.mxu0 %v273
  %352 = vmatprep.subr.bf16.mxu0 0
  %353 = vmatpush2.bf16.msra.mxu0 %v272
  %354 = vmatprep.subr.bf16.mxu0 0
  %355 = vmatpush2.bf16.msra.mxu0 %v271
  %356 = vmatprep.subr.bf16.mxu0 0
  %357 = vmatpush2.bf16.msra.mxu0 %v270
  %358 = vmatprep.subr.bf16.mxu0 0
  %359 = vmatpush2.bf16.msra.mxu0 %v269
  %360 = vmatprep.subr.bf16.mxu0 0
  %361 = vmatpush2.bf16.msra.mxu0 %v268
  %362 = vmatprep.subr.bf16.mxu0 0
  %363 = vmatpush2.bf16.msra.mxu0 %v267
  %364 = vmatprep.subr.bf16.mxu0 0
  %365 = vmatpush2.bf16.msra.mxu0 %v266
  %366 = vmatprep.mubr.bf16.mxu0 %v106
  %367 = vmatmul.mubr.bf16.gmra.mxu0 %v105
  %v368 = vpop.f32.mrf.mxu0
  %v369 = vadd.f32 %v95, %v368
  %v370 = vpop.f32.mrf.mxu0
  %v371 = vpop.f32.mrf.mxu0
  %v372 = vpop.f32.mrf.mxu0
  %373 = vdwg.mxu0
  %374 = vmatprep.subr.bf16.mxu0 0
  %375 = vmatpush1.bf16.msra.mxu0 %v281
  %376 = vmatprep.subr.bf16.mxu0 0
  %377 = vmatpush1.bf16.msra.mxu0 %v280
  %378 = vmatprep.subr.bf16.mxu0 0
  %379 = vmatpush1.bf16.msra.mxu0 %v279
  %380 = vmatprep.subr.bf16.mxu0 0
  %381 = vmatpush1.bf16.msra.mxu0 %v278
  %382 = vmatprep.subr.bf16.mxu0 0
  %383 = vmatpush1.bf16.msra.mxu0 %v277
  %384 = vmatprep.subr.bf16.mxu0 0
  %385 = vmatpush1.bf16.msra.mxu0 %v276
  %386 = vmatprep.subr.bf16.mxu0 0
  %387 = vmatpush1.bf16.msra.mxu0 %v275
  %388 = vmatprep.subr.bf16.mxu0 0
  %389 = vmatpush1.bf16.msra.mxu0 %v274
  %390 = vmatprep.subr.bf16.mxu0 0
  %391 = vmatpush2.bf16.msra.mxu0 %v289
  %392 = vmatprep.subr.bf16.mxu0 0
  %393 = vmatpush2.bf16.msra.mxu0 %v288
  %394 = vmatprep.subr.bf16.mxu0 0
  %395 = vmatpush2.bf16.msra.mxu0 %v287
  %396 = vmatprep.subr.bf16.mxu0 0
  %397 = vmatpush2.bf16.msra.mxu0 %v286
  %398 = vmatprep.subr.bf16.mxu0 0
  %399 = vmatpush2.bf16.msra.mxu0 %v285
  %400 = vmatprep.subr.bf16.mxu0 0
  %401 = vmatpush2.bf16.msra.mxu0 %v284
  %402 = vmatprep.subr.bf16.mxu0 0
  %403 = vmatpush2.bf16.msra.mxu0 %v283
  %404 = vmatprep.subr.bf16.mxu0 0
  %405 = vmatpush2.bf16.msra.mxu0 %v282
  %406 = vmatprep.mubr.bf16.mxu0 %v108
  %407 = vmatmul.mubr.bf16.gmra.mxu0 %v107
  %v408 = vpop.f32.mrf.mxu0
  %v409 = vadd.f32 %v369, %v408
  %v410 = vpop.f32.mrf.mxu0
  %v411 = vpop.f32.mrf.mxu0
  %v412 = vpop.f32.mrf.mxu0
  %413 = vdwg.mxu0
  %414 = vmatprep.subr.bf16.mxu0 0
  %415 = vmatpush1.bf16.msra.mxu0 0
  %416 = vmatprep.subr.bf16.mxu0 0
  %417 = vmatpush1.bf16.msra.mxu0 0
  %418 = vmatprep.subr.bf16.mxu0 0
  %419 = vmatpush1.bf16.msra.mxu0 0
  %420 = vmatprep.subr.bf16.mxu0 0
  %421 = vmatpush1.bf16.msra.mxu0 0
  %422 = vmatprep.subr.bf16.mxu0 0
  %423 = vmatpush1.bf16.msra.mxu0 %v293
  %424 = vmatprep.subr.bf16.mxu0 0
  %425 = vmatpush1.bf16.msra.mxu0 %v292
  %426 = vmatprep.subr.bf16.mxu0 0
  %427 = vmatpush1.bf16.msra.mxu0 %v291
  %428 = vmatprep.subr.bf16.mxu0 0
  %429 = vmatpush1.bf16.msra.mxu0 %v290
  %430 = vmatprep.subr.bf16.mxu0 0
  %431 = vmatpush2.bf16.msra.mxu0 0
  %432 = vmatprep.subr.bf16.mxu0 0
  %433 = vmatpush2.bf16.msra.mxu0 0
  %434 = vmatprep.subr.bf16.mxu0 0
  %435 = vmatpush2.bf16.msra.mxu0 0
  %436 = vmatprep.subr.bf16.mxu0 0
  %437 = vmatpush2.bf16.msra.mxu0 0
  %438 = vmatprep.subr.bf16.mxu0 0
  %439 = vmatpush2.bf16.msra.mxu0 0
  %440 = vmatprep.subr.bf16.mxu0 0
  %441 = vmatpush2.bf16.msra.mxu0 0
  %442 = vmatprep.subr.bf16.mxu0 0
  %443 = vmatpush2.bf16.msra.mxu0 0
  %444 = vmatprep.subr.bf16.mxu0 0
  %445 = vmatpush2.bf16.msra.mxu0 0
  %446 = vmatprep.mubr.bf16.mxu0 0
  %447 = vmatmul.mubr.bf16.gmra.mxu0 %v332
  %v448 = vpop.f32.mrf.mxu0
  %v449 = vadd.f32 %v409, %v448
  %v450 = vpop.f32.mrf.mxu0
  %v451 = vpop.f32.mrf.mxu0
  %v452 = vpop.f32.mrf.mxu0
  %453 = vdwg.mxu0
  %v454 = vmax.f32 %v449, 0.0
  %vm455 = vcmask 64512
  %456 = vst.msk [vmem:[%s3] sm:$0xff] %vm455, %v454
  // Predicated region
  $region14: #{sst_forward.51} parent=0 // pred_check
    _
  $region15: #{sst_forward.51} parent=0 // pred_check_branch
    %458 = sbr.rel (0) target = $region17
  $region16: #{sst_forward.51} parent=0 // pred_region
    _
  $region17: #{sst_forward.51} parent=0 // pred_fallthru
    _
  // Predicated region
  $region18: #{sst_forward.51} parent=0 // pred_check
    _
  $region19: #{sst_forward.51} parent=0 // pred_check_branch
    %460 = sbr.rel (0) target = $region21
  $region20: #{sst_forward.51} parent=0 // pred_region
    _
  $region21: #{sst_forward.51} parent=0 // pred_fallthru
    _

// kernel: sst_forward.50
$region0: #{sst_forward.50}
  #allocation0 [shape = 'u32[]', space=smem, size = 0x4, offset = 0x4, fixed_abs, tag = 'smem constant byte address 0x4 - core index']
  #allocation1 [shape = 'u32[144,128]{1,0:T(1,128)}', space=vmem, size = 0x12000, scoped, tag = 'internal scratch']
  %s0 = inlined_call_operand.vmem [shape: bf16[32,288], index: 0, kind: input, shape index: {}]
  %s1 = inlined_call_operand.vmem [shape: bf16[288,8], index: 1, kind: input, shape index: {}]
  %s2 = inlined_call_operand.vmem [shape: f32[1,8], index: 2, kind: input, shape index: {}]
  %s3 = inlined_call_operand.vmem [shape: f32[32,8], index: 3, kind: output, shape index: {}]
  %s4 = sld [smem:[#allocation0]]
  $region22: #{sst_forward.50} parent=0
    _
  %s6 = ssub.s32 1, %s4
  %s7 = scalar_select 0, %s6, %s4
  // Predicated region
  $region2: #{sst_forward.50} parent=0 // pred_check
    _
  $region3: #{sst_forward.50} parent=0 // pred_check_branch
    %9 = sbr.rel (0) target = $region5
  $region4: #{sst_forward.50} parent=0 // pred_region
    _
  $region5: #{sst_forward.50} parent=0 // pred_fallthru
    _
  // Predicated region
  $region6: #{sst_forward.50} parent=0 // pred_check
    _
  $region7: #{sst_forward.50} parent=0 // pred_check_branch
    %11 = sbr.rel (0) target = $region9
  $region8: #{sst_forward.50} parent=0 // pred_region
    _
  $region9: #{sst_forward.50} parent=0 // pred_fallthru
    _
  // Predicated region
  $region10: #{sst_forward.50} parent=0 // pred_check
    _
  $region11: #{sst_forward.50} parent=0 // pred_check_branch
    %13 = sbr.rel (0) target = $region13
  $region12: #{sst_forward.50} parent=0 // pred_region
    _
  $region13: #{sst_forward.50} parent=0 // pred_fallthru
    _
  %v15 = vld [vmem:[%s0] sm:$0xff]
  %v16 = vld [vmem:[%s0 + $0x8] sm:$0xf]
  %v17 = vld [vmem:[%s0 + $0xc] sm:$0xff]
  %v18 = vld [vmem:[%s0 + $0x14] sm:$0xf]
  %v19 = vld [vmem:[%s0 + $0x18] sm:$0xff]
  %v20 = vld [vmem:[%s0 + $0x20] sm:$0xf]
  %v21 = vld [vmem:[%s0 + $0x24] sm:$0xff]
  %v22 = vld [vmem:[%s0 + $0x2c] sm:$0xf]
  %v23 = vld [vmem:[%s1] sm:$0xf]
  %v24 = vld [vmem:[%s1 + $0x4] sm:$0xf]
  %v25 = vld [vmem:[%s1 + $0x8] sm:$0xf]
  %v26 = vld [vmem:[%s1 + $0xc] sm:$0xf]
  %v27 = vld [vmem:[%s1 + $0x10] sm:$0xf]
  %v28 = vld [vmem:[%s1 + $0x14] sm:$0xf]
  %v29 = vld [vmem:[%s1 + $0x18] sm:$0xf]
  %v30 = vld [vmem:[%s1 + $0x1c] sm:$0xf]
  %v31 = vld [vmem:[%s1 + $0x20] sm:$0xf]
  %v32 = vld [vmem:[%s1 + $0x24] sm:$0xf]
  %v33 = vld [vmem:[%s1 + $0x28] sm:$0xf]
  %v34 = vld [vmem:[%s1 + $0x2c] sm:$0xf]
  %v35 = vld [vmem:[%s1 + $0x30] sm:$0xf]
  %v36 = vld [vmem:[%s1 + $0x34] sm:$0xf]
  %v37 = vld [vmem:[%s1 + $0x38] sm:$0xf]
  %v38 = vld [vmem:[%s1 + $0x3c] sm:$0xf]
  %v39 = vld [vmem:[%s1 + $0x40] sm:$0xf]
  %v40 = vld [vmem:[%s1 + $0x44] sm:$0xf]
  %v41 = vld [vmem:[%s1 + $0x48] sm:$0xf]
  %v42 = vld [vmem:[%s1 + $0x4c] sm:$0xf]
  %v43 = vld [vmem:[%s1 + $0x50] sm:$0xf]
  %v44 = vld [vmem:[%s1 + $0x54] sm:$0xf]
  %v45 = vld [vmem:[%s1 + $0x58] sm:$0xf]
  %v46 = vld [vmem:[%s1 + $0x5c] sm:$0xf]
  %v47 = vld [vmem:[%s1 + $0x60] sm:$0xf]
  %v48 = vld [vmem:[%s1 + $0x64] sm:$0xf]
  %v49 = vld [vmem:[%s1 + $0x68] sm:$0xf]
  %v50 = vld [vmem:[%s1 + $0x6c] sm:$0xf]
  %v51 = vld [vmem:[%s1 + $0x70] sm:$0xf]
  %v52 = vld [vmem:[%s1 + $0x74] sm:$0xf]
  %v53 = vld [vmem:[%s1 + $0x78] sm:$0xf]
  %v54 = vld [vmem:[%s1 + $0x7c] sm:$0xf]
  %v55 = vld [vmem:[%s1 + $0x80] sm:$0xf]
  %v56 = vld [vmem:[%s1 + $0x84] sm:$0xf]
  %v57 = vld [vmem:[%s1 + $0x88] sm:$0xf]
  %v58 = vld [vmem:[%s1 + $0x8c] sm:$0xf]
  %v59 = vld [vmem:[%s2] sm:$0x1]
  %v61 = vlaneseq
  %v62 = vshrl.u32 %v61, 7
  %v63 = vsub.s32 0, %v62
  %v64 = vrot.slane %v59, %v63
  %v74 = vunpack.c.l.b16 %v15
  %v75 = vunpack.c.h.b16 %v15
  %v76 = vunpack.c.l.b16 %v16
  %v77 = vunpack.c.l.b16 %v17
  %v78 = vunpack.c.h.b16 %v17
  %v79 = vunpack.c.l.b16 %v18
  %v80 = vunpack.c.l.b16 %v19
  %v81 = vunpack.c.h.b16 %v19
  %v82 = vunpack.c.l.b16 %v20
  %v83 = vunpack.c.l.b16 %v21
  %v84 = vunpack.c.h.b16 %v21
  %v85 = vunpack.c.l.b16 %v22
  %v86 = vpack.c.b16 %v77, %v74
  %v87 = vpack.c.b16 %v78, %v75
  %v88 = vpack.c.b16 %v79, %v76
  %v89 = vpack.c.b16 %v83, %v80
  %v90 = vpack.c.b16 %v84, %v81
  %v91 = vpack.c.b16 %v85, %v82
  %v132 = vunpack.c.l.b16 %v23
  %v133 = vunpack.c.l.b16 %v24
  %v134 = vunpack.c.l.b16 %v25
  %v135 = vunpack.c.l.b16 %v26
  %v136 = vunpack.c.l.b16 %v27
  %v137 = vunpack.c.l.b16 %v28
  %v138 = vunpack.c.l.b16 %v29
  %v139 = vunpack.c.l.b16 %v30
  %v140 = vunpack.c.l.b16 %v31
  %v141 = vunpack.c.l.b16 %v32
  %v142 = vunpack.c.l.b16 %v33
  %v143 = vunpack.c.l.b16 %v34
  %v144 = vunpack.c.l.b16 %v35
  %v145 = vunpack.c.l.b16 %v36
  %v146 = vunpack.c.l.b16 %v37
  %v147 = vunpack.c.l.b16 %v38
  %v148 = vunpack.c.l.b16 %v39
  %v149 = vunpack.c.l.b16 %v40
  %v150 = vunpack.c.l.b16 %v41
  %v151 = vunpack.c.l.b16 %v42
  %v152 = vunpack.c.l.b16 %v43
  %v153 = vunpack.c.l.b16 %v44
  %v154 = vunpack.c.l.b16 %v45
  %v155 = vunpack.c.l.b16 %v46
  %v156 = vunpack.c.l.b16 %v47
  %v157 = vunpack.c.l.b16 %v48
  %v158 = vunpack.c.l.b16 %v49
  %v159 = vunpack.c.l.b16 %v50
  %v160 = vunpack.c.l.b16 %v51
  %v161 = vunpack.c.l.b16 %v52
  %v162 = vunpack.c.l.b16 %v53
  %v163 = vunpack.c.l.b16 %v54
  %v164 = vunpack.c.l.b16 %v55
  %v165 = vunpack.c.l.b16 %v56
  %v166 = vunpack.c.l.b16 %v57
  %v167 = vunpack.c.l.b16 %v58
  %v168 = vpack.c.b16 %v133, %v132
  %v169 = vpack.c.b16 %v135, %v134
  %v170 = vpack.c.b16 %v137, %v136
  %v171 = vpack.c.b16 %v139, %v138
  %v172 = vpack.c.b16 %v141, %v140
  %v173 = vpack.c.b16 %v143, %v142
  %v174 = vpack.c.b16 %v145, %v144
  %v175 = vpack.c.b16 %v147, %v146
  %v176 = vpack.c.b16 %v149, %v148
  %v177 = vpack.c.b16 %v151, %v150
  %v178 = vpack.c.b16 %v153, %v152
  %v179 = vpack.c.b16 %v155, %v154
  %v180 = vpack.c.b16 %v157, %v156
  %v181 = vpack.c.b16 %v159, %v158
  %v182 = vpack.c.b16 %v161, %v160
  %v183 = vpack.c.b16 %v163, %v162
  %v184 = vpack.c.b16 %v165, %v164
  %v185 = vpack.c.b16 %v167, %v166
  %vm204 = vcmask 261120
  %v206 = vsel %vm204, %v88, 0
  %v209 = vsel %vm204, %v91, 0
  %211 = vmatprep.subr.bf16.mxu0 0
  %212 = vmatpush1.bf16.msra.mxu0 %v175
  %213 = vmatprep.subr.bf16.mxu0 0
  %214 = vmatpush1.bf16.msra.mxu0 %v174
  %215 = vmatprep.subr.bf16.mxu0 0
  %216 = vmatpush1.bf16.msra.mxu0 %v173
  %217 = vmatprep.subr.bf16.mxu0 0
  %218 = vmatpush1.bf16.msra.mxu0 %v172
  %219 = vmatprep.subr.bf16.mxu0 0
  %220 = vmatpush1.bf16.msra.mxu0 %v171
  %221 = vmatprep.subr.bf16.mxu0 0
  %222 = vmatpush1.bf16.msra.mxu0 %v170
  %223 = vmatprep.subr.bf16.mxu0 0
  %224 = vmatpush1.bf16.msra.mxu0 %v169
  %225 = vmatprep.subr.bf16.mxu0 0
  %226 = vmatpush1.bf16.msra.mxu0 %v168
  %227 = vmatprep.subr.bf16.mxu0 0
  %228 = vmatpush2.bf16.msra.mxu0 %v183
  %229 = vmatprep.subr.bf16.mxu0 0
  %230 = vmatpush2.bf16.msra.mxu0 %v182
  %231 = vmatprep.subr.bf16.mxu0 0
  %232 = vmatpush2.bf16.msra.mxu0 %v181
  %233 = vmatprep.subr.bf16.mxu0 0
  %234 = vmatpush2.bf16.msra.mxu0 %v180
  %235 = vmatprep.subr.bf16.mxu0 0
  %236 = vmatpush2.bf16.msra.mxu0 %v179
  %237 = vmatprep.subr.bf16.mxu0 0
  %238 = vmatpush2.bf16.msra.mxu0 %v178
  %239 = vmatprep.subr.bf16.mxu0 0
  %240 = vmatpush2.bf16.msra.mxu0 %v177
  %241 = vmatprep.subr.bf16.mxu0 0
  %242 = vmatpush2.bf16.msra.mxu0 %v176
  %243 = vmatprep.mubr.bf16.mxu0 %v87
  %244 = vmatmul.mubr.bf16.gmra.mxu0 %v86
  %v245 = vpop.f32.mrf.mxu0
  %v246 = vadd.f32 %v64, %v245
  %v247 = vpop.f32.mrf.mxu0
  %v248 = vpop.f32.mrf.mxu0
  %v249 = vadd.f32 %v64, %v248
  %v250 = vpop.f32.mrf.mxu0
  %251 = vmatprep.mubr.bf16.mxu0 %v90
  %252 = vmatmul.mubr.bf16.gmra.mxu0 %v89
  %v253 = vpop.f32.mrf.mxu0
  %v254 = vadd.f32 %v64, %v253
  %v255 = vpop.f32.mrf.mxu0
  %v256 = vpop.f32.mrf.mxu0
  %v257 = vadd.f32 %v64, %v256
  %v258 = vpop.f32.mrf.mxu0
  %259 = vdwg.mxu0
  %260 = vmatprep.subr.bf16.mxu0 0
  %261 = vmatpush1.bf16.msra.mxu0 0
  %262 = vmatprep.subr.bf16.mxu0 0
  %263 = vmatpush1.bf16.msra.mxu0 0
  %264 = vmatprep.subr.bf16.mxu0 0
  %265 = vmatpush1.bf16.msra.mxu0 0
  %266 = vmatprep.subr.bf16.mxu0 0
  %267 = vmatpush1.bf16.msra.mxu0 0
  %268 = vmatprep.subr.bf16.mxu0 0
  %269 = vmatpush1.bf16.msra.mxu0 0
  %270 = vmatprep.subr.bf16.mxu0 0
  %271 = vmatpush1.bf16.msra.mxu0 0
  %272 = vmatprep.subr.bf16.mxu0 0
  %273 = vmatpush1.bf16.msra.mxu0 %v185
  %274 = vmatprep.subr.bf16.mxu0 0
  %275 = vmatpush1.bf16.msra.mxu0 %v184
  %276 = vmatprep.subr.bf16.mxu0 0
  %277 = vmatpush2.bf16.msra.mxu0 0
  %278 = vmatprep.subr.bf16.mxu0 0
  %279 = vmatpush2.bf16.msra.mxu0 0
  %280 = vmatprep.subr.bf16.mxu0 0
  %281 = vmatpush2.bf16.msra.mxu0 0
  %282 = vmatprep.subr.bf16.mxu0 0
  %283 = vmatpush2.bf16.msra.mxu0 0
  %284 = vmatprep.subr.bf16.mxu0 0
  %285 = vmatpush2.bf16.msra.mxu0 0
  %286 = vmatprep.subr.bf16.mxu0 0
  %287 = vmatpush2.bf16.msra.mxu0 0
  %288 = vmatprep.subr.bf16.mxu0 0
  %289 = vmatpush2.bf16.msra.mxu0 0
  %290 = vmatprep.subr.bf16.mxu0 0
  %291 = vmatpush2.bf16.msra.mxu0 0
  %292 = vmatprep.mubr.bf16.mxu0 0
  %293 = vmatmul.mubr.bf16.gmra.mxu0 %v206
  %v294 = vpop.f32.mrf.mxu0
  %v295 = vadd.f32 %v246, %v294
  %v296 = vpop.f32.mrf.mxu0
  %v297 = vpop.f32.mrf.mxu0
  %v298 = vadd.f32 %v249, %v297
  %v299 = vpop.f32.mrf.mxu0
  %300 = vmatprep.mubr.bf16.mxu0 0
  %301 = vmatmul.mubr.bf16.gmra.mxu0 %v209
  %v302 = vpop.f32.mrf.mxu0
  %v303 = vadd.f32 %v254, %v302
  %v304 = vpop.f32.mrf.mxu0
  %v305 = vpop.f32.mrf.mxu0
  %v306 = vadd.f32 %v257, %v305
  %v307 = vpop.f32.mrf.mxu0
  %308 = vdwg.mxu0
  %v309 = vmax.f32 %v295, 0.0
  %v310 = vmax.f32 %v298, 0.0
  %v311 = vmax.f32 %v303, 0.0
  %v312 = vmax.f32 %v306, 0.0
  %vm313 = vcmask 64512
  %314 = vst.msk [vmem:[%s3] sm:$0xff] %vm313, %v309
  %315 = vst.msk [vmem:[%s3 + $0x8] sm:$0xff] %vm313, %v310
  %316 = vst.msk [vmem:[%s3 + $0x10] sm:$0xff] %vm313, %v311
  %317 = vst.msk [vmem:[%s3 + $0x18] sm:$0xff] %vm313, %v312
  // Predicated region
  $region14: #{sst_forward.50} parent=0 // pred_check
    _
  $region15: #{sst_forward.50} parent=0 // pred_check_branch
    %319 = sbr.rel (0) target = $region17
  $region16: #{sst_forward.50} parent=0 // pred_region
    _
  $region17: #{sst_forward.50} parent=0 // pred_fallthru
    _
  // Predicated region
  $region18: #{sst_forward.50} parent=0 // pred_check
    _
  $region19: #{sst_forward.50} parent=0 // pred_check_branch
    %321 = sbr.rel (0) target = $region21
  $region20: #{sst_forward.50} parent=0 // pred_region
    _
  $region21: #{sst_forward.50} parent=0 // pred_fallthru
    _

// kernel: sst_forward.49
$region0: #{sst_forward.49}
  #allocation0 [shape = 'u32[]', space=smem, size = 0x4, offset = 0x4, fixed_abs, tag = 'smem constant byte address 0x4 - core index']
  #allocation1 [shape = 'u32[144,128]{1,0:T(1,128)}', space=vmem, size = 0x12000, scoped, tag = 'internal scratch']
  %s0 = inlined_call_operand.vmem [shape: bf16[128,144], index: 0, kind: input, shape index: {}]
  %s1 = inlined_call_operand.vmem [shape: bf16[144,8], index: 1, kind: input, shape index: {}]
  %s2 = inlined_call_operand.vmem [shape: f32[1,8], index: 2, kind: input, shape index: {}]
  %s3 = inlined_call_operand.vmem [shape: f32[128,8], index: 3, kind: output, shape index: {}]
  %s4 = sld [smem:[#allocation0]]
  $region22: #{sst_forward.49} parent=0
    _
  %s6 = ssub.s32 1, %s4
  %s7 = scalar_select 0, %s6, %s4
  // Predicated region
  $region2: #{sst_forward.49} parent=0 // pred_check
    _
  $region3: #{sst_forward.49} parent=0 // pred_check_branch
    %9 = sbr.rel (0) target = $region5
  $region4: #{sst_forward.49} parent=0 // pred_region
    _
  $region5: #{sst_forward.49} parent=0 // pred_fallthru
    _
  // Predicated region
  $region6: #{sst_forward.49} parent=0 // pred_check
    _
  $region7: #{sst_forward.49} parent=0 // pred_check_branch
    %11 = sbr.rel (0) target = $region9
  $region8: #{sst_forward.49} parent=0 // pred_region
    _
  $region9: #{sst_forward.49} parent=0 // pred_fallthru
    _
  // Predicated region
  $region10: #{sst_forward.49} parent=0 // pred_check
    _
  $region11: #{sst_forward.49} parent=0 // pred_check_branch
    %13 = sbr.rel (0) target = $region13
  $region12: #{sst_forward.49} parent=0 // pred_region
    _
  $region13: #{sst_forward.49} parent=0 // pred_fallthru
    _
  %v15 = vld [vmem:[%s0] sm:$0xff]
  %v16 = vld [vmem:[%s0 + $0x8] sm:$0xff]
  %v17 = vld [vmem:[%s0 + $0x10] sm:$0xff]
  %v18 = vld [vmem:[%s0 + $0x18] sm:$0xff]
  %v19 = vld [vmem:[%s0 + $0x20] sm:$0xff]
  %v20 = vld [vmem:[%s0 + $0x28] sm:$0xff]
  %v21 = vld [vmem:[%s0 + $0x30] sm:$0xff]
  %v22 = vld [vmem:[%s0 + $0x38] sm:$0xff]
  %v23 = vld [vmem:[%s0 + $0x40] sm:$0xff]
  %v24 = vld [vmem:[%s0 + $0x48] sm:$0xff]
  %v25 = vld [vmem:[%s0 + $0x50] sm:$0xff]
  %v26 = vld [vmem:[%s0 + $0x58] sm:$0xff]
  %v27 = vld [vmem:[%s0 + $0x60] sm:$0xff]
  %v28 = vld [vmem:[%s0 + $0x68] sm:$0xff]
  %v29 = vld [vmem:[%s0 + $0x70] sm:$0xff]
  %v30 = vld [vmem:[%s0 + $0x78] sm:$0xff]
  %v31 = vld [vmem:[%s1] sm:$0xf]
  %v32 = vld [vmem:[%s1 + $0x4] sm:$0xf]
  %v33 = vld [vmem:[%s1 + $0x8] sm:$0xf]
  %v34 = vld [vmem:[%s1 + $0xc] sm:$0xf]
  %v35 = vld [vmem:[%s1 + $0x10] sm:$0xf]
  %v36 = vld [vmem:[%s1 + $0x14] sm:$0xf]
  %v37 = vld [vmem:[%s1 + $0x18] sm:$0xf]
  %v38 = vld [vmem:[%s1 + $0x1c] sm:$0xf]
  %v39 = vld [vmem:[%s1 + $0x20] sm:$0xf]
  %v40 = vld [vmem:[%s1 + $0x24] sm:$0xf]
  %v41 = vld [vmem:[%s1 + $0x28] sm:$0xf]
  %v42 = vld [vmem:[%s1 + $0x2c] sm:$0xf]
  %v43 = vld [vmem:[%s1 + $0x30] sm:$0xf]
  %v44 = vld [vmem:[%s1 + $0x34] sm:$0xf]
  %v45 = vld [vmem:[%s1 + $0x38] sm:$0xf]
  %v46 = vld [vmem:[%s1 + $0x3c] sm:$0xf]
  %v47 = vld [vmem:[%s1 + $0x40] sm:$0xf]
  %v48 = vld [vmem:[%s1 + $0x44] sm:$0xf]
  %v49 = vld [vmem:[%s2] sm:$0x1]
  %v51 = vlaneseq
  %v52 = vshrl.u32 %v51, 7
  %v53 = vsub.s32 0, %v52
  %v54 = vrot.slane %v49, %v53
  %v72 = vunpack.c.l.b16 %v15
  %v73 = vunpack.c.h.b16 %v15
  %v74 = vunpack.c.l.b16 %v16
  %v75 = vunpack.c.h.b16 %v16
  %v76 = vunpack.c.l.b16 %v17
  %v77 = vunpack.c.h.b16 %v17
  %v78 = vunpack.c.l.b16 %v18
  %v79 = vunpack.c.h.b16 %v18
  %v80 = vunpack.c.l.b16 %v19
  %v81 = vunpack.c.h.b16 %v19
  %v82 = vunpack.c.l.b16 %v20
  %v83 = vunpack.c.h.b16 %v20
  %v84 = vunpack.c.l.b16 %v21
  %v85 = vunpack.c.h.b16 %v21
  %v86 = vunpack.c.l.b16 %v22
  %v87 = vunpack.c.h.b16 %v22
  %v88 = vunpack.c.l.b16 %v23
  %v89 = vunpack.c.h.b16 %v23
  %v90 = vunpack.c.l.b16 %v24
  %v91 = vunpack.c.h.b16 %v24
  %v92 = vunpack.c.l.b16 %v25
  %v93 = vunpack.c.h.b16 %v25
  %v94 = vunpack.c.l.b16 %v26
  %v95 = vunpack.c.h.b16 %v26
  %v96 = vunpack.c.l.b16 %v27
  %v97 = vunpack.c.h.b16 %v27
  %v98 = vunpack.c.l.b16 %v28
  %v99 = vunpack.c.h.b16 %v28
  %v100 = vunpack.c.l.b16 %v29
  %v101 = vunpack.c.h.b16 %v29
  %v102 = vunpack.c.l.b16 %v30
  %v103 = vunpack.c.h.b16 %v30
  %v104 = vpack.c.b16 %v74, %v72
  %v105 = vpack.c.b16 %v75, %v73
  %v106 = vpack.c.b16 %v78, %v76
  %v107 = vpack.c.b16 %v79, %v77
  %v108 = vpack.c.b16 %v82, %v80
  %v109 = vpack.c.b16 %v83, %v81
  %v110 = vpack.c.b16 %v86, %v84
  %v111 = vpack.c.b16 %v87, %v85
  %v112 = vpack.c.b16 %v90, %v88
  %v113 = vpack.c.b16 %v91, %v89
  %v114 = vpack.c.b16 %v94, %v92
  %v115 = vpack.c.b16 %v95, %v93
  %v116 = vpack.c.b16 %v98, %v96
  %v117 = vpack.c.b16 %v99, %v97
  %v118 = vpack.c.b16 %v102, %v100
  %v119 = vpack.c.b16 %v103, %v101
  %v146 = vunpack.c.l.b16 %v31
  %v147 = vunpack.c.l.b16 %v32
  %v148 = vunpack.c.l.b16 %v33
  %v149 = vunpack.c.l.b16 %v34
  %v150 = vunpack.c.l.b16 %v35
  %v151 = vunpack.c.l.b16 %v36
  %v152 = vunpack.c.l.b16 %v37
  %v153 = vunpack.c.l.b16 %v38
  %v154 = vunpack.c.l.b16 %v39
  %v155 = vunpack.c.l.b16 %v40
  %v156 = vunpack.c.l.b16 %v41
  %v157 = vunpack.c.l.b16 %v42
  %v158 = vunpack.c.l.b16 %v43
  %v159 = vunpack.c.l.b16 %v44
  %v160 = vunpack.c.l.b16 %v45
  %v161 = vunpack.c.l.b16 %v46
  %v162 = vunpack.c.l.b16 %v47
  %v163 = vunpack.c.l.b16 %v48
  %v164 = vpack.c.b16 %v147, %v146
  %v165 = vpack.c.b16 %v149, %v148
  %v166 = vpack.c.b16 %v151, %v150
  %v167 = vpack.c.b16 %v153, %v152
  %v168 = vpack.c.b16 %v155, %v154
  %v169 = vpack.c.b16 %v157, %v156
  %v170 = vpack.c.b16 %v159, %v158
  %v171 = vpack.c.b16 %v161, %v160
  %v172 = vpack.c.b16 %v163, %v162
  %vm182 = vcmask 130048
  %v184 = vsel %vm182, %v105, 0
  %v187 = vsel %vm182, %v107, 0
  %v190 = vsel %vm182, %v109, 0
  %v193 = vsel %vm182, %v111, 0
  %v196 = vsel %vm182, %v113, 0
  %v199 = vsel %vm182, %v115, 0
  %v202 = vsel %vm182, %v117, 0
  %v205 = vsel %vm182, %v119, 0
  %207 = vmatprep.subr.bf16.mxu0 0
  %208 = vmatpush1.bf16.msra.mxu0 %v171
  %209 = vmatprep.subr.bf16.mxu0 0
  %210 = vmatpush1.bf16.msra.mxu0 %v170
  %211 = vmatprep.subr.bf16.mxu0 0
  %212 = vmatpush1.bf16.msra.mxu0 %v169
  %213 = vmatprep.subr.bf16.mxu0 0
  %214 = vmatpush1.bf16.msra.mxu0 %v168
  %215 = vmatprep.subr.bf16.mxu0 0
  %216 = vmatpush1.bf16.msra.mxu0 %v167
  %217 = vmatprep.subr.bf16.mxu0 0
  %218 = vmatpush1.bf16.msra.mxu0 %v166
  %219 = vmatprep.subr.bf16.mxu0 0
  %220 = vmatpush1.bf16.msra.mxu0 %v165
  %221 = vmatprep.subr.bf16.mxu0 0
  %222 = vmatpush1.bf16.msra.mxu0 %v164
  %223 = vmatprep.subr.bf16.mxu0 0
  %224 = vmatpush2.bf16.msra.mxu0 0
  %225 = vmatprep.subr.bf16.mxu0 0
  %226 = vmatpush2.bf16.msra.mxu0 0
  %227 = vmatprep.subr.bf16.mxu0 0
  %228 = vmatpush2.bf16.msra.mxu0 0
  %229 = vmatprep.subr.bf16.mxu0 0
  %230 = vmatpush2.bf16.msra.mxu0 0
  %231 = vmatprep.subr.bf16.mxu0 0
  %232 = vmatpush2.bf16.msra.mxu0 0
  %233 = vmatprep.subr.bf16.mxu0 0
  %234 = vmatpush2.bf16.msra.mxu0 0
  %235 = vmatprep.subr.bf16.mxu0 0
  %236 = vmatpush2.bf16.msra.mxu0 0
  %237 = vmatprep.subr.bf16.mxu0 0
  %238 = vmatpush2.bf16.msra.mxu0 %v172
  %239 = vmatprep.mubr.bf16.mxu0 %v184
  %240 = vmatmul.mubr.bf16.gmra.mxu0 %v104
  %v241 = vpop.f32.mrf.mxu0
  %v242 = vadd.f32 %v54, %v241
  %v243 = vpop.f32.mrf.mxu0
  %v244 = vpop.f32.mrf.mxu0
  %v245 = vadd.f32 %v54, %v244
  %v246 = vpop.f32.mrf.mxu0
  %247 = vmatprep.mubr.bf16.mxu0 %v187
  %248 = vmatmul.mubr.bf16.gmra.mxu0 %v106
  %v249 = vpop.f32.mrf.mxu0
  %v250 = vadd.f32 %v54, %v249
  %v251 = vpop.f32.mrf.mxu0
  %v252 = vpop.f32.mrf.mxu0
  %v253 = vadd.f32 %v54, %v252
  %v254 = vpop.f32.mrf.mxu0
  %255 = vmatprep.mubr.bf16.mxu0 %v190
  %256 = vmatmul.mubr.bf16.gmra.mxu0 %v108
  %v257 = vpop.f32.mrf.mxu0
  %v258 = vadd.f32 %v54, %v257
  %v259 = vpop.f32.mrf.mxu0
  %v260 = vpop.f32.mrf.mxu0
  %v261 = vadd.f32 %v54, %v260
  %v262 = vpop.f32.mrf.mxu0
  %263 = vmatprep.mubr.bf16.mxu0 %v193
  %264 = vmatmul.mubr.bf16.gmra.mxu0 %v110
  %v265 = vpop.f32.mrf.mxu0
  %v266 = vadd.f32 %v54, %v265
  %v267 = vpop.f32.mrf.mxu0
  %v268 = vpop.f32.mrf.mxu0
  %v269 = vadd.f32 %v54, %v268
  %v270 = vpop.f32.mrf.mxu0
  %271 = vmatprep.mubr.bf16.mxu0 %v196
  %272 = vmatmul.mubr.bf16.gmra.mxu0 %v112
  %v273 = vpop.f32.mrf.mxu0
  %v274 = vadd.f32 %v54, %v273
  %v275 = vpop.f32.mrf.mxu0
  %v276 = vpop.f32.mrf.mxu0
  %v277 = vadd.f32 %v54, %v276
  %v278 = vpop.f32.mrf.mxu0
  %279 = vmatprep.mubr.bf16.mxu0 %v199
  %280 = vmatmul.mubr.bf16.gmra.mxu0 %v114
  %v281 = vpop.f32.mrf.mxu0
  %v282 = vadd.f32 %v54, %v281
  %v283 = vpop.f32.mrf.mxu0
  %v284 = vpop.f32.mrf.mxu0
  %v285 = vadd.f32 %v54, %v284
  %v286 = vpop.f32.mrf.mxu0
  %287 = vmatprep.mubr.bf16.mxu0 %v202
  %288 = vmatmul.mubr.bf16.gmra.mxu0 %v116
  %v289 = vpop.f32.mrf.mxu0
  %v290 = vadd.f32 %v54, %v289
  %v291 = vpop.f32.mrf.mxu0
  %v292 = vpop.f32.mrf.mxu0
  %v293 = vadd.f32 %v54, %v292
  %v294 = vpop.f32.mrf.mxu0
  %295 = vmatprep.mubr.bf16.mxu0 %v205
  %296 = vmatmul.mubr.bf16.gmra.mxu0 %v118
  %v297 = vpop.f32.mrf.mxu0
  %v298 = vadd.f32 %v54, %v297
  %v299 = vpop.f32.mrf.mxu0
  %v300 = vpop.f32.mrf.mxu0
  %v301 = vadd.f32 %v54, %v300
  %v302 = vpop.f32.mrf.mxu0
  %303 = vdwg.mxu0
  %v304 = vmax.f32 %v242, 0.0
  %v305 = vmax.f32 %v245, 0.0
  %v306 = vmax.f32 %v250, 0.0
  %v307 = vmax.f32 %v253, 0.0
  %v308 = vmax.f32 %v258, 0.0
  %v309 = vmax.f32 %v261, 0.0
  %v310 = vmax.f32 %v266, 0.0
  %v311 = vmax.f32 %v269, 0.0
  %v312 = vmax.f32 %v274, 0.0
  %v313 = vmax.f32 %v277, 0.0
  %v314 = vmax.f32 %v282, 0.0
  %v315 = vmax.f32 %v285, 0.0
  %v316 = vmax.f32 %v290, 0.0
  %v317 = vmax.f32 %v293, 0.0
  %v318 = vmax.f32 %v298, 0.0
  %v319 = vmax.f32 %v301, 0.0
  %vm320 = vcmask 64512
  %321 = vst.msk [vmem:[%s3] sm:$0xff] %vm320, %v304
  %322 = vst.msk [vmem:[%s3 + $0x8] sm:$0xff] %vm320, %v305
  %323 = vst.msk [vmem:[%s3 + $0x10] sm:$0xff] %vm320, %v306
  %324 = vst.msk [vmem:[%s3 + $0x18] sm:$0xff] %vm320, %v307
  %325 = vst.msk [vmem:[%s3 + $0x20] sm:$0xff] %vm320, %v308
  %326 = vst.msk [vmem:[%s3 + $0x28] sm:$0xff] %vm320, %v309
  %327 = vst.msk [vmem:[%s3 + $0x30] sm:$0xff] %vm320, %v310
  %328 = vst.msk [vmem:[%s3 + $0x38] sm:$0xff] %vm320, %v311
  %329 = vst.msk [vmem:[%s3 + $0x40] sm:$0xff] %vm320, %v312
  %330 = vst.msk [vmem:[%s3 + $0x48] sm:$0xff] %vm320, %v313
  %331 = vst.msk [vmem:[%s3 + $0x50] sm:$0xff] %vm320, %v314
  %332 = vst.msk [vmem:[%s3 + $0x58] sm:$0xff] %vm320, %v315
  %333 = vst.msk [vmem:[%s3 + $0x60] sm:$0xff] %vm320, %v316
  %334 = vst.msk [vmem:[%s3 + $0x68] sm:$0xff] %vm320, %v317
  %335 = vst.msk [vmem:[%s3 + $0x70] sm:$0xff] %vm320, %v318
  %336 = vst.msk [vmem:[%s3 + $0x78] sm:$0xff] %vm320, %v319
  // Predicated region
  $region14: #{sst_forward.49} parent=0 // pred_check
    _
  $region15: #{sst_forward.49} parent=0 // pred_check_branch
    %338 = sbr.rel (0) target = $region17
  $region16: #{sst_forward.49} parent=0 // pred_region
    _
  $region17: #{sst_forward.49} parent=0 // pred_fallthru
    _
  // Predicated region
  $region18: #{sst_forward.49} parent=0 // pred_check
    _
  $region19: #{sst_forward.49} parent=0 // pred_check_branch
    %340 = sbr.rel (0) target = $region21
  $region20: #{sst_forward.49} parent=0 // pred_region
    _
  $region21: #{sst_forward.49} parent=0 // pred_fallthru
    _

// kernel: sst_forward.55
$region0: #{sst_forward.55}
  #allocation0 [shape = 'u32[]', space=smem, size = 0x4, offset = 0x4, fixed_abs, tag = 'smem constant byte address 0x4 - core index']
  #allocation1 [shape = 'u32[144,128]{1,0:T(1,128)}', space=vmem, size = 0x12000, scoped, tag = 'internal scratch']
  #allocation2 [shape = 'f32[1,1]{1,0:T(1,128)S(1)}', space=vmem, size = 0x200, scoped, tag = 'scoped memory for sst_forward.55']
  %s0 = inlined_call_operand.vmem [shape: f32[64,96], index: 0, kind: input, shape index: {}]
  %s1 = inlined_call_operand.vmem [shape: f32[96,48], index: 1, kind: input, shape index: {}]
  %s2 = inlined_call_operand.vmem [shape: f32[48,24], index: 2, kind: input, shape index: {}]
  %s3 = inlined_call_operand.vmem [shape: f32[24,12], index: 3, kind: input, shape index: {}]
  %s4 = inlined_call_operand.vmem [shape: f32[12,6], index: 4, kind: input, shape index: {}]
  %s5 = inlined_call_operand.vmem [shape: f32[6,1], index: 5, kind: input, shape index: {}]
  %s6 = inlined_call_operand.vmem [shape: f32[1,48], index: 6, kind: input, shape index: {}]
  %s7 = inlined_call_operand.vmem [shape: f32[1,24], index: 7, kind: input, shape index: {}]
  %s8 = inlined_call_operand.vmem [shape: f32[1,12], index: 8, kind: input, shape index: {}]
  %s9 = inlined_call_operand.vmem [shape: f32[1,6], index: 9, kind: input, shape index: {}]
  %s10 = inlined_call_operand.<no memory space> [shape: f32[1,1], index: 10, kind: input, shape index: {}]
  %s11 = inlined_call_operand.vmem [shape: f32[64,1], index: 11, kind: output, shape index: {}]
  %s12 = sld [smem:[#allocation0]]
  $region54: #{sst_forward.55} parent=0
    _
  %s14 = ssub.s32 1, %s12
  %s15 = scalar_select 0, %s14, %s12
  %v16 = vstv %s10
  %17 = vst [vmem:[#allocation2] sm:$0x1] %v16
  // Predicated region
  $region2: #{sst_forward.55} parent=0 // pred_check
    _
  $region3: #{sst_forward.55} parent=0 // pred_check_branch
    %19 = sbr.rel (0) target = $region5
  $region4: #{sst_forward.55} parent=0 // pred_region
    _
  $region5: #{sst_forward.55} parent=0 // pred_fallthru
    _
  // Predicated region
  $region6: #{sst_forward.55} parent=0 // pred_check
    _
  $region7: #{sst_forward.55} parent=0 // pred_check_branch
    %21 = sbr.rel (0) target = $region9
  $region8: #{sst_forward.55} parent=0 // pred_region
    _
  $region9: #{sst_forward.55} parent=0 // pred_fallthru
    _
  // Predicated region
  $region10: #{sst_forward.55} parent=0 // pred_check
    _
  $region11: #{sst_forward.55} parent=0 // pred_check_branch
    %23 = sbr.rel (0) target = $region13
  $region12: #{sst_forward.55} parent=0 // pred_region
    _
  $region13: #{sst_forward.55} parent=0 // pred_fallthru
    _
  // Predicated region
  $region14: #{sst_forward.55} parent=0 // pred_check
    _
  $region15: #{sst_forward.55} parent=0 // pred_check_branch
    %25 = sbr.rel (0) target = $region17
  $region16: #{sst_forward.55} parent=0 // pred_region
    _
  $region17: #{sst_forward.55} parent=0 // pred_fallthru
    _
  // Predicated region
  $region18: #{sst_forward.55} parent=0 // pred_check
    _
  $region19: #{sst_forward.55} parent=0 // pred_check_branch
    %27 = sbr.rel (0) target = $region21
  $region20: #{sst_forward.55} parent=0 // pred_region
    _
  $region21: #{sst_forward.55} parent=0 // pred_fallthru
    _
  // Predicated region
  $region22: #{sst_forward.55} parent=0 // pred_check
    _
  $region23: #{sst_forward.55} parent=0 // pred_check_branch
    %29 = sbr.rel (0) target = $region25
  $region24: #{sst_forward.55} parent=0 // pred_region
    _
  $region25: #{sst_forward.55} parent=0 // pred_fallthru
    _
  // Predicated region
  $region26: #{sst_forward.55} parent=0 // pred_check
    _
  $region27: #{sst_forward.55} parent=0 // pred_check_branch
    %31 = sbr.rel (0) target = $region29
  $region28: #{sst_forward.55} parent=0 // pred_region
    _
  $region29: #{sst_forward.55} parent=0 // pred_fallthru
    _
  // Predicated region
  $region30: #{sst_forward.55} parent=0 // pred_check
    _
  $region31: #{sst_forward.55} parent=0 // pred_check_branch
    %33 = sbr.rel (0) target = $region33
  $region32: #{sst_forward.55} parent=0 // pred_region
    _
  $region33: #{sst_forward.55} parent=0 // pred_fallthru
    _
  // Predicated region
  $region34: #{sst_forward.55} parent=0 // pred_check
    _
  $region35: #{sst_forward.55} parent=0 // pred_check_branch
    %35 = sbr.rel (0) target = $region37
  $region36: #{sst_forward.55} parent=0 // pred_region
    _
  $region37: #{sst_forward.55} parent=0 // pred_fallthru
    _
  // Predicated region
  $region38: #{sst_forward.55} parent=0 // pred_check
    _
  $region39: #{sst_forward.55} parent=0 // pred_check_branch
    %37 = sbr.rel (0) target = $region41
  $region40: #{sst_forward.55} parent=0 // pred_region
    _
  $region41: #{sst_forward.55} parent=0 // pred_fallthru
    _
  // Predicated region
  $region42: #{sst_forward.55} parent=0 // pred_check
    _
  $region43: #{sst_forward.55} parent=0 // pred_check_branch
    %39 = sbr.rel (0) target = $region45
  $region44: #{sst_forward.55} parent=0 // pred_region
    _
  $region45: #{sst_forward.55} parent=0 // pred_fallthru
    _
  %v40 = vld [vmem:[%s0] sm:$0xff]
  %v41 = vld [vmem:[%s0 + $0x8] sm:$0xff]
  %v42 = vld [vmem:[%s0 + $0x10] sm:$0xff]
  %v43 = vld [vmem:[%s0 + $0x18] sm:$0xff]
  %v44 = vld [vmem:[%s0 + $0x20] sm:$0xff]
  %v45 = vld [vmem:[%s0 + $0x28] sm:$0xff]
  %v46 = vld [vmem:[%s0 + $0x30] sm:$0xff]
  %v47 = vld [vmem:[%s0 + $0x38] sm:$0xff]
  %v48 = vld [vmem:[%s1] sm:$0xff]
  %v49 = vld [vmem:[%s1 + $0x8] sm:$0xff]
  %v50 = vld [vmem:[%s1 + $0x10] sm:$0xff]
  %v51 = vld [vmem:[%s1 + $0x18] sm:$0xff]
  %v52 = vld [vmem:[%s1 + $0x20] sm:$0xff]
  %v53 = vld [vmem:[%s1 + $0x28] sm:$0xff]
  %v54 = vld [vmem:[%s1 + $0x30] sm:$0xff]
  %v55 = vld [vmem:[%s1 + $0x38] sm:$0xff]
  %v56 = vld [vmem:[%s1 + $0x40] sm:$0xff]
  %v57 = vld [vmem:[%s1 + $0x48] sm:$0xff]
  %v58 = vld [vmem:[%s1 + $0x50] sm:$0xff]
  %v59 = vld [vmem:[%s1 + $0x58] sm:$0xff]
  %v60 = vld [vmem:[%s6] sm:$0x1]
  %v62 = vlaneseq
  %v63 = vshrl.u32 %v62, 7
  %v64 = vsub.s32 0, %v63
  %v65 = vrot.slane %v60, %v64
  %vm67 = vcmask 785408
  %v69 = vsel %vm67, %v40, 0
  %v72 = vsel %vm67, %v41, 0
  %v75 = vsel %vm67, %v42, 0
  %v78 = vsel %vm67, %v43, 0
  %v81 = vsel %vm67, %v44, 0
  %v84 = vsel %vm67, %v45, 0
  %v87 = vsel %vm67, %v46, 0
  %v90 = vsel %vm67, %v47, 0
  %92 = vmatprep.subr.mxu0 0.0
  %93 = vmatpush1.msra.mxu0 0.0
  %94 = vmatprep.subr.mxu0 0.0
  %95 = vmatpush1.msra.mxu0 0.0
  %96 = vmatprep.subr.mxu0 0.0
  %97 = vmatpush1.msra.mxu0 0.0
  %98 = vmatprep.subr.mxu0 0.0
  %99 = vmatpush1.msra.mxu0 0.0
  %100 = vmatprep.subr.mxu0 0.0
  %101 = vmatpush1.msra.mxu0 %v59
  %102 = vmatprep.subr.mxu0 0.0
  %103 = vmatpush1.msra.mxu0 %v58
  %104 = vmatprep.subr.mxu0 0.0
  %105 = vmatpush1.msra.mxu0 %v57
  %106 = vmatprep.subr.mxu0 0.0
  %107 = vmatpush1.msra.mxu0 %v56
  %108 = vmatprep.subr.mxu0 0.0
  %109 = vmatpush1.msra.mxu0 %v55
  %110 = vmatprep.subr.mxu0 0.0
  %111 = vmatpush1.msra.mxu0 %v54
  %112 = vmatprep.subr.mxu0 0.0
  %113 = vmatpush1.msra.mxu0 %v53
  %114 = vmatprep.subr.mxu0 0.0
  %115 = vmatpush1.msra.mxu0 %v52
  %116 = vmatprep.subr.mxu0 0.0
  %117 = vmatpush1.msra.mxu0 %v51
  %118 = vmatprep.subr.mxu0 0.0
  %119 = vmatpush1.msra.mxu0 %v50
  %120 = vmatprep.subr.mxu0 0.0
  %121 = vmatpush1.msra.mxu0 %v49
  %122 = vmatprep.subr.mxu0 0.0
  %123 = vmatpush1.msra.mxu0 %v48
  %124 = vmatprep.subr.mxu0 0.0
  %125 = vmatpush2.msra.mxu0 0.0
  %126 = vmatprep.subr.mxu0 0.0
  %127 = vmatpush2.msra.mxu0 0.0
  %128 = vmatprep.subr.mxu0 0.0
  %129 = vmatpush2.msra.mxu0 0.0
  %130 = vmatprep.subr.mxu0 0.0
  %131 = vmatpush2.msra.mxu0 0.0
  %132 = vmatprep.subr.mxu0 0.0
  %133 = vmatpush2.msra.mxu0 0.0
  %134 = vmatprep.subr.mxu0 0.0
  %135 = vmatpush2.msra.mxu0 0.0
  %136 = vmatprep.subr.mxu0 0.0
  %137 = vmatpush2.msra.mxu0 0.0
  %138 = vmatprep.subr.mxu0 0.0
  %139 = vmatpush2.msra.mxu0 0.0
  %140 = vmatprep.subr.mxu0 0.0
  %141 = vmatpush2.msra.mxu0 0.0
  %142 = vmatprep.subr.mxu0 0.0
  %143 = vmatpush2.msra.mxu0 0.0
  %144 = vmatprep.subr.mxu0 0.0
  %145 = vmatpush2.msra.mxu0 0.0
  %146 = vmatprep.subr.mxu0 0.0
  %147 = vmatpush2.msra.mxu0 0.0
  %148 = vmatprep.subr.mxu0 0.0
  %149 = vmatpush2.msra.mxu0 0.0
  %150 = vmatprep.subr.mxu0 0.0
  %151 = vmatpush2.msra.mxu0 0.0
  %152 = vmatprep.subr.mxu0 0.0
  %153 = vmatpush2.msra.mxu0 0.0
  %154 = vmatprep.subr.mxu0 0.0
  %155 = vmatpush2.msra.mxu0 0.0
  %156 = vmatprep.mubr.f32.mxu0 0.0
  %157 = vmatmul.mubr.f32.gmra.mxu0 %v69
  %v158 = vpop.f32.mrf.mxu0
  %v159 = vadd.f32 %v65, %v158
  %v160 = vpop.f32.mrf.mxu0
  %161 = vmatprep.mubr.f32.mxu0 0.0
  %162 = vmatmul.mubr.f32.gmra.mxu0 %v72
  %v163 = vpop.f32.mrf.mxu0
  %v164 = vadd.f32 %v65, %v163
  %v165 = vpop.f32.mrf.mxu0
  %166 = vmatprep.mubr.f32.mxu0 0.0
  %167 = vmatmul.mubr.f32.gmra.mxu0 %v75
  %v168 = vpop.f32.mrf.mxu0
  %v169 = vadd.f32 %v65, %v168
  %v170 = vpop.f32.mrf.mxu0
  %171 = vmatprep.mubr.f32.mxu0 0.0
  %172 = vmatmul.mubr.f32.gmra.mxu0 %v78
  %v173 = vpop.f32.mrf.mxu0
  %v174 = vadd.f32 %v65, %v173
  %v175 = vpop.f32.mrf.mxu0
  %176 = vmatprep.mubr.f32.mxu0 0.0
  %177 = vmatmul.mubr.f32.gmra.mxu0 %v81
  %v178 = vpop.f32.mrf.mxu0
  %v179 = vadd.f32 %v65, %v178
  %v180 = vpop.f32.mrf.mxu0
  %181 = vmatprep.mubr.f32.mxu0 0.0
  %182 = vmatmul.mubr.f32.gmra.mxu0 %v84
  %v183 = vpop.f32.mrf.mxu0
  %v184 = vadd.f32 %v65, %v183
  %v185 = vpop.f32.mrf.mxu0
  %186 = vmatprep.mubr.f32.mxu0 0.0
  %187 = vmatmul.mubr.f32.gmra.mxu0 %v87
  %v188 = vpop.f32.mrf.mxu0
  %v189 = vadd.f32 %v65, %v188
  %v190 = vpop.f32.mrf.mxu0
  %191 = vmatprep.mubr.f32.mxu0 0.0
  %192 = vmatmul.mubr.f32.gmra.mxu0 %v90
  %v193 = vpop.f32.mrf.mxu0
  %v194 = vadd.f32 %v65, %v193
  %v195 = vpop.f32.mrf.mxu0
  %196 = vdwg.mxu0
  %v197 = vmax.f32 %v159, 0.0
  %v198 = vmax.f32 %v164, 0.0
  %v199 = vmax.f32 %v169, 0.0
  %v200 = vmax.f32 %v174, 0.0
  %v201 = vmax.f32 %v179, 0.0
  %v202 = vmax.f32 %v184, 0.0
  %v203 = vmax.f32 %v189, 0.0
  %v204 = vmax.f32 %v194, 0.0
  %v205 = vld [vmem:[%s2] sm:$0xff]
  %v206 = vld [vmem:[%s2 + $0x8] sm:$0xff]
  %v207 = vld [vmem:[%s2 + $0x10] sm:$0xff]
  %v208 = vld [vmem:[%s2 + $0x18] sm:$0xff]
  %v209 = vld [vmem:[%s2 + $0x20] sm:$0xff]
  %v210 = vld [vmem:[%s2 + $0x28] sm:$0xff]
  %v211 = vld [vmem:[%s7] sm:$0x1]
  %v213 = vlaneseq
  %v214 = vshrl.u32 %v213, 7
  %v215 = vsub.s32 0, %v214
  %v216 = vrot.slane %v211, %v215
  %vm218 = vcmask 392192
  %v220 = vsel %vm218, %v197, 0
  %v223 = vsel %vm218, %v198, 0
  %v226 = vsel %vm218, %v199, 0
  %v229 = vsel %vm218, %v200, 0
  %v232 = vsel %vm218, %v201, 0
  %v235 = vsel %vm218, %v202, 0
  %v238 = vsel %vm218, %v203, 0
  %v241 = vsel %vm218, %v204, 0
  %243 = vmatprep.subr.mxu0 0.0
  %244 = vmatpush1.msra.mxu0 0.0
  %245 = vmatprep.subr.mxu0 0.0
  %246 = vmatpush1.msra.mxu0 0.0
  %247 = vmatprep.subr.mxu0 0.0
  %248 = vmatpush1.msra.mxu0 0.0
  %249 = vmatprep.subr.mxu0 0.0
  %250 = vmatpush1.msra.mxu0 0.0
  %251 = vmatprep.subr.mxu0 0.0
  %252 = vmatpush1.msra.mxu0 0.0
  %253 = vmatprep.subr.mxu0 0.0
  %254 = vmatpush1.msra.mxu0 0.0
  %255 = vmatprep.subr.mxu0 0.0
  %256 = vmatpush1.msra.mxu0 0.0
  %257 = vmatprep.subr.mxu0 0.0
  %258 = vmatpush1.msra.mxu0 0.0
  %259 = vmatprep.subr.mxu0 0.0
  %260 = vmatpush1.msra.mxu0 0.0
  %261 = vmatprep.subr.mxu0 0.0
  %262 = vmatpush1.msra.mxu0 0.0
  %263 = vmatprep.subr.mxu0 0.0
  %264 = vmatpush1.msra.mxu0 %v210
  %265 = vmatprep.subr.mxu0 0.0
  %266 = vmatpush1.msra.mxu0 %v209
  %267 = vmatprep.subr.mxu0 0.0
  %268 = vmatpush1.msra.mxu0 %v208
  %269 = vmatprep.subr.mxu0 0.0
  %270 = vmatpush1.msra.mxu0 %v207
  %271 = vmatprep.subr.mxu0 0.0
  %272 = vmatpush1.msra.mxu0 %v206
  %273 = vmatprep.subr.mxu0 0.0
  %274 = vmatpush1.msra.mxu0 %v205
  %275 = vmatprep.subr.mxu0 0.0
  %276 = vmatpush2.msra.mxu0 0.0
  %277 = vmatprep.subr.mxu0 0.0
  %278 = vmatpush2.msra.mxu0 0.0
  %279 = vmatprep.subr.mxu0 0.0
  %280 = vmatpush2.msra.mxu0 0.0
  %281 = vmatprep.subr.mxu0 0.0
  %282 = vmatpush2.msra.mxu0 0.0
  %283 = vmatprep.subr.mxu0 0.0
  %284 = vmatpush2.msra.mxu0 0.0
  %285 = vmatprep.subr.mxu0 0.0
  %286 = vmatpush2.msra.mxu0 0.0
  %287 = vmatprep.subr.mxu0 0.0
  %288 = vmatpush2.msra.mxu0 0.0
  %289 = vmatprep.subr.mxu0 0.0
  %290 = vmatpush2.msra.mxu0 0.0
  %291 = vmatprep.subr.mxu0 0.0
  %292 = vmatpush2.msra.mxu0 0.0
  %293 = vmatprep.subr.mxu0 0.0
  %294 = vmatpush2.msra.mxu0 0.0
  %295 = vmatprep.subr.mxu0 0.0
  %296 = vmatpush2.msra.mxu0 0.0
  %297 = vmatprep.subr.mxu0 0.0
  %298 = vmatpush2.msra.mxu0 0.0
  %299 = vmatprep.subr.mxu0 0.0
  %300 = vmatpush2.msra.mxu0 0.0
  %301 = vmatprep.subr.mxu0 0.0
  %302 = vmatpush2.msra.mxu0 0.0
  %303 = vmatprep.subr.mxu0 0.0
  %304 = vmatpush2.msra.mxu0 0.0
  %305 = vmatprep.subr.mxu0 0.0
  %306 = vmatpush2.msra.mxu0 0.0
  %307 = vmatprep.mubr.f32.mxu0 0.0
  %308 = vmatmul.mubr.f32.gmra.mxu0 %v220
  %v309 = vpop.f32.mrf.mxu0
  %v310 = vadd.f32 %v216, %v309
  %v311 = vpop.f32.mrf.mxu0
  %312 = vmatprep.mubr.f32.mxu0 0.0
  %313 = vmatmul.mubr.f32.gmra.mxu0 %v223
  %v314 = vpop.f32.mrf.mxu0
  %v315 = vadd.f32 %v216, %v314
  %v316 = vpop.f32.mrf.mxu0
  %317 = vmatprep.mubr.f32.mxu0 0.0
  %318 = vmatmul.mubr.f32.gmra.mxu0 %v226
  %v319 = vpop.f32.mrf.mxu0
  %v320 = vadd.f32 %v216, %v319
  %v321 = vpop.f32.mrf.mxu0
  %322 = vmatprep.mubr.f32.mxu0 0.0
  %323 = vmatmul.mubr.f32.gmra.mxu0 %v229
  %v324 = vpop.f32.mrf.mxu0
  %v325 = vadd.f32 %v216, %v324
  %v326 = vpop.f32.mrf.mxu0
  %327 = vmatprep.mubr.f32.mxu0 0.0
  %328 = vmatmul.mubr.f32.gmra.mxu0 %v232
  %v329 = vpop.f32.mrf.mxu0
  %v330 = vadd.f32 %v216, %v329
  %v331 = vpop.f32.mrf.mxu0
  %332 = vmatprep.mubr.f32.mxu0 0.0
  %333 = vmatmul.mubr.f32.gmra.mxu0 %v235
  %v334 = vpop.f32.mrf.mxu0
  %v335 = vadd.f32 %v216, %v334
  %v336 = vpop.f32.mrf.mxu0
  %337 = vmatprep.mubr.f32.mxu0 0.0
  %338 = vmatmul.mubr.f32.gmra.mxu0 %v238
  %v339 = vpop.f32.mrf.mxu0
  %v340 = vadd.f32 %v216, %v339
  %v341 = vpop.f32.mrf.mxu0
  %342 = vmatprep.mubr.f32.mxu0 0.0
  %343 = vmatmul.mubr.f32.gmra.mxu0 %v241
  %v344 = vpop.f32.mrf.mxu0
  %v345 = vadd.f32 %v216, %v344
  %v346 = vpop.f32.mrf.mxu0
  %347 = vdwg.mxu0
  %v348 = vmax.f32 %v310, 0.0
  %v349 = vmax.f32 %v315, 0.0
  %v350 = vmax.f32 %v320, 0.0
  %v351 = vmax.f32 %v325, 0.0
  %v352 = vmax.f32 %v330, 0.0
  %v353 = vmax.f32 %v335, 0.0
  %v354 = vmax.f32 %v340, 0.0
  %v355 = vmax.f32 %v345, 0.0
  %v356 = vld [vmem:[%s3] sm:$0xff]
  %v357 = vld [vmem:[%s3 + $0x8] sm:$0xff]
  %v358 = vld [vmem:[%s3 + $0x10] sm:$0xff]
  %v359 = vld [vmem:[%s8] sm:$0x1]
  %v361 = vlaneseq
  %v362 = vshrl.u32 %v361, 7
  %v363 = vsub.s32 0, %v362
  %v364 = vrot.slane %v359, %v363
  %vm366 = vcmask 195584
  %v368 = vsel %vm366, %v348, 0
  %v371 = vsel %vm366, %v349, 0
  %v374 = vsel %vm366, %v350, 0
  %v377 = vsel %vm366, %v351, 0
  %v380 = vsel %vm366, %v352, 0
  %v383 = vsel %vm366, %v353, 0
  %v386 = vsel %vm366, %v354, 0
  %v389 = vsel %vm366, %v355, 0
  %391 = vmatprep.subr.mxu0 0.0
  %392 = vmatpush1.msra.mxu0 0.0
  %393 = vmatprep.subr.mxu0 0.0
  %394 = vmatpush1.msra.mxu0 0.0
  %395 = vmatprep.subr.mxu0 0.0
  %396 = vmatpush1.msra.mxu0 0.0
  %397 = vmatprep.subr.mxu0 0.0
  %398 = vmatpush1.msra.mxu0 0.0
  %399 = vmatprep.subr.mxu0 0.0
  %400 = vmatpush1.msra.mxu0 0.0
  %401 = vmatprep.subr.mxu0 0.0
  %402 = vmatpush1.msra.mxu0 0.0
  %403 = vmatprep.subr.mxu0 0.0
  %404 = vmatpush1.msra.mxu0 0.0
  %405 = vmatprep.subr.mxu0 0.0
  %406 = vmatpush1.msra.mxu0 0.0
  %407 = vmatprep.subr.mxu0 0.0
  %408 = vmatpush1.msra.mxu0 0.0
  %409 = vmatprep.subr.mxu0 0.0
  %410 = vmatpush1.msra.mxu0 0.0
  %411 = vmatprep.subr.mxu0 0.0
  %412 = vmatpush1.msra.mxu0 0.0
  %413 = vmatprep.subr.mxu0 0.0
  %414 = vmatpush1.msra.mxu0 0.0
  %415 = vmatprep.subr.mxu0 0.0
  %416 = vmatpush1.msra.mxu0 0.0
  %417 = vmatprep.subr.mxu0 0.0
  %418 = vmatpush1.msra.mxu0 %v358
  %419 = vmatprep.subr.mxu0 0.0
  %420 = vmatpush1.msra.mxu0 %v357
  %421 = vmatprep.subr.mxu0 0.0
  %422 = vmatpush1.msra.mxu0 %v356
  %423 = vmatprep.subr.mxu0 0.0
  %424 = vmatpush2.msra.mxu0 0.0
  %425 = vmatprep.subr.mxu0 0.0
  %426 = vmatpush2.msra.mxu0 0.0
  %427 = vmatprep.subr.mxu0 0.0
  %428 = vmatpush2.msra.mxu0 0.0
  %429 = vmatprep.subr.mxu0 0.0
  %430 = vmatpush2.msra.mxu0 0.0
  %431 = vmatprep.subr.mxu0 0.0
  %432 = vmatpush2.msra.mxu0 0.0
  %433 = vmatprep.subr.mxu0 0.0
  %434 = vmatpush2.msra.mxu0 0.0
  %435 = vmatprep.subr.mxu0 0.0
  %436 = vmatpush2.msra.mxu0 0.0
  %437 = vmatprep.subr.mxu0 0.0
  %438 = vmatpush2.msra.mxu0 0.0
  %439 = vmatprep.subr.mxu0 0.0
  %440 = vmatpush2.msra.mxu0 0.0
  %441 = vmatprep.subr.mxu0 0.0
  %442 = vmatpush2.msra.mxu0 0.0
  %443 = vmatprep.subr.mxu0 0.0
  %444 = vmatpush2.msra.mxu0 0.0
  %445 = vmatprep.subr.mxu0 0.0
  %446 = vmatpush2.msra.mxu0 0.0
  %447 = vmatprep.subr.mxu0 0.0
  %448 = vmatpush2.msra.mxu0 0.0
  %449 = vmatprep.subr.mxu0 0.0
  %450 = vmatpush2.msra.mxu0 0.0
  %451 = vmatprep.subr.mxu0 0.0
  %452 = vmatpush2.msra.mxu0 0.0
  %453 = vmatprep.subr.mxu0 0.0
  %454 = vmatpush2.msra.mxu0 0.0
  %455 = vmatprep.mubr.f32.mxu0 0.0
  %456 = vmatmul.mubr.f32.gmra.mxu0 %v368
  %v457 = vpop.f32.mrf.mxu0
  %v458 = vadd.f32 %v364, %v457
  %v459 = vpop.f32.mrf.mxu0
  %460 = vmatprep.mubr.f32.mxu0 0.0
  %461 = vmatmul.mubr.f32.gmra.mxu0 %v371
  %v462 = vpop.f32.mrf.mxu0
  %v463 = vadd.f32 %v364, %v462
  %v464 = vpop.f32.mrf.mxu0
  %465 = vmatprep.mubr.f32.mxu0 0.0
  %466 = vmatmul.mubr.f32.gmra.mxu0 %v374
  %v467 = vpop.f32.mrf.mxu0
  %v468 = vadd.f32 %v364, %v467
  %v469 = vpop.f32.mrf.mxu0
  %470 = vmatprep.mubr.f32.mxu0 0.0
  %471 = vmatmul.mubr.f32.gmra.mxu0 %v377
  %v472 = vpop.f32.mrf.mxu0
  %v473 = vadd.f32 %v364, %v472
  %v474 = vpop.f32.mrf.mxu0
  %475 = vmatprep.mubr.f32.mxu0 0.0
  %476 = vmatmul.mubr.f32.gmra.mxu0 %v380
  %v477 = vpop.f32.mrf.mxu0
  %v478 = vadd.f32 %v364, %v477
  %v479 = vpop.f32.mrf.mxu0
  %480 = vmatprep.mubr.f32.mxu0 0.0
  %481 = vmatmul.mubr.f32.gmra.mxu0 %v383
  %v482 = vpop.f32.mrf.mxu0
  %v483 = vadd.f32 %v364, %v482
  %v484 = vpop.f32.mrf.mxu0
  %485 = vmatprep.mubr.f32.mxu0 0.0
  %486 = vmatmul.mubr.f32.gmra.mxu0 %v386
  %v487 = vpop.f32.mrf.mxu0
  %v488 = vadd.f32 %v364, %v487
  %v489 = vpop.f32.mrf.mxu0
  %490 = vmatprep.mubr.f32.mxu0 0.0
  %491 = vmatmul.mubr.f32.gmra.mxu0 %v389
  %v492 = vpop.f32.mrf.mxu0
  %v493 = vadd.f32 %v364, %v492
  %v494 = vpop.f32.mrf.mxu0
  %495 = vdwg.mxu0
  %v496 = vmax.f32 %v458, 0.0
  %v497 = vmax.f32 %v463, 0.0
  %v498 = vmax.f32 %v468, 0.0
  %v499 = vmax.f32 %v473, 0.0
  %v500 = vmax.f32 %v478, 0.0
  %v501 = vmax.f32 %v483, 0.0
  %v502 = vmax.f32 %v488, 0.0
  %v503 = vmax.f32 %v493, 0.0
  %v504 = vld [vmem:[%s4] sm:$0xff]
  %v505 = vld [vmem:[%s4 + $0x8] sm:$0xf]
  %v506 = vld [vmem:[%s9] sm:$0x1]
  %v508 = vlaneseq
  %v509 = vshrl.u32 %v508, 7
  %v510 = vsub.s32 0, %v509
  %v511 = vrot.slane %v506, %v510
  %vm513 = vcmask 97280
  %v515 = vsel %vm513, %v496, 0
  %v518 = vsel %vm513, %v497, 0
  %v521 = vsel %vm513, %v498, 0
  %v524 = vsel %vm513, %v499, 0
  %v527 = vsel %vm513, %v500, 0
  %v530 = vsel %vm513, %v501, 0
  %v533 = vsel %vm513, %v502, 0
  %v536 = vsel %vm513, %v503, 0
  %vm538 = vcmask 1043456
  %v540 = vsel %vm538, %v505, 0
  %542 = vmatprep.subr.mxu0 0.0
  %543 = vmatpush1.msra.mxu0 0.0
  %544 = vmatprep.subr.mxu0 0.0
  %545 = vmatpush1.msra.mxu0 0.0
  %546 = vmatprep.subr.mxu0 0.0
  %547 = vmatpush1.msra.mxu0 0.0
  %548 = vmatprep.subr.mxu0 0.0
  %549 = vmatpush1.msra.mxu0 0.0
  %550 = vmatprep.subr.mxu0 0.0
  %551 = vmatpush1.msra.mxu0 0.0
  %552 = vmatprep.subr.mxu0 0.0
  %553 = vmatpush1.msra.mxu0 0.0
  %554 = vmatprep.subr.mxu0 0.0
  %555 = vmatpush1.msra.mxu0 0.0
  %556 = vmatprep.subr.mxu0 0.0
  %557 = vmatpush1.msra.mxu0 0.0
  %558 = vmatprep.subr.mxu0 0.0
  %559 = vmatpush1.msra.mxu0 0.0
  %560 = vmatprep.subr.mxu0 0.0
  %561 = vmatpush1.msra.mxu0 0.0
  %562 = vmatprep.subr.mxu0 0.0
  %563 = vmatpush1.msra.mxu0 0.0
  %564 = vmatprep.subr.mxu0 0.0
  %565 = vmatpush1.msra.mxu0 0.0
  %566 = vmatprep.subr.mxu0 0.0
  %567 = vmatpush1.msra.mxu0 0.0
  %568 = vmatprep.subr.mxu0 0.0
  %569 = vmatpush1.msra.mxu0 0.0
  %570 = vmatprep.subr.mxu0 0.0
  %571 = vmatpush1.msra.mxu0 %v540
  %572 = vmatprep.subr.mxu0 0.0
  %573 = vmatpush1.msra.mxu0 %v504
  %574 = vmatprep.subr.mxu0 0.0
  %575 = vmatpush2.msra.mxu0 0.0
  %576 = vmatprep.subr.mxu0 0.0
  %577 = vmatpush2.msra.mxu0 0.0
  %578 = vmatprep.subr.mxu0 0.0
  %579 = vmatpush2.msra.mxu0 0.0
  %580 = vmatprep.subr.mxu0 0.0
  %581 = vmatpush2.msra.mxu0 0.0
  %582 = vmatprep.subr.mxu0 0.0
  %583 = vmatpush2.msra.mxu0 0.0
  %584 = vmatprep.subr.mxu0 0.0
  %585 = vmatpush2.msra.mxu0 0.0
  %586 = vmatprep.subr.mxu0 0.0
  %587 = vmatpush2.msra.mxu0 0.0
  %588 = vmatprep.subr.mxu0 0.0
  %589 = vmatpush2.msra.mxu0 0.0
  %590 = vmatprep.subr.mxu0 0.0
  %591 = vmatpush2.msra.mxu0 0.0
  %592 = vmatprep.subr.mxu0 0.0
  %593 = vmatpush2.msra.mxu0 0.0
  %594 = vmatprep.subr.mxu0 0.0
  %595 = vmatpush2.msra.mxu0 0.0
  %596 = vmatprep.subr.mxu0 0.0
  %597 = vmatpush2.msra.mxu0 0.0
  %598 = vmatprep.subr.mxu0 0.0
  %599 = vmatpush2.msra.mxu0 0.0
  %600 = vmatprep.subr.mxu0 0.0
  %601 = vmatpush2.msra.mxu0 0.0
  %602 = vmatprep.subr.mxu0 0.0
  %603 = vmatpush2.msra.mxu0 0.0
  %604 = vmatprep.subr.mxu0 0.0
  %605 = vmatpush2.msra.mxu0 0.0
  %606 = vmatprep.mubr.f32.mxu0 0.0
  %607 = vmatmul.mubr.f32.gmra.mxu0 %v515
  %v608 = vpop.f32.mrf.mxu0
  %v609 = vadd.f32 %v511, %v608
  %v610 = vpop.f32.mrf.mxu0
  %611 = vmatprep.mubr.f32.mxu0 0.0
  %612 = vmatmul.mubr.f32.gmra.mxu0 %v518
  %v613 = vpop.f32.mrf.mxu0
  %v614 = vadd.f32 %v511, %v613
  %v615 = vpop.f32.mrf.mxu0
  %616 = vmatprep.mubr.f32.mxu0 0.0
  %617 = vmatmul.mubr.f32.gmra.mxu0 %v521
  %v618 = vpop.f32.mrf.mxu0
  %v619 = vadd.f32 %v511, %v618
  %v620 = vpop.f32.mrf.mxu0
  %621 = vmatprep.mubr.f32.mxu0 0.0
  %622 = vmatmul.mubr.f32.gmra.mxu0 %v524
  %v623 = vpop.f32.mrf.mxu0
  %v624 = vadd.f32 %v511, %v623
  %v625 = vpop.f32.mrf.mxu0
  %626 = vmatprep.mubr.f32.mxu0 0.0
  %627 = vmatmul.mubr.f32.gmra.mxu0 %v527
  %v628 = vpop.f32.mrf.mxu0
  %v629 = vadd.f32 %v511, %v628
  %v630 = vpop.f32.mrf.mxu0
  %631 = vmatprep.mubr.f32.mxu0 0.0
  %632 = vmatmul.mubr.f32.gmra.mxu0 %v530
  %v633 = vpop.f32.mrf.mxu0
  %v634 = vadd.f32 %v511, %v633
  %v635 = vpop.f32.mrf.mxu0
  %636 = vmatprep.mubr.f32.mxu0 0.0
  %637 = vmatmul.mubr.f32.gmra.mxu0 %v533
  %v638 = vpop.f32.mrf.mxu0
  %v639 = vadd.f32 %v511, %v638
  %v640 = vpop.f32.mrf.mxu0
  %641 = vmatprep.mubr.f32.mxu0 0.0
  %642 = vmatmul.mubr.f32.gmra.mxu0 %v536
  %v643 = vpop.f32.mrf.mxu0
  %v644 = vadd.f32 %v511, %v643
  %v645 = vpop.f32.mrf.mxu0
  %646 = vdwg.mxu0
  %v647 = vmax.f32 %v609, 0.0
  %v648 = vmax.f32 %v614, 0.0
  %v649 = vmax.f32 %v619, 0.0
  %v650 = vmax.f32 %v624, 0.0
  %v651 = vmax.f32 %v629, 0.0
  %v652 = vmax.f32 %v634, 0.0
  %v653 = vmax.f32 %v639, 0.0
  %v654 = vmax.f32 %v644, 0.0
  %v655 = vld [vmem:[%s5] sm:$0x3f]
  %v656 = vld [vmem:[#allocation2] sm:$0x1]
  %v658 = vlaneseq
  %v659 = vshrl.u32 %v658, 7
  %v660 = vsub.s32 0, %v659
  %v661 = vrot.slane %v656, %v660
  %vm663 = vcmask 48128
  %v665 = vsel %vm663, %v647, 0
  %v668 = vsel %vm663, %v648, 0
  %v671 = vsel %vm663, %v649, 0
  %v674 = vsel %vm663, %v650, 0
  %v677 = vsel %vm663, %v651, 0
  %v680 = vsel %vm663, %v652, 0
  %v683 = vsel %vm663, %v653, 0
  %v686 = vsel %vm663, %v654, 0
  %vm688 = vcmask 1045504
  %v690 = vsel %vm688, %v655, 0
  %692 = vmatprep.subr.mxu0 0.0
  %693 = vmatpush1.msra.mxu0 0.0
  %694 = vmatprep.subr.mxu0 0.0
  %695 = vmatpush1.msra.mxu0 0.0
  %696 = vmatprep.subr.mxu0 0.0
  %697 = vmatpush1.msra.mxu0 0.0
  %698 = vmatprep.subr.mxu0 0.0
  %699 = vmatpush1.msra.mxu0 0.0
  %700 = vmatprep.subr.mxu0 0.0
  %701 = vmatpush1.msra.mxu0 0.0
  %702 = vmatprep.subr.mxu0 0.0
  %703 = vmatpush1.msra.mxu0 0.0
  %704 = vmatprep.subr.mxu0 0.0
  %705 = vmatpush1.msra.mxu0 0.0
  %706 = vmatprep.subr.mxu0 0.0
  %707 = vmatpush1.msra.mxu0 0.0
  %708 = vmatprep.subr.mxu0 0.0
  %709 = vmatpush1.msra.mxu0 0.0
  %710 = vmatprep.subr.mxu0 0.0
  %711 = vmatpush1.msra.mxu0 0.0
  %712 = vmatprep.subr.mxu0 0.0
  %713 = vmatpush1.msra.mxu0 0.0
  %714 = vmatprep.subr.mxu0 0.0
  %715 = vmatpush1.msra.mxu0 0.0
  %716 = vmatprep.subr.mxu0 0.0
  %717 = vmatpush1.msra.mxu0 0.0
  %718 = vmatprep.subr.mxu0 0.0
  %719 = vmatpush1.msra.mxu0 0.0
  %720 = vmatprep.subr.mxu0 0.0
  %721 = vmatpush1.msra.mxu0 0.0
  %722 = vmatprep.subr.mxu0 0.0
  %723 = vmatpush1.msra.mxu0 %v690
  %724 = vmatprep.subr.mxu0 0.0
  %725 = vmatpush2.msra.mxu0 0.0
  %726 = vmatprep.subr.mxu0 0.0
  %727 = vmatpush2.msra.mxu0 0.0
  %728 = vmatprep.subr.mxu0 0.0
  %729 = vmatpush2.msra.mxu0 0.0
  %730 = vmatprep.subr.mxu0 0.0
  %731 = vmatpush2.msra.mxu0 0.0
  %732 = vmatprep.subr.mxu0 0.0
  %733 = vmatpush2.msra.mxu0 0.0
  %734 = vmatprep.subr.mxu0 0.0
  %735 = vmatpush2.msra.mxu0 0.0
  %736 = vmatprep.subr.mxu0 0.0
  %737 = vmatpush2.msra.mxu0 0.0
  %738 = vmatprep.subr.mxu0 0.0
  %739 = vmatpush2.msra.mxu0 0.0
  %740 = vmatprep.subr.mxu0 0.0
  %741 = vmatpush2.msra.mxu0 0.0
  %742 = vmatprep.subr.mxu0 0.0
  %743 = vmatpush2.msra.mxu0 0.0
  %744 = vmatprep.subr.mxu0 0.0
  %745 = vmatpush2.msra.mxu0 0.0
  %746 = vmatprep.subr.mxu0 0.0
  %747 = vmatpush2.msra.mxu0 0.0
  %748 = vmatprep.subr.mxu0 0.0
  %749 = vmatpush2.msra.mxu0 0.0
  %750 = vmatprep.subr.mxu0 0.0
  %751 = vmatpush2.msra.mxu0 0.0
  %752 = vmatprep.subr.mxu0 0.0
  %753 = vmatpush2.msra.mxu0 0.0
  %754 = vmatprep.subr.mxu0 0.0
  %755 = vmatpush2.msra.mxu0 0.0
  %756 = vmatprep.mubr.f32.mxu0 0.0
  %757 = vmatmul.mubr.f32.gmra.mxu0 %v665
  %v758 = vpop.f32.mrf.mxu0
  %v759 = vadd.f32 %v661, %v758
  %v760 = vpop.f32.mrf.mxu0
  %761 = vmatprep.mubr.f32.mxu0 0.0
  %762 = vmatmul.mubr.f32.gmra.mxu0 %v668
  %v763 = vpop.f32.mrf.mxu0
  %v764 = vadd.f32 %v661, %v763
  %v765 = vpop.f32.mrf.mxu0
  %766 = vmatprep.mubr.f32.mxu0 0.0
  %767 = vmatmul.mubr.f32.gmra.mxu0 %v671
  %v768 = vpop.f32.mrf.mxu0
  %v769 = vadd.f32 %v661, %v768
  %v770 = vpop.f32.mrf.mxu0
  %771 = vmatprep.mubr.f32.mxu0 0.0
  %772 = vmatmul.mubr.f32.gmra.mxu0 %v674
  %v773 = vpop.f32.mrf.mxu0
  %v774 = vadd.f32 %v661, %v773
  %v775 = vpop.f32.mrf.mxu0
  %776 = vmatprep.mubr.f32.mxu0 0.0
  %777 = vmatmul.mubr.f32.gmra.mxu0 %v677
  %v778 = vpop.f32.mrf.mxu0
  %v779 = vadd.f32 %v661, %v778
  %v780 = vpop.f32.mrf.mxu0
  %781 = vmatprep.mubr.f32.mxu0 0.0
  %782 = vmatmul.mubr.f32.gmra.mxu0 %v680
  %v783 = vpop.f32.mrf.mxu0
  %v784 = vadd.f32 %v661, %v783
  %v785 = vpop.f32.mrf.mxu0
  %786 = vmatprep.mubr.f32.mxu0 0.0
  %787 = vmatmul.mubr.f32.gmra.mxu0 %v683
  %v788 = vpop.f32.mrf.mxu0
  %v789 = vadd.f32 %v661, %v788
  %v790 = vpop.f32.mrf.mxu0
  %791 = vmatprep.mubr.f32.mxu0 0.0
  %792 = vmatmul.mubr.f32.gmra.mxu0 %v686
  %v793 = vpop.f32.mrf.mxu0
  %v794 = vadd.f32 %v661, %v793
  %v795 = vpop.f32.mrf.mxu0
  %796 = vdwg.mxu0
  %v797 = vmax.f32 %v759, 0.0
  %v798 = vmax.f32 %v764, 0.0
  %v799 = vmax.f32 %v769, 0.0
  %v800 = vmax.f32 %v774, 0.0
  %v801 = vmax.f32 %v779, 0.0
  %v802 = vmax.f32 %v784, 0.0
  %v803 = vmax.f32 %v789, 0.0
  %v804 = vmax.f32 %v794, 0.0
  %vm805 = vcmask 7168
  %806 = vst.msk [vmem:[%s11] sm:$0xff] %vm805, %v797
  %807 = vst.msk [vmem:[%s11 + $0x8] sm:$0xff] %vm805, %v798
  %808 = vst.msk [vmem:[%s11 + $0x10] sm:$0xff] %vm805, %v799
  %809 = vst.msk [vmem:[%s11 + $0x18] sm:$0xff] %vm805, %v800
  %810 = vst.msk [vmem:[%s11 + $0x20] sm:$0xff] %vm805, %v801
  %811 = vst.msk [vmem:[%s11 + $0x28] sm:$0xff] %vm805, %v802
  %812 = vst.msk [vmem:[%s11 + $0x30] sm:$0xff] %vm805, %v803
  %813 = vst.msk [vmem:[%s11 + $0x38] sm:$0xff] %vm805, %v804
  // Predicated region
  $region46: #{sst_forward.55} parent=0 // pred_check
    _
  $region47: #{sst_forward.55} parent=0 // pred_check_branch
    %815 = sbr.rel (0) target = $region49
  $region48: #{sst_forward.55} parent=0 // pred_region
    _
  $region49: #{sst_forward.55} parent=0 // pred_fallthru
    _
  // Predicated region
  $region50: #{sst_forward.55} parent=0 // pred_check
    _
  $region51: #{sst_forward.55} parent=0 // pred_check_branch
    %817 = sbr.rel (0) target = $region53
  $region52: #{sst_forward.55} parent=0 // pred_region
    _
  $region53: #{sst_forward.55} parent=0 // pred_fallthru
    _

</llo_original>
